<compile_context>
chip_gen: v5e
topology: v5e:2x2
jax: 0.10.0
libtpu: 0.0.40
codegen_flags: <defaults>
</compile_context>

<pallas_src>
import numpy as np

import jax
import jax.numpy as jnp
from jax.experimental import pallas as pl
from jax.experimental.pallas import tpu as pltpu


# --------------------------------------------------------------------------- #
# Canvas geometry: each stage works on a zero-padded canvas
#   A = 30x30 (28x28 valid), B = 16x16 (14x14), C = 9x9 (7x7), D = 5x5 (3x3)
# --------------------------------------------------------------------------- #


def _shift_mat(n, d):
    """S[i, j] = 1 iff j == i + d, so (S @ X)[i] = X[i + d] (zero past the edge)."""
    s = np.zeros((n, n), np.float32)
    idx = np.arange(n)
    j = idx + d
    ok = (j >= 0) & (j < n)
    s[idx[ok], j[ok]] = 1.0
    return s


def _conv_operators(w_oihw, bias, hp, wp):
    """3x3 stride-1 'same' conv on a (Cin*hp, wp) canvas as  sum_dx A_dx @ X @ C_dx."""
    w = np.asarray(w_oihw, np.float32)                    # (Cout, Cin, 3, 3)
    cout = w.shape[0]
    a = np.stack([
        sum(np.kron(w[:, :, dy, dx], _shift_mat(hp, dy - 1)) for dy in range(3))
        for dx in range(3)
    ])                                                    # (3, Cout*hp, Cin*hp)
    c = np.stack([_shift_mat(wp, dx - 1).T for dx in range(3)])     # (3, wp, wp)
    b = np.repeat(np.asarray(bias, np.float32), hp).reshape(cout * hp, 1)
    return (jnp.asarray(a, jnp.bfloat16),      # MXU operand -> bf16
            jnp.asarray(c, jnp.float32),       # exact 0/1 shift -> f32
            jnp.asarray(b, jnp.float32))


def _pool_operators(ch, hp_in, wp_in, hp_out, wp_out, p):
    """2x2/2 maxpool + placement into the next (zero-ringed) canvas."""
    r = np.zeros((2, ch * hp_out, ch * hp_in), np.float32)
    s = np.zeros((2, wp_in, wp_out), np.float32)
    for a in range(2):
        for c in range(ch):
            for y in range(p):
                r[a, c * hp_out + y + 1, c * hp_in + 2 * y + a + 1] = 1.0
    for b in range(2):
        for x in range(p):
            s[b, 2 * x + b + 1, x + 1] = 1.0
    return jnp.asarray(r, jnp.float32), jnp.asarray(s, jnp.float32)


def _dilate_operators(ch, hp_in, wp_in, hp_out, wp_out, v, r0, c0):
    """ConvTranspose input prep: scatter the valid v*v block with stride-2 zero
    dilation + asymmetric padding into the next canvas (all in VMEM)."""
    r = np.zeros((ch * hp_out, ch * hp_in), np.float32)
    s = np.zeros((wp_in, wp_out), np.float32)
    for c in range(ch):
        for i in range(v):
            r[c * hp_out + r0 + 2 * i, c * hp_in + 1 + i] = 1.0
    for j in range(v):
        s[1 + j, c0 + 2 * j] = 1.0
    return jnp.asarray(r, jnp.float32), jnp.asarray(s, jnp.float32)


def _convT_as_conv(w_iohw):
    """Equivalent regular-conv OIHW weight for a ConvTranspose2d weight (Cin,Cout,kh,kw)."""
    w = np.asarray(w_iohw, np.float32)
    return np.flip(np.transpose(w, (1, 0, 2, 3)), axis=(2, 3))


def build_operators(params):
    """Precompute every operator the fused kernel needs (runs once on host)."""
    ops = []
    # encoder: conv(1->4) + pool, conv(4->8) + pool, conv(8->16) + pool
    ops += list(_conv_operators(params["enc1_w"], params["enc1_b"], 30, 30))
    ops += list(_pool_operators(4, 30, 30, 16, 16, 14))
    ops += list(_conv_operators(params["enc2_w"], params["enc2_b"], 16, 16))
    ops += list(_pool_operators(8, 16, 16, 9, 9, 7))
    ops += list(_conv_operators(params["enc3_w"], params["enc3_b"], 9, 9))
    ops += list(_pool_operators(16, 9, 9, 5, 5, 3))
    # bottleneck conv(16->8) + regrid to dec1's dilated canvas (k3,s2,p0,op0)
    ops += list(_conv_operators(params["bottle_w"], params["bottle_b"], 5, 5))
    ops += list(_dilate_operators(8, 5, 5, 9, 9, 3, 2, 2))
    # decoder: convT(8->16), convT(16->8), convT(8->4), conv(4->1)+sigmoid
    ops += list(_conv_operators(_convT_as_conv(params["dec1_w"]), params["dec1_b"], 9, 9))
    ops += list(_dilate_operators(16, 9, 9, 16, 16, 7, 1, 1))
    ops += list(_conv_operators(_convT_as_conv(params["dec2_w"]), params["dec2_b"], 16, 16))
    ops += list(_dilate_operators(8, 16, 16, 30, 30, 14, 1, 1))
    ops += list(_conv_operators(_convT_as_conv(params["dec3_w"]), params["dec3_b"], 30, 30))
    msk = np.zeros((4 * 30, 30), np.float32)          # keeps only the valid 28x28 region
    for c in range(4):
        msk[c * 30 + 1:c * 30 + 29, 1:29] = 1.0
    ops.append(jnp.asarray(msk, jnp.float32))
    ops += list(_conv_operators(params["dec4_w"], params["dec4_b"], 30, 30))
    return ops


# --------------------------------------------------------------------------- #
# Fused Pallas kernel: the whole network for one batch element per grid step.
# --------------------------------------------------------------------------- #


def _cnn_ae_kernel(
    x_ref,
    a1, c1, b1, pr1, ps1,
    a2, c2, b2, pr2, ps2,
    a3, c3, b3, pr3, ps3,
    a4, c4, b4, dr4, ds4,
    a5, c5, b5, dr5, ds5,
    a6, c6, b6, dr6, ds6,
    a7, c7, b7, msk7,
    a8, c8, b8,
    o_ref,
):
    f32 = jnp.float32
    bf16 = jnp.bfloat16

    def conv(x_bf, a_ref, c_ref, b_ref):
        # x_bf: (Cin*Hp, Wp) bf16 canvas.  Returns conv + bias on the same canvas (f32).
        acc = None
        for dx in range(3):
            t = jnp.dot(a_ref[dx], x_bf, preferred_element_type=f32)   # bf16 MXU matmul
            t = jnp.dot(t, c_ref[dx], preferred_element_type=f32)      # exact column shift
            acc = t if acc is None else acc + t
        return acc + b_ref[...]

    def pool(y, r_ref, s_ref):
        # 2x2 / stride-2 maxpool fused with placement into the next canvas.
        outs = []
        for a in range(2):
            ra = jnp.dot(r_ref[a], y, preferred_element_type=f32)
            for b in range(2):
                outs.append(jnp.dot(ra, s_ref[b], preferred_element_type=f32))
        return jnp.maximum(jnp.maximum(outs[0], outs[1]),
                           jnp.maximum(outs[2], outs[3]))

    def regrid(y, r_ref, s_ref):
        # ConvTranspose zero-dilation + padding, entirely in VMEM.
        t = jnp.dot(r_ref[...], y, preferred_element_type=f32)
        return jnp.dot(t, s_ref[...], preferred_element_type=f32)

    relu = lambda v: jnp.maximum(v, 0.0)

    # ---------------- encoder ----------------
    h = relu(conv(x_ref[0], a1, c1, b1))          # (4*30, 30)
    h = pool(h, pr1, ps1).astype(bf16)            # (4*16, 16)
    h = relu(conv(h, a2, c2, b2))                 # (8*16, 16)
    h = pool(h, pr2, ps2).astype(bf16)            # (8*9, 9)
    h = relu(conv(h, a3, c3, b3))                 # (16*9, 9)
    h = pool(h, pr3, ps3).astype(bf16)            # (16*5, 5)
    # ---------------- bottleneck (no activation) ----------------
    h = conv(h, a4, c4, b4)                       # (8*5, 5)
    h = regrid(h, dr4, ds4).astype(bf16)          # (8*9, 9)
    # ---------------- decoder ----------------
    h = relu(conv(h, a5, c5, b5))                 # (16*9, 9)
    h = regrid(h, dr5, ds5).astype(bf16)          # (16*16, 16)
    h = relu(conv(h, a6, c6, b6))                 # (8*16, 16)
    h = regrid(h, dr6, ds6).astype(bf16)          # (8*30, 30)
    h = relu(conv(h, a7, c7, b7))                 # (4*30, 30)
    h = (h * msk7[...]).astype(bf16)              # zero the pad ring for the final conv
    h = conv(h, a8, c8, b8)                       # (1*30, 30)
    o_ref[0] = jax.nn.sigmoid(h)


def cnn_ae_forward(ops, x_nchw):
    """NCHW in / NCHW out; one fused pallas_call for the whole autoencoder."""
    n = x_nchw.shape[0]
    xp = jnp.pad(x_nchw.astype(jnp.float32), ((0, 0), (0, 0), (1, 1), (1, 1)))
    x_canvas = xp[:, 0].astype(jnp.bfloat16)                     # (N, 30, 30)

    in_specs = [pl.BlockSpec((1, 30, 30), lambda i: (i, 0, 0))]
    for op in ops:
        in_specs.append(pl.BlockSpec(op.shape, lambda i, _r=op.ndim: (0,) * _r))

    out_canvas = pl.pallas_call(
        _cnn_ae_kernel,
        out_shape=jax.ShapeDtypeStruct((n, 30, 30), jnp.float32),
        grid=(n,),
        in_specs=in_specs,
        out_specs=pl.BlockSpec((1, 30, 30), lambda i: (i, 0, 0)),
        compiler_params=pltpu.CompilerParams(dimension_semantics=("parallel",)),
    )(x_canvas, *ops)
    return out_canvas[:, 1:29, 1:29][:, None, :, :]              # crop valid 28x28, NCHW


# --------------------------------------------------------------------------- #
# Parameters (PyTorch layouts) and a pure-JAX reference for validation.
# --------------------------------------------------------------------------- #


def init_params(key):
    def conv_w(k, co, ci, ks=3):
        bound = 1.0 / float(ci * ks * ks) ** 0.5
        kw_, kb_ = jax.random.split(k)
        w = jax.random.uniform(kw_, (co, ci, ks, ks), jnp.float32, -bound, bound)
        b = jax.random.uniform(kb_, (co,), jnp.float32, -bound, bound)
        return w, b

    def convT_w(k, ci, co, ks=3):
        bound = 1.0 / float(co * ks * ks) ** 0.5
        kw_, kb_ = jax.random.split(k)
        w = jax.random.uniform(kw_, (ci, co, ks, ks), jnp.float32, -bound, bound)
        b = jax.random.uniform(kb_, (co,), jnp.float32, -bound, bound)
        return w, b

    ks = jax.random.split(key, 8)
    p = {}
    p["enc1_w"], p["enc1_b"] = conv_w(ks[0], 4, 1)
    p["enc2_w"], p["enc2_b"] = conv_w(ks[1], 8, 4)
    p["enc3_w"], p["enc3_b"] = conv_w(ks[2], 16, 8)
    p["bottle_w"], p["bottle_b"] = conv_w(ks[3], 8, 16)
    p["dec1_w"], p["dec1_b"] = convT_w(ks[4], 8, 16)
    p["dec2_w"], p["dec2_b"] = convT_w(ks[5], 16, 8)
    p["dec3_w"], p["dec3_b"] = convT_w(ks[6], 8, 4)
    p["dec4_w"], p["dec4_b"] = conv_w(ks[7], 1, 4)
    return p


def cnn_ae_reference(params, x_nchw):
    """Pure-JAX (XLA) f32 reference of the PyTorch CNN_AE.forward."""
    dn = ("NCHW", "OIHW", "NCHW")

    def conv(x, w, b, pad):
        y = jax.lax.conv_general_dilated(x, w, (1, 1), [(pad, pad), (pad, pad)],
                                         dimension_numbers=dn)
        return y + b.reshape(1, -1, 1, 1)

    def convT(x, w, b, stride, pad, outpad):
        w_conv = jnp.flip(jnp.transpose(w, (1, 0, 2, 3)), axis=(2, 3))
        lo, hi = 2 - pad, 2 - pad + outpad
        y = jax.lax.conv_general_dilated(x, w_conv, (1, 1), [(lo, hi), (lo, hi)],
                                         lhs_dilation=(stride, stride),
                                         dimension_numbers=dn)
        return y + b.reshape(1, -1, 1, 1)

    def pool(x):
        return jax.lax.reduce_window(x, -jnp.inf, jax.lax.max,
                                     (1, 1, 2, 2), (1, 1, 2, 2), "VALID")

    h = x_nchw.astype(jnp.float32)
    h = pool(jax.nn.relu(conv(h, params["enc1_w"], params["enc1_b"], 1)))
    h = pool(jax.nn.relu(conv(h, params["enc2_w"], params["enc2_b"], 1)))
    h = pool(jax.nn.relu(conv(h, params["enc3_w"], params["enc3_b"], 1)))
    h = conv(h, params["bottle_w"], params["bottle_b"], 1)
    h = jax.nn.relu(convT(h, params["dec1_w"], params["dec1_b"], 2, 0, 0))
    h = jax.nn.relu(convT(h, params["dec2_w"], params["dec2_b"], 2, 1, 1))
    h = jax.nn.relu(convT(h, params["dec3_w"], params["dec3_b"], 2, 1, 1))
    return jax.nn.sigmoid(conv(h, params["dec4_w"], params["dec4_b"], 1))


if __name__ == "__main__":
    key = jax.random.PRNGKey(0)
    pkey, xkey = jax.random.split(key)
    params = init_params(pkey)
    # MNIST-like input (the module's decode() implies a 3x3 bottleneck => 28x28 input)
    x = jax.random.uniform(xkey, (2, 1, 28, 28), jnp.float32)

    ops = build_operators(params)           # host-side, once
    fwd = jax.jit(cnn_ae_forward)
    y = fwd(ops, x)
    jax.block_until_ready(y)

    assert y.shape == (2, 1, 28, 28), y.shape
    assert bool(jnp.all(jnp.isfinite(y)))
    assert bool(jnp.all((y >= 0.0) & (y <= 1.0)))       # sigmoid output range

    # numerical check against a pure-JAX f32 reference (bf16 operands => loose tol)
    y_ref = jax.jit(cnn_ae_reference)(params, x)
    jax.block_until_ready(y_ref)
    err = float(jnp.max(jnp.abs(y.astype(jnp.float32) - y_ref)))
    assert err < 0.05, f"mismatch vs reference: {err}"

    print("KERNEL_OK")
</pallas_src>

<mosaic_0001>
module attributes {stable_mosaic.version = 11 : i64} {
  func.func @_cnn_ae_kernel(%arg0: i32, %arg1: memref<1x30x30xbf16, #tpu.memory_space<vmem>>, %arg2: memref<3x120x30xbf16, #tpu.memory_space<vmem>>, %arg3: memref<3x30x30xf32, #tpu.memory_space<vmem>>, %arg4: memref<120x1xf32, #tpu.memory_space<vmem>>, %arg5: memref<2x64x120xf32, #tpu.memory_space<vmem>>, %arg6: memref<2x30x16xf32, #tpu.memory_space<vmem>>, %arg7: memref<3x128x64xbf16, #tpu.memory_space<vmem>>, %arg8: memref<3x16x16xf32, #tpu.memory_space<vmem>>, %arg9: memref<128x1xf32, #tpu.memory_space<vmem>>, %arg10: memref<2x72x128xf32, #tpu.memory_space<vmem>>, %arg11: memref<2x16x9xf32, #tpu.memory_space<vmem>>, %arg12: memref<3x144x72xbf16, #tpu.memory_space<vmem>>, %arg13: memref<3x9x9xf32, #tpu.memory_space<vmem>>, %arg14: memref<144x1xf32, #tpu.memory_space<vmem>>, %arg15: memref<2x80x144xf32, #tpu.memory_space<vmem>>, %arg16: memref<2x9x5xf32, #tpu.memory_space<vmem>>, %arg17: memref<3x40x80xbf16, #tpu.memory_space<vmem>>, %arg18: memref<3x5x5xf32, #tpu.memory_space<vmem>>, %arg19: memref<40x1xf32, #tpu.memory_space<vmem>>, %arg20: memref<72x40xf32, #tpu.memory_space<vmem>>, %arg21: memref<5x9xf32, #tpu.memory_space<vmem>>, %arg22: memref<3x144x72xbf16, #tpu.memory_space<vmem>>, %arg23: memref<3x9x9xf32, #tpu.memory_space<vmem>>, %arg24: memref<144x1xf32, #tpu.memory_space<vmem>>, %arg25: memref<256x144xf32, #tpu.memory_space<vmem>>, %arg26: memref<9x16xf32, #tpu.memory_space<vmem>>, %arg27: memref<3x128x256xbf16, #tpu.memory_space<vmem>>, %arg28: memref<3x16x16xf32, #tpu.memory_space<vmem>>, %arg29: memref<128x1xf32, #tpu.memory_space<vmem>>, %arg30: memref<240x128xf32, #tpu.memory_space<vmem>>, %arg31: memref<16x30xf32, #tpu.memory_space<vmem>>, %arg32: memref<3x120x240xbf16, #tpu.memory_space<vmem>>, %arg33: memref<3x30x30xf32, #tpu.memory_space<vmem>>, %arg34: memref<120x1xf32, #tpu.memory_space<vmem>>, %arg35: memref<120x30xf32, #tpu.memory_space<vmem>>, %arg36: memref<3x30x120xbf16, #tpu.memory_space<vmem>>, %arg37: memref<3x30x30xf32, #tpu.memory_space<vmem>>, %arg38: memref<30x1xf32, #tpu.memory_space<vmem>>, %arg39: memref<1x30x30xf32, #tpu.memory_space<vmem>>) attributes {dimension_semantics = [#tpu.dimension_semantics<parallel>], iteration_bounds = array<i64: 2>, scalar_prefetch = 0 : i64, scratch_operands = 0 : i64, tpu.core_type = #tpu.core_type<tc>, window_params = [{transform_indices = @transform_0, window_bounds = array<i64: 1, 30, 30>}, {pipeline_mode = #tpu.pipeline_mode<synchronous>, transform_indices = @transform_1, window_bounds = array<i64: 3, 120, 30>}, {pipeline_mode = #tpu.pipeline_mode<synchronous>, transform_indices = @transform_2, window_bounds = array<i64: 3, 30, 30>}, {pipeline_mode = #tpu.pipeline_mode<synchronous>, transform_indices = @transform_3, window_bounds = array<i64: 120, 1>}, {pipeline_mode = #tpu.pipeline_mode<synchronous>, transform_indices = @transform_4, window_bounds = array<i64: 2, 64, 120>}, {pipeline_mode = #tpu.pipeline_mode<synchronous>, transform_indices = @transform_5, window_bounds = array<i64: 2, 30, 16>}, {pipeline_mode = #tpu.pipeline_mode<synchronous>, transform_indices = @transform_6, window_bounds = array<i64: 3, 128, 64>}, {pipeline_mode = #tpu.pipeline_mode<synchronous>, transform_indices = @transform_7, window_bounds = array<i64: 3, 16, 16>}, {pipeline_mode = #tpu.pipeline_mode<synchronous>, transform_indices = @transform_8, window_bounds = array<i64: 128, 1>}, {pipeline_mode = #tpu.pipeline_mode<synchronous>, transform_indices = @transform_9, window_bounds = array<i64: 2, 72, 128>}, {pipeline_mode = #tpu.pipeline_mode<synchronous>, transform_indices = @transform_10, window_bounds = array<i64: 2, 16, 9>}, {pipeline_mode = #tpu.pipeline_mode<synchronous>, transform_indices = @transform_11, window_bounds = array<i64: 3, 144, 72>}, {pipeline_mode = #tpu.pipeline_mode<synchronous>, transform_indices = @transform_12, window_bounds = array<i64: 3, 9, 9>}, {pipeline_mode = #tpu.pipeline_mode<synchronous>, transform_indices = @transform_13, window_bounds = array<i64: 144, 1>}, {pipeline_mode = #tpu.pipeline_mode<synchronous>, transform_indices = @transform_14, window_bounds = array<i64: 2, 80, 144>}, {pipeline_mode = #tpu.pipeline_mode<synchronous>, transform_indices = @transform_15, window_bounds = array<i64: 2, 9, 5>}, {pipeline_mode = #tpu.pipeline_mode<synchronous>, transform_indices = @transform_16, window_bounds = array<i64: 3, 40, 80>}, {pipeline_mode = #tpu.pipeline_mode<synchronous>, transform_indices = @transform_17, window_bounds = array<i64: 3, 5, 5>}, {pipeline_mode = #tpu.pipeline_mode<synchronous>, transform_indices = @transform_18, window_bounds = array<i64: 40, 1>}, {pipeline_mode = #tpu.pipeline_mode<synchronous>, transform_indices = @transform_19, window_bounds = array<i64: 72, 40>}, {pipeline_mode = #tpu.pipeline_mode<synchronous>, transform_indices = @transform_20, window_bounds = array<i64: 5, 9>}, {pipeline_mode = #tpu.pipeline_mode<synchronous>, transform_indices = @transform_21, window_bounds = array<i64: 3, 144, 72>}, {pipeline_mode = #tpu.pipeline_mode<synchronous>, transform_indices = @transform_22, window_bounds = array<i64: 3, 9, 9>}, {pipeline_mode = #tpu.pipeline_mode<synchronous>, transform_indices = @transform_23, window_bounds = array<i64: 144, 1>}, {pipeline_mode = #tpu.pipeline_mode<synchronous>, transform_indices = @transform_24, window_bounds = array<i64: 256, 144>}, {pipeline_mode = #tpu.pipeline_mode<synchronous>, transform_indices = @transform_25, window_bounds = array<i64: 9, 16>}, {pipeline_mode = #tpu.pipeline_mode<synchronous>, transform_indices = @transform_26, window_bounds = array<i64: 3, 128, 256>}, {pipeline_mode = #tpu.pipeline_mode<synchronous>, transform_indices = @transform_27, window_bounds = array<i64: 3, 16, 16>}, {pipeline_mode = #tpu.pipeline_mode<synchronous>, transform_indices = @transform_28, window_bounds = array<i64: 128, 1>}, {pipeline_mode = #tpu.pipeline_mode<synchronous>, transform_indices = @transform_29, window_bounds = array<i64: 240, 128>}, {pipeline_mode = #tpu.pipeline_mode<synchronous>, transform_indices = @transform_30, window_bounds = array<i64: 16, 30>}, {pipeline_mode = #tpu.pipeline_mode<synchronous>, transform_indices = @transform_31, window_bounds = array<i64: 3, 120, 240>}, {pipeline_mode = #tpu.pipeline_mode<synchronous>, transform_indices = @transform_32, window_bounds = array<i64: 3, 30, 30>}, {pipeline_mode = #tpu.pipeline_mode<synchronous>, transform_indices = @transform_33, window_bounds = array<i64: 120, 1>}, {pipeline_mode = #tpu.pipeline_mode<synchronous>, transform_indices = @transform_34, window_bounds = array<i64: 120, 30>}, {pipeline_mode = #tpu.pipeline_mode<synchronous>, transform_indices = @transform_35, window_bounds = array<i64: 3, 30, 120>}, {pipeline_mode = #tpu.pipeline_mode<synchronous>, transform_indices = @transform_36, window_bounds = array<i64: 3, 30, 30>}, {pipeline_mode = #tpu.pipeline_mode<synchronous>, transform_indices = @transform_37, window_bounds = array<i64: 30, 1>}, {transform_indices = @transform_38, window_bounds = array<i64: 1, 30, 30>}]} {
    %c0 = arith.constant 0 : index
    %c0_0 = arith.constant 0 : index
    %c0_1 = arith.constant 0 : index
    %0 = vector.load %arg1[%c0, %c0_0, %c0_1] : memref<1x30x30xbf16, #tpu.memory_space<vmem>>, vector<1x30x30xbf16>
    %1 = vector.shape_cast %0 : vector<1x30x30xbf16> to vector<30x30xbf16>
    %c0_2 = arith.constant 0 : index
    %c0_3 = arith.constant 0 : index
    %c0_4 = arith.constant 0 : index
    %2 = vector.load %arg2[%c0_2, %c0_3, %c0_4] : memref<3x120x30xbf16, #tpu.memory_space<vmem>>, vector<1x120x30xbf16>
    %3 = vector.shape_cast %2 : vector<1x120x30xbf16> to vector<120x30xbf16>
    %cst = arith.constant dense<0.000000e+00> : vector<120x30xf32>
    %4 = tpu.matmul %3, %1, %cst {dimension_numbers = #tpu.dot_dimension_numbers<[1], [0], [0], [1], [0, 0, 1, 1], [], []>} : vector<120x30xbf16>, vector<30x30xbf16>, vector<120x30xf32> -> vector<120x30xf32>
    %c0_5 = arith.constant 0 : index
    %c0_6 = arith.constant 0 : index
    %c0_7 = arith.constant 0 : index
    %5 = vector.load %arg3[%c0_5, %c0_6, %c0_7] : memref<3x30x30xf32, #tpu.memory_space<vmem>>, vector<1x30x30xf32>
    %6 = vector.shape_cast %5 : vector<1x30x30xf32> to vector<30x30xf32>
    %cst_8 = arith.constant dense<0.000000e+00> : vector<120x30xf32>
    %7 = tpu.matmul %4, %6, %cst_8 {dimension_numbers = #tpu.dot_dimension_numbers<[1], [0], [0], [1], [0, 0, 1, 1], [], []>} : vector<120x30xf32>, vector<30x30xf32>, vector<120x30xf32> -> vector<120x30xf32>
    %c1 = arith.constant 1 : index
    %c0_9 = arith.constant 0 : index
    %c0_10 = arith.constant 0 : index
    %8 = vector.load %arg2[%c1, %c0_9, %c0_10] : memref<3x120x30xbf16, #tpu.memory_space<vmem>>, vector<1x120x30xbf16>
    %9 = vector.shape_cast %8 : vector<1x120x30xbf16> to vector<120x30xbf16>
    %cst_11 = arith.constant dense<0.000000e+00> : vector<120x30xf32>
    %10 = tpu.matmul %9, %1, %cst_11 {dimension_numbers = #tpu.dot_dimension_numbers<[1], [0], [0], [1], [0, 0, 1, 1], [], []>} : vector<120x30xbf16>, vector<30x30xbf16>, vector<120x30xf32> -> vector<120x30xf32>
    %c1_12 = arith.constant 1 : index
    %c0_13 = arith.constant 0 : index
    %c0_14 = arith.constant 0 : index
    %11 = vector.load %arg3[%c1_12, %c0_13, %c0_14] : memref<3x30x30xf32, #tpu.memory_space<vmem>>, vector<1x30x30xf32>
    %12 = vector.shape_cast %11 : vector<1x30x30xf32> to vector<30x30xf32>
    %cst_15 = arith.constant dense<0.000000e+00> : vector<120x30xf32>
    %13 = tpu.matmul %10, %12, %cst_15 {dimension_numbers = #tpu.dot_dimension_numbers<[1], [0], [0], [1], [0, 0, 1, 1], [], []>} : vector<120x30xf32>, vector<30x30xf32>, vector<120x30xf32> -> vector<120x30xf32>
    %14 = arith.addf %7, %13 : vector<120x30xf32>
    %c2 = arith.constant 2 : index
    %c0_16 = arith.constant 0 : index
    %c0_17 = arith.constant 0 : index
    %15 = vector.load %arg2[%c2, %c0_16, %c0_17] : memref<3x120x30xbf16, #tpu.memory_space<vmem>>, vector<1x120x30xbf16>
    %16 = vector.shape_cast %15 : vector<1x120x30xbf16> to vector<120x30xbf16>
    %cst_18 = arith.constant dense<0.000000e+00> : vector<120x30xf32>
    %17 = tpu.matmul %16, %1, %cst_18 {dimension_numbers = #tpu.dot_dimension_numbers<[1], [0], [0], [1], [0, 0, 1, 1], [], []>} : vector<120x30xbf16>, vector<30x30xbf16>, vector<120x30xf32> -> vector<120x30xf32>
    %c2_19 = arith.constant 2 : index
    %c0_20 = arith.constant 0 : index
    %c0_21 = arith.constant 0 : index
    %18 = vector.load %arg3[%c2_19, %c0_20, %c0_21] : memref<3x30x30xf32, #tpu.memory_space<vmem>>, vector<1x30x30xf32>
    %19 = vector.shape_cast %18 : vector<1x30x30xf32> to vector<30x30xf32>
    %cst_22 = arith.constant dense<0.000000e+00> : vector<120x30xf32>
    %20 = tpu.matmul %17, %19, %cst_22 {dimension_numbers = #tpu.dot_dimension_numbers<[1], [0], [0], [1], [0, 0, 1, 1], [], []>} : vector<120x30xf32>, vector<30x30xf32>, vector<120x30xf32> -> vector<120x30xf32>
    %21 = arith.addf %14, %20 : vector<120x30xf32>
    %c0_23 = arith.constant 0 : index
    %c0_24 = arith.constant 0 : index
    %22 = vector.load %arg4[%c0_23, %c0_24] : memref<120x1xf32, #tpu.memory_space<vmem>>, vector<120x1xf32>
    %23 = vector.broadcast %22 : vector<120x1xf32> to vector<120x30xf32>
    %24 = arith.addf %21, %23 : vector<120x30xf32>
    %cst_25 = arith.constant 0.000000e+00 : f32
    %25 = vector.broadcast %cst_25 : f32 to vector<120x30xf32>
    %26 = arith.maximumf %24, %25 : vector<120x30xf32>
    %c0_26 = arith.constant 0 : index
    %c0_27 = arith.constant 0 : index
    %c0_28 = arith.constant 0 : index
    %27 = vector.load %arg5[%c0_26, %c0_27, %c0_28] : memref<2x64x120xf32, #tpu.memory_space<vmem>>, vector<1x64x120xf32>
    %28 = vector.shape_cast %27 : vector<1x64x120xf32> to vector<64x120xf32>
    %cst_29 = arith.constant dense<0.000000e+00> : vector<64x30xf32>
    %29 = tpu.matmul %28, %26, %cst_29 {dimension_numbers = #tpu.dot_dimension_numbers<[1], [0], [0], [1], [0, 0, 1, 1], [], []>} : vector<64x120xf32>, vector<120x30xf32>, vector<64x30xf32> -> vector<64x30xf32>
    %c0_30 = arith.constant 0 : index
    %c0_31 = arith.constant 0 : index
    %c0_32 = arith.constant 0 : index
    %30 = vector.load %arg6[%c0_30, %c0_31, %c0_32] : memref<2x30x16xf32, #tpu.memory_space<vmem>>, vector<1x30x16xf32>
    %31 = vector.shape_cast %30 : vector<1x30x16xf32> to vector<30x16xf32>
    %cst_33 = arith.constant dense<0.000000e+00> : vector<64x16xf32>
    %32 = tpu.matmul %29, %31, %cst_33 {dimension_numbers = #tpu.dot_dimension_numbers<[1], [0], [0], [1], [0, 0, 1, 1], [], []>} : vector<64x30xf32>, vector<30x16xf32>, vector<64x16xf32> -> vector<64x16xf32>
    %c1_34 = arith.constant 1 : index
    %c0_35 = arith.constant 0 : index
    %c0_36 = arith.constant 0 : index
    %33 = vector.load %arg6[%c1_34, %c0_35, %c0_36] : memref<2x30x16xf32, #tpu.memory_space<vmem>>, vector<1x30x16xf32>
    %34 = vector.shape_cast %33 : vector<1x30x16xf32> to vector<30x16xf32>
    %cst_37 = arith.constant dense<0.000000e+00> : vector<64x16xf32>
    %35 = tpu.matmul %29, %34, %cst_37 {dimension_numbers = #tpu.dot_dimension_numbers<[1], [0], [0], [1], [0, 0, 1, 1], [], []>} : vector<64x30xf32>, vector<30x16xf32>, vector<64x16xf32> -> vector<64x16xf32>
    %c1_38 = arith.constant 1 : index
    %c0_39 = arith.constant 0 : index
    %c0_40 = arith.constant 0 : index
    %36 = vector.load %arg5[%c1_38, %c0_39, %c0_40] : memref<2x64x120xf32, #tpu.memory_space<vmem>>, vector<1x64x120xf32>
    %37 = vector.shape_cast %36 : vector<1x64x120xf32> to vector<64x120xf32>
    %cst_41 = arith.constant dense<0.000000e+00> : vector<64x30xf32>
    %38 = tpu.matmul %37, %26, %cst_41 {dimension_numbers = #tpu.dot_dimension_numbers<[1], [0], [0], [1], [0, 0, 1, 1], [], []>} : vector<64x120xf32>, vector<120x30xf32>, vector<64x30xf32> -> vector<64x30xf32>
    %c0_42 = arith.constant 0 : index
    %c0_43 = arith.constant 0 : index
    %c0_44 = arith.constant 0 : index
    %39 = vector.load %arg6[%c0_42, %c0_43, %c0_44] : memref<2x30x16xf32, #tpu.memory_space<vmem>>, vector<1x30x16xf32>
    %40 = vector.shape_cast %39 : vector<1x30x16xf32> to vector<30x16xf32>
    %cst_45 = arith.constant dense<0.000000e+00> : vector<64x16xf32>
    %41 = tpu.matmul %38, %40, %cst_45 {dimension_numbers = #tpu.dot_dimension_numbers<[1], [0], [0], [1], [0, 0, 1, 1], [], []>} : vector<64x30xf32>, vector<30x16xf32>, vector<64x16xf32> -> vector<64x16xf32>
    %c1_46 = arith.constant 1 : index
    %c0_47 = arith.constant 0 : index
    %c0_48 = arith.constant 0 : index
    %42 = vector.load %arg6[%c1_46, %c0_47, %c0_48] : memref<2x30x16xf32, #tpu.memory_space<vmem>>, vector<1x30x16xf32>
    %43 = vector.shape_cast %42 : vector<1x30x16xf32> to vector<30x16xf32>
    %cst_49 = arith.constant dense<0.000000e+00> : vector<64x16xf32>
    %44 = tpu.matmul %38, %43, %cst_49 {dimension_numbers = #tpu.dot_dimension_numbers<[1], [0], [0], [1], [0, 0, 1, 1], [], []>} : vector<64x30xf32>, vector<30x16xf32>, vector<64x16xf32> -> vector<64x16xf32>
    %45 = arith.maximumf %32, %35 : vector<64x16xf32>
    %46 = arith.maximumf %41, %44 : vector<64x16xf32>
    %47 = arith.maximumf %45, %46 : vector<64x16xf32>
    %48 = arith.truncf %47 : vector<64x16xf32> to vector<64x16xbf16>
    %c0_50 = arith.constant 0 : index
    %c0_51 = arith.constant 0 : index
    %c0_52 = arith.constant 0 : index
    %49 = vector.load %arg7[%c0_50, %c0_51, %c0_52] : memref<3x128x64xbf16, #tpu.memory_space<vmem>>, vector<1x128x64xbf16>
    %50 = vector.shape_cast %49 : vector<1x128x64xbf16> to vector<128x64xbf16>
    %cst_53 = arith.constant dense<0.000000e+00> : vector<128x16xf32>
    %51 = tpu.matmul %50, %48, %cst_53 {dimension_numbers = #tpu.dot_dimension_numbers<[1], [0], [0], [1], [0, 0, 1, 1], [], []>} : vector<128x64xbf16>, vector<64x16xbf16>, vector<128x16xf32> -> vector<128x16xf32>
    %c0_54 = arith.constant 0 : index
    %c0_55 = arith.constant 0 : index
    %c0_56 = arith.constant 0 : index
    %52 = vector.load %arg8[%c0_54, %c0_55, %c0_56] : memref<3x16x16xf32, #tpu.memory_space<vmem>>, vector<1x16x16xf32>
    %53 = vector.shape_cast %52 : vector<1x16x16xf32> to vector<16x16xf32>
    %cst_57 = arith.constant dense<0.000000e+00> : vector<128x16xf32>
    %54 = tpu.matmul %51, %53, %cst_57 {dimension_numbers = #tpu.dot_dimension_numbers<[1], [0], [0], [1], [0, 0, 1, 1], [], []>} : vector<128x16xf32>, vector<16x16xf32>, vector<128x16xf32> -> vector<128x16xf32>
    %c1_58 = arith.constant 1 : index
    %c0_59 = arith.constant 0 : index
    %c0_60 = arith.constant 0 : index
    %55 = vector.load %arg7[%c1_58, %c0_59, %c0_60] : memref<3x128x64xbf16, #tpu.memory_space<vmem>>, vector<1x128x64xbf16>
    %56 = vector.shape_cast %55 : vector<1x128x64xbf16> to vector<128x64xbf16>
    %cst_61 = arith.constant dense<0.000000e+00> : vector<128x16xf32>
    %57 = tpu.matmul %56, %48, %cst_61 {dimension_numbers = #tpu.dot_dimension_numbers<[1], [0], [0], [1], [0, 0, 1, 1], [], []>} : vector<128x64xbf16>, vector<64x16xbf16>, vector<128x16xf32> -> vector<128x16xf32>
    %c1_62 = arith.constant 1 : index
    %c0_63 = arith.constant 0 : index
    %c0_64 = arith.constant 0 : index
    %58 = vector.load %arg8[%c1_62, %c0_63, %c0_64] : memref<3x16x16xf32, #tpu.memory_space<vmem>>, vector<1x16x16xf32>
    %59 = vector.shape_cast %58 : vector<1x16x16xf32> to vector<16x16xf32>
    %cst_65 = arith.constant dense<0.000000e+00> : vector<128x16xf32>
    %60 = tpu.matmul %57, %59, %cst_65 {dimension_numbers = #tpu.dot_dimension_numbers<[1], [0], [0], [1], [0, 0, 1, 1], [], []>} : vector<128x16xf32>, vector<16x16xf32>, vector<128x16xf32> -> vector<128x16xf32>
    %61 = arith.addf %54, %60 : vector<128x16xf32>
    %c2_66 = arith.constant 2 : index
    %c0_67 = arith.constant 0 : index
    %c0_68 = arith.constant 0 : index
    %62 = vector.load %arg7[%c2_66, %c0_67, %c0_68] : memref<3x128x64xbf16, #tpu.memory_space<vmem>>, vector<1x128x64xbf16>
    %63 = vector.shape_cast %62 : vector<1x128x64xbf16> to vector<128x64xbf16>
    %cst_69 = arith.constant dense<0.000000e+00> : vector<128x16xf32>
    %64 = tpu.matmul %63, %48, %cst_69 {dimension_numbers = #tpu.dot_dimension_numbers<[1], [0], [0], [1], [0, 0, 1, 1], [], []>} : vector<128x64xbf16>, vector<64x16xbf16>, vector<128x16xf32> -> vector<128x16xf32>
    %c2_70 = arith.constant 2 : index
    %c0_71 = arith.constant 0 : index
    %c0_72 = arith.constant 0 : index
    %65 = vector.load %arg8[%c2_70, %c0_71, %c0_72] : memref<3x16x16xf32, #tpu.memory_space<vmem>>, vector<1x16x16xf32>
    %66 = vector.shape_cast %65 : vector<1x16x16xf32> to vector<16x16xf32>
    %cst_73 = arith.constant dense<0.000000e+00> : vector<128x16xf32>
    %67 = tpu.matmul %64, %66, %cst_73 {dimension_numbers = #tpu.dot_dimension_numbers<[1], [0], [0], [1], [0, 0, 1, 1], [], []>} : vector<128x16xf32>, vector<16x16xf32>, vector<128x16xf32> -> vector<128x16xf32>
    %68 = arith.addf %61, %67 : vector<128x16xf32>
    %c0_74 = arith.constant 0 : index
    %c0_75 = arith.constant 0 : index
    %69 = vector.load %arg9[%c0_74, %c0_75] : memref<128x1xf32, #tpu.memory_space<vmem>>, vector<128x1xf32>
    %70 = vector.broadcast %69 : vector<128x1xf32> to vector<128x16xf32>
    %71 = arith.addf %68, %70 : vector<128x16xf32>
    %cst_76 = arith.constant 0.000000e+00 : f32
    %72 = vector.broadcast %cst_76 : f32 to vector<128x16xf32>
    %73 = arith.maximumf %71, %72 : vector<128x16xf32>
    %c0_77 = arith.constant 0 : index
    %c0_78 = arith.constant 0 : index
    %c0_79 = arith.constant 0 : index
    %74 = vector.load %arg10[%c0_77, %c0_78, %c0_79] : memref<2x72x128xf32, #tpu.memory_space<vmem>>, vector<1x72x128xf32>
    %75 = vector.shape_cast %74 : vector<1x72x128xf32> to vector<72x128xf32>
    %cst_80 = arith.constant dense<0.000000e+00> : vector<72x16xf32>
    %76 = tpu.matmul %75, %73, %cst_80 {dimension_numbers = #tpu.dot_dimension_numbers<[1], [0], [0], [1], [0, 0, 1, 1], [], []>} : vector<72x128xf32>, vector<128x16xf32>, vector<72x16xf32> -> vector<72x16xf32>
    %c0_81 = arith.constant 0 : index
    %c0_82 = arith.constant 0 : index
    %c0_83 = arith.constant 0 : index
    %77 = vector.load %arg11[%c0_81, %c0_82, %c0_83] : memref<2x16x9xf32, #tpu.memory_space<vmem>>, vector<1x16x9xf32>
    %78 = vector.shape_cast %77 : vector<1x16x9xf32> to vector<16x9xf32>
    %cst_84 = arith.constant dense<0.000000e+00> : vector<72x9xf32>
    %79 = tpu.matmul %76, %78, %cst_84 {dimension_numbers = #tpu.dot_dimension_numbers<[1], [0], [0], [1], [0, 0, 1, 1], [], []>} : vector<72x16xf32>, vector<16x9xf32>, vector<72x9xf32> -> vector<72x9xf32>
    %c1_85 = arith.constant 1 : index
    %c0_86 = arith.constant 0 : index
    %c0_87 = arith.constant 0 : index
    %80 = vector.load %arg11[%c1_85, %c0_86, %c0_87] : memref<2x16x9xf32, #tpu.memory_space<vmem>>, vector<1x16x9xf32>
    %81 = vector.shape_cast %80 : vector<1x16x9xf32> to vector<16x9xf32>
    %cst_88 = arith.constant dense<0.000000e+00> : vector<72x9xf32>
    %82 = tpu.matmul %76, %81, %cst_88 {dimension_numbers = #tpu.dot_dimension_numbers<[1], [0], [0], [1], [0, 0, 1, 1], [], []>} : vector<72x16xf32>, vector<16x9xf32>, vector<72x9xf32> -> vector<72x9xf32>
    %c1_89 = arith.constant 1 : index
    %c0_90 = arith.constant 0 : index
    %c0_91 = arith.constant 0 : index
    %83 = vector.load %arg10[%c1_89, %c0_90, %c0_91] : memref<2x72x128xf32, #tpu.memory_space<vmem>>, vector<1x72x128xf32>
    %84 = vector.shape_cast %83 : vector<1x72x128xf32> to vector<72x128xf32>
    %cst_92 = arith.constant dense<0.000000e+00> : vector<72x16xf32>
    %85 = tpu.matmul %84, %73, %cst_92 {dimension_numbers = #tpu.dot_dimension_numbers<[1], [0], [0], [1], [0, 0, 1, 1], [], []>} : vector<72x128xf32>, vector<128x16xf32>, vector<72x16xf32> -> vector<72x16xf32>
    %c0_93 = arith.constant 0 : index
    %c0_94 = arith.constant 0 : index
    %c0_95 = arith.constant 0 : index
    %86 = vector.load %arg11[%c0_93, %c0_94, %c0_95] : memref<2x16x9xf32, #tpu.memory_space<vmem>>, vector<1x16x9xf32>
    %87 = vector.shape_cast %86 : vector<1x16x9xf32> to vector<16x9xf32>
    %cst_96 = arith.constant dense<0.000000e+00> : vector<72x9xf32>
    %88 = tpu.matmul %85, %87, %cst_96 {dimension_numbers = #tpu.dot_dimension_numbers<[1], [0], [0], [1], [0, 0, 1, 1], [], []>} : vector<72x16xf32>, vector<16x9xf32>, vector<72x9xf32> -> vector<72x9xf32>
    %c1_97 = arith.constant 1 : index
    %c0_98 = arith.constant 0 : index
    %c0_99 = arith.constant 0 : index
    %89 = vector.load %arg11[%c1_97, %c0_98, %c0_99] : memref<2x16x9xf32, #tpu.memory_space<vmem>>, vector<1x16x9xf32>
    %90 = vector.shape_cast %89 : vector<1x16x9xf32> to vector<16x9xf32>
    %cst_100 = arith.constant dense<0.000000e+00> : vector<72x9xf32>
    %91 = tpu.matmul %85, %90, %cst_100 {dimension_numbers = #tpu.dot_dimension_numbers<[1], [0], [0], [1], [0, 0, 1, 1], [], []>} : vector<72x16xf32>, vector<16x9xf32>, vector<72x9xf32> -> vector<72x9xf32>
    %92 = arith.maximumf %79, %82 : vector<72x9xf32>
    %93 = arith.maximumf %88, %91 : vector<72x9xf32>
    %94 = arith.maximumf %92, %93 : vector<72x9xf32>
    %95 = arith.truncf %94 : vector<72x9xf32> to vector<72x9xbf16>
    %c0_101 = arith.constant 0 : index
    %c0_102 = arith.constant 0 : index
    %c0_103 = arith.constant 0 : index
    %96 = vector.load %arg12[%c0_101, %c0_102, %c0_103] : memref<3x144x72xbf16, #tpu.memory_space<vmem>>, vector<1x144x72xbf16>
    %97 = vector.shape_cast %96 : vector<1x144x72xbf16> to vector<144x72xbf16>
    %cst_104 = arith.constant dense<0.000000e+00> : vector<144x9xf32>
    %98 = tpu.matmul %97, %95, %cst_104 {dimension_numbers = #tpu.dot_dimension_numbers<[1], [0], [0], [1], [0, 0, 1, 1], [], []>} : vector<144x72xbf16>, vector<72x9xbf16>, vector<144x9xf32> -> vector<144x9xf32>
    %c0_105 = arith.constant 0 : index
    %c0_106 = arith.constant 0 : index
    %c0_107 = arith.constant 0 : index
    %99 = vector.load %arg13[%c0_105, %c0_106, %c0_107] : memref<3x9x9xf32, #tpu.memory_space<vmem>>, vector<1x9x9xf32>
    %100 = vector.shape_cast %99 : vector<1x9x9xf32> to vector<9x9xf32>
    %cst_108 = arith.constant dense<0.000000e+00> : vector<144x9xf32>
    %101 = tpu.matmul %98, %100, %cst_108 {dimension_numbers = #tpu.dot_dimension_numbers<[1], [0], [0], [1], [0, 0, 1, 1], [], []>} : vector<144x9xf32>, vector<9x9xf32>, vector<144x9xf32> -> vector<144x9xf32>
    %c1_109 = arith.constant 1 : index
    %c0_110 = arith.constant 0 : index
    %c0_111 = arith.constant 0 : index
    %102 = vector.load %arg12[%c1_109, %c0_110, %c0_111] : memref<3x144x72xbf16, #tpu.memory_space<vmem>>, vector<1x144x72xbf16>
    %103 = vector.shape_cast %102 : vector<1x144x72xbf16> to vector<144x72xbf16>
    %cst_112 = arith.constant dense<0.000000e+00> : vector<144x9xf32>
    %104 = tpu.matmul %103, %95, %cst_112 {dimension_numbers = #tpu.dot_dimension_numbers<[1], [0], [0], [1], [0, 0, 1, 1], [], []>} : vector<144x72xbf16>, vector<72x9xbf16>, vector<144x9xf32> -> vector<144x9xf32>
    %c1_113 = arith.constant 1 : index
    %c0_114 = arith.constant 0 : index
    %c0_115 = arith.constant 0 : index
    %105 = vector.load %arg13[%c1_113, %c0_114, %c0_115] : memref<3x9x9xf32, #tpu.memory_space<vmem>>, vector<1x9x9xf32>
    %106 = vector.shape_cast %105 : vector<1x9x9xf32> to vector<9x9xf32>
    %cst_116 = arith.constant dense<0.000000e+00> : vector<144x9xf32>
    %107 = tpu.matmul %104, %106, %cst_116 {dimension_numbers = #tpu.dot_dimension_numbers<[1], [0], [0], [1], [0, 0, 1, 1], [], []>} : vector<144x9xf32>, vector<9x9xf32>, vector<144x9xf32> -> vector<144x9xf32>
    %108 = arith.addf %101, %107 : vector<144x9xf32>
    %c2_117 = arith.constant 2 : index
    %c0_118 = arith.constant 0 : index
    %c0_119 = arith.constant 0 : index
    %109 = vector.load %arg12[%c2_117, %c0_118, %c0_119] : memref<3x144x72xbf16, #tpu.memory_space<vmem>>, vector<1x144x72xbf16>
    %110 = vector.shape_cast %109 : vector<1x144x72xbf16> to vector<144x72xbf16>
    %cst_120 = arith.constant dense<0.000000e+00> : vector<144x9xf32>
    %111 = tpu.matmul %110, %95, %cst_120 {dimension_numbers = #tpu.dot_dimension_numbers<[1], [0], [0], [1], [0, 0, 1, 1], [], []>} : vector<144x72xbf16>, vector<72x9xbf16>, vector<144x9xf32> -> vector<144x9xf32>
    %c2_121 = arith.constant 2 : index
    %c0_122 = arith.constant 0 : index
    %c0_123 = arith.constant 0 : index
    %112 = vector.load %arg13[%c2_121, %c0_122, %c0_123] : memref<3x9x9xf32, #tpu.memory_space<vmem>>, vector<1x9x9xf32>
    %113 = vector.shape_cast %112 : vector<1x9x9xf32> to vector<9x9xf32>
    %cst_124 = arith.constant dense<0.000000e+00> : vector<144x9xf32>
    %114 = tpu.matmul %111, %113, %cst_124 {dimension_numbers = #tpu.dot_dimension_numbers<[1], [0], [0], [1], [0, 0, 1, 1], [], []>} : vector<144x9xf32>, vector<9x9xf32>, vector<144x9xf32> -> vector<144x9xf32>
    %115 = arith.addf %108, %114 : vector<144x9xf32>
    %c0_125 = arith.constant 0 : index
    %c0_126 = arith.constant 0 : index
    %116 = vector.load %arg14[%c0_125, %c0_126] : memref<144x1xf32, #tpu.memory_space<vmem>>, vector<144x1xf32>
    %117 = vector.broadcast %116 : vector<144x1xf32> to vector<144x9xf32>
    %118 = arith.addf %115, %117 : vector<144x9xf32>
    %cst_127 = arith.constant 0.000000e+00 : f32
    %119 = vector.broadcast %cst_127 : f32 to vector<144x9xf32>
    %120 = arith.maximumf %118, %119 : vector<144x9xf32>
    %c0_128 = arith.constant 0 : index
    %c0_129 = arith.constant 0 : index
    %c0_130 = arith.constant 0 : index
    %121 = vector.load %arg15[%c0_128, %c0_129, %c0_130] : memref<2x80x144xf32, #tpu.memory_space<vmem>>, vector<1x80x144xf32>
    %122 = vector.shape_cast %121 : vector<1x80x144xf32> to vector<80x144xf32>
    %cst_131 = arith.constant dense<0.000000e+00> : vector<80x9xf32>
    %123 = tpu.matmul %122, %120, %cst_131 {dimension_numbers = #tpu.dot_dimension_numbers<[1], [0], [0], [1], [0, 0, 1, 1], [], []>} : vector<80x144xf32>, vector<144x9xf32>, vector<80x9xf32> -> vector<80x9xf32>
    %c0_132 = arith.constant 0 : index
    %c0_133 = arith.constant 0 : index
    %c0_134 = arith.constant 0 : index
    %124 = vector.load %arg16[%c0_132, %c0_133, %c0_134] : memref<2x9x5xf32, #tpu.memory_space<vmem>>, vector<1x9x5xf32>
    %125 = vector.shape_cast %124 : vector<1x9x5xf32> to vector<9x5xf32>
    %cst_135 = arith.constant dense<0.000000e+00> : vector<80x5xf32>
    %126 = tpu.matmul %123, %125, %cst_135 {dimension_numbers = #tpu.dot_dimension_numbers<[1], [0], [0], [1], [0, 0, 1, 1], [], []>} : vector<80x9xf32>, vector<9x5xf32>, vector<80x5xf32> -> vector<80x5xf32>
    %c1_136 = arith.constant 1 : index
    %c0_137 = arith.constant 0 : index
    %c0_138 = arith.constant 0 : index
    %127 = vector.load %arg16[%c1_136, %c0_137, %c0_138] : memref<2x9x5xf32, #tpu.memory_space<vmem>>, vector<1x9x5xf32>
    %128 = vector.shape_cast %127 : vector<1x9x5xf32> to vector<9x5xf32>
    %cst_139 = arith.constant dense<0.000000e+00> : vector<80x5xf32>
    %129 = tpu.matmul %123, %128, %cst_139 {dimension_numbers = #tpu.dot_dimension_numbers<[1], [0], [0], [1], [0, 0, 1, 1], [], []>} : vector<80x9xf32>, vector<9x5xf32>, vector<80x5xf32> -> vector<80x5xf32>
    %c1_140 = arith.constant 1 : index
    %c0_141 = arith.constant 0 : index
    %c0_142 = arith.constant 0 : index
    %130 = vector.load %arg15[%c1_140, %c0_141, %c0_142] : memref<2x80x144xf32, #tpu.memory_space<vmem>>, vector<1x80x144xf32>
    %131 = vector.shape_cast %130 : vector<1x80x144xf32> to vector<80x144xf32>
    %cst_143 = arith.constant dense<0.000000e+00> : vector<80x9xf32>
    %132 = tpu.matmul %131, %120, %cst_143 {dimension_numbers = #tpu.dot_dimension_numbers<[1], [0], [0], [1], [0, 0, 1, 1], [], []>} : vector<80x144xf32>, vector<144x9xf32>, vector<80x9xf32> -> vector<80x9xf32>
    %c0_144 = arith.constant 0 : index
    %c0_145 = arith.constant 0 : index
    %c0_146 = arith.constant 0 : index
    %133 = vector.load %arg16[%c0_144, %c0_145, %c0_146] : memref<2x9x5xf32, #tpu.memory_space<vmem>>, vector<1x9x5xf32>
    %134 = vector.shape_cast %133 : vector<1x9x5xf32> to vector<9x5xf32>
    %cst_147 = arith.constant dense<0.000000e+00> : vector<80x5xf32>
    %135 = tpu.matmul %132, %134, %cst_147 {dimension_numbers = #tpu.dot_dimension_numbers<[1], [0], [0], [1], [0, 0, 1, 1], [], []>} : vector<80x9xf32>, vector<9x5xf32>, vector<80x5xf32> -> vector<80x5xf32>
    %c1_148 = arith.constant 1 : index
    %c0_149 = arith.constant 0 : index
    %c0_150 = arith.constant 0 : index
    %136 = vector.load %arg16[%c1_148, %c0_149, %c0_150] : memref<2x9x5xf32, #tpu.memory_space<vmem>>, vector<1x9x5xf32>
    %137 = vector.shape_cast %136 : vector<1x9x5xf32> to vector<9x5xf32>
    %cst_151 = arith.constant dense<0.000000e+00> : vector<80x5xf32>
    %138 = tpu.matmul %132, %137, %cst_151 {dimension_numbers = #tpu.dot_dimension_numbers<[1], [0], [0], [1], [0, 0, 1, 1], [], []>} : vector<80x9xf32>, vector<9x5xf32>, vector<80x5xf32> -> vector<80x5xf32>
    %139 = arith.maximumf %126, %129 : vector<80x5xf32>
    %140 = arith.maximumf %135, %138 : vector<80x5xf32>
    %141 = arith.maximumf %139, %140 : vector<80x5xf32>
    %142 = arith.truncf %141 : vector<80x5xf32> to vector<80x5xbf16>
    %c0_152 = arith.constant 0 : index
    %c0_153 = arith.constant 0 : index
    %c0_154 = arith.constant 0 : index
    %143 = vector.load %arg17[%c0_152, %c0_153, %c0_154] : memref<3x40x80xbf16, #tpu.memory_space<vmem>>, vector<1x40x80xbf16>
    %144 = vector.shape_cast %143 : vector<1x40x80xbf16> to vector<40x80xbf16>
    %cst_155 = arith.constant dense<0.000000e+00> : vector<40x5xf32>
    %145 = tpu.matmul %144, %142, %cst_155 {dimension_numbers = #tpu.dot_dimension_numbers<[1], [0], [0], [1], [0, 0, 1, 1], [], []>} : vector<40x80xbf16>, vector<80x5xbf16>, vector<40x5xf32> -> vector<40x5xf32>
    %c0_156 = arith.constant 0 : index
    %c0_157 = arith.constant 0 : index
    %c0_158 = arith.constant 0 : index
    %146 = vector.load %arg18[%c0_156, %c0_157, %c0_158] : memref<3x5x5xf32, #tpu.memory_space<vmem>>, vector<1x5x5xf32>
    %147 = vector.shape_cast %146 : vector<1x5x5xf32> to vector<5x5xf32>
    %cst_159 = arith.constant dense<0.000000e+00> : vector<40x5xf32>
    %148 = tpu.matmul %145, %147, %cst_159 {dimension_numbers = #tpu.dot_dimension_numbers<[1], [0], [0], [1], [0, 0, 1, 1], [], []>} : vector<40x5xf32>, vector<5x5xf32>, vector<40x5xf32> -> vector<40x5xf32>
    %c1_160 = arith.constant 1 : index
    %c0_161 = arith.constant 0 : index
    %c0_162 = arith.constant 0 : index
    %149 = vector.load %arg17[%c1_160, %c0_161, %c0_162] : memref<3x40x80xbf16, #tpu.memory_space<vmem>>, vector<1x40x80xbf16>
    %150 = vector.shape_cast %149 : vector<1x40x80xbf16> to vector<40x80xbf16>
    %cst_163 = arith.constant dense<0.000000e+00> : vector<40x5xf32>
    %151 = tpu.matmul %150, %142, %cst_163 {dimension_numbers = #tpu.dot_dimension_numbers<[1], [0], [0], [1], [0, 0, 1, 1], [], []>} : vector<40x80xbf16>, vector<80x5xbf16>, vector<40x5xf32> -> vector<40x5xf32>
    %c1_164 = arith.constant 1 : index
    %c0_165 = arith.constant 0 : index
    %c0_166 = arith.constant 0 : index
    %152 = vector.load %arg18[%c1_164, %c0_165, %c0_166] : memref<3x5x5xf32, #tpu.memory_space<vmem>>, vector<1x5x5xf32>
    %153 = vector.shape_cast %152 : vector<1x5x5xf32> to vector<5x5xf32>
    %cst_167 = arith.constant dense<0.000000e+00> : vector<40x5xf32>
    %154 = tpu.matmul %151, %153, %cst_167 {dimension_numbers = #tpu.dot_dimension_numbers<[1], [0], [0], [1], [0, 0, 1, 1], [], []>} : vector<40x5xf32>, vector<5x5xf32>, vector<40x5xf32> -> vector<40x5xf32>
    %155 = arith.addf %148, %154 : vector<40x5xf32>
    %c2_168 = arith.constant 2 : index
    %c0_169 = arith.constant 0 : index
    %c0_170 = arith.constant 0 : index
    %156 = vector.load %arg17[%c2_168, %c0_169, %c0_170] : memref<3x40x80xbf16, #tpu.memory_space<vmem>>, vector<1x40x80xbf16>
    %157 = vector.shape_cast %156 : vector<1x40x80xbf16> to vector<40x80xbf16>
    %cst_171 = arith.constant dense<0.000000e+00> : vector<40x5xf32>
    %158 = tpu.matmul %157, %142, %cst_171 {dimension_numbers = #tpu.dot_dimension_numbers<[1], [0], [0], [1], [0, 0, 1, 1], [], []>} : vector<40x80xbf16>, vector<80x5xbf16>, vector<40x5xf32> -> vector<40x5xf32>
    %c2_172 = arith.constant 2 : index
    %c0_173 = arith.constant 0 : index
    %c0_174 = arith.constant 0 : index
    %159 = vector.load %arg18[%c2_172, %c0_173, %c0_174] : memref<3x5x5xf32, #tpu.memory_space<vmem>>, vector<1x5x5xf32>
    %160 = vector.shape_cast %159 : vector<1x5x5xf32> to vector<5x5xf32>
    %cst_175 = arith.constant dense<0.000000e+00> : vector<40x5xf32>
    %161 = tpu.matmul %158, %160, %cst_175 {dimension_numbers = #tpu.dot_dimension_numbers<[1], [0], [0], [1], [0, 0, 1, 1], [], []>} : vector<40x5xf32>, vector<5x5xf32>, vector<40x5xf32> -> vector<40x5xf32>
    %162 = arith.addf %155, %161 : vector<40x5xf32>
    %c0_176 = arith.constant 0 : index
    %c0_177 = arith.constant 0 : index
    %163 = vector.load %arg19[%c0_176, %c0_177] : memref<40x1xf32, #tpu.memory_space<vmem>>, vector<40x1xf32>
    %164 = vector.broadcast %163 : vector<40x1xf32> to vector<40x5xf32>
    %165 = arith.addf %162, %164 : vector<40x5xf32>
    %c0_178 = arith.constant 0 : index
    %c0_179 = arith.constant 0 : index
    %166 = vector.load %arg20[%c0_178, %c0_179] : memref<72x40xf32, #tpu.memory_space<vmem>>, vector<72x40xf32>
    %cst_180 = arith.constant dense<0.000000e+00> : vector<72x5xf32>
    %167 = tpu.matmul %166, %165, %cst_180 {dimension_numbers = #tpu.dot_dimension_numbers<[1], [0], [0], [1], [0, 0, 1, 1], [], []>} : vector<72x40xf32>, vector<40x5xf32>, vector<72x5xf32> -> vector<72x5xf32>
    %c0_181 = arith.constant 0 : index
    %c0_182 = arith.constant 0 : index
    %168 = vector.load %arg21[%c0_181, %c0_182] : memref<5x9xf32, #tpu.memory_space<vmem>>, vector<5x9xf32>
    %cst_183 = arith.constant dense<0.000000e+00> : vector<72x9xf32>
    %169 = tpu.matmul %167, %168, %cst_183 {dimension_numbers = #tpu.dot_dimension_numbers<[1], [0], [0], [1], [0, 0, 1, 1], [], []>} : vector<72x5xf32>, vector<5x9xf32>, vector<72x9xf32> -> vector<72x9xf32>
    %170 = arith.truncf %169 : vector<72x9xf32> to vector<72x9xbf16>
    %c0_184 = arith.constant 0 : index
    %c0_185 = arith.constant 0 : index
    %c0_186 = arith.constant 0 : index
    %171 = vector.load %arg22[%c0_184, %c0_185, %c0_186] : memref<3x144x72xbf16, #tpu.memory_space<vmem>>, vector<1x144x72xbf16>
    %172 = vector.shape_cast %171 : vector<1x144x72xbf16> to vector<144x72xbf16>
    %cst_187 = arith.constant dense<0.000000e+00> : vector<144x9xf32>
    %173 = tpu.matmul %172, %170, %cst_187 {dimension_numbers = #tpu.dot_dimension_numbers<[1], [0], [0], [1], [0, 0, 1, 1], [], []>} : vector<144x72xbf16>, vector<72x9xbf16>, vector<144x9xf32> -> vector<144x9xf32>
    %c0_188 = arith.constant 0 : index
    %c0_189 = arith.constant 0 : index
    %c0_190 = arith.constant 0 : index
    %174 = vector.load %arg23[%c0_188, %c0_189, %c0_190] : memref<3x9x9xf32, #tpu.memory_space<vmem>>, vector<1x9x9xf32>
    %175 = vector.shape_cast %174 : vector<1x9x9xf32> to vector<9x9xf32>
    %cst_191 = arith.constant dense<0.000000e+00> : vector<144x9xf32>
    %176 = tpu.matmul %173, %175, %cst_191 {dimension_numbers = #tpu.dot_dimension_numbers<[1], [0], [0], [1], [0, 0, 1, 1], [], []>} : vector<144x9xf32>, vector<9x9xf32>, vector<144x9xf32> -> vector<144x9xf32>
    %c1_192 = arith.constant 1 : index
    %c0_193 = arith.constant 0 : index
    %c0_194 = arith.constant 0 : index
    %177 = vector.load %arg22[%c1_192, %c0_193, %c0_194] : memref<3x144x72xbf16, #tpu.memory_space<vmem>>, vector<1x144x72xbf16>
    %178 = vector.shape_cast %177 : vector<1x144x72xbf16> to vector<144x72xbf16>
    %cst_195 = arith.constant dense<0.000000e+00> : vector<144x9xf32>
    %179 = tpu.matmul %178, %170, %cst_195 {dimension_numbers = #tpu.dot_dimension_numbers<[1], [0], [0], [1], [0, 0, 1, 1], [], []>} : vector<144x72xbf16>, vector<72x9xbf16>, vector<144x9xf32> -> vector<144x9xf32>
    %c1_196 = arith.constant 1 : index
    %c0_197 = arith.constant 0 : index
    %c0_198 = arith.constant 0 : index
    %180 = vector.load %arg23[%c1_196, %c0_197, %c0_198] : memref<3x9x9xf32, #tpu.memory_space<vmem>>, vector<1x9x9xf32>
    %181 = vector.shape_cast %180 : vector<1x9x9xf32> to vector<9x9xf32>
    %cst_199 = arith.constant dense<0.000000e+00> : vector<144x9xf32>
    %182 = tpu.matmul %179, %181, %cst_199 {dimension_numbers = #tpu.dot_dimension_numbers<[1], [0], [0], [1], [0, 0, 1, 1], [], []>} : vector<144x9xf32>, vector<9x9xf32>, vector<144x9xf32> -> vector<144x9xf32>
    %183 = arith.addf %176, %182 : vector<144x9xf32>
    %c2_200 = arith.constant 2 : index
    %c0_201 = arith.constant 0 : index
    %c0_202 = arith.constant 0 : index
    %184 = vector.load %arg22[%c2_200, %c0_201, %c0_202] : memref<3x144x72xbf16, #tpu.memory_space<vmem>>, vector<1x144x72xbf16>
    %185 = vector.shape_cast %184 : vector<1x144x72xbf16> to vector<144x72xbf16>
    %cst_203 = arith.constant dense<0.000000e+00> : vector<144x9xf32>
    %186 = tpu.matmul %185, %170, %cst_203 {dimension_numbers = #tpu.dot_dimension_numbers<[1], [0], [0], [1], [0, 0, 1, 1], [], []>} : vector<144x72xbf16>, vector<72x9xbf16>, vector<144x9xf32> -> vector<144x9xf32>
    %c2_204 = arith.constant 2 : index
    %c0_205 = arith.constant 0 : index
    %c0_206 = arith.constant 0 : index
    %187 = vector.load %arg23[%c2_204, %c0_205, %c0_206] : memref<3x9x9xf32, #tpu.memory_space<vmem>>, vector<1x9x9xf32>
    %188 = vector.shape_cast %187 : vector<1x9x9xf32> to vector<9x9xf32>
    %cst_207 = arith.constant dense<0.000000e+00> : vector<144x9xf32>
    %189 = tpu.matmul %186, %188, %cst_207 {dimension_numbers = #tpu.dot_dimension_numbers<[1], [0], [0], [1], [0, 0, 1, 1], [], []>} : vector<144x9xf32>, vector<9x9xf32>, vector<144x9xf32> -> vector<144x9xf32>
    %190 = arith.addf %183, %189 : vector<144x9xf32>
    %c0_208 = arith.constant 0 : index
    %c0_209 = arith.constant 0 : index
    %191 = vector.load %arg24[%c0_208, %c0_209] : memref<144x1xf32, #tpu.memory_space<vmem>>, vector<144x1xf32>
    %192 = vector.broadcast %191 : vector<144x1xf32> to vector<144x9xf32>
    %193 = arith.addf %190, %192 : vector<144x9xf32>
    %cst_210 = arith.constant 0.000000e+00 : f32
    %194 = vector.broadcast %cst_210 : f32 to vector<144x9xf32>
    %195 = arith.maximumf %193, %194 : vector<144x9xf32>
    %c0_211 = arith.constant 0 : index
    %c0_212 = arith.constant 0 : index
    %196 = vector.load %arg25[%c0_211, %c0_212] : memref<256x144xf32, #tpu.memory_space<vmem>>, vector<256x144xf32>
    %cst_213 = arith.constant dense<0.000000e+00> : vector<256x9xf32>
    %197 = tpu.matmul %196, %195, %cst_213 {dimension_numbers = #tpu.dot_dimension_numbers<[1], [0], [0], [1], [0, 0, 1, 1], [], []>} : vector<256x144xf32>, vector<144x9xf32>, vector<256x9xf32> -> vector<256x9xf32>
    %c0_214 = arith.constant 0 : index
    %c0_215 = arith.constant 0 : index
    %198 = vector.load %arg26[%c0_214, %c0_215] : memref<9x16xf32, #tpu.memory_space<vmem>>, vector<9x16xf32>
    %cst_216 = arith.constant dense<0.000000e+00> : vector<256x16xf32>
    %199 = tpu.matmul %197, %198, %cst_216 {dimension_numbers = #tpu.dot_dimension_numbers<[1], [0], [0], [1], [0, 0, 1, 1], [], []>} : vector<256x9xf32>, vector<9x16xf32>, vector<256x16xf32> -> vector<256x16xf32>
    %200 = arith.truncf %199 : vector<256x16xf32> to vector<256x16xbf16>
    %c0_217 = arith.constant 0 : index
    %c0_218 = arith.constant 0 : index
    %c0_219 = arith.constant 0 : index
    %201 = vector.load %arg27[%c0_217, %c0_218, %c0_219] : memref<3x128x256xbf16, #tpu.memory_space<vmem>>, vector<1x128x256xbf16>
    %202 = vector.shape_cast %201 : vector<1x128x256xbf16> to vector<128x256xbf16>
    %cst_220 = arith.constant dense<0.000000e+00> : vector<128x16xf32>
    %203 = tpu.matmul %202, %200, %cst_220 {dimension_numbers = #tpu.dot_dimension_numbers<[1], [0], [0], [1], [0, 0, 1, 1], [], []>} : vector<128x256xbf16>, vector<256x16xbf16>, vector<128x16xf32> -> vector<128x16xf32>
    %c0_221 = arith.constant 0 : index
    %c0_222 = arith.constant 0 : index
    %c0_223 = arith.constant 0 : index
    %204 = vector.load %arg28[%c0_221, %c0_222, %c0_223] : memref<3x16x16xf32, #tpu.memory_space<vmem>>, vector<1x16x16xf32>
    %205 = vector.shape_cast %204 : vector<1x16x16xf32> to vector<16x16xf32>
    %cst_224 = arith.constant dense<0.000000e+00> : vector<128x16xf32>
    %206 = tpu.matmul %203, %205, %cst_224 {dimension_numbers = #tpu.dot_dimension_numbers<[1], [0], [0], [1], [0, 0, 1, 1], [], []>} : vector<128x16xf32>, vector<16x16xf32>, vector<128x16xf32> -> vector<128x16xf32>
    %c1_225 = arith.constant 1 : index
    %c0_226 = arith.constant 0 : index
    %c0_227 = arith.constant 0 : index
    %207 = vector.load %arg27[%c1_225, %c0_226, %c0_227] : memref<3x128x256xbf16, #tpu.memory_space<vmem>>, vector<1x128x256xbf16>
    %208 = vector.shape_cast %207 : vector<1x128x256xbf16> to vector<128x256xbf16>
    %cst_228 = arith.constant dense<0.000000e+00> : vector<128x16xf32>
    %209 = tpu.matmul %208, %200, %cst_228 {dimension_numbers = #tpu.dot_dimension_numbers<[1], [0], [0], [1], [0, 0, 1, 1], [], []>} : vector<128x256xbf16>, vector<256x16xbf16>, vector<128x16xf32> -> vector<128x16xf32>
    %c1_229 = arith.constant 1 : index
    %c0_230 = arith.constant 0 : index
    %c0_231 = arith.constant 0 : index
    %210 = vector.load %arg28[%c1_229, %c0_230, %c0_231] : memref<3x16x16xf32, #tpu.memory_space<vmem>>, vector<1x16x16xf32>
    %211 = vector.shape_cast %210 : vector<1x16x16xf32> to vector<16x16xf32>
    %cst_232 = arith.constant dense<0.000000e+00> : vector<128x16xf32>
    %212 = tpu.matmul %209, %211, %cst_232 {dimension_numbers = #tpu.dot_dimension_numbers<[1], [0], [0], [1], [0, 0, 1, 1], [], []>} : vector<128x16xf32>, vector<16x16xf32>, vector<128x16xf32> -> vector<128x16xf32>
    %213 = arith.addf %206, %212 : vector<128x16xf32>
    %c2_233 = arith.constant 2 : index
    %c0_234 = arith.constant 0 : index
    %c0_235 = arith.constant 0 : index
    %214 = vector.load %arg27[%c2_233, %c0_234, %c0_235] : memref<3x128x256xbf16, #tpu.memory_space<vmem>>, vector<1x128x256xbf16>
    %215 = vector.shape_cast %214 : vector<1x128x256xbf16> to vector<128x256xbf16>
    %cst_236 = arith.constant dense<0.000000e+00> : vector<128x16xf32>
    %216 = tpu.matmul %215, %200, %cst_236 {dimension_numbers = #tpu.dot_dimension_numbers<[1], [0], [0], [1], [0, 0, 1, 1], [], []>} : vector<128x256xbf16>, vector<256x16xbf16>, vector<128x16xf32> -> vector<128x16xf32>
    %c2_237 = arith.constant 2 : index
    %c0_238 = arith.constant 0 : index
    %c0_239 = arith.constant 0 : index
    %217 = vector.load %arg28[%c2_237, %c0_238, %c0_239] : memref<3x16x16xf32, #tpu.memory_space<vmem>>, vector<1x16x16xf32>
    %218 = vector.shape_cast %217 : vector<1x16x16xf32> to vector<16x16xf32>
    %cst_240 = arith.constant dense<0.000000e+00> : vector<128x16xf32>
    %219 = tpu.matmul %216, %218, %cst_240 {dimension_numbers = #tpu.dot_dimension_numbers<[1], [0], [0], [1], [0, 0, 1, 1], [], []>} : vector<128x16xf32>, vector<16x16xf32>, vector<128x16xf32> -> vector<128x16xf32>
    %220 = arith.addf %213, %219 : vector<128x16xf32>
    %c0_241 = arith.constant 0 : index
    %c0_242 = arith.constant 0 : index
    %221 = vector.load %arg29[%c0_241, %c0_242] : memref<128x1xf32, #tpu.memory_space<vmem>>, vector<128x1xf32>
    %222 = vector.broadcast %221 : vector<128x1xf32> to vector<128x16xf32>
    %223 = arith.addf %220, %222 : vector<128x16xf32>
    %cst_243 = arith.constant 0.000000e+00 : f32
    %224 = vector.broadcast %cst_243 : f32 to vector<128x16xf32>
    %225 = arith.maximumf %223, %224 : vector<128x16xf32>
    %c0_244 = arith.constant 0 : index
    %c0_245 = arith.constant 0 : index
    %226 = vector.load %arg30[%c0_244, %c0_245] : memref<240x128xf32, #tpu.memory_space<vmem>>, vector<240x128xf32>
    %cst_246 = arith.constant dense<0.000000e+00> : vector<240x16xf32>
    %227 = tpu.matmul %226, %225, %cst_246 {dimension_numbers = #tpu.dot_dimension_numbers<[1], [0], [0], [1], [0, 0, 1, 1], [], []>} : vector<240x128xf32>, vector<128x16xf32>, vector<240x16xf32> -> vector<240x16xf32>
    %c0_247 = arith.constant 0 : index
    %c0_248 = arith.constant 0 : index
    %228 = vector.load %arg31[%c0_247, %c0_248] : memref<16x30xf32, #tpu.memory_space<vmem>>, vector<16x30xf32>
    %cst_249 = arith.constant dense<0.000000e+00> : vector<240x30xf32>
    %229 = tpu.matmul %227, %228, %cst_249 {dimension_numbers = #tpu.dot_dimension_numbers<[1], [0], [0], [1], [0, 0, 1, 1], [], []>} : vector<240x16xf32>, vector<16x30xf32>, vector<240x30xf32> -> vector<240x30xf32>
    %230 = arith.truncf %229 : vector<240x30xf32> to vector<240x30xbf16>
    %c0_250 = arith.constant 0 : index
    %c0_251 = arith.constant 0 : index
    %c0_252 = arith.constant 0 : index
    %231 = vector.load %arg32[%c0_250, %c0_251, %c0_252] : memref<3x120x240xbf16, #tpu.memory_space<vmem>>, vector<1x120x240xbf16>
    %232 = vector.shape_cast %231 : vector<1x120x240xbf16> to vector<120x240xbf16>
    %cst_253 = arith.constant dense<0.000000e+00> : vector<120x30xf32>
    %233 = tpu.matmul %232, %230, %cst_253 {dimension_numbers = #tpu.dot_dimension_numbers<[1], [0], [0], [1], [0, 0, 1, 1], [], []>} : vector<120x240xbf16>, vector<240x30xbf16>, vector<120x30xf32> -> vector<120x30xf32>
    %c0_254 = arith.constant 0 : index
    %c0_255 = arith.constant 0 : index
    %c0_256 = arith.constant 0 : index
    %234 = vector.load %arg33[%c0_254, %c0_255, %c0_256] : memref<3x30x30xf32, #tpu.memory_space<vmem>>, vector<1x30x30xf32>
    %235 = vector.shape_cast %234 : vector<1x30x30xf32> to vector<30x30xf32>
    %cst_257 = arith.constant dense<0.000000e+00> : vector<120x30xf32>
    %236 = tpu.matmul %233, %235, %cst_257 {dimension_numbers = #tpu.dot_dimension_numbers<[1], [0], [0], [1], [0, 0, 1, 1], [], []>} : vector<120x30xf32>, vector<30x30xf32>, vector<120x30xf32> -> vector<120x30xf32>
    %c1_258 = arith.constant 1 : index
    %c0_259 = arith.constant 0 : index
    %c0_260 = arith.constant 0 : index
    %237 = vector.load %arg32[%c1_258, %c0_259, %c0_260] : memref<3x120x240xbf16, #tpu.memory_space<vmem>>, vector<1x120x240xbf16>
    %238 = vector.shape_cast %237 : vector<1x120x240xbf16> to vector<120x240xbf16>
    %cst_261 = arith.constant dense<0.000000e+00> : vector<120x30xf32>
    %239 = tpu.matmul %238, %230, %cst_261 {dimension_numbers = #tpu.dot_dimension_numbers<[1], [0], [0], [1], [0, 0, 1, 1], [], []>} : vector<120x240xbf16>, vector<240x30xbf16>, vector<120x30xf32> -> vector<120x30xf32>
    %c1_262 = arith.constant 1 : index
    %c0_263 = arith.constant 0 : index
    %c0_264 = arith.constant 0 : index
    %240 = vector.load %arg33[%c1_262, %c0_263, %c0_264] : memref<3x30x30xf32, #tpu.memory_space<vmem>>, vector<1x30x30xf32>
    %241 = vector.shape_cast %240 : vector<1x30x30xf32> to vector<30x30xf32>
    %cst_265 = arith.constant dense<0.000000e+00> : vector<120x30xf32>
    %242 = tpu.matmul %239, %241, %cst_265 {dimension_numbers = #tpu.dot_dimension_numbers<[1], [0], [0], [1], [0, 0, 1, 1], [], []>} : vector<120x30xf32>, vector<30x30xf32>, vector<120x30xf32> -> vector<120x30xf32>
    %243 = arith.addf %236, %242 : vector<120x30xf32>
    %c2_266 = arith.constant 2 : index
    %c0_267 = arith.constant 0 : index
    %c0_268 = arith.constant 0 : index
    %244 = vector.load %arg32[%c2_266, %c0_267, %c0_268] : memref<3x120x240xbf16, #tpu.memory_space<vmem>>, vector<1x120x240xbf16>
    %245 = vector.shape_cast %244 : vector<1x120x240xbf16> to vector<120x240xbf16>
    %cst_269 = arith.constant dense<0.000000e+00> : vector<120x30xf32>
    %246 = tpu.matmul %245, %230, %cst_269 {dimension_numbers = #tpu.dot_dimension_numbers<[1], [0], [0], [1], [0, 0, 1, 1], [], []>} : vector<120x240xbf16>, vector<240x30xbf16>, vector<120x30xf32> -> vector<120x30xf32>
    %c2_270 = arith.constant 2 : index
    %c0_271 = arith.constant 0 : index
    %c0_272 = arith.constant 0 : index
    %247 = vector.load %arg33[%c2_270, %c0_271, %c0_272] : memref<3x30x30xf32, #tpu.memory_space<vmem>>, vector<1x30x30xf32>
    %248 = vector.shape_cast %247 : vector<1x30x30xf32> to vector<30x30xf32>
    %cst_273 = arith.constant dense<0.000000e+00> : vector<120x30xf32>
    %249 = tpu.matmul %246, %248, %cst_273 {dimension_numbers = #tpu.dot_dimension_numbers<[1], [0], [0], [1], [0, 0, 1, 1], [], []>} : vector<120x30xf32>, vector<30x30xf32>, vector<120x30xf32> -> vector<120x30xf32>
    %250 = arith.addf %243, %249 : vector<120x30xf32>
    %c0_274 = arith.constant 0 : index
    %c0_275 = arith.constant 0 : index
    %251 = vector.load %arg34[%c0_274, %c0_275] : memref<120x1xf32, #tpu.memory_space<vmem>>, vector<120x1xf32>
    %252 = vector.broadcast %251 : vector<120x1xf32> to vector<120x30xf32>
    %253 = arith.addf %250, %252 : vector<120x30xf32>
    %cst_276 = arith.constant 0.000000e+00 : f32
    %254 = vector.broadcast %cst_276 : f32 to vector<120x30xf32>
    %255 = arith.maximumf %253, %254 : vector<120x30xf32>
    %c0_277 = arith.constant 0 : index
    %c0_278 = arith.constant 0 : index
    %256 = vector.load %arg35[%c0_277, %c0_278] : memref<120x30xf32, #tpu.memory_space<vmem>>, vector<120x30xf32>
    %257 = arith.mulf %255, %256 : vector<120x30xf32>
    %258 = arith.truncf %257 : vector<120x30xf32> to vector<120x30xbf16>
    %c0_279 = arith.constant 0 : index
    %c0_280 = arith.constant 0 : index
    %c0_281 = arith.constant 0 : index
    %259 = vector.load %arg36[%c0_279, %c0_280, %c0_281] : memref<3x30x120xbf16, #tpu.memory_space<vmem>>, vector<1x30x120xbf16>
    %260 = vector.shape_cast %259 : vector<1x30x120xbf16> to vector<30x120xbf16>
    %cst_282 = arith.constant dense<0.000000e+00> : vector<30x30xf32>
    %261 = tpu.matmul %260, %258, %cst_282 {dimension_numbers = #tpu.dot_dimension_numbers<[1], [0], [0], [1], [0, 0, 1, 1], [], []>} : vector<30x120xbf16>, vector<120x30xbf16>, vector<30x30xf32> -> vector<30x30xf32>
    %c0_283 = arith.constant 0 : index
    %c0_284 = arith.constant 0 : index
    %c0_285 = arith.constant 0 : index
    %262 = vector.load %arg37[%c0_283, %c0_284, %c0_285] : memref<3x30x30xf32, #tpu.memory_space<vmem>>, vector<1x30x30xf32>
    %263 = vector.shape_cast %262 : vector<1x30x30xf32> to vector<30x30xf32>
    %cst_286 = arith.constant dense<0.000000e+00> : vector<30x30xf32>
    %264 = tpu.matmul %261, %263, %cst_286 {dimension_numbers = #tpu.dot_dimension_numbers<[1], [0], [0], [1], [0, 0, 1, 1], [], []>} : vector<30x30xf32>, vector<30x30xf32>, vector<30x30xf32> -> vector<30x30xf32>
    %c1_287 = arith.constant 1 : index
    %c0_288 = arith.constant 0 : index
    %c0_289 = arith.constant 0 : index
    %265 = vector.load %arg36[%c1_287, %c0_288, %c0_289] : memref<3x30x120xbf16, #tpu.memory_space<vmem>>, vector<1x30x120xbf16>
    %266 = vector.shape_cast %265 : vector<1x30x120xbf16> to vector<30x120xbf16>
    %cst_290 = arith.constant dense<0.000000e+00> : vector<30x30xf32>
    %267 = tpu.matmul %266, %258, %cst_290 {dimension_numbers = #tpu.dot_dimension_numbers<[1], [0], [0], [1], [0, 0, 1, 1], [], []>} : vector<30x120xbf16>, vector<120x30xbf16>, vector<30x30xf32> -> vector<30x30xf32>
    %c1_291 = arith.constant 1 : index
    %c0_292 = arith.constant 0 : index
    %c0_293 = arith.constant 0 : index
    %268 = vector.load %arg37[%c1_291, %c0_292, %c0_293] : memref<3x30x30xf32, #tpu.memory_space<vmem>>, vector<1x30x30xf32>
    %269 = vector.shape_cast %268 : vector<1x30x30xf32> to vector<30x30xf32>
    %cst_294 = arith.constant dense<0.000000e+00> : vector<30x30xf32>
    %270 = tpu.matmul %267, %269, %cst_294 {dimension_numbers = #tpu.dot_dimension_numbers<[1], [0], [0], [1], [0, 0, 1, 1], [], []>} : vector<30x30xf32>, vector<30x30xf32>, vector<30x30xf32> -> vector<30x30xf32>
    %271 = arith.addf %264, %270 : vector<30x30xf32>
    %c2_295 = arith.constant 2 : index
    %c0_296 = arith.constant 0 : index
    %c0_297 = arith.constant 0 : index
    %272 = vector.load %arg36[%c2_295, %c0_296, %c0_297] : memref<3x30x120xbf16, #tpu.memory_space<vmem>>, vector<1x30x120xbf16>
    %273 = vector.shape_cast %272 : vector<1x30x120xbf16> to vector<30x120xbf16>
    %cst_298 = arith.constant dense<0.000000e+00> : vector<30x30xf32>
    %274 = tpu.matmul %273, %258, %cst_298 {dimension_numbers = #tpu.dot_dimension_numbers<[1], [0], [0], [1], [0, 0, 1, 1], [], []>} : vector<30x120xbf16>, vector<120x30xbf16>, vector<30x30xf32> -> vector<30x30xf32>
    %c2_299 = arith.constant 2 : index
    %c0_300 = arith.constant 0 : index
    %c0_301 = arith.constant 0 : index
    %275 = vector.load %arg37[%c2_299, %c0_300, %c0_301] : memref<3x30x30xf32, #tpu.memory_space<vmem>>, vector<1x30x30xf32>
    %276 = vector.shape_cast %275 : vector<1x30x30xf32> to vector<30x30xf32>
    %cst_302 = arith.constant dense<0.000000e+00> : vector<30x30xf32>
    %277 = tpu.matmul %274, %276, %cst_302 {dimension_numbers = #tpu.dot_dimension_numbers<[1], [0], [0], [1], [0, 0, 1, 1], [], []>} : vector<30x30xf32>, vector<30x30xf32>, vector<30x30xf32> -> vector<30x30xf32>
    %278 = arith.addf %271, %277 : vector<30x30xf32>
    %c0_303 = arith.constant 0 : index
    %c0_304 = arith.constant 0 : index
    %279 = vector.load %arg38[%c0_303, %c0_304] : memref<30x1xf32, #tpu.memory_space<vmem>>, vector<30x1xf32>
    %280 = vector.broadcast %279 : vector<30x1xf32> to vector<30x30xf32>
    %281 = arith.addf %278, %280 : vector<30x30xf32>
    %282 = arith.negf %281 : vector<30x30xf32>
    %283 = math.exp %282 : vector<30x30xf32>
    %cst_305 = arith.constant 1.000000e+00 : f32
    %284 = vector.broadcast %cst_305 : f32 to vector<30x30xf32>
    %285 = arith.addf %284, %283 : vector<30x30xf32>
    %286 = arith.divf %284, %285 : vector<30x30xf32>
    %c0_306 = arith.constant 0 : index
    %c0_307 = arith.constant 0 : index
    %c0_308 = arith.constant 0 : index
    %287 = vector.load %arg39[%c0_306, %c0_307, %c0_308] : memref<1x30x30xf32, #tpu.memory_space<vmem>>, vector<1x30x30xf32>
    %288 = vector.shape_cast %287 : vector<1x30x30xf32> to vector<30x30xf32>
    %289 = vector.shape_cast %286 : vector<30x30xf32> to vector<1x30x30xf32>
    tpu.vector_store %arg39[%c0_306, %c0_307, %c0_308], %289 {strides = array<i32>} : memref<1x30x30xf32, #tpu.memory_space<vmem>>, vector<1x30x30xf32>,
    return
  }
  func.func @transform_0(%arg0: i32) -> (i32, i32, i32) {
    %c0_i32 = arith.constant 0 : i32
    %c0_i32_0 = arith.constant 0 : i32
    %c0_i32_1 = arith.constant 0 : i32
    return %arg0, %c0_i32, %c0_i32_0 : i32, i32, i32
  }
  func.func @transform_1(%arg0: i32) -> (i32, i32, i32) {
    %c0_i32 = arith.constant 0 : i32
    %c0_i32_0 = arith.constant 0 : i32
    %c0_i32_1 = arith.constant 0 : i32
    %c0_i32_2 = arith.constant 0 : i32
    return %c0_i32, %c0_i32_0, %c0_i32_1 : i32, i32, i32
  }
  func.func @transform_2(%arg0: i32) -> (i32, i32, i32) {
    %c0_i32 = arith.constant 0 : i32
    %c0_i32_0 = arith.constant 0 : i32
    %c0_i32_1 = arith.constant 0 : i32
    %c0_i32_2 = arith.constant 0 : i32
    return %c0_i32, %c0_i32_0, %c0_i32_1 : i32, i32, i32
  }
  func.func @transform_3(%arg0: i32) -> (i32, i32) {
    %c0_i32 = arith.constant 0 : i32
    %c0_i32_0 = arith.constant 0 : i32
    %c0_i32_1 = arith.constant 0 : i32
    return %c0_i32, %c0_i32_0 : i32, i32
  }
  func.func @transform_4(%arg0: i32) -> (i32, i32, i32) {
    %c0_i32 = arith.constant 0 : i32
    %c0_i32_0 = arith.constant 0 : i32
    %c0_i32_1 = arith.constant 0 : i32
    %c0_i32_2 = arith.constant 0 : i32
    return %c0_i32, %c0_i32_0, %c0_i32_1 : i32, i32, i32
  }
  func.func @transform_5(%arg0: i32) -> (i32, i32, i32) {
    %c0_i32 = arith.constant 0 : i32
    %c0_i32_0 = arith.constant 0 : i32
    %c0_i32_1 = arith.constant 0 : i32
    %c0_i32_2 = arith.constant 0 : i32
    return %c0_i32, %c0_i32_0, %c0_i32_1 : i32, i32, i32
  }
  func.func @transform_6(%arg0: i32) -> (i32, i32, i32) {
    %c0_i32 = arith.constant 0 : i32
    %c0_i32_0 = arith.constant 0 : i32
    %c0_i32_1 = arith.constant 0 : i32
    %c0_i32_2 = arith.constant 0 : i32
    return %c0_i32, %c0_i32_0, %c0_i32_1 : i32, i32, i32
  }
  func.func @transform_7(%arg0: i32) -> (i32, i32, i32) {
    %c0_i32 = arith.constant 0 : i32
    %c0_i32_0 = arith.constant 0 : i32
    %c0_i32_1 = arith.constant 0 : i32
    %c0_i32_2 = arith.constant 0 : i32
    return %c0_i32, %c0_i32_0, %c0_i32_1 : i32, i32, i32
  }
  func.func @transform_8(%arg0: i32) -> (i32, i32) {
    %c0_i32 = arith.constant 0 : i32
    %c0_i32_0 = arith.constant 0 : i32
    %c0_i32_1 = arith.constant 0 : i32
    return %c0_i32, %c0_i32_0 : i32, i32
  }
  func.func @transform_9(%arg0: i32) -> (i32, i32, i32) {
    %c0_i32 = arith.constant 0 : i32
    %c0_i32_0 = arith.constant 0 : i32
    %c0_i32_1 = arith.constant 0 : i32
    %c0_i32_2 = arith.constant 0 : i32
    return %c0_i32, %c0_i32_0, %c0_i32_1 : i32, i32, i32
  }
  func.func @transform_10(%arg0: i32) -> (i32, i32, i32) {
    %c0_i32 = arith.constant 0 : i32
    %c0_i32_0 = arith.constant 0 : i32
    %c0_i32_1 = arith.constant 0 : i32
    %c0_i32_2 = arith.constant 0 : i32
    return %c0_i32, %c0_i32_0, %c0_i32_1 : i32, i32, i32
  }
  func.func @transform_11(%arg0: i32) -> (i32, i32, i32) {
    %c0_i32 = arith.constant 0 : i32
    %c0_i32_0 = arith.constant 0 : i32
    %c0_i32_1 = arith.constant 0 : i32
    %c0_i32_2 = arith.constant 0 : i32
    return %c0_i32, %c0_i32_0, %c0_i32_1 : i32, i32, i32
  }
  func.func @transform_12(%arg0: i32) -> (i32, i32, i32) {
    %c0_i32 = arith.constant 0 : i32
    %c0_i32_0 = arith.constant 0 : i32
    %c0_i32_1 = arith.constant 0 : i32
    %c0_i32_2 = arith.constant 0 : i32
    return %c0_i32, %c0_i32_0, %c0_i32_1 : i32, i32, i32
  }
  func.func @transform_13(%arg0: i32) -> (i32, i32) {
    %c0_i32 = arith.constant 0 : i32
    %c0_i32_0 = arith.constant 0 : i32
    %c0_i32_1 = arith.constant 0 : i32
    return %c0_i32, %c0_i32_0 : i32, i32
  }
  func.func @transform_14(%arg0: i32) -> (i32, i32, i32) {
    %c0_i32 = arith.constant 0 : i32
    %c0_i32_0 = arith.constant 0 : i32
    %c0_i32_1 = arith.constant 0 : i32
    %c0_i32_2 = arith.constant 0 : i32
    return %c0_i32, %c0_i32_0, %c0_i32_1 : i32, i32, i32
  }
  func.func @transform_15(%arg0: i32) -> (i32, i32, i32) {
    %c0_i32 = arith.constant 0 : i32
    %c0_i32_0 = arith.constant 0 : i32
    %c0_i32_1 = arith.constant 0 : i32
    %c0_i32_2 = arith.constant 0 : i32
    return %c0_i32, %c0_i32_0, %c0_i32_1 : i32, i32, i32
  }
  func.func @transform_16(%arg0: i32) -> (i32, i32, i32) {
    %c0_i32 = arith.constant 0 : i32
    %c0_i32_0 = arith.constant 0 : i32
    %c0_i32_1 = arith.constant 0 : i32
    %c0_i32_2 = arith.constant 0 : i32
    return %c0_i32, %c0_i32_0, %c0_i32_1 : i32, i32, i32
  }
  func.func @transform_17(%arg0: i32) -> (i32, i32, i32) {
    %c0_i32 = arith.constant 0 : i32
    %c0_i32_0 = arith.constant 0 : i32
    %c0_i32_1 = arith.constant 0 : i32
    %c0_i32_2 = arith.constant 0 : i32
    return %c0_i32, %c0_i32_0, %c0_i32_1 : i32, i32, i32
  }
  func.func @transform_18(%arg0: i32) -> (i32, i32) {
    %c0_i32 = arith.constant 0 : i32
    %c0_i32_0 = arith.constant 0 : i32
    %c0_i32_1 = arith.constant 0 : i32
    return %c0_i32, %c0_i32_0 : i32, i32
  }
  func.func @transform_19(%arg0: i32) -> (i32, i32) {
    %c0_i32 = arith.constant 0 : i32
    %c0_i32_0 = arith.constant 0 : i32
    %c0_i32_1 = arith.constant 0 : i32
    return %c0_i32, %c0_i32_0 : i32, i32
  }
  func.func @transform_20(%arg0: i32) -> (i32, i32) {
    %c0_i32 = arith.constant 0 : i32
    %c0_i32_0 = arith.constant 0 : i32
    %c0_i32_1 = arith.constant 0 : i32
    return %c0_i32, %c0_i32_0 : i32, i32
  }
  func.func @transform_21(%arg0: i32) -> (i32, i32, i32) {
    %c0_i32 = arith.constant 0 : i32
    %c0_i32_0 = arith.constant 0 : i32
    %c0_i32_1 = arith.constant 0 : i32
    %c0_i32_2 = arith.constant 0 : i32
    return %c0_i32, %c0_i32_0, %c0_i32_1 : i32, i32, i32
  }
  func.func @transform_22(%arg0: i32) -> (i32, i32, i32) {
    %c0_i32 = arith.constant 0 : i32
    %c0_i32_0 = arith.constant 0 : i32
    %c0_i32_1 = arith.constant 0 : i32
    %c0_i32_2 = arith.constant 0 : i32
    return %c0_i32, %c0_i32_0, %c0_i32_1 : i32, i32, i32
  }
  func.func @transform_23(%arg0: i32) -> (i32, i32) {
    %c0_i32 = arith.constant 0 : i32
    %c0_i32_0 = arith.constant 0 : i32
    %c0_i32_1 = arith.constant 0 : i32
    return %c0_i32, %c0_i32_0 : i32, i32
  }
  func.func @transform_24(%arg0: i32) -> (i32, i32) {
    %c0_i32 = arith.constant 0 : i32
    %c0_i32_0 = arith.constant 0 : i32
    %c0_i32_1 = arith.constant 0 : i32
    return %c0_i32, %c0_i32_0 : i32, i32
  }
  func.func @transform_25(%arg0: i32) -> (i32, i32) {
    %c0_i32 = arith.constant 0 : i32
    %c0_i32_0 = arith.constant 0 : i32
    %c0_i32_1 = arith.constant 0 : i32
    return %c0_i32, %c0_i32_0 : i32, i32
  }
  func.func @transform_26(%arg0: i32) -> (i32, i32, i32) {
    %c0_i32 = arith.constant 0 : i32
    %c0_i32_0 = arith.constant 0 : i32
    %c0_i32_1 = arith.constant 0 : i32
    %c0_i32_2 = arith.constant 0 : i32
    return %c0_i32, %c0_i32_0, %c0_i32_1 : i32, i32, i32
  }
  func.func @transform_27(%arg0: i32) -> (i32, i32, i32) {
    %c0_i32 = arith.constant 0 : i32
    %c0_i32_0 = arith.constant 0 : i32
    %c0_i32_1 = arith.constant 0 : i32
    %c0_i32_2 = arith.constant 0 : i32
    return %c0_i32, %c0_i32_0, %c0_i32_1 : i32, i32, i32
  }
  func.func @transform_28(%arg0: i32) -> (i32, i32) {
    %c0_i32 = arith.constant 0 : i32
    %c0_i32_0 = arith.constant 0 : i32
    %c0_i32_1 = arith.constant 0 : i32
    return %c0_i32, %c0_i32_0 : i32, i32
  }
  func.func @transform_29(%arg0: i32) -> (i32, i32) {
    %c0_i32 = arith.constant 0 : i32
    %c0_i32_0 = arith.constant 0 : i32
    %c0_i32_1 = arith.constant 0 : i32
    return %c0_i32, %c0_i32_0 : i32, i32
  }
  func.func @transform_30(%arg0: i32) -> (i32, i32) {
    %c0_i32 = arith.constant 0 : i32
    %c0_i32_0 = arith.constant 0 : i32
    %c0_i32_1 = arith.constant 0 : i32
    return %c0_i32, %c0_i32_0 : i32, i32
  }
  func.func @transform_31(%arg0: i32) -> (i32, i32, i32) {
    %c0_i32 = arith.constant 0 : i32
    %c0_i32_0 = arith.constant 0 : i32
    %c0_i32_1 = arith.constant 0 : i32
    %c0_i32_2 = arith.constant 0 : i32
    return %c0_i32, %c0_i32_0, %c0_i32_1 : i32, i32, i32
  }
  func.func @transform_32(%arg0: i32) -> (i32, i32, i32) {
    %c0_i32 = arith.constant 0 : i32
    %c0_i32_0 = arith.constant 0 : i32
    %c0_i32_1 = arith.constant 0 : i32
    %c0_i32_2 = arith.constant 0 : i32
    return %c0_i32, %c0_i32_0, %c0_i32_1 : i32, i32, i32
  }
  func.func @transform_33(%arg0: i32) -> (i32, i32) {
    %c0_i32 = arith.constant 0 : i32
    %c0_i32_0 = arith.constant 0 : i32
    %c0_i32_1 = arith.constant 0 : i32
    return %c0_i32, %c0_i32_0 : i32, i32
  }
  func.func @transform_34(%arg0: i32) -> (i32, i32) {
    %c0_i32 = arith.constant 0 : i32
    %c0_i32_0 = arith.constant 0 : i32
    %c0_i32_1 = arith.constant 0 : i32
    return %c0_i32, %c0_i32_0 : i32, i32
  }
  func.func @transform_35(%arg0: i32) -> (i32, i32, i32) {
    %c0_i32 = arith.constant 0 : i32
    %c0_i32_0 = arith.constant 0 : i32
    %c0_i32_1 = arith.constant 0 : i32
    %c0_i32_2 = arith.constant 0 : i32
    return %c0_i32, %c0_i32_0, %c0_i32_1 : i32, i32, i32
  }
  func.func @transform_36(%arg0: i32) -> (i32, i32, i32) {
    %c0_i32 = arith.constant 0 : i32
    %c0_i32_0 = arith.constant 0 : i32
    %c0_i32_1 = arith.constant 0 : i32
    %c0_i32_2 = arith.constant 0 : i32
    return %c0_i32, %c0_i32_0, %c0_i32_1 : i32, i32, i32
  }
  func.func @transform_37(%arg0: i32) -> (i32, i32) {
    %c0_i32 = arith.constant 0 : i32
    %c0_i32_0 = arith.constant 0 : i32
    %c0_i32_1 = arith.constant 0 : i32
    return %c0_i32, %c0_i32_0 : i32, i32
  }
  func.func @transform_38(%arg0: i32) -> (i32, i32, i32) {
    %c0_i32 = arith.constant 0 : i32
    %c0_i32_0 = arith.constant 0 : i32
    %c0_i32_1 = arith.constant 0 : i32
    return %arg0, %c0_i32, %c0_i32_0 : i32, i32, i32
  }
}

</mosaic_0001>

<llo_original>
// kernel: cnn_ae_forward.1
$region0: #{cnn_ae_forward.1}
  #allocation0 [shape = 'u32[]', space=smem, size = 0x4, offset = 0x4, fixed_abs, tag = 'smem constant byte address 0x4 - core index']
  #allocation1 [shape = 'u32[72,128]{1,0:T(1,128)}', space=vmem, size = 0x9000, scoped, tag = 'internal scratch']
  %s0 = inlined_call_operand.smem [shape: u32[39], index: -1, kind: input, shape index: {}]
  %s1 = sld [smem:[%s0]]
  %s2 = scalar_lea.smem %s0, 1
  %s3 = sld [smem:[%s2]]
  %s4 = scalar_lea.smem %s0, 2
  %s5 = sld [smem:[%s4]]
  %s6 = scalar_lea.smem %s0, 3
  %s7 = sld [smem:[%s6]]
  %s8 = scalar_lea.smem %s0, 4
  %s9 = sld [smem:[%s8]]
  %s10 = scalar_lea.smem %s0, 5
  %s11 = sld [smem:[%s10]]
  %s12 = scalar_lea.smem %s0, 6
  %s13 = sld [smem:[%s12]]
  %s14 = scalar_lea.smem %s0, 7
  %s15 = sld [smem:[%s14]]
  %s16 = scalar_lea.smem %s0, 8
  %s17 = sld [smem:[%s16]]
  %s18 = scalar_lea.smem %s0, 9
  %s19 = sld [smem:[%s18]]
  %s20 = scalar_lea.smem %s0, 10
  %s21 = sld [smem:[%s20]]
  %s22 = scalar_lea.smem %s0, 11
  %s23 = sld [smem:[%s22]]
  %s24 = scalar_lea.smem %s0, 12
  %s25 = sld [smem:[%s24]]
  %s26 = scalar_lea.smem %s0, 13
  %s27 = sld [smem:[%s26]]
  %s28 = scalar_lea.smem %s0, 14
  %s29 = sld [smem:[%s28]]
  %s30 = scalar_lea.smem %s0, 15
  %s31 = sld [smem:[%s30]]
  %s32 = scalar_lea.smem %s0, 16
  %s33 = sld [smem:[%s32]]
  %s34 = scalar_lea.smem %s0, 17
  %s35 = sld [smem:[%s34]]
  %s36 = scalar_lea.smem %s0, 18
  %s37 = sld [smem:[%s36]]
  %s38 = scalar_lea.smem %s0, 19
  %s39 = sld [smem:[%s38]]
  %s40 = scalar_lea.smem %s0, 20
  %s41 = sld [smem:[%s40]]
  %s42 = scalar_lea.smem %s0, 21
  %s43 = sld [smem:[%s42]]
  %s44 = scalar_lea.smem %s0, 22
  %s45 = sld [smem:[%s44]]
  %s46 = scalar_lea.smem %s0, 23
  %s47 = sld [smem:[%s46]]
  %s48 = scalar_lea.smem %s0, 24
  %s49 = sld [smem:[%s48]]
  %s50 = scalar_lea.smem %s0, 25
  %s51 = sld [smem:[%s50]]
  %s52 = scalar_lea.smem %s0, 26
  %s53 = sld [smem:[%s52]]
  %s54 = scalar_lea.smem %s0, 27
  %s55 = sld [smem:[%s54]]
  %s56 = scalar_lea.smem %s0, 28
  %s57 = sld [smem:[%s56]]
  %s58 = scalar_lea.smem %s0, 29
  %s59 = sld [smem:[%s58]]
  %s60 = scalar_lea.smem %s0, 30
  %s61 = sld [smem:[%s60]]
  %s62 = scalar_lea.smem %s0, 31
  %s63 = sld [smem:[%s62]]
  %s64 = scalar_lea.smem %s0, 32
  %s65 = sld [smem:[%s64]]
  %s66 = scalar_lea.smem %s0, 33
  %s67 = sld [smem:[%s66]]
  %s68 = scalar_lea.smem %s0, 34
  %s69 = sld [smem:[%s68]]
  %s70 = scalar_lea.smem %s0, 35
  %s71 = sld [smem:[%s70]]
  %s72 = scalar_lea.smem %s0, 36
  %s73 = sld [smem:[%s72]]
  %s74 = scalar_lea.smem %s0, 37
  %s75 = sld [smem:[%s74]]
  %s76 = scalar_lea.smem %s0, 38
  %s77 = sld [smem:[%s76]]
  %s78 = sld [smem:[#allocation0]]
  $region185: #{cnn_ae_forward.1} parent=0
    _
  %s80 = ssub.s32 1, %s78
  %s81 = scalar_select 0, %s80, %s78
  loop: start=0, step=1, limit=4
  $region2: #{cnn_ae_forward.1} parent=0 // loop_pre_header
    _
  $region3: #{cnn_ae_forward.1} parent=0 // loop_header
    %s83 = sphi 0, %s87
    %p84 = scmp.ge.s32.totalorder %s83, 4
    %s93 = sphi 0, %s95
    %s96 = sphi 0, %s93
    %s97 = sphi 0, %s96
    %s113 = sphi 0, %s97
    %s117 = sphi 0, %s117
    %s119 = sphi 0, %s117
    %s120 = sphi 0, %s119
    %s134 = sphi 0, %s120
    %s138 = sphi 0, %s138
    %s140 = sphi 0, %s138
    %s141 = sphi 0, %s140
    %s155 = sphi 0, %s141
    %s159 = sphi 0, %s159
    %s161 = sphi 0, %s159
    %s162 = sphi 0, %s161
    %s176 = sphi 0, %s162
    %s180 = sphi 0, %s180
    %s182 = sphi 0, %s180
    %s183 = sphi 0, %s182
    %s197 = sphi 0, %s183
    %s201 = sphi 0, %s201
    %s203 = sphi 0, %s201
    %s204 = sphi 0, %s203
    %s218 = sphi 0, %s204
    %s222 = sphi 0, %s222
    %s224 = sphi 0, %s222
    %s225 = sphi 0, %s224
    %s239 = sphi 0, %s225
    %s243 = sphi 0, %s243
    %s245 = sphi 0, %s243
    %s246 = sphi 0, %s245
    %s260 = sphi 0, %s246
    %s264 = sphi 0, %s264
    %s266 = sphi 0, %s264
    %s267 = sphi 0, %s266
    %s281 = sphi 0, %s267
    %s285 = sphi 0, %s285
    %s287 = sphi 0, %s285
    %s288 = sphi 0, %s287
    %s302 = sphi 0, %s288
    %s306 = sphi 0, %s306
    %s308 = sphi 0, %s306
    %s309 = sphi 0, %s308
    %s323 = sphi 0, %s309
    %s327 = sphi 0, %s327
    %s329 = sphi 0, %s327
    %s330 = sphi 0, %s329
    %s344 = sphi 0, %s330
    %s348 = sphi 0, %s348
    %s350 = sphi 0, %s348
    %s351 = sphi 0, %s350
    %s365 = sphi 0, %s351
    %s369 = sphi 0, %s369
    %s371 = sphi 0, %s369
    %s372 = sphi 0, %s371
    %s386 = sphi 0, %s372
    %s390 = sphi 0, %s390
    %s392 = sphi 0, %s390
    %s393 = sphi 0, %s392
    %s407 = sphi 0, %s393
    %s411 = sphi 0, %s411
    %s413 = sphi 0, %s411
    %s414 = sphi 0, %s413
    %s428 = sphi 0, %s414
    %s432 = sphi 0, %s432
    %s434 = sphi 0, %s432
    %s435 = sphi 0, %s434
    %s449 = sphi 0, %s435
    %s453 = sphi 0, %s453
    %s455 = sphi 0, %s453
    %s456 = sphi 0, %s455
    %s470 = sphi 0, %s456
    %s474 = sphi 0, %s474
    %s476 = sphi 0, %s474
    %s477 = sphi 0, %s476
    %s491 = sphi 0, %s477
    %s495 = sphi 0, %s495
    %s497 = sphi 0, %s495
    %s498 = sphi 0, %s497
    %s512 = sphi 0, %s498
    %s516 = sphi 0, %s516
    %s518 = sphi 0, %s516
    %s519 = sphi 0, %s518
    %s533 = sphi 0, %s519
    %s537 = sphi 0, %s537
    %s539 = sphi 0, %s537
    %s540 = sphi 0, %s539
    %s554 = sphi 0, %s540
    %s558 = sphi 0, %s558
    %s560 = sphi 0, %s558
    %s561 = sphi 0, %s560
    %s575 = sphi 0, %s561
    %s579 = sphi 0, %s579
    %s581 = sphi 0, %s579
    %s582 = sphi 0, %s581
    %s596 = sphi 0, %s582
    %s600 = sphi 0, %s600
    %s602 = sphi 0, %s600
    %s603 = sphi 0, %s602
    %s617 = sphi 0, %s603
    %s621 = sphi 0, %s621
    %s623 = sphi 0, %s621
    %s624 = sphi 0, %s623
    %s638 = sphi 0, %s624
    %s642 = sphi 0, %s642
    %s644 = sphi 0, %s642
    %s645 = sphi 0, %s644
    %s659 = sphi 0, %s645
    %s663 = sphi 0, %s663
    %s665 = sphi 0, %s663
    %s666 = sphi 0, %s665
    %s680 = sphi 0, %s666
    %s684 = sphi 0, %s684
    %s686 = sphi 0, %s684
    %s687 = sphi 0, %s686
    %s701 = sphi 0, %s687
    %s705 = sphi 0, %s705
    %s707 = sphi 0, %s705
    %s708 = sphi 0, %s707
    %s722 = sphi 0, %s708
    %s726 = sphi 0, %s726
    %s728 = sphi 0, %s726
    %s729 = sphi 0, %s728
    %s743 = sphi 0, %s729
    %s747 = sphi 0, %s747
    %s749 = sphi 0, %s747
    %s750 = sphi 0, %s749
    %s764 = sphi 0, %s750
    %s768 = sphi 0, %s768
    %s770 = sphi 0, %s768
    %s771 = sphi 0, %s770
    %s785 = sphi 0, %s771
    %s789 = sphi 0, %s789
    %s791 = sphi 0, %s789
    %s792 = sphi 0, %s791
    %s806 = sphi 0, %s792
    %s810 = sphi 0, %s810
    %s812 = sphi 0, %s810
    %s813 = sphi 0, %s812
    %s827 = sphi 0, %s813
    %s831 = sphi 0, %s831
    %s833 = sphi 0, %s831
    %s834 = sphi 0, %s833
    %s848 = sphi 0, %s834
    %s852 = sphi 0, %s852
    %s854 = sphi 0, %s852
    %s855 = sphi 0, %s854
    %s869 = sphi 0, %s855
    %s873 = sphi 0, %s873
    %s875 = sphi 0, %s873
    %s876 = sphi 0, %s875
    %s890 = sphi 0, %s876
    %s896 = sphi 0, %s898
    %s899 = sphi 0, %s896
    %s900 = sphi 0, %s899
    %s916 = sphi 0, %s900
  $region4: #{cnn_ae_forward.1} parent=0 // loop_header_branch
    %86 = sbr.rel (%p84) target = $region8
  $region5: #{cnn_ae_forward.1} parent=0 // loop_body
    %s88 = ssub.s32 %s83, 1
    %s89 = ssub.s32 %s83, 2
    %s90 = sadd.s32 %s83, 1
    %s91 = ssub.s32 %s83, %s90
    %p92 = scmp.eq.s32.totalorder %s91, 0
    %s94 = sadd.s32 %s93, 1
    %s95 = scalar_select %p92, %s93, %s94
    %p98 = pneg %p92
    %p99 = scmp.eq.s32.totalorder %s83, 1
    %p100 = por %p98, %p99
    %p101 = scmp.ne.s32.totalorder %s93, %s96
    %p102 = scmp.eq.s32.totalorder %s83, 0
    %p103 = por %p101, %p102
    %p104 = scmp.ne.s32.totalorder %s93, %s96
    %p105 = scmp.eq.s32.totalorder %s88, 1
    %p106 = por %p104, %p105
    %p107 = scmp.ne.s32.totalorder %s96, %s97
    %p108 = scmp.eq.s32.totalorder %s88, 0
    %p109 = por %p107, %p108
    %p110 = scmp.ne.s32.totalorder %s96, %s97
    %p111 = scmp.eq.s32.totalorder %s89, 1
    %p112 = por %p110, %p111
    %p114 = scmp.ne.s32.totalorder %s97, %s113
    %p115 = scmp.eq.s32.totalorder %s89, 0
    %p116 = por %p114, %p115
    %s118 = sadd.s32 %s117, 1
    %p121 = scmp.eq.s32.totalorder %s83, 1
    %p122 = scmp.ne.s32.totalorder %s117, %s119
    %p123 = scmp.eq.s32.totalorder %s83, 0
    %p124 = por %p122, %p123
    %p125 = scmp.ne.s32.totalorder %s117, %s119
    %p126 = scmp.eq.s32.totalorder %s88, 1
    %p127 = por %p125, %p126
    %p128 = scmp.ne.s32.totalorder %s119, %s120
    %p129 = scmp.eq.s32.totalorder %s88, 0
    %p130 = por %p128, %p129
    %p131 = scmp.ne.s32.totalorder %s119, %s120
    %p132 = scmp.eq.s32.totalorder %s89, 1
    %p133 = por %p131, %p132
    %p135 = scmp.ne.s32.totalorder %s120, %s134
    %p136 = scmp.eq.s32.totalorder %s89, 0
    %p137 = por %p135, %p136
    %s139 = sadd.s32 %s138, 1
    %p142 = scmp.eq.s32.totalorder %s83, 1
    %p143 = scmp.ne.s32.totalorder %s138, %s140
    %p144 = scmp.eq.s32.totalorder %s83, 0
    %p145 = por %p143, %p144
    %p146 = scmp.ne.s32.totalorder %s138, %s140
    %p147 = scmp.eq.s32.totalorder %s88, 1
    %p148 = por %p146, %p147
    %p149 = scmp.ne.s32.totalorder %s140, %s141
    %p150 = scmp.eq.s32.totalorder %s88, 0
    %p151 = por %p149, %p150
    %p152 = scmp.ne.s32.totalorder %s140, %s141
    %p153 = scmp.eq.s32.totalorder %s89, 1
    %p154 = por %p152, %p153
    %p156 = scmp.ne.s32.totalorder %s141, %s155
    %p157 = scmp.eq.s32.totalorder %s89, 0
    %p158 = por %p156, %p157
    %s160 = sadd.s32 %s159, 1
    %p163 = scmp.eq.s32.totalorder %s83, 1
    %p164 = scmp.ne.s32.totalorder %s159, %s161
    %p165 = scmp.eq.s32.totalorder %s83, 0
    %p166 = por %p164, %p165
    %p167 = scmp.ne.s32.totalorder %s159, %s161
    %p168 = scmp.eq.s32.totalorder %s88, 1
    %p169 = por %p167, %p168
    %p170 = scmp.ne.s32.totalorder %s161, %s162
    %p171 = scmp.eq.s32.totalorder %s88, 0
    %p172 = por %p170, %p171
    %p173 = scmp.ne.s32.totalorder %s161, %s162
    %p174 = scmp.eq.s32.totalorder %s89, 1
    %p175 = por %p173, %p174
    %p177 = scmp.ne.s32.totalorder %s162, %s176
    %p178 = scmp.eq.s32.totalorder %s89, 0
    %p179 = por %p177, %p178
    %s181 = sadd.s32 %s180, 1
    %p184 = scmp.eq.s32.totalorder %s83, 1
    %p185 = scmp.ne.s32.totalorder %s180, %s182
    %p186 = scmp.eq.s32.totalorder %s83, 0
    %p187 = por %p185, %p186
    %p188 = scmp.ne.s32.totalorder %s180, %s182
    %p189 = scmp.eq.s32.totalorder %s88, 1
    %p190 = por %p188, %p189
    %p191 = scmp.ne.s32.totalorder %s182, %s183
    %p192 = scmp.eq.s32.totalorder %s88, 0
    %p193 = por %p191, %p192
    %p194 = scmp.ne.s32.totalorder %s182, %s183
    %p195 = scmp.eq.s32.totalorder %s89, 1
    %p196 = por %p194, %p195
    %p198 = scmp.ne.s32.totalorder %s183, %s197
    %p199 = scmp.eq.s32.totalorder %s89, 0
    %p200 = por %p198, %p199
    %s202 = sadd.s32 %s201, 1
    %p205 = scmp.eq.s32.totalorder %s83, 1
    %p206 = scmp.ne.s32.totalorder %s201, %s203
    %p207 = scmp.eq.s32.totalorder %s83, 0
    %p208 = por %p206, %p207
    %p209 = scmp.ne.s32.totalorder %s201, %s203
    %p210 = scmp.eq.s32.totalorder %s88, 1
    %p211 = por %p209, %p210
    %p212 = scmp.ne.s32.totalorder %s203, %s204
    %p213 = scmp.eq.s32.totalorder %s88, 0
    %p214 = por %p212, %p213
    %p215 = scmp.ne.s32.totalorder %s203, %s204
    %p216 = scmp.eq.s32.totalorder %s89, 1
    %p217 = por %p215, %p216
    %p219 = scmp.ne.s32.totalorder %s204, %s218
    %p220 = scmp.eq.s32.totalorder %s89, 0
    %p221 = por %p219, %p220
    %s223 = sadd.s32 %s222, 1
    %p226 = scmp.eq.s32.totalorder %s83, 1
    %p227 = scmp.ne.s32.totalorder %s222, %s224
    %p228 = scmp.eq.s32.totalorder %s83, 0
    %p229 = por %p227, %p228
    %p230 = scmp.ne.s32.totalorder %s222, %s224
    %p231 = scmp.eq.s32.totalorder %s88, 1
    %p232 = por %p230, %p231
    %p233 = scmp.ne.s32.totalorder %s224, %s225
    %p234 = scmp.eq.s32.totalorder %s88, 0
    %p235 = por %p233, %p234
    %p236 = scmp.ne.s32.totalorder %s224, %s225
    %p237 = scmp.eq.s32.totalorder %s89, 1
    %p238 = por %p236, %p237
    %p240 = scmp.ne.s32.totalorder %s225, %s239
    %p241 = scmp.eq.s32.totalorder %s89, 0
    %p242 = por %p240, %p241
    %s244 = sadd.s32 %s243, 1
    %p247 = scmp.eq.s32.totalorder %s83, 1
    %p248 = scmp.ne.s32.totalorder %s243, %s245
    %p249 = scmp.eq.s32.totalorder %s83, 0
    %p250 = por %p248, %p249
    %p251 = scmp.ne.s32.totalorder %s243, %s245
    %p252 = scmp.eq.s32.totalorder %s88, 1
    %p253 = por %p251, %p252
    %p254 = scmp.ne.s32.totalorder %s245, %s246
    %p255 = scmp.eq.s32.totalorder %s88, 0
    %p256 = por %p254, %p255
    %p257 = scmp.ne.s32.totalorder %s245, %s246
    %p258 = scmp.eq.s32.totalorder %s89, 1
    %p259 = por %p257, %p258
    %p261 = scmp.ne.s32.totalorder %s246, %s260
    %p262 = scmp.eq.s32.totalorder %s89, 0
    %p263 = por %p261, %p262
    %s265 = sadd.s32 %s264, 1
    %p268 = scmp.eq.s32.totalorder %s83, 1
    %p269 = scmp.ne.s32.totalorder %s264, %s266
    %p270 = scmp.eq.s32.totalorder %s83, 0
    %p271 = por %p269, %p270
    %p272 = scmp.ne.s32.totalorder %s264, %s266
    %p273 = scmp.eq.s32.totalorder %s88, 1
    %p274 = por %p272, %p273
    %p275 = scmp.ne.s32.totalorder %s266, %s267
    %p276 = scmp.eq.s32.totalorder %s88, 0
    %p277 = por %p275, %p276
    %p278 = scmp.ne.s32.totalorder %s266, %s267
    %p279 = scmp.eq.s32.totalorder %s89, 1
    %p280 = por %p278, %p279
    %p282 = scmp.ne.s32.totalorder %s267, %s281
    %p283 = scmp.eq.s32.totalorder %s89, 0
    %p284 = por %p282, %p283
    %s286 = sadd.s32 %s285, 1
    %p289 = scmp.eq.s32.totalorder %s83, 1
    %p290 = scmp.ne.s32.totalorder %s285, %s287
    %p291 = scmp.eq.s32.totalorder %s83, 0
    %p292 = por %p290, %p291
    %p293 = scmp.ne.s32.totalorder %s285, %s287
    %p294 = scmp.eq.s32.totalorder %s88, 1
    %p295 = por %p293, %p294
    %p296 = scmp.ne.s32.totalorder %s287, %s288
    %p297 = scmp.eq.s32.totalorder %s88, 0
    %p298 = por %p296, %p297
    %p299 = scmp.ne.s32.totalorder %s287, %s288
    %p300 = scmp.eq.s32.totalorder %s89, 1
    %p301 = por %p299, %p300
    %p303 = scmp.ne.s32.totalorder %s288, %s302
    %p304 = scmp.eq.s32.totalorder %s89, 0
    %p305 = por %p303, %p304
    %s307 = sadd.s32 %s306, 1
    %p310 = scmp.eq.s32.totalorder %s83, 1
    %p311 = scmp.ne.s32.totalorder %s306, %s308
    %p312 = scmp.eq.s32.totalorder %s83, 0
    %p313 = por %p311, %p312
    %p314 = scmp.ne.s32.totalorder %s306, %s308
    %p315 = scmp.eq.s32.totalorder %s88, 1
    %p316 = por %p314, %p315
    %p317 = scmp.ne.s32.totalorder %s308, %s309
    %p318 = scmp.eq.s32.totalorder %s88, 0
    %p319 = por %p317, %p318
    %p320 = scmp.ne.s32.totalorder %s308, %s309
    %p321 = scmp.eq.s32.totalorder %s89, 1
    %p322 = por %p320, %p321
    %p324 = scmp.ne.s32.totalorder %s309, %s323
    %p325 = scmp.eq.s32.totalorder %s89, 0
    %p326 = por %p324, %p325
    %s328 = sadd.s32 %s327, 1
    %p331 = scmp.eq.s32.totalorder %s83, 1
    %p332 = scmp.ne.s32.totalorder %s327, %s329
    %p333 = scmp.eq.s32.totalorder %s83, 0
    %p334 = por %p332, %p333
    %p335 = scmp.ne.s32.totalorder %s327, %s329
    %p336 = scmp.eq.s32.totalorder %s88, 1
    %p337 = por %p335, %p336
    %p338 = scmp.ne.s32.totalorder %s329, %s330
    %p339 = scmp.eq.s32.totalorder %s88, 0
    %p340 = por %p338, %p339
    %p341 = scmp.ne.s32.totalorder %s329, %s330
    %p342 = scmp.eq.s32.totalorder %s89, 1
    %p343 = por %p341, %p342
    %p345 = scmp.ne.s32.totalorder %s330, %s344
    %p346 = scmp.eq.s32.totalorder %s89, 0
    %p347 = por %p345, %p346
    %s349 = sadd.s32 %s348, 1
    %p352 = scmp.eq.s32.totalorder %s83, 1
    %p353 = scmp.ne.s32.totalorder %s348, %s350
    %p354 = scmp.eq.s32.totalorder %s83, 0
    %p355 = por %p353, %p354
    %p356 = scmp.ne.s32.totalorder %s348, %s350
    %p357 = scmp.eq.s32.totalorder %s88, 1
    %p358 = por %p356, %p357
    %p359 = scmp.ne.s32.totalorder %s350, %s351
    %p360 = scmp.eq.s32.totalorder %s88, 0
    %p361 = por %p359, %p360
    %p362 = scmp.ne.s32.totalorder %s350, %s351
    %p363 = scmp.eq.s32.totalorder %s89, 1
    %p364 = por %p362, %p363
    %p366 = scmp.ne.s32.totalorder %s351, %s365
    %p367 = scmp.eq.s32.totalorder %s89, 0
    %p368 = por %p366, %p367
    %s370 = sadd.s32 %s369, 1
    %p373 = scmp.eq.s32.totalorder %s83, 1
    %p374 = scmp.ne.s32.totalorder %s369, %s371
    %p375 = scmp.eq.s32.totalorder %s83, 0
    %p376 = por %p374, %p375
    %p377 = scmp.ne.s32.totalorder %s369, %s371
    %p378 = scmp.eq.s32.totalorder %s88, 1
    %p379 = por %p377, %p378
    %p380 = scmp.ne.s32.totalorder %s371, %s372
    %p381 = scmp.eq.s32.totalorder %s88, 0
    %p382 = por %p380, %p381
    %p383 = scmp.ne.s32.totalorder %s371, %s372
    %p384 = scmp.eq.s32.totalorder %s89, 1
    %p385 = por %p383, %p384
    %p387 = scmp.ne.s32.totalorder %s372, %s386
    %p388 = scmp.eq.s32.totalorder %s89, 0
    %p389 = por %p387, %p388
    %s391 = sadd.s32 %s390, 1
    %p394 = scmp.eq.s32.totalorder %s83, 1
    %p395 = scmp.ne.s32.totalorder %s390, %s392
    %p396 = scmp.eq.s32.totalorder %s83, 0
    %p397 = por %p395, %p396
    %p398 = scmp.ne.s32.totalorder %s390, %s392
    %p399 = scmp.eq.s32.totalorder %s88, 1
    %p400 = por %p398, %p399
    %p401 = scmp.ne.s32.totalorder %s392, %s393
    %p402 = scmp.eq.s32.totalorder %s88, 0
    %p403 = por %p401, %p402
    %p404 = scmp.ne.s32.totalorder %s392, %s393
    %p405 = scmp.eq.s32.totalorder %s89, 1
    %p406 = por %p404, %p405
    %p408 = scmp.ne.s32.totalorder %s393, %s407
    %p409 = scmp.eq.s32.totalorder %s89, 0
    %p410 = por %p408, %p409
    %s412 = sadd.s32 %s411, 1
    %p415 = scmp.eq.s32.totalorder %s83, 1
    %p416 = scmp.ne.s32.totalorder %s411, %s413
    %p417 = scmp.eq.s32.totalorder %s83, 0
    %p418 = por %p416, %p417
    %p419 = scmp.ne.s32.totalorder %s411, %s413
    %p420 = scmp.eq.s32.totalorder %s88, 1
    %p421 = por %p419, %p420
    %p422 = scmp.ne.s32.totalorder %s413, %s414
    %p423 = scmp.eq.s32.totalorder %s88, 0
    %p424 = por %p422, %p423
    %p425 = scmp.ne.s32.totalorder %s413, %s414
    %p426 = scmp.eq.s32.totalorder %s89, 1
    %p427 = por %p425, %p426
    %p429 = scmp.ne.s32.totalorder %s414, %s428
    %p430 = scmp.eq.s32.totalorder %s89, 0
    %p431 = por %p429, %p430
    %s433 = sadd.s32 %s432, 1
    %p436 = scmp.eq.s32.totalorder %s83, 1
    %p437 = scmp.ne.s32.totalorder %s432, %s434
    %p438 = scmp.eq.s32.totalorder %s83, 0
    %p439 = por %p437, %p438
    %p440 = scmp.ne.s32.totalorder %s432, %s434
    %p441 = scmp.eq.s32.totalorder %s88, 1
    %p442 = por %p440, %p441
    %p443 = scmp.ne.s32.totalorder %s434, %s435
    %p444 = scmp.eq.s32.totalorder %s88, 0
    %p445 = por %p443, %p444
    %p446 = scmp.ne.s32.totalorder %s434, %s435
    %p447 = scmp.eq.s32.totalorder %s89, 1
    %p448 = por %p446, %p447
    %p450 = scmp.ne.s32.totalorder %s435, %s449
    %p451 = scmp.eq.s32.totalorder %s89, 0
    %p452 = por %p450, %p451
    %s454 = sadd.s32 %s453, 1
    %p457 = scmp.eq.s32.totalorder %s83, 1
    %p458 = scmp.ne.s32.totalorder %s453, %s455
    %p459 = scmp.eq.s32.totalorder %s83, 0
    %p460 = por %p458, %p459
    %p461 = scmp.ne.s32.totalorder %s453, %s455
    %p462 = scmp.eq.s32.totalorder %s88, 1
    %p463 = por %p461, %p462
    %p464 = scmp.ne.s32.totalorder %s455, %s456
    %p465 = scmp.eq.s32.totalorder %s88, 0
    %p466 = por %p464, %p465
    %p467 = scmp.ne.s32.totalorder %s455, %s456
    %p468 = scmp.eq.s32.totalorder %s89, 1
    %p469 = por %p467, %p468
    %p471 = scmp.ne.s32.totalorder %s456, %s470
    %p472 = scmp.eq.s32.totalorder %s89, 0
    %p473 = por %p471, %p472
    %s475 = sadd.s32 %s474, 1
    %p478 = scmp.eq.s32.totalorder %s83, 1
    %p479 = scmp.ne.s32.totalorder %s474, %s476
    %p480 = scmp.eq.s32.totalorder %s83, 0
    %p481 = por %p479, %p480
    %p482 = scmp.ne.s32.totalorder %s474, %s476
    %p483 = scmp.eq.s32.totalorder %s88, 1
    %p484 = por %p482, %p483
    %p485 = scmp.ne.s32.totalorder %s476, %s477
    %p486 = scmp.eq.s32.totalorder %s88, 0
    %p487 = por %p485, %p486
    %p488 = scmp.ne.s32.totalorder %s476, %s477
    %p489 = scmp.eq.s32.totalorder %s89, 1
    %p490 = por %p488, %p489
    %p492 = scmp.ne.s32.totalorder %s477, %s491
    %p493 = scmp.eq.s32.totalorder %s89, 0
    %p494 = por %p492, %p493
    %s496 = sadd.s32 %s495, 1
    %p499 = scmp.eq.s32.totalorder %s83, 1
    %p500 = scmp.ne.s32.totalorder %s495, %s497
    %p501 = scmp.eq.s32.totalorder %s83, 0
    %p502 = por %p500, %p501
    %p503 = scmp.ne.s32.totalorder %s495, %s497
    %p504 = scmp.eq.s32.totalorder %s88, 1
    %p505 = por %p503, %p504
    %p506 = scmp.ne.s32.totalorder %s497, %s498
    %p507 = scmp.eq.s32.totalorder %s88, 0
    %p508 = por %p506, %p507
    %p509 = scmp.ne.s32.totalorder %s497, %s498
    %p510 = scmp.eq.s32.totalorder %s89, 1
    %p511 = por %p509, %p510
    %p513 = scmp.ne.s32.totalorder %s498, %s512
    %p514 = scmp.eq.s32.totalorder %s89, 0
    %p515 = por %p513, %p514
    %s517 = sadd.s32 %s516, 1
    %p520 = scmp.eq.s32.totalorder %s83, 1
    %p521 = scmp.ne.s32.totalorder %s516, %s518
    %p522 = scmp.eq.s32.totalorder %s83, 0
    %p523 = por %p521, %p522
    %p524 = scmp.ne.s32.totalorder %s516, %s518
    %p525 = scmp.eq.s32.totalorder %s88, 1
    %p526 = por %p524, %p525
    %p527 = scmp.ne.s32.totalorder %s518, %s519
    %p528 = scmp.eq.s32.totalorder %s88, 0
    %p529 = por %p527, %p528
    %p530 = scmp.ne.s32.totalorder %s518, %s519
    %p531 = scmp.eq.s32.totalorder %s89, 1
    %p532 = por %p530, %p531
    %p534 = scmp.ne.s32.totalorder %s519, %s533
    %p535 = scmp.eq.s32.totalorder %s89, 0
    %p536 = por %p534, %p535
    %s538 = sadd.s32 %s537, 1
    %p541 = scmp.eq.s32.totalorder %s83, 1
    %p542 = scmp.ne.s32.totalorder %s537, %s539
    %p543 = scmp.eq.s32.totalorder %s83, 0
    %p544 = por %p542, %p543
    %p545 = scmp.ne.s32.totalorder %s537, %s539
    %p546 = scmp.eq.s32.totalorder %s88, 1
    %p547 = por %p545, %p546
    %p548 = scmp.ne.s32.totalorder %s539, %s540
    %p549 = scmp.eq.s32.totalorder %s88, 0
    %p550 = por %p548, %p549
    %p551 = scmp.ne.s32.totalorder %s539, %s540
    %p552 = scmp.eq.s32.totalorder %s89, 1
    %p553 = por %p551, %p552
    %p555 = scmp.ne.s32.totalorder %s540, %s554
    %p556 = scmp.eq.s32.totalorder %s89, 0
    %p557 = por %p555, %p556
    %s559 = sadd.s32 %s558, 1
    %p562 = scmp.eq.s32.totalorder %s83, 1
    %p563 = scmp.ne.s32.totalorder %s558, %s560
    %p564 = scmp.eq.s32.totalorder %s83, 0
    %p565 = por %p563, %p564
    %p566 = scmp.ne.s32.totalorder %s558, %s560
    %p567 = scmp.eq.s32.totalorder %s88, 1
    %p568 = por %p566, %p567
    %p569 = scmp.ne.s32.totalorder %s560, %s561
    %p570 = scmp.eq.s32.totalorder %s88, 0
    %p571 = por %p569, %p570
    %p572 = scmp.ne.s32.totalorder %s560, %s561
    %p573 = scmp.eq.s32.totalorder %s89, 1
    %p574 = por %p572, %p573
    %p576 = scmp.ne.s32.totalorder %s561, %s575
    %p577 = scmp.eq.s32.totalorder %s89, 0
    %p578 = por %p576, %p577
    %s580 = sadd.s32 %s579, 1
    %p583 = scmp.eq.s32.totalorder %s83, 1
    %p584 = scmp.ne.s32.totalorder %s579, %s581
    %p585 = scmp.eq.s32.totalorder %s83, 0
    %p586 = por %p584, %p585
    %p587 = scmp.ne.s32.totalorder %s579, %s581
    %p588 = scmp.eq.s32.totalorder %s88, 1
    %p589 = por %p587, %p588
    %p590 = scmp.ne.s32.totalorder %s581, %s582
    %p591 = scmp.eq.s32.totalorder %s88, 0
    %p592 = por %p590, %p591
    %p593 = scmp.ne.s32.totalorder %s581, %s582
    %p594 = scmp.eq.s32.totalorder %s89, 1
    %p595 = por %p593, %p594
    %p597 = scmp.ne.s32.totalorder %s582, %s596
    %p598 = scmp.eq.s32.totalorder %s89, 0
    %p599 = por %p597, %p598
    %s601 = sadd.s32 %s600, 1
    %p604 = scmp.eq.s32.totalorder %s83, 1
    %p605 = scmp.ne.s32.totalorder %s600, %s602
    %p606 = scmp.eq.s32.totalorder %s83, 0
    %p607 = por %p605, %p606
    %p608 = scmp.ne.s32.totalorder %s600, %s602
    %p609 = scmp.eq.s32.totalorder %s88, 1
    %p610 = por %p608, %p609
    %p611 = scmp.ne.s32.totalorder %s602, %s603
    %p612 = scmp.eq.s32.totalorder %s88, 0
    %p613 = por %p611, %p612
    %p614 = scmp.ne.s32.totalorder %s602, %s603
    %p615 = scmp.eq.s32.totalorder %s89, 1
    %p616 = por %p614, %p615
    %p618 = scmp.ne.s32.totalorder %s603, %s617
    %p619 = scmp.eq.s32.totalorder %s89, 0
    %p620 = por %p618, %p619
    %s622 = sadd.s32 %s621, 1
    %p625 = scmp.eq.s32.totalorder %s83, 1
    %p626 = scmp.ne.s32.totalorder %s621, %s623
    %p627 = scmp.eq.s32.totalorder %s83, 0
    %p628 = por %p626, %p627
    %p629 = scmp.ne.s32.totalorder %s621, %s623
    %p630 = scmp.eq.s32.totalorder %s88, 1
    %p631 = por %p629, %p630
    %p632 = scmp.ne.s32.totalorder %s623, %s624
    %p633 = scmp.eq.s32.totalorder %s88, 0
    %p634 = por %p632, %p633
    %p635 = scmp.ne.s32.totalorder %s623, %s624
    %p636 = scmp.eq.s32.totalorder %s89, 1
    %p637 = por %p635, %p636
    %p639 = scmp.ne.s32.totalorder %s624, %s638
    %p640 = scmp.eq.s32.totalorder %s89, 0
    %p641 = por %p639, %p640
    %s643 = sadd.s32 %s642, 1
    %p646 = scmp.eq.s32.totalorder %s83, 1
    %p647 = scmp.ne.s32.totalorder %s642, %s644
    %p648 = scmp.eq.s32.totalorder %s83, 0
    %p649 = por %p647, %p648
    %p650 = scmp.ne.s32.totalorder %s642, %s644
    %p651 = scmp.eq.s32.totalorder %s88, 1
    %p652 = por %p650, %p651
    %p653 = scmp.ne.s32.totalorder %s644, %s645
    %p654 = scmp.eq.s32.totalorder %s88, 0
    %p655 = por %p653, %p654
    %p656 = scmp.ne.s32.totalorder %s644, %s645
    %p657 = scmp.eq.s32.totalorder %s89, 1
    %p658 = por %p656, %p657
    %p660 = scmp.ne.s32.totalorder %s645, %s659
    %p661 = scmp.eq.s32.totalorder %s89, 0
    %p662 = por %p660, %p661
    %s664 = sadd.s32 %s663, 1
    %p667 = scmp.eq.s32.totalorder %s83, 1
    %p668 = scmp.ne.s32.totalorder %s663, %s665
    %p669 = scmp.eq.s32.totalorder %s83, 0
    %p670 = por %p668, %p669
    %p671 = scmp.ne.s32.totalorder %s663, %s665
    %p672 = scmp.eq.s32.totalorder %s88, 1
    %p673 = por %p671, %p672
    %p674 = scmp.ne.s32.totalorder %s665, %s666
    %p675 = scmp.eq.s32.totalorder %s88, 0
    %p676 = por %p674, %p675
    %p677 = scmp.ne.s32.totalorder %s665, %s666
    %p678 = scmp.eq.s32.totalorder %s89, 1
    %p679 = por %p677, %p678
    %p681 = scmp.ne.s32.totalorder %s666, %s680
    %p682 = scmp.eq.s32.totalorder %s89, 0
    %p683 = por %p681, %p682
    %s685 = sadd.s32 %s684, 1
    %p688 = scmp.eq.s32.totalorder %s83, 1
    %p689 = scmp.ne.s32.totalorder %s684, %s686
    %p690 = scmp.eq.s32.totalorder %s83, 0
    %p691 = por %p689, %p690
    %p692 = scmp.ne.s32.totalorder %s684, %s686
    %p693 = scmp.eq.s32.totalorder %s88, 1
    %p694 = por %p692, %p693
    %p695 = scmp.ne.s32.totalorder %s686, %s687
    %p696 = scmp.eq.s32.totalorder %s88, 0
    %p697 = por %p695, %p696
    %p698 = scmp.ne.s32.totalorder %s686, %s687
    %p699 = scmp.eq.s32.totalorder %s89, 1
    %p700 = por %p698, %p699
    %p702 = scmp.ne.s32.totalorder %s687, %s701
    %p703 = scmp.eq.s32.totalorder %s89, 0
    %p704 = por %p702, %p703
    %s706 = sadd.s32 %s705, 1
    %p709 = scmp.eq.s32.totalorder %s83, 1
    %p710 = scmp.ne.s32.totalorder %s705, %s707
    %p711 = scmp.eq.s32.totalorder %s83, 0
    %p712 = por %p710, %p711
    %p713 = scmp.ne.s32.totalorder %s705, %s707
    %p714 = scmp.eq.s32.totalorder %s88, 1
    %p715 = por %p713, %p714
    %p716 = scmp.ne.s32.totalorder %s707, %s708
    %p717 = scmp.eq.s32.totalorder %s88, 0
    %p718 = por %p716, %p717
    %p719 = scmp.ne.s32.totalorder %s707, %s708
    %p720 = scmp.eq.s32.totalorder %s89, 1
    %p721 = por %p719, %p720
    %p723 = scmp.ne.s32.totalorder %s708, %s722
    %p724 = scmp.eq.s32.totalorder %s89, 0
    %p725 = por %p723, %p724
    %s727 = sadd.s32 %s726, 1
    %p730 = scmp.eq.s32.totalorder %s83, 1
    %p731 = scmp.ne.s32.totalorder %s726, %s728
    %p732 = scmp.eq.s32.totalorder %s83, 0
    %p733 = por %p731, %p732
    %p734 = scmp.ne.s32.totalorder %s726, %s728
    %p735 = scmp.eq.s32.totalorder %s88, 1
    %p736 = por %p734, %p735
    %p737 = scmp.ne.s32.totalorder %s728, %s729
    %p738 = scmp.eq.s32.totalorder %s88, 0
    %p739 = por %p737, %p738
    %p740 = scmp.ne.s32.totalorder %s728, %s729
    %p741 = scmp.eq.s32.totalorder %s89, 1
    %p742 = por %p740, %p741
    %p744 = scmp.ne.s32.totalorder %s729, %s743
    %p745 = scmp.eq.s32.totalorder %s89, 0
    %p746 = por %p744, %p745
    %s748 = sadd.s32 %s747, 1
    %p751 = scmp.eq.s32.totalorder %s83, 1
    %p752 = scmp.ne.s32.totalorder %s747, %s749
    %p753 = scmp.eq.s32.totalorder %s83, 0
    %p754 = por %p752, %p753
    %p755 = scmp.ne.s32.totalorder %s747, %s749
    %p756 = scmp.eq.s32.totalorder %s88, 1
    %p757 = por %p755, %p756
    %p758 = scmp.ne.s32.totalorder %s749, %s750
    %p759 = scmp.eq.s32.totalorder %s88, 0
    %p760 = por %p758, %p759
    %p761 = scmp.ne.s32.totalorder %s749, %s750
    %p762 = scmp.eq.s32.totalorder %s89, 1
    %p763 = por %p761, %p762
    %p765 = scmp.ne.s32.totalorder %s750, %s764
    %p766 = scmp.eq.s32.totalorder %s89, 0
    %p767 = por %p765, %p766
    %s769 = sadd.s32 %s768, 1
    %p772 = scmp.eq.s32.totalorder %s83, 1
    %p773 = scmp.ne.s32.totalorder %s768, %s770
    %p774 = scmp.eq.s32.totalorder %s83, 0
    %p775 = por %p773, %p774
    %p776 = scmp.ne.s32.totalorder %s768, %s770
    %p777 = scmp.eq.s32.totalorder %s88, 1
    %p778 = por %p776, %p777
    %p779 = scmp.ne.s32.totalorder %s770, %s771
    %p780 = scmp.eq.s32.totalorder %s88, 0
    %p781 = por %p779, %p780
    %p782 = scmp.ne.s32.totalorder %s770, %s771
    %p783 = scmp.eq.s32.totalorder %s89, 1
    %p784 = por %p782, %p783
    %p786 = scmp.ne.s32.totalorder %s771, %s785
    %p787 = scmp.eq.s32.totalorder %s89, 0
    %p788 = por %p786, %p787
    %s790 = sadd.s32 %s789, 1
    %p793 = scmp.eq.s32.totalorder %s83, 1
    %p794 = scmp.ne.s32.totalorder %s789, %s791
    %p795 = scmp.eq.s32.totalorder %s83, 0
    %p796 = por %p794, %p795
    %p797 = scmp.ne.s32.totalorder %s789, %s791
    %p798 = scmp.eq.s32.totalorder %s88, 1
    %p799 = por %p797, %p798
    %p800 = scmp.ne.s32.totalorder %s791, %s792
    %p801 = scmp.eq.s32.totalorder %s88, 0
    %p802 = por %p800, %p801
    %p803 = scmp.ne.s32.totalorder %s791, %s792
    %p804 = scmp.eq.s32.totalorder %s89, 1
    %p805 = por %p803, %p804
    %p807 = scmp.ne.s32.totalorder %s792, %s806
    %p808 = scmp.eq.s32.totalorder %s89, 0
    %p809 = por %p807, %p808
    %s811 = sadd.s32 %s810, 1
    %p814 = scmp.eq.s32.totalorder %s83, 1
    %p815 = scmp.ne.s32.totalorder %s810, %s812
    %p816 = scmp.eq.s32.totalorder %s83, 0
    %p817 = por %p815, %p816
    %p818 = scmp.ne.s32.totalorder %s810, %s812
    %p819 = scmp.eq.s32.totalorder %s88, 1
    %p820 = por %p818, %p819
    %p821 = scmp.ne.s32.totalorder %s812, %s813
    %p822 = scmp.eq.s32.totalorder %s88, 0
    %p823 = por %p821, %p822
    %p824 = scmp.ne.s32.totalorder %s812, %s813
    %p825 = scmp.eq.s32.totalorder %s89, 1
    %p826 = por %p824, %p825
    %p828 = scmp.ne.s32.totalorder %s813, %s827
    %p829 = scmp.eq.s32.totalorder %s89, 0
    %p830 = por %p828, %p829
    %s832 = sadd.s32 %s831, 1
    %p835 = scmp.eq.s32.totalorder %s83, 1
    %p836 = scmp.ne.s32.totalorder %s831, %s833
    %p837 = scmp.eq.s32.totalorder %s83, 0
    %p838 = por %p836, %p837
    %p839 = scmp.ne.s32.totalorder %s831, %s833
    %p840 = scmp.eq.s32.totalorder %s88, 1
    %p841 = por %p839, %p840
    %p842 = scmp.ne.s32.totalorder %s833, %s834
    %p843 = scmp.eq.s32.totalorder %s88, 0
    %p844 = por %p842, %p843
    %p845 = scmp.ne.s32.totalorder %s833, %s834
    %p846 = scmp.eq.s32.totalorder %s89, 1
    %p847 = por %p845, %p846
    %p849 = scmp.ne.s32.totalorder %s834, %s848
    %p850 = scmp.eq.s32.totalorder %s89, 0
    %p851 = por %p849, %p850
    %s853 = sadd.s32 %s852, 1
    %p856 = scmp.eq.s32.totalorder %s83, 1
    %p857 = scmp.ne.s32.totalorder %s852, %s854
    %p858 = scmp.eq.s32.totalorder %s83, 0
    %p859 = por %p857, %p858
    %p860 = scmp.ne.s32.totalorder %s852, %s854
    %p861 = scmp.eq.s32.totalorder %s88, 1
    %p862 = por %p860, %p861
    %p863 = scmp.ne.s32.totalorder %s854, %s855
    %p864 = scmp.eq.s32.totalorder %s88, 0
    %p865 = por %p863, %p864
    %p866 = scmp.ne.s32.totalorder %s854, %s855
    %p867 = scmp.eq.s32.totalorder %s89, 1
    %p868 = por %p866, %p867
    %p870 = scmp.ne.s32.totalorder %s855, %s869
    %p871 = scmp.eq.s32.totalorder %s89, 0
    %p872 = por %p870, %p871
    %s874 = sadd.s32 %s873, 1
    %p877 = scmp.eq.s32.totalorder %s83, 1
    %p878 = scmp.ne.s32.totalorder %s873, %s875
    %p879 = scmp.eq.s32.totalorder %s83, 0
    %p880 = por %p878, %p879
    %p881 = scmp.ne.s32.totalorder %s873, %s875
    %p882 = scmp.eq.s32.totalorder %s88, 1
    %p883 = por %p881, %p882
    %p884 = scmp.ne.s32.totalorder %s875, %s876
    %p885 = scmp.eq.s32.totalorder %s88, 0
    %p886 = por %p884, %p885
    %p887 = scmp.ne.s32.totalorder %s875, %s876
    %p888 = scmp.eq.s32.totalorder %s89, 1
    %p889 = por %p887, %p888
    %p891 = scmp.ne.s32.totalorder %s876, %s890
    %p892 = scmp.eq.s32.totalorder %s89, 0
    %p893 = por %p891, %p892
    %s894 = ssub.s32 %s83, %s90
    %p895 = scmp.eq.s32.totalorder %s894, 0
    %s897 = sadd.s32 %s896, 1
    %s898 = scalar_select %p895, %s896, %s897
    %p901 = pneg %p895
    %p902 = scmp.eq.s32.totalorder %s83, 1
    %p903 = por %p901, %p902
    %p904 = scmp.ne.s32.totalorder %s896, %s899
    %p905 = scmp.eq.s32.totalorder %s83, 0
    %p906 = por %p904, %p905
    %p907 = scmp.ne.s32.totalorder %s896, %s899
    %p908 = scmp.eq.s32.totalorder %s88, 1
    %p909 = por %p907, %p908
    %p910 = scmp.ne.s32.totalorder %s899, %s900
    %p911 = scmp.eq.s32.totalorder %s88, 0
    %p912 = por %p910, %p911
    %p913 = scmp.ne.s32.totalorder %s899, %s900
    %p914 = scmp.eq.s32.totalorder %s89, 1
    %p915 = por %p913, %p914
    %p917 = scmp.ne.s32.totalorder %s900, %s916
    %p918 = scmp.eq.s32.totalorder %s89, 0
    %p919 = por %p917, %p918
    %p920 = scmp.le.s32.totalorder 1, %s83
    %p921 = scmp.lt.s32.totalorder %s83, 3
    %p922 = pnand %p920, %p921
    %p923 = pneg %p922
    // Predicated region
    $region9: #{cnn_ae_forward.1} parent=5 // pred_check
      _
    $region10: #{cnn_ae_forward.1} parent=5 // pred_check_branch
      %925 = sbr.rel (%p922) target = $region12
    $region11: #{cnn_ae_forward.1} parent=5 // pred_region
      %s926 = ssub.s32 %s83, 1
      // Predicated region
      $region13: #{cnn_ae_forward.1} parent=11 // pred_check
        %p927 = pneg %p130
      $region14: #{cnn_ae_forward.1} parent=11 // pred_check_branch
        %929 = sbr.rel (%p927) target = $region16
      $region15: #{cnn_ae_forward.1} parent=11 // pred_region
        _
      $region16: #{cnn_ae_forward.1} parent=11 // pred_fallthru
        _
      // Predicated region
      $region17: #{cnn_ae_forward.1} parent=11 // pred_check
        %p930 = pneg %p151
      $region18: #{cnn_ae_forward.1} parent=11 // pred_check_branch
        %932 = sbr.rel (%p930) target = $region20
      $region19: #{cnn_ae_forward.1} parent=11 // pred_region
        _
      $region20: #{cnn_ae_forward.1} parent=11 // pred_fallthru
        _
      // Predicated region
      $region21: #{cnn_ae_forward.1} parent=11 // pred_check
        %p933 = pneg %p172
      $region22: #{cnn_ae_forward.1} parent=11 // pred_check_branch
        %935 = sbr.rel (%p933) target = $region24
      $region23: #{cnn_ae_forward.1} parent=11 // pred_region
        _
      $region24: #{cnn_ae_forward.1} parent=11 // pred_fallthru
        _
      // Predicated region
      $region25: #{cnn_ae_forward.1} parent=11 // pred_check
        %p936 = pneg %p193
      $region26: #{cnn_ae_forward.1} parent=11 // pred_check_branch
        %938 = sbr.rel (%p936) target = $region28
      $region27: #{cnn_ae_forward.1} parent=11 // pred_region
        _
      $region28: #{cnn_ae_forward.1} parent=11 // pred_fallthru
        _
      // Predicated region
      $region29: #{cnn_ae_forward.1} parent=11 // pred_check
        %p939 = pneg %p214
      $region30: #{cnn_ae_forward.1} parent=11 // pred_check_branch
        %941 = sbr.rel (%p939) target = $region32
      $region31: #{cnn_ae_forward.1} parent=11 // pred_region
        _
      $region32: #{cnn_ae_forward.1} parent=11 // pred_fallthru
        _
      // Predicated region
      $region33: #{cnn_ae_forward.1} parent=11 // pred_check
        %p942 = pneg %p235
      $region34: #{cnn_ae_forward.1} parent=11 // pred_check_branch
        %944 = sbr.rel (%p942) target = $region36
      $region35: #{cnn_ae_forward.1} parent=11 // pred_region
        _
      $region36: #{cnn_ae_forward.1} parent=11 // pred_fallthru
        _
      // Predicated region
      $region37: #{cnn_ae_forward.1} parent=11 // pred_check
        %p945 = pneg %p256
      $region38: #{cnn_ae_forward.1} parent=11 // pred_check_branch
        %947 = sbr.rel (%p945) target = $region40
      $region39: #{cnn_ae_forward.1} parent=11 // pred_region
        _
      $region40: #{cnn_ae_forward.1} parent=11 // pred_fallthru
        _
      // Predicated region
      $region41: #{cnn_ae_forward.1} parent=11 // pred_check
        %p948 = pneg %p277
      $region42: #{cnn_ae_forward.1} parent=11 // pred_check_branch
        %950 = sbr.rel (%p948) target = $region44
      $region43: #{cnn_ae_forward.1} parent=11 // pred_region
        _
      $region44: #{cnn_ae_forward.1} parent=11 // pred_fallthru
        _
      // Predicated region
      $region45: #{cnn_ae_forward.1} parent=11 // pred_check
        %p951 = pneg %p298
      $region46: #{cnn_ae_forward.1} parent=11 // pred_check_branch
        %953 = sbr.rel (%p951) target = $region48
      $region47: #{cnn_ae_forward.1} parent=11 // pred_region
        _
      $region48: #{cnn_ae_forward.1} parent=11 // pred_fallthru
        _
      // Predicated region
      $region49: #{cnn_ae_forward.1} parent=11 // pred_check
        %p954 = pneg %p319
      $region50: #{cnn_ae_forward.1} parent=11 // pred_check_branch
        %956 = sbr.rel (%p954) target = $region52
      $region51: #{cnn_ae_forward.1} parent=11 // pred_region
        _
      $region52: #{cnn_ae_forward.1} parent=11 // pred_fallthru
        _
      // Predicated region
      $region53: #{cnn_ae_forward.1} parent=11 // pred_check
        %p957 = pneg %p340
      $region54: #{cnn_ae_forward.1} parent=11 // pred_check_branch
        %959 = sbr.rel (%p957) target = $region56
      $region55: #{cnn_ae_forward.1} parent=11 // pred_region
        _
      $region56: #{cnn_ae_forward.1} parent=11 // pred_fallthru
        _
      // Predicated region
      $region57: #{cnn_ae_forward.1} parent=11 // pred_check
        %p960 = pneg %p361
      $region58: #{cnn_ae_forward.1} parent=11 // pred_check_branch
        %962 = sbr.rel (%p960) target = $region60
      $region59: #{cnn_ae_forward.1} parent=11 // pred_region
        _
      $region60: #{cnn_ae_forward.1} parent=11 // pred_fallthru
        _
      // Predicated region
      $region61: #{cnn_ae_forward.1} parent=11 // pred_check
        %p963 = pneg %p382
      $region62: #{cnn_ae_forward.1} parent=11 // pred_check_branch
        %965 = sbr.rel (%p963) target = $region64
      $region63: #{cnn_ae_forward.1} parent=11 // pred_region
        _
      $region64: #{cnn_ae_forward.1} parent=11 // pred_fallthru
        _
      // Predicated region
      $region65: #{cnn_ae_forward.1} parent=11 // pred_check
        %p966 = pneg %p403
      $region66: #{cnn_ae_forward.1} parent=11 // pred_check_branch
        %968 = sbr.rel (%p966) target = $region68
      $region67: #{cnn_ae_forward.1} parent=11 // pred_region
        _
      $region68: #{cnn_ae_forward.1} parent=11 // pred_fallthru
        _
      // Predicated region
      $region69: #{cnn_ae_forward.1} parent=11 // pred_check
        %p969 = pneg %p424
      $region70: #{cnn_ae_forward.1} parent=11 // pred_check_branch
        %971 = sbr.rel (%p969) target = $region72
      $region71: #{cnn_ae_forward.1} parent=11 // pred_region
        _
      $region72: #{cnn_ae_forward.1} parent=11 // pred_fallthru
        _
      // Predicated region
      $region73: #{cnn_ae_forward.1} parent=11 // pred_check
        %p972 = pneg %p445
      $region74: #{cnn_ae_forward.1} parent=11 // pred_check_branch
        %974 = sbr.rel (%p972) target = $region76
      $region75: #{cnn_ae_forward.1} parent=11 // pred_region
        _
      $region76: #{cnn_ae_forward.1} parent=11 // pred_fallthru
        _
      // Predicated region
      $region77: #{cnn_ae_forward.1} parent=11 // pred_check
        %p975 = pneg %p466
      $region78: #{cnn_ae_forward.1} parent=11 // pred_check_branch
        %977 = sbr.rel (%p975) target = $region80
      $region79: #{cnn_ae_forward.1} parent=11 // pred_region
        _
      $region80: #{cnn_ae_forward.1} parent=11 // pred_fallthru
        _
      // Predicated region
      $region81: #{cnn_ae_forward.1} parent=11 // pred_check
        %p978 = pneg %p487
      $region82: #{cnn_ae_forward.1} parent=11 // pred_check_branch
        %980 = sbr.rel (%p978) target = $region84
      $region83: #{cnn_ae_forward.1} parent=11 // pred_region
        _
      $region84: #{cnn_ae_forward.1} parent=11 // pred_fallthru
        _
      // Predicated region
      $region85: #{cnn_ae_forward.1} parent=11 // pred_check
        %p981 = pneg %p508
      $region86: #{cnn_ae_forward.1} parent=11 // pred_check_branch
        %983 = sbr.rel (%p981) target = $region88
      $region87: #{cnn_ae_forward.1} parent=11 // pred_region
        _
      $region88: #{cnn_ae_forward.1} parent=11 // pred_fallthru
        _
      // Predicated region
      $region89: #{cnn_ae_forward.1} parent=11 // pred_check
        %p984 = pneg %p529
      $region90: #{cnn_ae_forward.1} parent=11 // pred_check_branch
        %986 = sbr.rel (%p984) target = $region92
      $region91: #{cnn_ae_forward.1} parent=11 // pred_region
        _
      $region92: #{cnn_ae_forward.1} parent=11 // pred_fallthru
        _
      // Predicated region
      $region93: #{cnn_ae_forward.1} parent=11 // pred_check
        %p987 = pneg %p550
      $region94: #{cnn_ae_forward.1} parent=11 // pred_check_branch
        %989 = sbr.rel (%p987) target = $region96
      $region95: #{cnn_ae_forward.1} parent=11 // pred_region
        _
      $region96: #{cnn_ae_forward.1} parent=11 // pred_fallthru
        _
      // Predicated region
      $region97: #{cnn_ae_forward.1} parent=11 // pred_check
        %p990 = pneg %p571
      $region98: #{cnn_ae_forward.1} parent=11 // pred_check_branch
        %992 = sbr.rel (%p990) target = $region100
      $region99: #{cnn_ae_forward.1} parent=11 // pred_region
        _
      $region100: #{cnn_ae_forward.1} parent=11 // pred_fallthru
        _
      // Predicated region
      $region101: #{cnn_ae_forward.1} parent=11 // pred_check
        %p993 = pneg %p592
      $region102: #{cnn_ae_forward.1} parent=11 // pred_check_branch
        %995 = sbr.rel (%p993) target = $region104
      $region103: #{cnn_ae_forward.1} parent=11 // pred_region
        _
      $region104: #{cnn_ae_forward.1} parent=11 // pred_fallthru
        _
      // Predicated region
      $region105: #{cnn_ae_forward.1} parent=11 // pred_check
        %p996 = pneg %p613
      $region106: #{cnn_ae_forward.1} parent=11 // pred_check_branch
        %998 = sbr.rel (%p996) target = $region108
      $region107: #{cnn_ae_forward.1} parent=11 // pred_region
        _
      $region108: #{cnn_ae_forward.1} parent=11 // pred_fallthru
        _
      // Predicated region
      $region109: #{cnn_ae_forward.1} parent=11 // pred_check
        %p999 = pneg %p634
      $region110: #{cnn_ae_forward.1} parent=11 // pred_check_branch
        %1001 = sbr.rel (%p999) target = $region112
      $region111: #{cnn_ae_forward.1} parent=11 // pred_region
        _
      $region112: #{cnn_ae_forward.1} parent=11 // pred_fallthru
        _
      // Predicated region
      $region113: #{cnn_ae_forward.1} parent=11 // pred_check
        %p1002 = pneg %p655
      $region114: #{cnn_ae_forward.1} parent=11 // pred_check_branch
        %1004 = sbr.rel (%p1002) target = $region116
      $region115: #{cnn_ae_forward.1} parent=11 // pred_region
        _
      $region116: #{cnn_ae_forward.1} parent=11 // pred_fallthru
        _
      // Predicated region
      $region117: #{cnn_ae_forward.1} parent=11 // pred_check
        %p1005 = pneg %p676
      $region118: #{cnn_ae_forward.1} parent=11 // pred_check_branch
        %1007 = sbr.rel (%p1005) target = $region120
      $region119: #{cnn_ae_forward.1} parent=11 // pred_region
        _
      $region120: #{cnn_ae_forward.1} parent=11 // pred_fallthru
        _
      // Predicated region
      $region121: #{cnn_ae_forward.1} parent=11 // pred_check
        %p1008 = pneg %p697
      $region122: #{cnn_ae_forward.1} parent=11 // pred_check_branch
        %1010 = sbr.rel (%p1008) target = $region124
      $region123: #{cnn_ae_forward.1} parent=11 // pred_region
        _
      $region124: #{cnn_ae_forward.1} parent=11 // pred_fallthru
        _
      // Predicated region
      $region125: #{cnn_ae_forward.1} parent=11 // pred_check
        %p1011 = pneg %p718
      $region126: #{cnn_ae_forward.1} parent=11 // pred_check_branch
        %1013 = sbr.rel (%p1011) target = $region128
      $region127: #{cnn_ae_forward.1} parent=11 // pred_region
        _
      $region128: #{cnn_ae_forward.1} parent=11 // pred_fallthru
        _
      // Predicated region
      $region129: #{cnn_ae_forward.1} parent=11 // pred_check
        %p1014 = pneg %p739
      $region130: #{cnn_ae_forward.1} parent=11 // pred_check_branch
        %1016 = sbr.rel (%p1014) target = $region132
      $region131: #{cnn_ae_forward.1} parent=11 // pred_region
        _
      $region132: #{cnn_ae_forward.1} parent=11 // pred_fallthru
        _
      // Predicated region
      $region133: #{cnn_ae_forward.1} parent=11 // pred_check
        %p1017 = pneg %p760
      $region134: #{cnn_ae_forward.1} parent=11 // pred_check_branch
        %1019 = sbr.rel (%p1017) target = $region136
      $region135: #{cnn_ae_forward.1} parent=11 // pred_region
        _
      $region136: #{cnn_ae_forward.1} parent=11 // pred_fallthru
        _
      // Predicated region
      $region137: #{cnn_ae_forward.1} parent=11 // pred_check
        %p1020 = pneg %p781
      $region138: #{cnn_ae_forward.1} parent=11 // pred_check_branch
        %1022 = sbr.rel (%p1020) target = $region140
      $region139: #{cnn_ae_forward.1} parent=11 // pred_region
        _
      $region140: #{cnn_ae_forward.1} parent=11 // pred_fallthru
        _
      // Predicated region
      $region141: #{cnn_ae_forward.1} parent=11 // pred_check
        %p1023 = pneg %p802
      $region142: #{cnn_ae_forward.1} parent=11 // pred_check_branch
        %1025 = sbr.rel (%p1023) target = $region144
      $region143: #{cnn_ae_forward.1} parent=11 // pred_region
        _
      $region144: #{cnn_ae_forward.1} parent=11 // pred_fallthru
        _
      // Predicated region
      $region145: #{cnn_ae_forward.1} parent=11 // pred_check
        %p1026 = pneg %p823
      $region146: #{cnn_ae_forward.1} parent=11 // pred_check_branch
        %1028 = sbr.rel (%p1026) target = $region148
      $region147: #{cnn_ae_forward.1} parent=11 // pred_region
        _
      $region148: #{cnn_ae_forward.1} parent=11 // pred_fallthru
        _
      // Predicated region
      $region149: #{cnn_ae_forward.1} parent=11 // pred_check
        %p1029 = pneg %p844
      $region150: #{cnn_ae_forward.1} parent=11 // pred_check_branch
        %1031 = sbr.rel (%p1029) target = $region152
      $region151: #{cnn_ae_forward.1} parent=11 // pred_region
        _
      $region152: #{cnn_ae_forward.1} parent=11 // pred_fallthru
        _
      // Predicated region
      $region153: #{cnn_ae_forward.1} parent=11 // pred_check
        %p1032 = pneg %p865
      $region154: #{cnn_ae_forward.1} parent=11 // pred_check_branch
        %1034 = sbr.rel (%p1032) target = $region156
      $region155: #{cnn_ae_forward.1} parent=11 // pred_region
        _
      $region156: #{cnn_ae_forward.1} parent=11 // pred_fallthru
        _
      // Predicated region
      $region157: #{cnn_ae_forward.1} parent=11 // pred_check
        %p1035 = pneg %p886
      $region158: #{cnn_ae_forward.1} parent=11 // pred_check_branch
        %1037 = sbr.rel (%p1035) target = $region160
      $region159: #{cnn_ae_forward.1} parent=11 // pred_region
        _
      $region160: #{cnn_ae_forward.1} parent=11 // pred_fallthru
        _
    $region12: #{cnn_ae_forward.1} parent=5 // pred_fallthru
      _
    %p1038 = scmp.lt.s32.totalorder %s83, 2
    // Predicated region
    $region161: #{cnn_ae_forward.1} parent=5 // pred_check
      %p1039 = pneg %p1038
    $region162: #{cnn_ae_forward.1} parent=5 // pred_check_branch
      %1041 = sbr.rel (%p1039) target = $region164
    $region163: #{cnn_ae_forward.1} parent=5 // pred_region
      // Predicated region
      $region165: #{cnn_ae_forward.1} parent=163 // pred_check
        %p1042 = pneg %p103
      $region166: #{cnn_ae_forward.1} parent=163 // pred_check_branch
        %1044 = sbr.rel (%p1042) target = $region168
      $region167: #{cnn_ae_forward.1} parent=163 // pred_region
        %p1045 = scmp.lt.s32.totalorder %s83, 1
        %s1046 = scalar_select %p1045, %s83, 1
        %s1047 = smul.addr %s1046, 4
        %s1048 = smul.addr %s1047, 4
        %s1049 = scalar_lea.vmem %s1, %s1048
      $region168: #{cnn_ae_forward.1} parent=163 // pred_fallthru
        _
    $region164: #{cnn_ae_forward.1} parent=5 // pred_fallthru
      _
    %p1050 = scmp.le.s32.totalorder 1, %s83
    %p1051 = scmp.lt.s32.totalorder %s83, 3
    %p1052 = pnand %p1050, %p1051
    %p1053 = pneg %p1052
    // Predicated region
    $region169: #{cnn_ae_forward.1} parent=5 // pred_check
      _
    $region170: #{cnn_ae_forward.1} parent=5 // pred_check_branch
      %1055 = sbr.rel (%p1052) target = $region172
    $region171: #{cnn_ae_forward.1} parent=5 // pred_region
      %s1056 = ssub.s32 %s83, 1
      %p1057 = scmp.lt.s32.totalorder %s88, 1
      %s1058 = scalar_select %p1057, %s88, 1
      %s1059 = smul.addr %s1058, 4
      %s1060 = smul.addr %s1059, 4
      %s1061 = scalar_lea.vmem %s1, %s1060
      %p1062 = pneg %p109
      %p1063 = pneg %p106
      %p1064 = pneg %p130
      %p1065 = pneg %p127
      %p1066 = pneg %p151
      %p1067 = pneg %p148
      %p1068 = pneg %p172
      %p1069 = pneg %p169
      %p1070 = pneg %p193
      %p1071 = pneg %p190
      %p1072 = pneg %p214
      %p1073 = pneg %p211
      %p1074 = pneg %p235
      %p1075 = pneg %p232
      %p1076 = pneg %p256
      %p1077 = pneg %p253
      %p1078 = pneg %p277
      %p1079 = pneg %p274
      %p1080 = pneg %p298
      %p1081 = pneg %p295
      %p1082 = pneg %p319
      %p1083 = pneg %p316
      %p1084 = pneg %p340
      %p1085 = pneg %p337
      %p1086 = pneg %p361
      %p1087 = pneg %p358
      %p1088 = pneg %p382
      %p1089 = pneg %p379
      %p1090 = pneg %p403
      %p1091 = pneg %p400
      %p1092 = pneg %p424
      %p1093 = pneg %p421
      %p1094 = pneg %p445
      %p1095 = pneg %p442
      %p1096 = pneg %p466
      %p1097 = pneg %p463
      %p1098 = pneg %p487
      %p1099 = pneg %p484
      %p1100 = pneg %p508
      %p1101 = pneg %p505
      %p1102 = pneg %p529
      %p1103 = pneg %p526
      %p1104 = pneg %p550
      %p1105 = pneg %p547
      %p1106 = pneg %p571
      %p1107 = pneg %p568
      %p1108 = pneg %p592
      %p1109 = pneg %p589
      %p1110 = pneg %p613
      %p1111 = pneg %p610
      %p1112 = pneg %p634
      %p1113 = pneg %p631
      %p1114 = pneg %p655
      %p1115 = pneg %p652
      %p1116 = pneg %p676
      %p1117 = pneg %p673
      %p1118 = pneg %p697
      %p1119 = pneg %p694
      %p1120 = pneg %p718
      %p1121 = pneg %p715
      %p1122 = pneg %p739
      %p1123 = pneg %p736
      %p1124 = pneg %p760
      %p1125 = pneg %p757
      %p1126 = pneg %p781
      %p1127 = pneg %p778
      %p1128 = pneg %p802
      %p1129 = pneg %p799
      %p1130 = pneg %p823
      %p1131 = pneg %p820
      %p1132 = pneg %p844
      %p1133 = pneg %p841
      %p1134 = pneg %p865
      %p1135 = pneg %p862
      %p1136 = pneg %p886
      %p1137 = pneg %p883
      %p1138 = pneg %p912
      %p1139 = pneg %p909
      %p1140 = scmp.lt.s32.totalorder %s88, 1
      %s1141 = scalar_select %p1140, %s88, 1
      %s1142 = smul.addr %s1141, 4
      %s1143 = smul.addr %s1142, 8
      %s1144 = scalar_lea.vmem %s77, %s1143
      %p1145 = scmp.lt.s32.totalorder %s88, 1
      %s1146 = scalar_select %p1145, %s88, 1
      %s1147 = smul.addr %s1146, 4
      %s1148 = smul.addr %s1147, 4
      %s1149 = scalar_lea.vmem %s1, %s1148
      %p1150 = scmp.lt.s32.totalorder %s88, 1
      %s1151 = scalar_select %p1150, %s88, 1
      %s1152 = smul.addr %s1151, 4
      %s1153 = smul.addr %s1152, 8
      %s1154 = scalar_lea.vmem %s77, %s1153
      %v1156 = vld [vmem:[%s1149] sm:$0xf]
      %v1157 = vld [vmem:[%s1149 + $0x4] sm:$0xf]
      %v1158 = vld [vmem:[%s1149 + $0x8] sm:$0xf]
      %v1159 = vld [vmem:[%s1149 + $0xc] sm:$0x7]
      %v1160 = vld [vmem:[%s3] sm:$0xf]
      %v1161 = vld [vmem:[%s3 + $0x4] sm:$0xf]
      %v1162 = vld [vmem:[%s3 + $0x8] sm:$0xf]
      %v1163 = vld [vmem:[%s3 + $0xc] sm:$0xf]
      %v1164 = vld [vmem:[%s3 + $0x10] sm:$0xf]
      %v1165 = vld [vmem:[%s3 + $0x14] sm:$0xf]
      %v1166 = vld [vmem:[%s3 + $0x18] sm:$0xf]
      %v1167 = vld [vmem:[%s3 + $0x1c] sm:$0xf]
      %v1168 = vld [vmem:[%s3 + $0x20] sm:$0xf]
      %v1169 = vld [vmem:[%s3 + $0x24] sm:$0xf]
      %v1170 = vld [vmem:[%s3 + $0x28] sm:$0xf]
      %v1171 = vld [vmem:[%s3 + $0x2c] sm:$0xf]
      %v1172 = vld [vmem:[%s3 + $0x30] sm:$0xf]
      %v1173 = vld [vmem:[%s3 + $0x34] sm:$0xf]
      %v1174 = vld [vmem:[%s3 + $0x38] sm:$0xf]
      %v1190 = vunpack.c.l.b16 %v1160
      %v1191 = vunpack.c.l.b16 %v1161
      %v1192 = vunpack.c.l.b16 %v1162
      %v1193 = vunpack.c.l.b16 %v1163
      %v1194 = vunpack.c.l.b16 %v1164
      %v1195 = vunpack.c.l.b16 %v1165
      %v1196 = vunpack.c.l.b16 %v1166
      %v1197 = vunpack.c.l.b16 %v1167
      %v1198 = vunpack.c.l.b16 %v1168
      %v1199 = vunpack.c.l.b16 %v1169
      %v1200 = vunpack.c.l.b16 %v1170
      %v1201 = vunpack.c.l.b16 %v1171
      %v1202 = vunpack.c.l.b16 %v1172
      %v1203 = vunpack.c.l.b16 %v1173
      %v1204 = vunpack.c.l.b16 %v1174
      %v1205 = vpack.c.b16 %v1191, %v1190
      %v1206 = vpack.c.b16 %v1193, %v1192
      %v1207 = vpack.c.b16 %v1195, %v1194
      %v1208 = vpack.c.b16 %v1197, %v1196
      %v1209 = vpack.c.b16 %v1199, %v1198
      %v1210 = vpack.c.b16 %v1201, %v1200
      %v1211 = vpack.c.b16 %v1203, %v1202
      %v1212 = vpack.c.b16 %v1204, %v1204
      %v1217 = vunpack.c.l.b16 %v1156
      %v1218 = vunpack.c.l.b16 %v1157
      %v1219 = vunpack.c.l.b16 %v1158
      %v1220 = vunpack.c.l.b16 %v1159
      %v1221 = vpack.c.b16 %v1218, %v1217
      %v1222 = vpack.c.b16 %v1220, %v1219
      %vm1224 = vcmask 244736
      %v1226 = vsel %vm1224, %v1205, 0
      %v1229 = vsel %vm1224, %v1206, 0
      %v1232 = vsel %vm1224, %v1207, 0
      %v1235 = vsel %vm1224, %v1208, 0
      %v1238 = vsel %vm1224, %v1209, 0
      %v1241 = vsel %vm1224, %v1210, 0
      %v1244 = vsel %vm1224, %v1211, 0
      %v1247 = vsel %vm1224, %v1212, 0
      %vm1249 = vcmask 1046528
      %v1251 = vsel %vm1249, %v1222, 0
      %1253 = vmatpush.bf16.msra.mxu0 0
      %1254 = vmatpush.bf16.msra.mxu0 0
      %1255 = vmatpush.bf16.msra.mxu0 0
      %1256 = vmatpush.bf16.msra.mxu0 0
      %1257 = vmatpush.bf16.msra.mxu0 0
      %1258 = vmatpush.bf16.msra.mxu0 0
      %1259 = vmatpush.bf16.msra.mxu0 %v1251
      %1260 = vmatpush.bf16.msra.mxu0 %v1221
      %1261 = vmatmul.bf16.gmra.mxu0 %v1226
      %v1262 = vpop.f32.mrf.mxu0
      %v1263 = vadd.f32 0.0, %v1262
      %v1264 = vpop.f32.mrf.mxu0
      %v1265 = vadd.f32 0.0, %v1264
      %1266 = vmatmul.bf16.gmra.mxu0 %v1229
      %v1267 = vpop.f32.mrf.mxu0
      %v1268 = vadd.f32 0.0, %v1267
      %v1269 = vpop.f32.mrf.mxu0
      %v1270 = vadd.f32 0.0, %v1269
      %1271 = vmatmul.bf16.gmra.mxu0 %v1232
      %v1272 = vpop.f32.mrf.mxu0
      %v1273 = vadd.f32 0.0, %v1272
      %v1274 = vpop.f32.mrf.mxu0
      %v1275 = vadd.f32 0.0, %v1274
      %1276 = vmatmul.bf16.gmra.mxu0 %v1235
      %v1277 = vpop.f32.mrf.mxu0
      %v1278 = vadd.f32 0.0, %v1277
      %v1279 = vpop.f32.mrf.mxu0
      %v1280 = vadd.f32 0.0, %v1279
      %1281 = vmatmul.bf16.gmra.mxu0 %v1238
      %v1282 = vpop.f32.mrf.mxu0
      %v1283 = vadd.f32 0.0, %v1282
      %v1284 = vpop.f32.mrf.mxu0
      %v1285 = vadd.f32 0.0, %v1284
      %1286 = vmatmul.bf16.gmra.mxu0 %v1241
      %v1287 = vpop.f32.mrf.mxu0
      %v1288 = vadd.f32 0.0, %v1287
      %v1289 = vpop.f32.mrf.mxu0
      %v1290 = vadd.f32 0.0, %v1289
      %1291 = vmatmul.bf16.gmra.mxu0 %v1244
      %v1292 = vpop.f32.mrf.mxu0
      %v1293 = vadd.f32 0.0, %v1292
      %v1294 = vpop.f32.mrf.mxu0
      %v1295 = vadd.f32 0.0, %v1294
      %1296 = vmatmul.bf16.gmra.mxu0 %v1247
      %v1297 = vpop.f32.mrf.mxu0
      %v1298 = vadd.f32 0.0, %v1297
      %v1299 = vpop.f32.mrf.mxu0
      %1300 = vdwg.mxu0
      %v1301 = vld [vmem:[%s5] sm:$0xff]
      %v1302 = vld [vmem:[%s5 + $0x8] sm:$0xff]
      %v1303 = vld [vmem:[%s5 + $0x10] sm:$0xff]
      %v1304 = vld [vmem:[%s5 + $0x18] sm:$0x3f]
      %s1305 = scalar_lea.vmem %s3, 60
      %v1306 = vld [vmem:[%s1305] sm:$0xf]
      %v1307 = vld [vmem:[%s1305 + $0x4] sm:$0xf]
      %v1308 = vld [vmem:[%s1305 + $0x8] sm:$0xf]
      %v1309 = vld [vmem:[%s1305 + $0xc] sm:$0xf]
      %v1310 = vld [vmem:[%s1305 + $0x10] sm:$0xf]
      %v1311 = vld [vmem:[%s1305 + $0x14] sm:$0xf]
      %v1312 = vld [vmem:[%s1305 + $0x18] sm:$0xf]
      %v1313 = vld [vmem:[%s1305 + $0x1c] sm:$0xf]
      %v1314 = vld [vmem:[%s1305 + $0x20] sm:$0xf]
      %v1315 = vld [vmem:[%s1305 + $0x24] sm:$0xf]
      %v1316 = vld [vmem:[%s1305 + $0x28] sm:$0xf]
      %v1317 = vld [vmem:[%s1305 + $0x2c] sm:$0xf]
      %v1318 = vld [vmem:[%s1305 + $0x30] sm:$0xf]
      %v1319 = vld [vmem:[%s1305 + $0x34] sm:$0xf]
      %v1320 = vld [vmem:[%s1305 + $0x38] sm:$0xf]
      %v1336 = vunpack.c.l.b16 %v1306
      %v1337 = vunpack.c.l.b16 %v1307
      %v1338 = vunpack.c.l.b16 %v1308
      %v1339 = vunpack.c.l.b16 %v1309
      %v1340 = vunpack.c.l.b16 %v1310
      %v1341 = vunpack.c.l.b16 %v1311
      %v1342 = vunpack.c.l.b16 %v1312
      %v1343 = vunpack.c.l.b16 %v1313
      %v1344 = vunpack.c.l.b16 %v1314
      %v1345 = vunpack.c.l.b16 %v1315
      %v1346 = vunpack.c.l.b16 %v1316
      %v1347 = vunpack.c.l.b16 %v1317
      %v1348 = vunpack.c.l.b16 %v1318
      %v1349 = vunpack.c.l.b16 %v1319
      %v1350 = vunpack.c.l.b16 %v1320
      %v1351 = vpack.c.b16 %v1337, %v1336
      %v1352 = vpack.c.b16 %v1339, %v1338
      %v1353 = vpack.c.b16 %v1341, %v1340
      %v1354 = vpack.c.b16 %v1343, %v1342
      %v1355 = vpack.c.b16 %v1345, %v1344
      %v1356 = vpack.c.b16 %v1347, %v1346
      %v1357 = vpack.c.b16 %v1349, %v1348
      %v1358 = vpack.c.b16 %v1350, %v1350
      %v1360 = vsel %vm1224, %v1351, 0
      %v1363 = vsel %vm1224, %v1352, 0
      %v1366 = vsel %vm1224, %v1353, 0
      %v1369 = vsel %vm1224, %v1354, 0
      %v1372 = vsel %vm1224, %v1355, 0
      %v1375 = vsel %vm1224, %v1356, 0
      %v1378 = vsel %vm1224, %v1357, 0
      %v1381 = vsel %vm1224, %v1358, 0
      %1383 = vmatpush.bf16.msra.mxu0 0
      %1384 = vmatpush.bf16.msra.mxu0 0
      %1385 = vmatpush.bf16.msra.mxu0 0
      %1386 = vmatpush.bf16.msra.mxu0 0
      %1387 = vmatpush.bf16.msra.mxu0 0
      %1388 = vmatpush.bf16.msra.mxu0 0
      %1389 = vmatpush.bf16.msra.mxu0 %v1251
      %1390 = vmatpush.bf16.msra.mxu0 %v1221
      %1391 = vmatmul.bf16.gmra.mxu0 %v1360
      %v1392 = vpop.f32.mrf.mxu0
      %v1393 = vadd.f32 0.0, %v1392
      %v1394 = vpop.f32.mrf.mxu0
      %v1395 = vadd.f32 0.0, %v1394
      %1396 = vmatmul.bf16.gmra.mxu0 %v1363
      %v1397 = vpop.f32.mrf.mxu0
      %v1398 = vadd.f32 0.0, %v1397
      %v1399 = vpop.f32.mrf.mxu0
      %v1400 = vadd.f32 0.0, %v1399
      %1401 = vmatmul.bf16.gmra.mxu0 %v1366
      %v1402 = vpop.f32.mrf.mxu0
      %v1403 = vadd.f32 0.0, %v1402
      %v1404 = vpop.f32.mrf.mxu0
      %v1405 = vadd.f32 0.0, %v1404
      %1406 = vmatmul.bf16.gmra.mxu0 %v1369
      %v1407 = vpop.f32.mrf.mxu0
      %v1408 = vadd.f32 0.0, %v1407
      %v1409 = vpop.f32.mrf.mxu0
      %v1410 = vadd.f32 0.0, %v1409
      %1411 = vmatmul.bf16.gmra.mxu0 %v1372
      %v1412 = vpop.f32.mrf.mxu0
      %v1413 = vadd.f32 0.0, %v1412
      %v1414 = vpop.f32.mrf.mxu0
      %v1415 = vadd.f32 0.0, %v1414
      %1416 = vmatmul.bf16.gmra.mxu0 %v1375
      %v1417 = vpop.f32.mrf.mxu0
      %v1418 = vadd.f32 0.0, %v1417
      %v1419 = vpop.f32.mrf.mxu0
      %v1420 = vadd.f32 0.0, %v1419
      %1421 = vmatmul.bf16.gmra.mxu0 %v1378
      %v1422 = vpop.f32.mrf.mxu0
      %v1423 = vadd.f32 0.0, %v1422
      %v1424 = vpop.f32.mrf.mxu0
      %v1425 = vadd.f32 0.0, %v1424
      %1426 = vmatmul.bf16.gmra.mxu0 %v1381
      %v1427 = vpop.f32.mrf.mxu0
      %v1428 = vadd.f32 0.0, %v1427
      %v1429 = vpop.f32.mrf.mxu0
      %1430 = vdwg.mxu0
      %s1431 = scalar_lea.vmem %s5, 32
      %v1432 = vld [vmem:[%s1431] sm:$0xff]
      %v1433 = vld [vmem:[%s1431 + $0x8] sm:$0xff]
      %v1434 = vld [vmem:[%s1431 + $0x10] sm:$0xff]
      %v1435 = vld [vmem:[%s1431 + $0x18] sm:$0x3f]
      %v1437 = vsel %vm1224, %v1393, 0
      %v1440 = vsel %vm1224, %v1395, 0
      %v1443 = vsel %vm1224, %v1398, 0
      %v1446 = vsel %vm1224, %v1400, 0
      %v1449 = vsel %vm1224, %v1403, 0
      %v1452 = vsel %vm1224, %v1405, 0
      %v1455 = vsel %vm1224, %v1408, 0
      %v1458 = vsel %vm1224, %v1410, 0
      %v1461 = vsel %vm1224, %v1413, 0
      %v1464 = vsel %vm1224, %v1415, 0
      %v1467 = vsel %vm1224, %v1418, 0
      %v1470 = vsel %vm1224, %v1420, 0
      %v1473 = vsel %vm1224, %v1423, 0
      %v1476 = vsel %vm1224, %v1425, 0
      %v1479 = vsel %vm1224, %v1428, 0
      %vm1481 = vcmask 1045504
      %v1483 = vsel %vm1481, %v1435, 0
      %1485 = vmatpush.msra.mxu0 0.0
      %1486 = vmatpush.msra.mxu0 0.0
      %1487 = vmatpush.msra.mxu0 0.0
      %1488 = vmatpush.msra.mxu0 0.0
      %1489 = vmatpush.msra.mxu0 0.0
      %1490 = vmatpush.msra.mxu0 0.0
      %1491 = vmatpush.msra.mxu0 0.0
      %1492 = vmatpush.msra.mxu0 0.0
      %1493 = vmatpush.msra.mxu0 0.0
      %1494 = vmatpush.msra.mxu0 0.0
      %1495 = vmatpush.msra.mxu0 0.0
      %1496 = vmatpush.msra.mxu0 0.0
      %1497 = vmatpush.msra.mxu0 %v1483
      %1498 = vmatpush.msra.mxu0 %v1434
      %1499 = vmatpush.msra.mxu0 %v1433
      %1500 = vmatpush.msra.mxu0 %v1432
      %1501 = vmatmul.f32.gmra.mxu0 %v1437
      %v1502 = vpop.f32.mrf.mxu0
      %v1503 = vadd.f32 0.0, %v1502
      %1504 = vmatmul.f32.gmra.mxu0 %v1440
      %v1505 = vpop.f32.mrf.mxu0
      %v1506 = vadd.f32 0.0, %v1505
      %1507 = vmatmul.f32.gmra.mxu0 %v1443
      %v1508 = vpop.f32.mrf.mxu0
      %v1509 = vadd.f32 0.0, %v1508
      %1510 = vmatmul.f32.gmra.mxu0 %v1446
      %v1511 = vpop.f32.mrf.mxu0
      %v1512 = vadd.f32 0.0, %v1511
      %1513 = vmatmul.f32.gmra.mxu0 %v1449
      %v1514 = vpop.f32.mrf.mxu0
      %v1515 = vadd.f32 0.0, %v1514
      %1516 = vmatmul.f32.gmra.mxu0 %v1452
      %v1517 = vpop.f32.mrf.mxu0
      %v1518 = vadd.f32 0.0, %v1517
      %1519 = vmatmul.f32.gmra.mxu0 %v1455
      %v1520 = vpop.f32.mrf.mxu0
      %v1521 = vadd.f32 0.0, %v1520
      %1522 = vmatmul.f32.gmra.mxu0 %v1458
      %v1523 = vpop.f32.mrf.mxu0
      %v1524 = vadd.f32 0.0, %v1523
      %1525 = vmatmul.f32.gmra.mxu0 %v1461
      %v1526 = vpop.f32.mrf.mxu0
      %v1527 = vadd.f32 0.0, %v1526
      %1528 = vmatmul.f32.gmra.mxu0 %v1464
      %v1529 = vpop.f32.mrf.mxu0
      %v1530 = vadd.f32 0.0, %v1529
      %1531 = vmatmul.f32.gmra.mxu0 %v1467
      %v1532 = vpop.f32.mrf.mxu0
      %v1533 = vadd.f32 0.0, %v1532
      %1534 = vmatmul.f32.gmra.mxu0 %v1470
      %v1535 = vpop.f32.mrf.mxu0
      %v1536 = vadd.f32 0.0, %v1535
      %1537 = vmatmul.f32.gmra.mxu0 %v1473
      %v1538 = vpop.f32.mrf.mxu0
      %v1539 = vadd.f32 0.0, %v1538
      %1540 = vmatmul.f32.gmra.mxu0 %v1476
      %v1541 = vpop.f32.mrf.mxu0
      %v1542 = vadd.f32 0.0, %v1541
      %1543 = vmatmul.f32.gmra.mxu0 %v1479
      %v1544 = vpop.f32.mrf.mxu0
      %v1545 = vadd.f32 0.0, %v1544
      %1546 = vdwg.mxu0
      %v1548 = vsel %vm1224, %v1263, 0
      %v1551 = vsel %vm1224, %v1265, 0
      %v1554 = vsel %vm1224, %v1268, 0
      %v1557 = vsel %vm1224, %v1270, 0
      %v1560 = vsel %vm1224, %v1273, 0
      %v1563 = vsel %vm1224, %v1275, 0
      %v1566 = vsel %vm1224, %v1278, 0
      %v1569 = vsel %vm1224, %v1280, 0
      %v1572 = vsel %vm1224, %v1283, 0
      %v1575 = vsel %vm1224, %v1285, 0
      %v1578 = vsel %vm1224, %v1288, 0
      %v1581 = vsel %vm1224, %v1290, 0
      %v1584 = vsel %vm1224, %v1293, 0
      %v1587 = vsel %vm1224, %v1295, 0
      %v1590 = vsel %vm1224, %v1298, 0
      %v1593 = vsel %vm1481, %v1304, 0
      %1595 = vmatpush.msra.mxu0 0.0
      %1596 = vmatpush.msra.mxu0 0.0
      %1597 = vmatpush.msra.mxu0 0.0
      %1598 = vmatpush.msra.mxu0 0.0
      %1599 = vmatpush.msra.mxu0 0.0
      %1600 = vmatpush.msra.mxu0 0.0
      %1601 = vmatpush.msra.mxu0 0.0
      %1602 = vmatpush.msra.mxu0 0.0
      %1603 = vmatpush.msra.mxu0 0.0
      %1604 = vmatpush.msra.mxu0 0.0
      %1605 = vmatpush.msra.mxu0 0.0
      %1606 = vmatpush.msra.mxu0 0.0
      %1607 = vmatpush.msra.mxu0 %v1593
      %1608 = vmatpush.msra.mxu0 %v1303
      %1609 = vmatpush.msra.mxu0 %v1302
      %1610 = vmatpush.msra.mxu0 %v1301
      %1611 = vmatmul.f32.gmra.mxu0 %v1548
      %v1612 = vpop.f32.mrf.mxu0
      %v1613 = vadd.f32 %v1503, %v1612
      %1614 = vmatmul.f32.gmra.mxu0 %v1551
      %v1615 = vpop.f32.mrf.mxu0
      %v1616 = vadd.f32 %v1506, %v1615
      %1617 = vmatmul.f32.gmra.mxu0 %v1554
      %v1618 = vpop.f32.mrf.mxu0
      %v1619 = vadd.f32 %v1509, %v1618
      %1620 = vmatmul.f32.gmra.mxu0 %v1557
      %v1621 = vpop.f32.mrf.mxu0
      %v1622 = vadd.f32 %v1512, %v1621
      %1623 = vmatmul.f32.gmra.mxu0 %v1560
      %v1624 = vpop.f32.mrf.mxu0
      %v1625 = vadd.f32 %v1515, %v1624
      %1626 = vmatmul.f32.gmra.mxu0 %v1563
      %v1627 = vpop.f32.mrf.mxu0
      %v1628 = vadd.f32 %v1518, %v1627
      %1629 = vmatmul.f32.gmra.mxu0 %v1566
      %v1630 = vpop.f32.mrf.mxu0
      %v1631 = vadd.f32 %v1521, %v1630
      %1632 = vmatmul.f32.gmra.mxu0 %v1569
      %v1633 = vpop.f32.mrf.mxu0
      %v1634 = vadd.f32 %v1524, %v1633
      %1635 = vmatmul.f32.gmra.mxu0 %v1572
      %v1636 = vpop.f32.mrf.mxu0
      %v1637 = vadd.f32 %v1527, %v1636
      %1638 = vmatmul.f32.gmra.mxu0 %v1575
      %v1639 = vpop.f32.mrf.mxu0
      %v1640 = vadd.f32 %v1530, %v1639
      %1641 = vmatmul.f32.gmra.mxu0 %v1578
      %v1642 = vpop.f32.mrf.mxu0
      %v1643 = vadd.f32 %v1533, %v1642
      %1644 = vmatmul.f32.gmra.mxu0 %v1581
      %v1645 = vpop.f32.mrf.mxu0
      %v1646 = vadd.f32 %v1536, %v1645
      %1647 = vmatmul.f32.gmra.mxu0 %v1584
      %v1648 = vpop.f32.mrf.mxu0
      %v1649 = vadd.f32 %v1539, %v1648
      %1650 = vmatmul.f32.gmra.mxu0 %v1587
      %v1651 = vpop.f32.mrf.mxu0
      %v1652 = vadd.f32 %v1542, %v1651
      %1653 = vmatmul.f32.gmra.mxu0 %v1590
      %v1654 = vpop.f32.mrf.mxu0
      %v1655 = vadd.f32 %v1545, %v1654
      %1656 = vdwg.mxu0
      %s1657 = scalar_lea.vmem %s3, 120
      %v1658 = vld [vmem:[%s1657] sm:$0xf]
      %v1659 = vld [vmem:[%s1657 + $0x4] sm:$0xf]
      %v1660 = vld [vmem:[%s1657 + $0x8] sm:$0xf]
      %v1661 = vld [vmem:[%s1657 + $0xc] sm:$0xf]
      %v1662 = vld [vmem:[%s1657 + $0x10] sm:$0xf]
      %v1663 = vld [vmem:[%s1657 + $0x14] sm:$0xf]
      %v1664 = vld [vmem:[%s1657 + $0x18] sm:$0xf]
      %v1665 = vld [vmem:[%s1657 + $0x1c] sm:$0xf]
      %v1666 = vld [vmem:[%s1657 + $0x20] sm:$0xf]
      %v1667 = vld [vmem:[%s1657 + $0x24] sm:$0xf]
      %v1668 = vld [vmem:[%s1657 + $0x28] sm:$0xf]
      %v1669 = vld [vmem:[%s1657 + $0x2c] sm:$0xf]
      %v1670 = vld [vmem:[%s1657 + $0x30] sm:$0xf]
      %v1671 = vld [vmem:[%s1657 + $0x34] sm:$0xf]
      %v1672 = vld [vmem:[%s1657 + $0x38] sm:$0xf]
      %v1688 = vunpack.c.l.b16 %v1658
      %v1689 = vunpack.c.l.b16 %v1659
      %v1690 = vunpack.c.l.b16 %v1660
      %v1691 = vunpack.c.l.b16 %v1661
      %v1692 = vunpack.c.l.b16 %v1662
      %v1693 = vunpack.c.l.b16 %v1663
      %v1694 = vunpack.c.l.b16 %v1664
      %v1695 = vunpack.c.l.b16 %v1665
      %v1696 = vunpack.c.l.b16 %v1666
      %v1697 = vunpack.c.l.b16 %v1667
      %v1698 = vunpack.c.l.b16 %v1668
      %v1699 = vunpack.c.l.b16 %v1669
      %v1700 = vunpack.c.l.b16 %v1670
      %v1701 = vunpack.c.l.b16 %v1671
      %v1702 = vunpack.c.l.b16 %v1672
      %v1703 = vpack.c.b16 %v1689, %v1688
      %v1704 = vpack.c.b16 %v1691, %v1690
      %v1705 = vpack.c.b16 %v1693, %v1692
      %v1706 = vpack.c.b16 %v1695, %v1694
      %v1707 = vpack.c.b16 %v1697, %v1696
      %v1708 = vpack.c.b16 %v1699, %v1698
      %v1709 = vpack.c.b16 %v1701, %v1700
      %v1710 = vpack.c.b16 %v1702, %v1702
      %v1712 = vsel %vm1224, %v1703, 0
      %v1715 = vsel %vm1224, %v1704, 0
      %v1718 = vsel %vm1224, %v1705, 0
      %v1721 = vsel %vm1224, %v1706, 0
      %v1724 = vsel %vm1224, %v1707, 0
      %v1727 = vsel %vm1224, %v1708, 0
      %v1730 = vsel %vm1224, %v1709, 0
      %v1733 = vsel %vm1224, %v1710, 0
      %1735 = vmatpush.bf16.msra.mxu0 0
      %1736 = vmatpush.bf16.msra.mxu0 0
      %1737 = vmatpush.bf16.msra.mxu0 0
      %1738 = vmatpush.bf16.msra.mxu0 0
      %1739 = vmatpush.bf16.msra.mxu0 0
      %1740 = vmatpush.bf16.msra.mxu0 0
      %1741 = vmatpush.bf16.msra.mxu0 %v1251
      %1742 = vmatpush.bf16.msra.mxu0 %v1221
      %1743 = vmatmul.bf16.gmra.mxu0 %v1712
      %v1744 = vpop.f32.mrf.mxu0
      %v1745 = vadd.f32 0.0, %v1744
      %v1746 = vpop.f32.mrf.mxu0
      %v1747 = vadd.f32 0.0, %v1746
      %1748 = vmatmul.bf16.gmra.mxu0 %v1715
      %v1749 = vpop.f32.mrf.mxu0
      %v1750 = vadd.f32 0.0, %v1749
      %v1751 = vpop.f32.mrf.mxu0
      %v1752 = vadd.f32 0.0, %v1751
      %1753 = vmatmul.bf16.gmra.mxu0 %v1718
      %v1754 = vpop.f32.mrf.mxu0
      %v1755 = vadd.f32 0.0, %v1754
      %v1756 = vpop.f32.mrf.mxu0
      %v1757 = vadd.f32 0.0, %v1756
      %1758 = vmatmul.bf16.gmra.mxu0 %v1721
      %v1759 = vpop.f32.mrf.mxu0
      %v1760 = vadd.f32 0.0, %v1759
      %v1761 = vpop.f32.mrf.mxu0
      %v1762 = vadd.f32 0.0, %v1761
      %1763 = vmatmul.bf16.gmra.mxu0 %v1724
      %v1764 = vpop.f32.mrf.mxu0
      %v1765 = vadd.f32 0.0, %v1764
      %v1766 = vpop.f32.mrf.mxu0
      %v1767 = vadd.f32 0.0, %v1766
      %1768 = vmatmul.bf16.gmra.mxu0 %v1727
      %v1769 = vpop.f32.mrf.mxu0
      %v1770 = vadd.f32 0.0, %v1769
      %v1771 = vpop.f32.mrf.mxu0
      %v1772 = vadd.f32 0.0, %v1771
      %1773 = vmatmul.bf16.gmra.mxu0 %v1730
      %v1774 = vpop.f32.mrf.mxu0
      %v1775 = vadd.f32 0.0, %v1774
      %v1776 = vpop.f32.mrf.mxu0
      %v1777 = vadd.f32 0.0, %v1776
      %1778 = vmatmul.bf16.gmra.mxu0 %v1733
      %v1779 = vpop.f32.mrf.mxu0
      %v1780 = vadd.f32 0.0, %v1779
      %v1781 = vpop.f32.mrf.mxu0
      %1782 = vdwg.mxu0
      %s1783 = scalar_lea.vmem %s5, 64
      %v1784 = vld [vmem:[%s1783] sm:$0xff]
      %v1785 = vld [vmem:[%s1783 + $0x8] sm:$0xff]
      %v1786 = vld [vmem:[%s1783 + $0x10] sm:$0xff]
      %v1787 = vld [vmem:[%s1783 + $0x18] sm:$0x3f]
      %v1789 = vsel %vm1224, %v1745, 0
      %v1792 = vsel %vm1224, %v1747, 0
      %v1795 = vsel %vm1224, %v1750, 0
      %v1798 = vsel %vm1224, %v1752, 0
      %v1801 = vsel %vm1224, %v1755, 0
      %v1804 = vsel %vm1224, %v1757, 0
      %v1807 = vsel %vm1224, %v1760, 0
      %v1810 = vsel %vm1224, %v1762, 0
      %v1813 = vsel %vm1224, %v1765, 0
      %v1816 = vsel %vm1224, %v1767, 0
      %v1819 = vsel %vm1224, %v1770, 0
      %v1822 = vsel %vm1224, %v1772, 0
      %v1825 = vsel %vm1224, %v1775, 0
      %v1828 = vsel %vm1224, %v1777, 0
      %v1831 = vsel %vm1224, %v1780, 0
      %v1834 = vsel %vm1481, %v1787, 0
      %1836 = vmatpush.msra.mxu0 0.0
      %1837 = vmatpush.msra.mxu0 0.0
      %1838 = vmatpush.msra.mxu0 0.0
      %1839 = vmatpush.msra.mxu0 0.0
      %1840 = vmatpush.msra.mxu0 0.0
      %1841 = vmatpush.msra.mxu0 0.0
      %1842 = vmatpush.msra.mxu0 0.0
      %1843 = vmatpush.msra.mxu0 0.0
      %1844 = vmatpush.msra.mxu0 0.0
      %1845 = vmatpush.msra.mxu0 0.0
      %1846 = vmatpush.msra.mxu0 0.0
      %1847 = vmatpush.msra.mxu0 0.0
      %1848 = vmatpush.msra.mxu0 %v1834
      %1849 = vmatpush.msra.mxu0 %v1786
      %1850 = vmatpush.msra.mxu0 %v1785
      %1851 = vmatpush.msra.mxu0 %v1784
      %1852 = vmatmul.f32.gmra.mxu0 %v1789
      %v1853 = vpop.f32.mrf.mxu0
      %v1854 = vadd.f32 0.0, %v1853
      %1855 = vmatmul.f32.gmra.mxu0 %v1792
      %v1856 = vpop.f32.mrf.mxu0
      %v1857 = vadd.f32 0.0, %v1856
      %1858 = vmatmul.f32.gmra.mxu0 %v1795
      %v1859 = vpop.f32.mrf.mxu0
      %v1860 = vadd.f32 0.0, %v1859
      %1861 = vmatmul.f32.gmra.mxu0 %v1798
      %v1862 = vpop.f32.mrf.mxu0
      %v1863 = vadd.f32 0.0, %v1862
      %1864 = vmatmul.f32.gmra.mxu0 %v1801
      %v1865 = vpop.f32.mrf.mxu0
      %v1866 = vadd.f32 0.0, %v1865
      %1867 = vmatmul.f32.gmra.mxu0 %v1804
      %v1868 = vpop.f32.mrf.mxu0
      %v1869 = vadd.f32 0.0, %v1868
      %1870 = vmatmul.f32.gmra.mxu0 %v1807
      %v1871 = vpop.f32.mrf.mxu0
      %v1872 = vadd.f32 0.0, %v1871
      %1873 = vmatmul.f32.gmra.mxu0 %v1810
      %v1874 = vpop.f32.mrf.mxu0
      %v1875 = vadd.f32 0.0, %v1874
      %1876 = vmatmul.f32.gmra.mxu0 %v1813
      %v1877 = vpop.f32.mrf.mxu0
      %v1878 = vadd.f32 0.0, %v1877
      %1879 = vmatmul.f32.gmra.mxu0 %v1816
      %v1880 = vpop.f32.mrf.mxu0
      %v1881 = vadd.f32 0.0, %v1880
      %1882 = vmatmul.f32.gmra.mxu0 %v1819
      %v1883 = vpop.f32.mrf.mxu0
      %v1884 = vadd.f32 0.0, %v1883
      %1885 = vmatmul.f32.gmra.mxu0 %v1822
      %v1886 = vpop.f32.mrf.mxu0
      %v1887 = vadd.f32 0.0, %v1886
      %1888 = vmatmul.f32.gmra.mxu0 %v1825
      %v1889 = vpop.f32.mrf.mxu0
      %v1890 = vadd.f32 0.0, %v1889
      %1891 = vmatmul.f32.gmra.mxu0 %v1828
      %v1892 = vpop.f32.mrf.mxu0
      %v1893 = vadd.f32 0.0, %v1892
      %1894 = vmatmul.f32.gmra.mxu0 %v1831
      %v1895 = vpop.f32.mrf.mxu0
      %v1896 = vadd.f32 0.0, %v1895
      %1897 = vdwg.mxu0
      %v1898 = vadd.f32 %v1613, %v1854
      %v1899 = vadd.f32 %v1616, %v1857
      %v1900 = vadd.f32 %v1619, %v1860
      %v1901 = vadd.f32 %v1622, %v1863
      %v1902 = vadd.f32 %v1625, %v1866
      %v1903 = vadd.f32 %v1628, %v1869
      %v1904 = vadd.f32 %v1631, %v1872
      %v1905 = vadd.f32 %v1634, %v1875
      %v1906 = vadd.f32 %v1637, %v1878
      %v1907 = vadd.f32 %v1640, %v1881
      %v1908 = vadd.f32 %v1643, %v1884
      %v1909 = vadd.f32 %v1646, %v1887
      %v1910 = vadd.f32 %v1649, %v1890
      %v1911 = vadd.f32 %v1652, %v1893
      %v1912 = vadd.f32 %v1655, %v1896
      %v1913 = vld [vmem:[%s7] sm:$0xff]
      %v1914 = vld [vmem:[%s7 + $0x8] sm:$0xff]
      %v1915 = vld [vmem:[%s7 + $0x10] sm:$0xff]
      %v1916 = vld [vmem:[%s7 + $0x18] sm:$0xff]
      %v1917 = vld [vmem:[%s7 + $0x20] sm:$0xff]
      %v1918 = vld [vmem:[%s7 + $0x28] sm:$0xff]
      %v1919 = vld [vmem:[%s7 + $0x30] sm:$0xff]
      %v1920 = vld [vmem:[%s7 + $0x38] sm:$0xff]
      %v1921 = vld [vmem:[%s7 + $0x40] sm:$0xff]
      %v1922 = vld [vmem:[%s7 + $0x48] sm:$0xff]
      %v1923 = vld [vmem:[%s7 + $0x50] sm:$0xff]
      %v1924 = vld [vmem:[%s7 + $0x58] sm:$0xff]
      %v1925 = vld [vmem:[%s7 + $0x60] sm:$0xff]
      %v1926 = vld [vmem:[%s7 + $0x68] sm:$0xff]
      %v1927 = vld [vmem:[%s7 + $0x70] sm:$0xff]
      %1929 = vset.pattern.permute.xlu0 0
      %1930 = vperm.xlu0 %1929, %v1913
      %v1931 = vpop.permute.xlu0 %1930
      %1934 = vset.pattern.permute.xlu0 0
      %1935 = vperm.xlu0 %1934, %v1914
      %v1936 = vpop.permute.xlu0 %1935
      %1939 = vset.pattern.permute.xlu0 0
      %1940 = vperm.xlu0 %1939, %v1915
      %v1941 = vpop.permute.xlu0 %1940
      %1944 = vset.pattern.permute.xlu0 0
      %1945 = vperm.xlu0 %1944, %v1916
      %v1946 = vpop.permute.xlu0 %1945
      %1949 = vset.pattern.permute.xlu0 0
      %1950 = vperm.xlu0 %1949, %v1917
      %v1951 = vpop.permute.xlu0 %1950
      %1954 = vset.pattern.permute.xlu0 0
      %1955 = vperm.xlu0 %1954, %v1918
      %v1956 = vpop.permute.xlu0 %1955
      %1959 = vset.pattern.permute.xlu0 0
      %1960 = vperm.xlu0 %1959, %v1919
      %v1961 = vpop.permute.xlu0 %1960
      %1964 = vset.pattern.permute.xlu0 0
      %1965 = vperm.xlu0 %1964, %v1920
      %v1966 = vpop.permute.xlu0 %1965
      %1969 = vset.pattern.permute.xlu0 0
      %1970 = vperm.xlu0 %1969, %v1921
      %v1971 = vpop.permute.xlu0 %1970
      %1974 = vset.pattern.permute.xlu0 0
      %1975 = vperm.xlu0 %1974, %v1922
      %v1976 = vpop.permute.xlu0 %1975
      %1979 = vset.pattern.permute.xlu0 0
      %1980 = vperm.xlu0 %1979, %v1923
      %v1981 = vpop.permute.xlu0 %1980
      %1984 = vset.pattern.permute.xlu0 0
      %1985 = vperm.xlu0 %1984, %v1924
      %v1986 = vpop.permute.xlu0 %1985
      %1989 = vset.pattern.permute.xlu0 0
      %1990 = vperm.xlu0 %1989, %v1925
      %v1991 = vpop.permute.xlu0 %1990
      %1994 = vset.pattern.permute.xlu0 0
      %1995 = vperm.xlu0 %1994, %v1926
      %v1996 = vpop.permute.xlu0 %1995
      %1999 = vset.pattern.permute.xlu0 0
      %2000 = vperm.xlu0 %1999, %v1927
      %v2001 = vpop.permute.xlu0 %2000
      %v2003 = vadd.f32 %v1898, %v1931
      %v2004 = vadd.f32 %v1899, %v1936
      %v2005 = vadd.f32 %v1900, %v1941
      %v2006 = vadd.f32 %v1901, %v1946
      %v2007 = vadd.f32 %v1902, %v1951
      %v2008 = vadd.f32 %v1903, %v1956
      %v2009 = vadd.f32 %v1904, %v1961
      %v2010 = vadd.f32 %v1905, %v1966
      %v2011 = vadd.f32 %v1906, %v1971
      %v2012 = vadd.f32 %v1907, %v1976
      %v2013 = vadd.f32 %v1908, %v1981
      %v2014 = vadd.f32 %v1909, %v1986
      %v2015 = vadd.f32 %v1910, %v1991
      %v2016 = vadd.f32 %v1911, %v1996
      %v2017 = vadd.f32 %v1912, %v2001
      %v2018 = vmax.f32 %v2003, 0.0
      %v2019 = vmax.f32 %v2004, 0.0
      %v2020 = vmax.f32 %v2005, 0.0
      %v2021 = vmax.f32 %v2006, 0.0
      %v2022 = vmax.f32 %v2007, 0.0
      %v2023 = vmax.f32 %v2008, 0.0
      %v2024 = vmax.f32 %v2009, 0.0
      %v2025 = vmax.f32 %v2010, 0.0
      %v2026 = vmax.f32 %v2011, 0.0
      %v2027 = vmax.f32 %v2012, 0.0
      %v2028 = vmax.f32 %v2013, 0.0
      %v2029 = vmax.f32 %v2014, 0.0
      %v2030 = vmax.f32 %v2015, 0.0
      %v2031 = vmax.f32 %v2016, 0.0
      %v2032 = vmax.f32 %v2017, 0.0
      %v2033 = vld [vmem:[%s9] sm:$0xff]
      %v2034 = vld [vmem:[%s9 + $0x8] sm:$0xff]
      %v2035 = vld [vmem:[%s9 + $0x10] sm:$0xff]
      %v2036 = vld [vmem:[%s9 + $0x18] sm:$0xff]
      %v2037 = vld [vmem:[%s9 + $0x20] sm:$0xff]
      %v2038 = vld [vmem:[%s9 + $0x28] sm:$0xff]
      %v2039 = vld [vmem:[%s9 + $0x30] sm:$0xff]
      %v2040 = vld [vmem:[%s9 + $0x38] sm:$0xff]
      %vm2041 = vcmask 982016
      %v2043 = vsel %vm2041, %v2033, 0
      %v2046 = vsel %vm2041, %v2034, 0
      %v2049 = vsel %vm2041, %v2035, 0
      %v2052 = vsel %vm2041, %v2036, 0
      %v2055 = vsel %vm2041, %v2037, 0
      %v2058 = vsel %vm2041, %v2038, 0
      %v2061 = vsel %vm2041, %v2039, 0
      %v2064 = vsel %vm2041, %v2040, 0
      %2066 = vmatpush.msra.mxu0 0.0
      %2067 = vmatpush.msra.mxu0 %v2032
      %2068 = vmatpush.msra.mxu0 %v2031
      %2069 = vmatpush.msra.mxu0 %v2030
      %2070 = vmatpush.msra.mxu0 %v2029
      %2071 = vmatpush.msra.mxu0 %v2028
      %2072 = vmatpush.msra.mxu0 %v2027
      %2073 = vmatpush.msra.mxu0 %v2026
      %2074 = vmatpush.msra.mxu0 %v2025
      %2075 = vmatpush.msra.mxu0 %v2024
      %2076 = vmatpush.msra.mxu0 %v2023
      %2077 = vmatpush.msra.mxu0 %v2022
      %2078 = vmatpush.msra.mxu0 %v2021
      %2079 = vmatpush.msra.mxu0 %v2020
      %2080 = vmatpush.msra.mxu0 %v2019
      %2081 = vmatpush.msra.mxu0 %v2018
      %2082 = vmatmul.f32.gmra.mxu0 %v2043
      %v2083 = vpop.f32.mrf.mxu0
      %v2084 = vadd.f32 0.0, %v2083
      %2085 = vmatmul.f32.gmra.mxu0 %v2046
      %v2086 = vpop.f32.mrf.mxu0
      %v2087 = vadd.f32 0.0, %v2086
      %2088 = vmatmul.f32.gmra.mxu0 %v2049
      %v2089 = vpop.f32.mrf.mxu0
      %v2090 = vadd.f32 0.0, %v2089
      %2091 = vmatmul.f32.gmra.mxu0 %v2052
      %v2092 = vpop.f32.mrf.mxu0
      %v2093 = vadd.f32 0.0, %v2092
      %2094 = vmatmul.f32.gmra.mxu0 %v2055
      %v2095 = vpop.f32.mrf.mxu0
      %v2096 = vadd.f32 0.0, %v2095
      %2097 = vmatmul.f32.gmra.mxu0 %v2058
      %v2098 = vpop.f32.mrf.mxu0
      %v2099 = vadd.f32 0.0, %v2098
      %2100 = vmatmul.f32.gmra.mxu0 %v2061
      %v2101 = vpop.f32.mrf.mxu0
      %v2102 = vadd.f32 0.0, %v2101
      %2103 = vmatmul.f32.gmra.mxu0 %v2064
      %v2104 = vpop.f32.mrf.mxu0
      %v2105 = vadd.f32 0.0, %v2104
      %2106 = vdwg.mxu0
      %v2107 = vld [vmem:[%s11] sm:$0xff]
      %v2108 = vld [vmem:[%s11 + $0x8] sm:$0xff]
      %v2109 = vld [vmem:[%s11 + $0x10] sm:$0xff]
      %v2110 = vld [vmem:[%s11 + $0x18] sm:$0x3f]
      %v2112 = vsel %vm1224, %v2084, 0
      %v2115 = vsel %vm1224, %v2087, 0
      %v2118 = vsel %vm1224, %v2090, 0
      %v2121 = vsel %vm1224, %v2093, 0
      %v2124 = vsel %vm1224, %v2096, 0
      %v2127 = vsel %vm1224, %v2099, 0
      %v2130 = vsel %vm1224, %v2102, 0
      %v2133 = vsel %vm1224, %v2105, 0
      %v2136 = vsel %vm1481, %v2110, 0
      %2138 = vmatpush.msra.mxu0 0.0
      %2139 = vmatpush.msra.mxu0 0.0
      %2140 = vmatpush.msra.mxu0 0.0
      %2141 = vmatpush.msra.mxu0 0.0
      %2142 = vmatpush.msra.mxu0 0.0
      %2143 = vmatpush.msra.mxu0 0.0
      %2144 = vmatpush.msra.mxu0 0.0
      %2145 = vmatpush.msra.mxu0 0.0
      %2146 = vmatpush.msra.mxu0 0.0
      %2147 = vmatpush.msra.mxu0 0.0
      %2148 = vmatpush.msra.mxu0 0.0
      %2149 = vmatpush.msra.mxu0 0.0
      %2150 = vmatpush.msra.mxu0 %v2136
      %2151 = vmatpush.msra.mxu0 %v2109
      %2152 = vmatpush.msra.mxu0 %v2108
      %2153 = vmatpush.msra.mxu0 %v2107
      %2154 = vmatmul.f32.gmra.mxu0 %v2112
      %v2155 = vpop.f32.mrf.mxu0
      %v2156 = vadd.f32 0.0, %v2155
      %2157 = vmatmul.f32.gmra.mxu0 %v2115
      %v2158 = vpop.f32.mrf.mxu0
      %v2159 = vadd.f32 0.0, %v2158
      %2160 = vmatmul.f32.gmra.mxu0 %v2118
      %v2161 = vpop.f32.mrf.mxu0
      %v2162 = vadd.f32 0.0, %v2161
      %2163 = vmatmul.f32.gmra.mxu0 %v2121
      %v2164 = vpop.f32.mrf.mxu0
      %v2165 = vadd.f32 0.0, %v2164
      %2166 = vmatmul.f32.gmra.mxu0 %v2124
      %v2167 = vpop.f32.mrf.mxu0
      %v2168 = vadd.f32 0.0, %v2167
      %2169 = vmatmul.f32.gmra.mxu0 %v2127
      %v2170 = vpop.f32.mrf.mxu0
      %v2171 = vadd.f32 0.0, %v2170
      %2172 = vmatmul.f32.gmra.mxu0 %v2130
      %v2173 = vpop.f32.mrf.mxu0
      %v2174 = vadd.f32 0.0, %v2173
      %2175 = vmatmul.f32.gmra.mxu0 %v2133
      %v2176 = vpop.f32.mrf.mxu0
      %v2177 = vadd.f32 0.0, %v2176
      %2178 = vdwg.mxu0
      %s2179 = scalar_lea.vmem %s11, 32
      %v2180 = vld [vmem:[%s2179] sm:$0xff]
      %v2181 = vld [vmem:[%s2179 + $0x8] sm:$0xff]
      %v2182 = vld [vmem:[%s2179 + $0x10] sm:$0xff]
      %v2183 = vld [vmem:[%s2179 + $0x18] sm:$0x3f]
      %v2185 = vsel %vm1481, %v2183, 0
      %2187 = vmatpush.msra.mxu0 0.0
      %2188 = vmatpush.msra.mxu0 0.0
      %2189 = vmatpush.msra.mxu0 0.0
      %2190 = vmatpush.msra.mxu0 0.0
      %2191 = vmatpush.msra.mxu0 0.0
      %2192 = vmatpush.msra.mxu0 0.0
      %2193 = vmatpush.msra.mxu0 0.0
      %2194 = vmatpush.msra.mxu0 0.0
      %2195 = vmatpush.msra.mxu0 0.0
      %2196 = vmatpush.msra.mxu0 0.0
      %2197 = vmatpush.msra.mxu0 0.0
      %2198 = vmatpush.msra.mxu0 0.0
      %2199 = vmatpush.msra.mxu0 %v2185
      %2200 = vmatpush.msra.mxu0 %v2182
      %2201 = vmatpush.msra.mxu0 %v2181
      %2202 = vmatpush.msra.mxu0 %v2180
      %2203 = vmatmul.f32.gmra.mxu0 %v2112
      %v2204 = vpop.f32.mrf.mxu0
      %v2205 = vadd.f32 0.0, %v2204
      %2206 = vmatmul.f32.gmra.mxu0 %v2115
      %v2207 = vpop.f32.mrf.mxu0
      %v2208 = vadd.f32 0.0, %v2207
      %2209 = vmatmul.f32.gmra.mxu0 %v2118
      %v2210 = vpop.f32.mrf.mxu0
      %v2211 = vadd.f32 0.0, %v2210
      %2212 = vmatmul.f32.gmra.mxu0 %v2121
      %v2213 = vpop.f32.mrf.mxu0
      %v2214 = vadd.f32 0.0, %v2213
      %2215 = vmatmul.f32.gmra.mxu0 %v2124
      %v2216 = vpop.f32.mrf.mxu0
      %v2217 = vadd.f32 0.0, %v2216
      %2218 = vmatmul.f32.gmra.mxu0 %v2127
      %v2219 = vpop.f32.mrf.mxu0
      %v2220 = vadd.f32 0.0, %v2219
      %2221 = vmatmul.f32.gmra.mxu0 %v2130
      %v2222 = vpop.f32.mrf.mxu0
      %v2223 = vadd.f32 0.0, %v2222
      %2224 = vmatmul.f32.gmra.mxu0 %v2133
      %v2225 = vpop.f32.mrf.mxu0
      %v2226 = vadd.f32 0.0, %v2225
      %2227 = vdwg.mxu0
      %s2228 = scalar_lea.vmem %s9, 64
      %v2229 = vld [vmem:[%s2228] sm:$0xff]
      %v2230 = vld [vmem:[%s2228 + $0x8] sm:$0xff]
      %v2231 = vld [vmem:[%s2228 + $0x10] sm:$0xff]
      %v2232 = vld [vmem:[%s2228 + $0x18] sm:$0xff]
      %v2233 = vld [vmem:[%s2228 + $0x20] sm:$0xff]
      %v2234 = vld [vmem:[%s2228 + $0x28] sm:$0xff]
      %v2235 = vld [vmem:[%s2228 + $0x30] sm:$0xff]
      %v2236 = vld [vmem:[%s2228 + $0x38] sm:$0xff]
      %v2238 = vsel %vm2041, %v2229, 0
      %v2241 = vsel %vm2041, %v2230, 0
      %v2244 = vsel %vm2041, %v2231, 0
      %v2247 = vsel %vm2041, %v2232, 0
      %v2250 = vsel %vm2041, %v2233, 0
      %v2253 = vsel %vm2041, %v2234, 0
      %v2256 = vsel %vm2041, %v2235, 0
      %v2259 = vsel %vm2041, %v2236, 0
      %2261 = vmatpush.msra.mxu0 0.0
      %2262 = vmatpush.msra.mxu0 %v2032
      %2263 = vmatpush.msra.mxu0 %v2031
      %2264 = vmatpush.msra.mxu0 %v2030
      %2265 = vmatpush.msra.mxu0 %v2029
      %2266 = vmatpush.msra.mxu0 %v2028
      %2267 = vmatpush.msra.mxu0 %v2027
      %2268 = vmatpush.msra.mxu0 %v2026
      %2269 = vmatpush.msra.mxu0 %v2025
      %2270 = vmatpush.msra.mxu0 %v2024
      %2271 = vmatpush.msra.mxu0 %v2023
      %2272 = vmatpush.msra.mxu0 %v2022
      %2273 = vmatpush.msra.mxu0 %v2021
      %2274 = vmatpush.msra.mxu0 %v2020
      %2275 = vmatpush.msra.mxu0 %v2019
      %2276 = vmatpush.msra.mxu0 %v2018
      %2277 = vmatmul.f32.gmra.mxu0 %v2238
      %v2278 = vpop.f32.mrf.mxu0
      %v2279 = vadd.f32 0.0, %v2278
      %2280 = vmatmul.f32.gmra.mxu0 %v2241
      %v2281 = vpop.f32.mrf.mxu0
      %v2282 = vadd.f32 0.0, %v2281
      %2283 = vmatmul.f32.gmra.mxu0 %v2244
      %v2284 = vpop.f32.mrf.mxu0
      %v2285 = vadd.f32 0.0, %v2284
      %2286 = vmatmul.f32.gmra.mxu0 %v2247
      %v2287 = vpop.f32.mrf.mxu0
      %v2288 = vadd.f32 0.0, %v2287
      %2289 = vmatmul.f32.gmra.mxu0 %v2250
      %v2290 = vpop.f32.mrf.mxu0
      %v2291 = vadd.f32 0.0, %v2290
      %2292 = vmatmul.f32.gmra.mxu0 %v2253
      %v2293 = vpop.f32.mrf.mxu0
      %v2294 = vadd.f32 0.0, %v2293
      %2295 = vmatmul.f32.gmra.mxu0 %v2256
      %v2296 = vpop.f32.mrf.mxu0
      %v2297 = vadd.f32 0.0, %v2296
      %2298 = vmatmul.f32.gmra.mxu0 %v2259
      %v2299 = vpop.f32.mrf.mxu0
      %v2300 = vadd.f32 0.0, %v2299
      %2301 = vdwg.mxu0
      %v2303 = vsel %vm1224, %v2279, 0
      %v2306 = vsel %vm1224, %v2282, 0
      %v2309 = vsel %vm1224, %v2285, 0
      %v2312 = vsel %vm1224, %v2288, 0
      %v2315 = vsel %vm1224, %v2291, 0
      %v2318 = vsel %vm1224, %v2294, 0
      %v2321 = vsel %vm1224, %v2297, 0
      %v2324 = vsel %vm1224, %v2300, 0
      %2326 = vmatpush.msra.mxu0 0.0
      %2327 = vmatpush.msra.mxu0 0.0
      %2328 = vmatpush.msra.mxu0 0.0
      %2329 = vmatpush.msra.mxu0 0.0
      %2330 = vmatpush.msra.mxu0 0.0
      %2331 = vmatpush.msra.mxu0 0.0
      %2332 = vmatpush.msra.mxu0 0.0
      %2333 = vmatpush.msra.mxu0 0.0
      %2334 = vmatpush.msra.mxu0 0.0
      %2335 = vmatpush.msra.mxu0 0.0
      %2336 = vmatpush.msra.mxu0 0.0
      %2337 = vmatpush.msra.mxu0 0.0
      %2338 = vmatpush.msra.mxu0 %v2136
      %2339 = vmatpush.msra.mxu0 %v2109
      %2340 = vmatpush.msra.mxu0 %v2108
      %2341 = vmatpush.msra.mxu0 %v2107
      %2342 = vmatmul.f32.gmra.mxu0 %v2303
      %v2343 = vpop.f32.mrf.mxu0
      %v2344 = vadd.f32 0.0, %v2343
      %2345 = vmatmul.f32.gmra.mxu0 %v2306
      %v2346 = vpop.f32.mrf.mxu0
      %v2347 = vadd.f32 0.0, %v2346
      %2348 = vmatmul.f32.gmra.mxu0 %v2309
      %v2349 = vpop.f32.mrf.mxu0
      %v2350 = vadd.f32 0.0, %v2349
      %2351 = vmatmul.f32.gmra.mxu0 %v2312
      %v2352 = vpop.f32.mrf.mxu0
      %v2353 = vadd.f32 0.0, %v2352
      %2354 = vmatmul.f32.gmra.mxu0 %v2315
      %v2355 = vpop.f32.mrf.mxu0
      %v2356 = vadd.f32 0.0, %v2355
      %2357 = vmatmul.f32.gmra.mxu0 %v2318
      %v2358 = vpop.f32.mrf.mxu0
      %v2359 = vadd.f32 0.0, %v2358
      %2360 = vmatmul.f32.gmra.mxu0 %v2321
      %v2361 = vpop.f32.mrf.mxu0
      %v2362 = vadd.f32 0.0, %v2361
      %2363 = vmatmul.f32.gmra.mxu0 %v2324
      %v2364 = vpop.f32.mrf.mxu0
      %v2365 = vadd.f32 0.0, %v2364
      %2366 = vdwg.mxu0
      %2367 = vmatpush.msra.mxu0 0.0
      %2368 = vmatpush.msra.mxu0 0.0
      %2369 = vmatpush.msra.mxu0 0.0
      %2370 = vmatpush.msra.mxu0 0.0
      %2371 = vmatpush.msra.mxu0 0.0
      %2372 = vmatpush.msra.mxu0 0.0
      %2373 = vmatpush.msra.mxu0 0.0
      %2374 = vmatpush.msra.mxu0 0.0
      %2375 = vmatpush.msra.mxu0 0.0
      %2376 = vmatpush.msra.mxu0 0.0
      %2377 = vmatpush.msra.mxu0 0.0
      %2378 = vmatpush.msra.mxu0 0.0
      %2379 = vmatpush.msra.mxu0 %v2185
      %2380 = vmatpush.msra.mxu0 %v2182
      %2381 = vmatpush.msra.mxu0 %v2181
      %2382 = vmatpush.msra.mxu0 %v2180
      %2383 = vmatmul.f32.gmra.mxu0 %v2303
      %v2384 = vpop.f32.mrf.mxu0
      %v2385 = vadd.f32 0.0, %v2384
      %2386 = vmatmul.f32.gmra.mxu0 %v2306
      %v2387 = vpop.f32.mrf.mxu0
      %v2388 = vadd.f32 0.0, %v2387
      %2389 = vmatmul.f32.gmra.mxu0 %v2309
      %v2390 = vpop.f32.mrf.mxu0
      %v2391 = vadd.f32 0.0, %v2390
      %2392 = vmatmul.f32.gmra.mxu0 %v2312
      %v2393 = vpop.f32.mrf.mxu0
      %v2394 = vadd.f32 0.0, %v2393
      %2395 = vmatmul.f32.gmra.mxu0 %v2315
      %v2396 = vpop.f32.mrf.mxu0
      %v2397 = vadd.f32 0.0, %v2396
      %2398 = vmatmul.f32.gmra.mxu0 %v2318
      %v2399 = vpop.f32.mrf.mxu0
      %v2400 = vadd.f32 0.0, %v2399
      %2401 = vmatmul.f32.gmra.mxu0 %v2321
      %v2402 = vpop.f32.mrf.mxu0
      %v2403 = vadd.f32 0.0, %v2402
      %2404 = vmatmul.f32.gmra.mxu0 %v2324
      %v2405 = vpop.f32.mrf.mxu0
      %v2406 = vadd.f32 0.0, %v2405
      %2407 = vdwg.mxu0
      %v2408 = vmax.f32 %v2156, %v2205
      %v2409 = vmax.f32 %v2159, %v2208
      %v2410 = vmax.f32 %v2162, %v2211
      %v2411 = vmax.f32 %v2165, %v2214
      %v2412 = vmax.f32 %v2168, %v2217
      %v2413 = vmax.f32 %v2171, %v2220
      %v2414 = vmax.f32 %v2174, %v2223
      %v2415 = vmax.f32 %v2177, %v2226
      %v2416 = vmax.f32 %v2344, %v2385
      %v2417 = vmax.f32 %v2347, %v2388
      %v2418 = vmax.f32 %v2350, %v2391
      %v2419 = vmax.f32 %v2353, %v2394
      %v2420 = vmax.f32 %v2356, %v2397
      %v2421 = vmax.f32 %v2359, %v2400
      %v2422 = vmax.f32 %v2362, %v2403
      %v2423 = vmax.f32 %v2365, %v2406
      %v2424 = vmax.f32 %v2408, %v2416
      %v2425 = vmax.f32 %v2409, %v2417
      %v2426 = vmax.f32 %v2410, %v2418
      %v2427 = vmax.f32 %v2411, %v2419
      %v2428 = vmax.f32 %v2412, %v2420
      %v2429 = vmax.f32 %v2413, %v2421
      %v2430 = vmax.f32 %v2414, %v2422
      %v2431 = vmax.f32 %v2415, %v2423
      %v2432 = vpack.c.bf16 %v2425, %v2424
      %v2433 = vpack.c.bf16 %v2427, %v2426
      %v2434 = vpack.c.bf16 %v2429, %v2428
      %v2435 = vpack.c.bf16 %v2431, %v2430
      %v2436 = vld [vmem:[%s13] sm:$0xf]
      %v2437 = vld [vmem:[%s13 + $0x4] sm:$0xf]
      %v2438 = vld [vmem:[%s13 + $0x8] sm:$0xf]
      %v2439 = vld [vmem:[%s13 + $0xc] sm:$0xf]
      %v2440 = vld [vmem:[%s13 + $0x10] sm:$0xf]
      %v2441 = vld [vmem:[%s13 + $0x14] sm:$0xf]
      %v2442 = vld [vmem:[%s13 + $0x18] sm:$0xf]
      %v2443 = vld [vmem:[%s13 + $0x1c] sm:$0xf]
      %v2444 = vld [vmem:[%s13 + $0x20] sm:$0xf]
      %v2445 = vld [vmem:[%s13 + $0x24] sm:$0xf]
      %v2446 = vld [vmem:[%s13 + $0x28] sm:$0xf]
      %v2447 = vld [vmem:[%s13 + $0x2c] sm:$0xf]
      %v2448 = vld [vmem:[%s13 + $0x30] sm:$0xf]
      %v2449 = vld [vmem:[%s13 + $0x34] sm:$0xf]
      %v2450 = vld [vmem:[%s13 + $0x38] sm:$0xf]
      %v2451 = vld [vmem:[%s13 + $0x3c] sm:$0xf]
      %v2468 = vunpack.c.l.b16 %v2436
      %v2469 = vunpack.c.l.b16 %v2437
      %v2470 = vunpack.c.l.b16 %v2438
      %v2471 = vunpack.c.l.b16 %v2439
      %v2472 = vunpack.c.l.b16 %v2440
      %v2473 = vunpack.c.l.b16 %v2441
      %v2474 = vunpack.c.l.b16 %v2442
      %v2475 = vunpack.c.l.b16 %v2443
      %v2476 = vunpack.c.l.b16 %v2444
      %v2477 = vunpack.c.l.b16 %v2445
      %v2478 = vunpack.c.l.b16 %v2446
      %v2479 = vunpack.c.l.b16 %v2447
      %v2480 = vunpack.c.l.b16 %v2448
      %v2481 = vunpack.c.l.b16 %v2449
      %v2482 = vunpack.c.l.b16 %v2450
      %v2483 = vunpack.c.l.b16 %v2451
      %v2484 = vpack.c.b16 %v2469, %v2468
      %v2485 = vpack.c.b16 %v2471, %v2470
      %v2486 = vpack.c.b16 %v2473, %v2472
      %v2487 = vpack.c.b16 %v2475, %v2474
      %v2488 = vpack.c.b16 %v2477, %v2476
      %v2489 = vpack.c.b16 %v2479, %v2478
      %v2490 = vpack.c.b16 %v2481, %v2480
      %v2491 = vpack.c.b16 %v2483, %v2482
      %vm2492 = vcmask 523264
      %v2494 = vsel %vm2492, %v2484, 0
      %v2497 = vsel %vm2492, %v2485, 0
      %v2500 = vsel %vm2492, %v2486, 0
      %v2503 = vsel %vm2492, %v2487, 0
      %v2506 = vsel %vm2492, %v2488, 0
      %v2509 = vsel %vm2492, %v2489, 0
      %v2512 = vsel %vm2492, %v2490, 0
      %v2515 = vsel %vm2492, %v2491, 0
      %2517 = vmatpush.bf16.msra.mxu0 0
      %2518 = vmatpush.bf16.msra.mxu0 0
      %2519 = vmatpush.bf16.msra.mxu0 0
      %2520 = vmatpush.bf16.msra.mxu0 0
      %2521 = vmatpush.bf16.msra.mxu0 %v2435
      %2522 = vmatpush.bf16.msra.mxu0 %v2434
      %2523 = vmatpush.bf16.msra.mxu0 %v2433
      %2524 = vmatpush.bf16.msra.mxu0 %v2432
      %2525 = vmatmul.bf16.gmra.mxu0 %v2494
      %v2526 = vpop.f32.mrf.mxu0
      %v2527 = vadd.f32 0.0, %v2526
      %v2528 = vpop.f32.mrf.mxu0
      %v2529 = vadd.f32 0.0, %v2528
      %2530 = vmatmul.bf16.gmra.mxu0 %v2497
      %v2531 = vpop.f32.mrf.mxu0
      %v2532 = vadd.f32 0.0, %v2531
      %v2533 = vpop.f32.mrf.mxu0
      %v2534 = vadd.f32 0.0, %v2533
      %2535 = vmatmul.bf16.gmra.mxu0 %v2500
      %v2536 = vpop.f32.mrf.mxu0
      %v2537 = vadd.f32 0.0, %v2536
      %v2538 = vpop.f32.mrf.mxu0
      %v2539 = vadd.f32 0.0, %v2538
      %2540 = vmatmul.bf16.gmra.mxu0 %v2503
      %v2541 = vpop.f32.mrf.mxu0
      %v2542 = vadd.f32 0.0, %v2541
      %v2543 = vpop.f32.mrf.mxu0
      %v2544 = vadd.f32 0.0, %v2543
      %2545 = vmatmul.bf16.gmra.mxu0 %v2506
      %v2546 = vpop.f32.mrf.mxu0
      %v2547 = vadd.f32 0.0, %v2546
      %v2548 = vpop.f32.mrf.mxu0
      %v2549 = vadd.f32 0.0, %v2548
      %2550 = vmatmul.bf16.gmra.mxu0 %v2509
      %v2551 = vpop.f32.mrf.mxu0
      %v2552 = vadd.f32 0.0, %v2551
      %v2553 = vpop.f32.mrf.mxu0
      %v2554 = vadd.f32 0.0, %v2553
      %2555 = vmatmul.bf16.gmra.mxu0 %v2512
      %v2556 = vpop.f32.mrf.mxu0
      %v2557 = vadd.f32 0.0, %v2556
      %v2558 = vpop.f32.mrf.mxu0
      %v2559 = vadd.f32 0.0, %v2558
      %2560 = vmatmul.bf16.gmra.mxu0 %v2515
      %v2561 = vpop.f32.mrf.mxu0
      %v2562 = vadd.f32 0.0, %v2561
      %v2563 = vpop.f32.mrf.mxu0
      %v2564 = vadd.f32 0.0, %v2563
      %2565 = vdwg.mxu0
      %v2566 = vld [vmem:[%s15] sm:$0xff]
      %v2567 = vld [vmem:[%s15 + $0x8] sm:$0xff]
      %s2568 = scalar_lea.vmem %s13, 64
      %v2569 = vld [vmem:[%s2568] sm:$0xf]
      %v2570 = vld [vmem:[%s2568 + $0x4] sm:$0xf]
      %v2571 = vld [vmem:[%s2568 + $0x8] sm:$0xf]
      %v2572 = vld [vmem:[%s2568 + $0xc] sm:$0xf]
      %v2573 = vld [vmem:[%s2568 + $0x10] sm:$0xf]
      %v2574 = vld [vmem:[%s2568 + $0x14] sm:$0xf]
      %v2575 = vld [vmem:[%s2568 + $0x18] sm:$0xf]
      %v2576 = vld [vmem:[%s2568 + $0x1c] sm:$0xf]
      %v2577 = vld [vmem:[%s2568 + $0x20] sm:$0xf]
      %v2578 = vld [vmem:[%s2568 + $0x24] sm:$0xf]
      %v2579 = vld [vmem:[%s2568 + $0x28] sm:$0xf]
      %v2580 = vld [vmem:[%s2568 + $0x2c] sm:$0xf]
      %v2581 = vld [vmem:[%s2568 + $0x30] sm:$0xf]
      %v2582 = vld [vmem:[%s2568 + $0x34] sm:$0xf]
      %v2583 = vld [vmem:[%s2568 + $0x38] sm:$0xf]
      %v2584 = vld [vmem:[%s2568 + $0x3c] sm:$0xf]
      %v2601 = vunpack.c.l.b16 %v2569
      %v2602 = vunpack.c.l.b16 %v2570
      %v2603 = vunpack.c.l.b16 %v2571
      %v2604 = vunpack.c.l.b16 %v2572
      %v2605 = vunpack.c.l.b16 %v2573
      %v2606 = vunpack.c.l.b16 %v2574
      %v2607 = vunpack.c.l.b16 %v2575
      %v2608 = vunpack.c.l.b16 %v2576
      %v2609 = vunpack.c.l.b16 %v2577
      %v2610 = vunpack.c.l.b16 %v2578
      %v2611 = vunpack.c.l.b16 %v2579
      %v2612 = vunpack.c.l.b16 %v2580
      %v2613 = vunpack.c.l.b16 %v2581
      %v2614 = vunpack.c.l.b16 %v2582
      %v2615 = vunpack.c.l.b16 %v2583
      %v2616 = vunpack.c.l.b16 %v2584
      %v2617 = vpack.c.b16 %v2602, %v2601
      %v2618 = vpack.c.b16 %v2604, %v2603
      %v2619 = vpack.c.b16 %v2606, %v2605
      %v2620 = vpack.c.b16 %v2608, %v2607
      %v2621 = vpack.c.b16 %v2610, %v2609
      %v2622 = vpack.c.b16 %v2612, %v2611
      %v2623 = vpack.c.b16 %v2614, %v2613
      %v2624 = vpack.c.b16 %v2616, %v2615
      %v2626 = vsel %vm2492, %v2617, 0
      %v2629 = vsel %vm2492, %v2618, 0
      %v2632 = vsel %vm2492, %v2619, 0
      %v2635 = vsel %vm2492, %v2620, 0
      %v2638 = vsel %vm2492, %v2621, 0
      %v2641 = vsel %vm2492, %v2622, 0
      %v2644 = vsel %vm2492, %v2623, 0
      %v2647 = vsel %vm2492, %v2624, 0
      %2649 = vmatpush.bf16.msra.mxu0 0
      %2650 = vmatpush.bf16.msra.mxu0 0
      %2651 = vmatpush.bf16.msra.mxu0 0
      %2652 = vmatpush.bf16.msra.mxu0 0
      %2653 = vmatpush.bf16.msra.mxu0 %v2435
      %2654 = vmatpush.bf16.msra.mxu0 %v2434
      %2655 = vmatpush.bf16.msra.mxu0 %v2433
      %2656 = vmatpush.bf16.msra.mxu0 %v2432
      %2657 = vmatmul.bf16.gmra.mxu0 %v2626
      %v2658 = vpop.f32.mrf.mxu0
      %v2659 = vadd.f32 0.0, %v2658
      %v2660 = vpop.f32.mrf.mxu0
      %v2661 = vadd.f32 0.0, %v2660
      %2662 = vmatmul.bf16.gmra.mxu0 %v2629
      %v2663 = vpop.f32.mrf.mxu0
      %v2664 = vadd.f32 0.0, %v2663
      %v2665 = vpop.f32.mrf.mxu0
      %v2666 = vadd.f32 0.0, %v2665
      %2667 = vmatmul.bf16.gmra.mxu0 %v2632
      %v2668 = vpop.f32.mrf.mxu0
      %v2669 = vadd.f32 0.0, %v2668
      %v2670 = vpop.f32.mrf.mxu0
      %v2671 = vadd.f32 0.0, %v2670
      %2672 = vmatmul.bf16.gmra.mxu0 %v2635
      %v2673 = vpop.f32.mrf.mxu0
      %v2674 = vadd.f32 0.0, %v2673
      %v2675 = vpop.f32.mrf.mxu0
      %v2676 = vadd.f32 0.0, %v2675
      %2677 = vmatmul.bf16.gmra.mxu0 %v2638
      %v2678 = vpop.f32.mrf.mxu0
      %v2679 = vadd.f32 0.0, %v2678
      %v2680 = vpop.f32.mrf.mxu0
      %v2681 = vadd.f32 0.0, %v2680
      %2682 = vmatmul.bf16.gmra.mxu0 %v2641
      %v2683 = vpop.f32.mrf.mxu0
      %v2684 = vadd.f32 0.0, %v2683
      %v2685 = vpop.f32.mrf.mxu0
      %v2686 = vadd.f32 0.0, %v2685
      %2687 = vmatmul.bf16.gmra.mxu0 %v2644
      %v2688 = vpop.f32.mrf.mxu0
      %v2689 = vadd.f32 0.0, %v2688
      %v2690 = vpop.f32.mrf.mxu0
      %v2691 = vadd.f32 0.0, %v2690
      %2692 = vmatmul.bf16.gmra.mxu0 %v2647
      %v2693 = vpop.f32.mrf.mxu0
      %v2694 = vadd.f32 0.0, %v2693
      %v2695 = vpop.f32.mrf.mxu0
      %v2696 = vadd.f32 0.0, %v2695
      %2697 = vdwg.mxu0
      %s2698 = scalar_lea.vmem %s15, 16
      %v2699 = vld [vmem:[%s2698] sm:$0xff]
      %v2700 = vld [vmem:[%s2698 + $0x8] sm:$0xff]
      %vm2701 = vcmask 130048
      %v2703 = vsel %vm2701, %v2659, 0
      %v2706 = vsel %vm2701, %v2661, 0
      %v2709 = vsel %vm2701, %v2664, 0
      %v2712 = vsel %vm2701, %v2666, 0
      %v2715 = vsel %vm2701, %v2669, 0
      %v2718 = vsel %vm2701, %v2671, 0
      %v2721 = vsel %vm2701, %v2674, 0
      %v2724 = vsel %vm2701, %v2676, 0
      %v2727 = vsel %vm2701, %v2679, 0
      %v2730 = vsel %vm2701, %v2681, 0
      %v2733 = vsel %vm2701, %v2684, 0
      %v2736 = vsel %vm2701, %v2686, 0
      %v2739 = vsel %vm2701, %v2689, 0
      %v2742 = vsel %vm2701, %v2691, 0
      %v2745 = vsel %vm2701, %v2694, 0
      %v2748 = vsel %vm2701, %v2696, 0
      %2750 = vmatpush.msra.mxu0 0.0
      %2751 = vmatpush.msra.mxu0 0.0
      %2752 = vmatpush.msra.mxu0 0.0
      %2753 = vmatpush.msra.mxu0 0.0
      %2754 = vmatpush.msra.mxu0 0.0
      %2755 = vmatpush.msra.mxu0 0.0
      %2756 = vmatpush.msra.mxu0 0.0
      %2757 = vmatpush.msra.mxu0 0.0
      %2758 = vmatpush.msra.mxu0 0.0
      %2759 = vmatpush.msra.mxu0 0.0
      %2760 = vmatpush.msra.mxu0 0.0
      %2761 = vmatpush.msra.mxu0 0.0
      %2762 = vmatpush.msra.mxu0 0.0
      %2763 = vmatpush.msra.mxu0 0.0
      %2764 = vmatpush.msra.mxu0 %v2700
      %2765 = vmatpush.msra.mxu0 %v2699
      %2766 = vmatmul.f32.gmra.mxu0 %v2703
      %v2767 = vpop.f32.mrf.mxu0
      %v2768 = vadd.f32 0.0, %v2767
      %2769 = vmatmul.f32.gmra.mxu0 %v2706
      %v2770 = vpop.f32.mrf.mxu0
      %v2771 = vadd.f32 0.0, %v2770
      %2772 = vmatmul.f32.gmra.mxu0 %v2709
      %v2773 = vpop.f32.mrf.mxu0
      %v2774 = vadd.f32 0.0, %v2773
      %2775 = vmatmul.f32.gmra.mxu0 %v2712
      %v2776 = vpop.f32.mrf.mxu0
      %v2777 = vadd.f32 0.0, %v2776
      %2778 = vmatmul.f32.gmra.mxu0 %v2715
      %v2779 = vpop.f32.mrf.mxu0
      %v2780 = vadd.f32 0.0, %v2779
      %2781 = vmatmul.f32.gmra.mxu0 %v2718
      %v2782 = vpop.f32.mrf.mxu0
      %v2783 = vadd.f32 0.0, %v2782
      %2784 = vmatmul.f32.gmra.mxu0 %v2721
      %v2785 = vpop.f32.mrf.mxu0
      %v2786 = vadd.f32 0.0, %v2785
      %2787 = vmatmul.f32.gmra.mxu0 %v2724
      %v2788 = vpop.f32.mrf.mxu0
      %v2789 = vadd.f32 0.0, %v2788
      %2790 = vmatmul.f32.gmra.mxu0 %v2727
      %v2791 = vpop.f32.mrf.mxu0
      %v2792 = vadd.f32 0.0, %v2791
      %2793 = vmatmul.f32.gmra.mxu0 %v2730
      %v2794 = vpop.f32.mrf.mxu0
      %v2795 = vadd.f32 0.0, %v2794
      %2796 = vmatmul.f32.gmra.mxu0 %v2733
      %v2797 = vpop.f32.mrf.mxu0
      %v2798 = vadd.f32 0.0, %v2797
      %2799 = vmatmul.f32.gmra.mxu0 %v2736
      %v2800 = vpop.f32.mrf.mxu0
      %v2801 = vadd.f32 0.0, %v2800
      %2802 = vmatmul.f32.gmra.mxu0 %v2739
      %v2803 = vpop.f32.mrf.mxu0
      %v2804 = vadd.f32 0.0, %v2803
      %2805 = vmatmul.f32.gmra.mxu0 %v2742
      %v2806 = vpop.f32.mrf.mxu0
      %v2807 = vadd.f32 0.0, %v2806
      %2808 = vmatmul.f32.gmra.mxu0 %v2745
      %v2809 = vpop.f32.mrf.mxu0
      %v2810 = vadd.f32 0.0, %v2809
      %2811 = vmatmul.f32.gmra.mxu0 %v2748
      %v2812 = vpop.f32.mrf.mxu0
      %v2813 = vadd.f32 0.0, %v2812
      %2814 = vdwg.mxu0
      %v2816 = vsel %vm2701, %v2527, 0
      %v2819 = vsel %vm2701, %v2529, 0
      %v2822 = vsel %vm2701, %v2532, 0
      %v2825 = vsel %vm2701, %v2534, 0
      %v2828 = vsel %vm2701, %v2537, 0
      %v2831 = vsel %vm2701, %v2539, 0
      %v2834 = vsel %vm2701, %v2542, 0
      %v2837 = vsel %vm2701, %v2544, 0
      %v2840 = vsel %vm2701, %v2547, 0
      %v2843 = vsel %vm2701, %v2549, 0
      %v2846 = vsel %vm2701, %v2552, 0
      %v2849 = vsel %vm2701, %v2554, 0
      %v2852 = vsel %vm2701, %v2557, 0
      %v2855 = vsel %vm2701, %v2559, 0
      %v2858 = vsel %vm2701, %v2562, 0
      %v2861 = vsel %vm2701, %v2564, 0
      %2863 = vmatpush.msra.mxu0 0.0
      %2864 = vmatpush.msra.mxu0 0.0
      %2865 = vmatpush.msra.mxu0 0.0
      %2866 = vmatpush.msra.mxu0 0.0
      %2867 = vmatpush.msra.mxu0 0.0
      %2868 = vmatpush.msra.mxu0 0.0
      %2869 = vmatpush.msra.mxu0 0.0
      %2870 = vmatpush.msra.mxu0 0.0
      %2871 = vmatpush.msra.mxu0 0.0
      %2872 = vmatpush.msra.mxu0 0.0
      %2873 = vmatpush.msra.mxu0 0.0
      %2874 = vmatpush.msra.mxu0 0.0
      %2875 = vmatpush.msra.mxu0 0.0
      %2876 = vmatpush.msra.mxu0 0.0
      %2877 = vmatpush.msra.mxu0 %v2567
      %2878 = vmatpush.msra.mxu0 %v2566
      %2879 = vmatmul.f32.gmra.mxu0 %v2816
      %v2880 = vpop.f32.mrf.mxu0
      %v2881 = vadd.f32 %v2768, %v2880
      %2882 = vmatmul.f32.gmra.mxu0 %v2819
      %v2883 = vpop.f32.mrf.mxu0
      %v2884 = vadd.f32 %v2771, %v2883
      %2885 = vmatmul.f32.gmra.mxu0 %v2822
      %v2886 = vpop.f32.mrf.mxu0
      %v2887 = vadd.f32 %v2774, %v2886
      %2888 = vmatmul.f32.gmra.mxu0 %v2825
      %v2889 = vpop.f32.mrf.mxu0
      %v2890 = vadd.f32 %v2777, %v2889
      %2891 = vmatmul.f32.gmra.mxu0 %v2828
      %v2892 = vpop.f32.mrf.mxu0
      %v2893 = vadd.f32 %v2780, %v2892
      %2894 = vmatmul.f32.gmra.mxu0 %v2831
      %v2895 = vpop.f32.mrf.mxu0
      %v2896 = vadd.f32 %v2783, %v2895
      %2897 = vmatmul.f32.gmra.mxu0 %v2834
      %v2898 = vpop.f32.mrf.mxu0
      %v2899 = vadd.f32 %v2786, %v2898
      %2900 = vmatmul.f32.gmra.mxu0 %v2837
      %v2901 = vpop.f32.mrf.mxu0
      %v2902 = vadd.f32 %v2789, %v2901
      %2903 = vmatmul.f32.gmra.mxu0 %v2840
      %v2904 = vpop.f32.mrf.mxu0
      %v2905 = vadd.f32 %v2792, %v2904
      %2906 = vmatmul.f32.gmra.mxu0 %v2843
      %v2907 = vpop.f32.mrf.mxu0
      %v2908 = vadd.f32 %v2795, %v2907
      %2909 = vmatmul.f32.gmra.mxu0 %v2846
      %v2910 = vpop.f32.mrf.mxu0
      %v2911 = vadd.f32 %v2798, %v2910
      %2912 = vmatmul.f32.gmra.mxu0 %v2849
      %v2913 = vpop.f32.mrf.mxu0
      %v2914 = vadd.f32 %v2801, %v2913
      %2915 = vmatmul.f32.gmra.mxu0 %v2852
      %v2916 = vpop.f32.mrf.mxu0
      %v2917 = vadd.f32 %v2804, %v2916
      %2918 = vmatmul.f32.gmra.mxu0 %v2855
      %v2919 = vpop.f32.mrf.mxu0
      %v2920 = vadd.f32 %v2807, %v2919
      %2921 = vmatmul.f32.gmra.mxu0 %v2858
      %v2922 = vpop.f32.mrf.mxu0
      %v2923 = vadd.f32 %v2810, %v2922
      %2924 = vmatmul.f32.gmra.mxu0 %v2861
      %v2925 = vpop.f32.mrf.mxu0
      %v2926 = vadd.f32 %v2813, %v2925
      %2927 = vdwg.mxu0
      %s2928 = scalar_lea.vmem %s13, 128
      %v2929 = vld [vmem:[%s2928] sm:$0xf]
      %v2930 = vld [vmem:[%s2928 + $0x4] sm:$0xf]
      %v2931 = vld [vmem:[%s2928 + $0x8] sm:$0xf]
      %v2932 = vld [vmem:[%s2928 + $0xc] sm:$0xf]
      %v2933 = vld [vmem:[%s2928 + $0x10] sm:$0xf]
      %v2934 = vld [vmem:[%s2928 + $0x14] sm:$0xf]
      %v2935 = vld [vmem:[%s2928 + $0x18] sm:$0xf]
      %v2936 = vld [vmem:[%s2928 + $0x1c] sm:$0xf]
      %v2937 = vld [vmem:[%s2928 + $0x20] sm:$0xf]
      %v2938 = vld [vmem:[%s2928 + $0x24] sm:$0xf]
      %v2939 = vld [vmem:[%s2928 + $0x28] sm:$0xf]
      %v2940 = vld [vmem:[%s2928 + $0x2c] sm:$0xf]
      %v2941 = vld [vmem:[%s2928 + $0x30] sm:$0xf]
      %v2942 = vld [vmem:[%s2928 + $0x34] sm:$0xf]
      %v2943 = vld [vmem:[%s2928 + $0x38] sm:$0xf]
      %v2944 = vld [vmem:[%s2928 + $0x3c] sm:$0xf]
      %v2961 = vunpack.c.l.b16 %v2929
      %v2962 = vunpack.c.l.b16 %v2930
      %v2963 = vunpack.c.l.b16 %v2931
      %v2964 = vunpack.c.l.b16 %v2932
      %v2965 = vunpack.c.l.b16 %v2933
      %v2966 = vunpack.c.l.b16 %v2934
      %v2967 = vunpack.c.l.b16 %v2935
      %v2968 = vunpack.c.l.b16 %v2936
      %v2969 = vunpack.c.l.b16 %v2937
      %v2970 = vunpack.c.l.b16 %v2938
      %v2971 = vunpack.c.l.b16 %v2939
      %v2972 = vunpack.c.l.b16 %v2940
      %v2973 = vunpack.c.l.b16 %v2941
      %v2974 = vunpack.c.l.b16 %v2942
      %v2975 = vunpack.c.l.b16 %v2943
      %v2976 = vunpack.c.l.b16 %v2944
      %v2977 = vpack.c.b16 %v2962, %v2961
      %v2978 = vpack.c.b16 %v2964, %v2963
      %v2979 = vpack.c.b16 %v2966, %v2965
      %v2980 = vpack.c.b16 %v2968, %v2967
      %v2981 = vpack.c.b16 %v2970, %v2969
      %v2982 = vpack.c.b16 %v2972, %v2971
      %v2983 = vpack.c.b16 %v2974, %v2973
      %v2984 = vpack.c.b16 %v2976, %v2975
      %v2986 = vsel %vm2492, %v2977, 0
      %v2989 = vsel %vm2492, %v2978, 0
      %v2992 = vsel %vm2492, %v2979, 0
      %v2995 = vsel %vm2492, %v2980, 0
      %v2998 = vsel %vm2492, %v2981, 0
      %v3001 = vsel %vm2492, %v2982, 0
      %v3004 = vsel %vm2492, %v2983, 0
      %v3007 = vsel %vm2492, %v2984, 0
      %3009 = vmatpush.bf16.msra.mxu0 0
      %3010 = vmatpush.bf16.msra.mxu0 0
      %3011 = vmatpush.bf16.msra.mxu0 0
      %3012 = vmatpush.bf16.msra.mxu0 0
      %3013 = vmatpush.bf16.msra.mxu0 %v2435
      %3014 = vmatpush.bf16.msra.mxu0 %v2434
      %3015 = vmatpush.bf16.msra.mxu0 %v2433
      %3016 = vmatpush.bf16.msra.mxu0 %v2432
      %3017 = vmatmul.bf16.gmra.mxu0 %v2986
      %v3018 = vpop.f32.mrf.mxu0
      %v3019 = vadd.f32 0.0, %v3018
      %v3020 = vpop.f32.mrf.mxu0
      %v3021 = vadd.f32 0.0, %v3020
      %3022 = vmatmul.bf16.gmra.mxu0 %v2989
      %v3023 = vpop.f32.mrf.mxu0
      %v3024 = vadd.f32 0.0, %v3023
      %v3025 = vpop.f32.mrf.mxu0
      %v3026 = vadd.f32 0.0, %v3025
      %3027 = vmatmul.bf16.gmra.mxu0 %v2992
      %v3028 = vpop.f32.mrf.mxu0
      %v3029 = vadd.f32 0.0, %v3028
      %v3030 = vpop.f32.mrf.mxu0
      %v3031 = vadd.f32 0.0, %v3030
      %3032 = vmatmul.bf16.gmra.mxu0 %v2995
      %v3033 = vpop.f32.mrf.mxu0
      %v3034 = vadd.f32 0.0, %v3033
      %v3035 = vpop.f32.mrf.mxu0
      %v3036 = vadd.f32 0.0, %v3035
      %3037 = vmatmul.bf16.gmra.mxu0 %v2998
      %v3038 = vpop.f32.mrf.mxu0
      %v3039 = vadd.f32 0.0, %v3038
      %v3040 = vpop.f32.mrf.mxu0
      %v3041 = vadd.f32 0.0, %v3040
      %3042 = vmatmul.bf16.gmra.mxu0 %v3001
      %v3043 = vpop.f32.mrf.mxu0
      %v3044 = vadd.f32 0.0, %v3043
      %v3045 = vpop.f32.mrf.mxu0
      %v3046 = vadd.f32 0.0, %v3045
      %3047 = vmatmul.bf16.gmra.mxu0 %v3004
      %v3048 = vpop.f32.mrf.mxu0
      %v3049 = vadd.f32 0.0, %v3048
      %v3050 = vpop.f32.mrf.mxu0
      %v3051 = vadd.f32 0.0, %v3050
      %3052 = vmatmul.bf16.gmra.mxu0 %v3007
      %v3053 = vpop.f32.mrf.mxu0
      %v3054 = vadd.f32 0.0, %v3053
      %v3055 = vpop.f32.mrf.mxu0
      %v3056 = vadd.f32 0.0, %v3055
      %3057 = vdwg.mxu0
      %s3058 = scalar_lea.vmem %s15, 32
      %v3059 = vld [vmem:[%s3058] sm:$0xff]
      %v3060 = vld [vmem:[%s3058 + $0x8] sm:$0xff]
      %v3062 = vsel %vm2701, %v3019, 0
      %v3065 = vsel %vm2701, %v3021, 0
      %v3068 = vsel %vm2701, %v3024, 0
      %v3071 = vsel %vm2701, %v3026, 0
      %v3074 = vsel %vm2701, %v3029, 0
      %v3077 = vsel %vm2701, %v3031, 0
      %v3080 = vsel %vm2701, %v3034, 0
      %v3083 = vsel %vm2701, %v3036, 0
      %v3086 = vsel %vm2701, %v3039, 0
      %v3089 = vsel %vm2701, %v3041, 0
      %v3092 = vsel %vm2701, %v3044, 0
      %v3095 = vsel %vm2701, %v3046, 0
      %v3098 = vsel %vm2701, %v3049, 0
      %v3101 = vsel %vm2701, %v3051, 0
      %v3104 = vsel %vm2701, %v3054, 0
      %v3107 = vsel %vm2701, %v3056, 0
      %3109 = vmatpush.msra.mxu0 0.0
      %3110 = vmatpush.msra.mxu0 0.0
      %3111 = vmatpush.msra.mxu0 0.0
      %3112 = vmatpush.msra.mxu0 0.0
      %3113 = vmatpush.msra.mxu0 0.0
      %3114 = vmatpush.msra.mxu0 0.0
      %3115 = vmatpush.msra.mxu0 0.0
      %3116 = vmatpush.msra.mxu0 0.0
      %3117 = vmatpush.msra.mxu0 0.0
      %3118 = vmatpush.msra.mxu0 0.0
      %3119 = vmatpush.msra.mxu0 0.0
      %3120 = vmatpush.msra.mxu0 0.0
      %3121 = vmatpush.msra.mxu0 0.0
      %3122 = vmatpush.msra.mxu0 0.0
      %3123 = vmatpush.msra.mxu0 %v3060
      %3124 = vmatpush.msra.mxu0 %v3059
      %3125 = vmatmul.f32.gmra.mxu0 %v3062
      %v3126 = vpop.f32.mrf.mxu0
      %v3127 = vadd.f32 0.0, %v3126
      %3128 = vmatmul.f32.gmra.mxu0 %v3065
      %v3129 = vpop.f32.mrf.mxu0
      %v3130 = vadd.f32 0.0, %v3129
      %3131 = vmatmul.f32.gmra.mxu0 %v3068
      %v3132 = vpop.f32.mrf.mxu0
      %v3133 = vadd.f32 0.0, %v3132
      %3134 = vmatmul.f32.gmra.mxu0 %v3071
      %v3135 = vpop.f32.mrf.mxu0
      %v3136 = vadd.f32 0.0, %v3135
      %3137 = vmatmul.f32.gmra.mxu0 %v3074
      %v3138 = vpop.f32.mrf.mxu0
      %v3139 = vadd.f32 0.0, %v3138
      %3140 = vmatmul.f32.gmra.mxu0 %v3077
      %v3141 = vpop.f32.mrf.mxu0
      %v3142 = vadd.f32 0.0, %v3141
      %3143 = vmatmul.f32.gmra.mxu0 %v3080
      %v3144 = vpop.f32.mrf.mxu0
      %v3145 = vadd.f32 0.0, %v3144
      %3146 = vmatmul.f32.gmra.mxu0 %v3083
      %v3147 = vpop.f32.mrf.mxu0
      %v3148 = vadd.f32 0.0, %v3147
      %3149 = vmatmul.f32.gmra.mxu0 %v3086
      %v3150 = vpop.f32.mrf.mxu0
      %v3151 = vadd.f32 0.0, %v3150
      %3152 = vmatmul.f32.gmra.mxu0 %v3089
      %v3153 = vpop.f32.mrf.mxu0
      %v3154 = vadd.f32 0.0, %v3153
      %3155 = vmatmul.f32.gmra.mxu0 %v3092
      %v3156 = vpop.f32.mrf.mxu0
      %v3157 = vadd.f32 0.0, %v3156
      %3158 = vmatmul.f32.gmra.mxu0 %v3095
      %v3159 = vpop.f32.mrf.mxu0
      %v3160 = vadd.f32 0.0, %v3159
      %3161 = vmatmul.f32.gmra.mxu0 %v3098
      %v3162 = vpop.f32.mrf.mxu0
      %v3163 = vadd.f32 0.0, %v3162
      %3164 = vmatmul.f32.gmra.mxu0 %v3101
      %v3165 = vpop.f32.mrf.mxu0
      %v3166 = vadd.f32 0.0, %v3165
      %3167 = vmatmul.f32.gmra.mxu0 %v3104
      %v3168 = vpop.f32.mrf.mxu0
      %v3169 = vadd.f32 0.0, %v3168
      %3170 = vmatmul.f32.gmra.mxu0 %v3107
      %v3171 = vpop.f32.mrf.mxu0
      %v3172 = vadd.f32 0.0, %v3171
      %3173 = vdwg.mxu0
      %v3174 = vadd.f32 %v2881, %v3127
      %v3175 = vadd.f32 %v2884, %v3130
      %v3176 = vadd.f32 %v2887, %v3133
      %v3177 = vadd.f32 %v2890, %v3136
      %v3178 = vadd.f32 %v2893, %v3139
      %v3179 = vadd.f32 %v2896, %v3142
      %v3180 = vadd.f32 %v2899, %v3145
      %v3181 = vadd.f32 %v2902, %v3148
      %v3182 = vadd.f32 %v2905, %v3151
      %v3183 = vadd.f32 %v2908, %v3154
      %v3184 = vadd.f32 %v2911, %v3157
      %v3185 = vadd.f32 %v2914, %v3160
      %v3186 = vadd.f32 %v2917, %v3163
      %v3187 = vadd.f32 %v2920, %v3166
      %v3188 = vadd.f32 %v2923, %v3169
      %v3189 = vadd.f32 %v2926, %v3172
      %v3190 = vld [vmem:[%s17] sm:$0xff]
      %v3191 = vld [vmem:[%s17 + $0x8] sm:$0xff]
      %v3192 = vld [vmem:[%s17 + $0x10] sm:$0xff]
      %v3193 = vld [vmem:[%s17 + $0x18] sm:$0xff]
      %v3194 = vld [vmem:[%s17 + $0x20] sm:$0xff]
      %v3195 = vld [vmem:[%s17 + $0x28] sm:$0xff]
      %v3196 = vld [vmem:[%s17 + $0x30] sm:$0xff]
      %v3197 = vld [vmem:[%s17 + $0x38] sm:$0xff]
      %v3198 = vld [vmem:[%s17 + $0x40] sm:$0xff]
      %v3199 = vld [vmem:[%s17 + $0x48] sm:$0xff]
      %v3200 = vld [vmem:[%s17 + $0x50] sm:$0xff]
      %v3201 = vld [vmem:[%s17 + $0x58] sm:$0xff]
      %v3202 = vld [vmem:[%s17 + $0x60] sm:$0xff]
      %v3203 = vld [vmem:[%s17 + $0x68] sm:$0xff]
      %v3204 = vld [vmem:[%s17 + $0x70] sm:$0xff]
      %v3205 = vld [vmem:[%s17 + $0x78] sm:$0xff]
      %3207 = vset.pattern.permute.xlu0 0
      %3208 = vperm.xlu0 %3207, %v3190
      %v3209 = vpop.permute.xlu0 %3208
      %3212 = vset.pattern.permute.xlu0 0
      %3213 = vperm.xlu0 %3212, %v3191
      %v3214 = vpop.permute.xlu0 %3213
      %3217 = vset.pattern.permute.xlu0 0
      %3218 = vperm.xlu0 %3217, %v3192
      %v3219 = vpop.permute.xlu0 %3218
      %3222 = vset.pattern.permute.xlu0 0
      %3223 = vperm.xlu0 %3222, %v3193
      %v3224 = vpop.permute.xlu0 %3223
      %3227 = vset.pattern.permute.xlu0 0
      %3228 = vperm.xlu0 %3227, %v3194
      %v3229 = vpop.permute.xlu0 %3228
      %3232 = vset.pattern.permute.xlu0 0
      %3233 = vperm.xlu0 %3232, %v3195
      %v3234 = vpop.permute.xlu0 %3233
      %3237 = vset.pattern.permute.xlu0 0
      %3238 = vperm.xlu0 %3237, %v3196
      %v3239 = vpop.permute.xlu0 %3238
      %3242 = vset.pattern.permute.xlu0 0
      %3243 = vperm.xlu0 %3242, %v3197
      %v3244 = vpop.permute.xlu0 %3243
      %3247 = vset.pattern.permute.xlu0 0
      %3248 = vperm.xlu0 %3247, %v3198
      %v3249 = vpop.permute.xlu0 %3248
      %3252 = vset.pattern.permute.xlu0 0
      %3253 = vperm.xlu0 %3252, %v3199
      %v3254 = vpop.permute.xlu0 %3253
      %3257 = vset.pattern.permute.xlu0 0
      %3258 = vperm.xlu0 %3257, %v3200
      %v3259 = vpop.permute.xlu0 %3258
      %3262 = vset.pattern.permute.xlu0 0
      %3263 = vperm.xlu0 %3262, %v3201
      %v3264 = vpop.permute.xlu0 %3263
      %3267 = vset.pattern.permute.xlu0 0
      %3268 = vperm.xlu0 %3267, %v3202
      %v3269 = vpop.permute.xlu0 %3268
      %3272 = vset.pattern.permute.xlu0 0
      %3273 = vperm.xlu0 %3272, %v3203
      %v3274 = vpop.permute.xlu0 %3273
      %3277 = vset.pattern.permute.xlu0 0
      %3278 = vperm.xlu0 %3277, %v3204
      %v3279 = vpop.permute.xlu0 %3278
      %3282 = vset.pattern.permute.xlu0 0
      %3283 = vperm.xlu0 %3282, %v3205
      %v3284 = vpop.permute.xlu0 %3283
      %v3286 = vadd.f32 %v3174, %v3209
      %v3287 = vadd.f32 %v3175, %v3214
      %v3288 = vadd.f32 %v3176, %v3219
      %v3289 = vadd.f32 %v3177, %v3224
      %v3290 = vadd.f32 %v3178, %v3229
      %v3291 = vadd.f32 %v3179, %v3234
      %v3292 = vadd.f32 %v3180, %v3239
      %v3293 = vadd.f32 %v3181, %v3244
      %v3294 = vadd.f32 %v3182, %v3249
      %v3295 = vadd.f32 %v3183, %v3254
      %v3296 = vadd.f32 %v3184, %v3259
      %v3297 = vadd.f32 %v3185, %v3264
      %v3298 = vadd.f32 %v3186, %v3269
      %v3299 = vadd.f32 %v3187, %v3274
      %v3300 = vadd.f32 %v3188, %v3279
      %v3301 = vadd.f32 %v3189, %v3284
      %v3302 = vmax.f32 %v3286, 0.0
      %v3303 = vmax.f32 %v3287, 0.0
      %v3304 = vmax.f32 %v3288, 0.0
      %v3305 = vmax.f32 %v3289, 0.0
      %v3306 = vmax.f32 %v3290, 0.0
      %v3307 = vmax.f32 %v3291, 0.0
      %v3308 = vmax.f32 %v3292, 0.0
      %v3309 = vmax.f32 %v3293, 0.0
      %v3310 = vmax.f32 %v3294, 0.0
      %v3311 = vmax.f32 %v3295, 0.0
      %v3312 = vmax.f32 %v3296, 0.0
      %v3313 = vmax.f32 %v3297, 0.0
      %v3314 = vmax.f32 %v3298, 0.0
      %v3315 = vmax.f32 %v3299, 0.0
      %v3316 = vmax.f32 %v3300, 0.0
      %v3317 = vmax.f32 %v3301, 0.0
      %v3318 = vld [vmem:[%s19] sm:$0xff]
      %v3319 = vld [vmem:[%s19 + $0x8] sm:$0xff]
      %v3320 = vld [vmem:[%s19 + $0x10] sm:$0xff]
      %v3321 = vld [vmem:[%s19 + $0x18] sm:$0xff]
      %v3322 = vld [vmem:[%s19 + $0x20] sm:$0xff]
      %v3323 = vld [vmem:[%s19 + $0x28] sm:$0xff]
      %v3324 = vld [vmem:[%s19 + $0x30] sm:$0xff]
      %v3325 = vld [vmem:[%s19 + $0x38] sm:$0xff]
      %v3326 = vld [vmem:[%s19 + $0x40] sm:$0xff]
      %3327 = vmatpush.msra.mxu0 %v3317
      %3328 = vmatpush.msra.mxu0 %v3316
      %3329 = vmatpush.msra.mxu0 %v3315
      %3330 = vmatpush.msra.mxu0 %v3314
      %3331 = vmatpush.msra.mxu0 %v3313
      %3332 = vmatpush.msra.mxu0 %v3312
      %3333 = vmatpush.msra.mxu0 %v3311
      %3334 = vmatpush.msra.mxu0 %v3310
      %3335 = vmatpush.msra.mxu0 %v3309
      %3336 = vmatpush.msra.mxu0 %v3308
      %3337 = vmatpush.msra.mxu0 %v3307
      %3338 = vmatpush.msra.mxu0 %v3306
      %3339 = vmatpush.msra.mxu0 %v3305
      %3340 = vmatpush.msra.mxu0 %v3304
      %3341 = vmatpush.msra.mxu0 %v3303
      %3342 = vmatpush.msra.mxu0 %v3302
      %3343 = vmatmul.f32.gmra.mxu0 %v3318
      %v3344 = vpop.f32.mrf.mxu0
      %v3345 = vadd.f32 0.0, %v3344
      %3346 = vmatmul.f32.gmra.mxu0 %v3319
      %v3347 = vpop.f32.mrf.mxu0
      %v3348 = vadd.f32 0.0, %v3347
      %3349 = vmatmul.f32.gmra.mxu0 %v3320
      %v3350 = vpop.f32.mrf.mxu0
      %v3351 = vadd.f32 0.0, %v3350
      %3352 = vmatmul.f32.gmra.mxu0 %v3321
      %v3353 = vpop.f32.mrf.mxu0
      %v3354 = vadd.f32 0.0, %v3353
      %3355 = vmatmul.f32.gmra.mxu0 %v3322
      %v3356 = vpop.f32.mrf.mxu0
      %v3357 = vadd.f32 0.0, %v3356
      %3358 = vmatmul.f32.gmra.mxu0 %v3323
      %v3359 = vpop.f32.mrf.mxu0
      %v3360 = vadd.f32 0.0, %v3359
      %3361 = vmatmul.f32.gmra.mxu0 %v3324
      %v3362 = vpop.f32.mrf.mxu0
      %v3363 = vadd.f32 0.0, %v3362
      %3364 = vmatmul.f32.gmra.mxu0 %v3325
      %v3365 = vpop.f32.mrf.mxu0
      %v3366 = vadd.f32 0.0, %v3365
      %3367 = vmatmul.f32.gmra.mxu0 %v3326
      %v3368 = vpop.f32.mrf.mxu0
      %v3369 = vadd.f32 0.0, %v3368
      %3370 = vdwg.mxu0
      %v3371 = vld [vmem:[%s21] sm:$0xff]
      %v3372 = vld [vmem:[%s21 + $0x8] sm:$0xff]
      %v3374 = vsel %vm2701, %v3345, 0
      %v3377 = vsel %vm2701, %v3348, 0
      %v3380 = vsel %vm2701, %v3351, 0
      %v3383 = vsel %vm2701, %v3354, 0
      %v3386 = vsel %vm2701, %v3357, 0
      %v3389 = vsel %vm2701, %v3360, 0
      %v3392 = vsel %vm2701, %v3363, 0
      %v3395 = vsel %vm2701, %v3366, 0
      %v3398 = vsel %vm2701, %v3369, 0
      %3400 = vmatpush.msra.mxu0 0.0
      %3401 = vmatpush.msra.mxu0 0.0
      %3402 = vmatpush.msra.mxu0 0.0
      %3403 = vmatpush.msra.mxu0 0.0
      %3404 = vmatpush.msra.mxu0 0.0
      %3405 = vmatpush.msra.mxu0 0.0
      %3406 = vmatpush.msra.mxu0 0.0
      %3407 = vmatpush.msra.mxu0 0.0
      %3408 = vmatpush.msra.mxu0 0.0
      %3409 = vmatpush.msra.mxu0 0.0
      %3410 = vmatpush.msra.mxu0 0.0
      %3411 = vmatpush.msra.mxu0 0.0
      %3412 = vmatpush.msra.mxu0 0.0
      %3413 = vmatpush.msra.mxu0 0.0
      %3414 = vmatpush.msra.mxu0 %v3372
      %3415 = vmatpush.msra.mxu0 %v3371
      %3416 = vmatmul.f32.gmra.mxu0 %v3374
      %v3417 = vpop.f32.mrf.mxu0
      %v3418 = vadd.f32 0.0, %v3417
      %3419 = vmatmul.f32.gmra.mxu0 %v3377
      %v3420 = vpop.f32.mrf.mxu0
      %v3421 = vadd.f32 0.0, %v3420
      %3422 = vmatmul.f32.gmra.mxu0 %v3380
      %v3423 = vpop.f32.mrf.mxu0
      %v3424 = vadd.f32 0.0, %v3423
      %3425 = vmatmul.f32.gmra.mxu0 %v3383
      %v3426 = vpop.f32.mrf.mxu0
      %v3427 = vadd.f32 0.0, %v3426
      %3428 = vmatmul.f32.gmra.mxu0 %v3386
      %v3429 = vpop.f32.mrf.mxu0
      %v3430 = vadd.f32 0.0, %v3429
      %3431 = vmatmul.f32.gmra.mxu0 %v3389
      %v3432 = vpop.f32.mrf.mxu0
      %v3433 = vadd.f32 0.0, %v3432
      %3434 = vmatmul.f32.gmra.mxu0 %v3392
      %v3435 = vpop.f32.mrf.mxu0
      %v3436 = vadd.f32 0.0, %v3435
      %3437 = vmatmul.f32.gmra.mxu0 %v3395
      %v3438 = vpop.f32.mrf.mxu0
      %v3439 = vadd.f32 0.0, %v3438
      %3440 = vmatmul.f32.gmra.mxu0 %v3398
      %v3441 = vpop.f32.mrf.mxu0
      %v3442 = vadd.f32 0.0, %v3441
      %3443 = vdwg.mxu0
      %s3444 = scalar_lea.vmem %s21, 16
      %v3445 = vld [vmem:[%s3444] sm:$0xff]
      %v3446 = vld [vmem:[%s3444 + $0x8] sm:$0xff]
      %3447 = vmatpush.msra.mxu0 0.0
      %3448 = vmatpush.msra.mxu0 0.0
      %3449 = vmatpush.msra.mxu0 0.0
      %3450 = vmatpush.msra.mxu0 0.0
      %3451 = vmatpush.msra.mxu0 0.0
      %3452 = vmatpush.msra.mxu0 0.0
      %3453 = vmatpush.msra.mxu0 0.0
      %3454 = vmatpush.msra.mxu0 0.0
      %3455 = vmatpush.msra.mxu0 0.0
      %3456 = vmatpush.msra.mxu0 0.0
      %3457 = vmatpush.msra.mxu0 0.0
      %3458 = vmatpush.msra.mxu0 0.0
      %3459 = vmatpush.msra.mxu0 0.0
      %3460 = vmatpush.msra.mxu0 0.0
      %3461 = vmatpush.msra.mxu0 %v3446
      %3462 = vmatpush.msra.mxu0 %v3445
      %3463 = vmatmul.f32.gmra.mxu0 %v3374
      %v3464 = vpop.f32.mrf.mxu0
      %v3465 = vadd.f32 0.0, %v3464
      %3466 = vmatmul.f32.gmra.mxu0 %v3377
      %v3467 = vpop.f32.mrf.mxu0
      %v3468 = vadd.f32 0.0, %v3467
      %3469 = vmatmul.f32.gmra.mxu0 %v3380
      %v3470 = vpop.f32.mrf.mxu0
      %v3471 = vadd.f32 0.0, %v3470
      %3472 = vmatmul.f32.gmra.mxu0 %v3383
      %v3473 = vpop.f32.mrf.mxu0
      %v3474 = vadd.f32 0.0, %v3473
      %3475 = vmatmul.f32.gmra.mxu0 %v3386
      %v3476 = vpop.f32.mrf.mxu0
      %v3477 = vadd.f32 0.0, %v3476
      %3478 = vmatmul.f32.gmra.mxu0 %v3389
      %v3479 = vpop.f32.mrf.mxu0
      %v3480 = vadd.f32 0.0, %v3479
      %3481 = vmatmul.f32.gmra.mxu0 %v3392
      %v3482 = vpop.f32.mrf.mxu0
      %v3483 = vadd.f32 0.0, %v3482
      %3484 = vmatmul.f32.gmra.mxu0 %v3395
      %v3485 = vpop.f32.mrf.mxu0
      %v3486 = vadd.f32 0.0, %v3485
      %3487 = vmatmul.f32.gmra.mxu0 %v3398
      %v3488 = vpop.f32.mrf.mxu0
      %v3489 = vadd.f32 0.0, %v3488
      %3490 = vdwg.mxu0
      %s3491 = scalar_lea.vmem %s19, 72
      %v3492 = vld [vmem:[%s3491] sm:$0xff]
      %v3493 = vld [vmem:[%s3491 + $0x8] sm:$0xff]
      %v3494 = vld [vmem:[%s3491 + $0x10] sm:$0xff]
      %v3495 = vld [vmem:[%s3491 + $0x18] sm:$0xff]
      %v3496 = vld [vmem:[%s3491 + $0x20] sm:$0xff]
      %v3497 = vld [vmem:[%s3491 + $0x28] sm:$0xff]
      %v3498 = vld [vmem:[%s3491 + $0x30] sm:$0xff]
      %v3499 = vld [vmem:[%s3491 + $0x38] sm:$0xff]
      %v3500 = vld [vmem:[%s3491 + $0x40] sm:$0xff]
      %3501 = vmatpush.msra.mxu0 %v3317
      %3502 = vmatpush.msra.mxu0 %v3316
      %3503 = vmatpush.msra.mxu0 %v3315
      %3504 = vmatpush.msra.mxu0 %v3314
      %3505 = vmatpush.msra.mxu0 %v3313
      %3506 = vmatpush.msra.mxu0 %v3312
      %3507 = vmatpush.msra.mxu0 %v3311
      %3508 = vmatpush.msra.mxu0 %v3310
      %3509 = vmatpush.msra.mxu0 %v3309
      %3510 = vmatpush.msra.mxu0 %v3308
      %3511 = vmatpush.msra.mxu0 %v3307
      %3512 = vmatpush.msra.mxu0 %v3306
      %3513 = vmatpush.msra.mxu0 %v3305
      %3514 = vmatpush.msra.mxu0 %v3304
      %3515 = vmatpush.msra.mxu0 %v3303
      %3516 = vmatpush.msra.mxu0 %v3302
      %3517 = vmatmul.f32.gmra.mxu0 %v3492
      %v3518 = vpop.f32.mrf.mxu0
      %v3519 = vadd.f32 0.0, %v3518
      %3520 = vmatmul.f32.gmra.mxu0 %v3493
      %v3521 = vpop.f32.mrf.mxu0
      %v3522 = vadd.f32 0.0, %v3521
      %3523 = vmatmul.f32.gmra.mxu0 %v3494
      %v3524 = vpop.f32.mrf.mxu0
      %v3525 = vadd.f32 0.0, %v3524
      %3526 = vmatmul.f32.gmra.mxu0 %v3495
      %v3527 = vpop.f32.mrf.mxu0
      %v3528 = vadd.f32 0.0, %v3527
      %3529 = vmatmul.f32.gmra.mxu0 %v3496
      %v3530 = vpop.f32.mrf.mxu0
      %v3531 = vadd.f32 0.0, %v3530
      %3532 = vmatmul.f32.gmra.mxu0 %v3497
      %v3533 = vpop.f32.mrf.mxu0
      %v3534 = vadd.f32 0.0, %v3533
      %3535 = vmatmul.f32.gmra.mxu0 %v3498
      %v3536 = vpop.f32.mrf.mxu0
      %v3537 = vadd.f32 0.0, %v3536
      %3538 = vmatmul.f32.gmra.mxu0 %v3499
      %v3539 = vpop.f32.mrf.mxu0
      %v3540 = vadd.f32 0.0, %v3539
      %3541 = vmatmul.f32.gmra.mxu0 %v3500
      %v3542 = vpop.f32.mrf.mxu0
      %v3543 = vadd.f32 0.0, %v3542
      %3544 = vdwg.mxu0
      %v3546 = vsel %vm2701, %v3519, 0
      %v3549 = vsel %vm2701, %v3522, 0
      %v3552 = vsel %vm2701, %v3525, 0
      %v3555 = vsel %vm2701, %v3528, 0
      %v3558 = vsel %vm2701, %v3531, 0
      %v3561 = vsel %vm2701, %v3534, 0
      %v3564 = vsel %vm2701, %v3537, 0
      %v3567 = vsel %vm2701, %v3540, 0
      %v3570 = vsel %vm2701, %v3543, 0
      %3572 = vmatpush.msra.mxu0 0.0
      %3573 = vmatpush.msra.mxu0 0.0
      %3574 = vmatpush.msra.mxu0 0.0
      %3575 = vmatpush.msra.mxu0 0.0
      %3576 = vmatpush.msra.mxu0 0.0
      %3577 = vmatpush.msra.mxu0 0.0
      %3578 = vmatpush.msra.mxu0 0.0
      %3579 = vmatpush.msra.mxu0 0.0
      %3580 = vmatpush.msra.mxu0 0.0
      %3581 = vmatpush.msra.mxu0 0.0
      %3582 = vmatpush.msra.mxu0 0.0
      %3583 = vmatpush.msra.mxu0 0.0
      %3584 = vmatpush.msra.mxu0 0.0
      %3585 = vmatpush.msra.mxu0 0.0
      %3586 = vmatpush.msra.mxu0 %v3372
      %3587 = vmatpush.msra.mxu0 %v3371
      %3588 = vmatmul.f32.gmra.mxu0 %v3546
      %v3589 = vpop.f32.mrf.mxu0
      %v3590 = vadd.f32 0.0, %v3589
      %3591 = vmatmul.f32.gmra.mxu0 %v3549
      %v3592 = vpop.f32.mrf.mxu0
      %v3593 = vadd.f32 0.0, %v3592
      %3594 = vmatmul.f32.gmra.mxu0 %v3552
      %v3595 = vpop.f32.mrf.mxu0
      %v3596 = vadd.f32 0.0, %v3595
      %3597 = vmatmul.f32.gmra.mxu0 %v3555
      %v3598 = vpop.f32.mrf.mxu0
      %v3599 = vadd.f32 0.0, %v3598
      %3600 = vmatmul.f32.gmra.mxu0 %v3558
      %v3601 = vpop.f32.mrf.mxu0
      %v3602 = vadd.f32 0.0, %v3601
      %3603 = vmatmul.f32.gmra.mxu0 %v3561
      %v3604 = vpop.f32.mrf.mxu0
      %v3605 = vadd.f32 0.0, %v3604
      %3606 = vmatmul.f32.gmra.mxu0 %v3564
      %v3607 = vpop.f32.mrf.mxu0
      %v3608 = vadd.f32 0.0, %v3607
      %3609 = vmatmul.f32.gmra.mxu0 %v3567
      %v3610 = vpop.f32.mrf.mxu0
      %v3611 = vadd.f32 0.0, %v3610
      %3612 = vmatmul.f32.gmra.mxu0 %v3570
      %v3613 = vpop.f32.mrf.mxu0
      %v3614 = vadd.f32 0.0, %v3613
      %3615 = vdwg.mxu0
      %3616 = vmatpush.msra.mxu0 0.0
      %3617 = vmatpush.msra.mxu0 0.0
      %3618 = vmatpush.msra.mxu0 0.0
      %3619 = vmatpush.msra.mxu0 0.0
      %3620 = vmatpush.msra.mxu0 0.0
      %3621 = vmatpush.msra.mxu0 0.0
      %3622 = vmatpush.msra.mxu0 0.0
      %3623 = vmatpush.msra.mxu0 0.0
      %3624 = vmatpush.msra.mxu0 0.0
      %3625 = vmatpush.msra.mxu0 0.0
      %3626 = vmatpush.msra.mxu0 0.0
      %3627 = vmatpush.msra.mxu0 0.0
      %3628 = vmatpush.msra.mxu0 0.0
      %3629 = vmatpush.msra.mxu0 0.0
      %3630 = vmatpush.msra.mxu0 %v3446
      %3631 = vmatpush.msra.mxu0 %v3445
      %3632 = vmatmul.f32.gmra.mxu0 %v3546
      %v3633 = vpop.f32.mrf.mxu0
      %v3634 = vadd.f32 0.0, %v3633
      %3635 = vmatmul.f32.gmra.mxu0 %v3549
      %v3636 = vpop.f32.mrf.mxu0
      %v3637 = vadd.f32 0.0, %v3636
      %3638 = vmatmul.f32.gmra.mxu0 %v3552
      %v3639 = vpop.f32.mrf.mxu0
      %v3640 = vadd.f32 0.0, %v3639
      %3641 = vmatmul.f32.gmra.mxu0 %v3555
      %v3642 = vpop.f32.mrf.mxu0
      %v3643 = vadd.f32 0.0, %v3642
      %3644 = vmatmul.f32.gmra.mxu0 %v3558
      %v3645 = vpop.f32.mrf.mxu0
      %v3646 = vadd.f32 0.0, %v3645
      %3647 = vmatmul.f32.gmra.mxu0 %v3561
      %v3648 = vpop.f32.mrf.mxu0
      %v3649 = vadd.f32 0.0, %v3648
      %3650 = vmatmul.f32.gmra.mxu0 %v3564
      %v3651 = vpop.f32.mrf.mxu0
      %v3652 = vadd.f32 0.0, %v3651
      %3653 = vmatmul.f32.gmra.mxu0 %v3567
      %v3654 = vpop.f32.mrf.mxu0
      %v3655 = vadd.f32 0.0, %v3654
      %3656 = vmatmul.f32.gmra.mxu0 %v3570
      %v3657 = vpop.f32.mrf.mxu0
      %v3658 = vadd.f32 0.0, %v3657
      %3659 = vdwg.mxu0
      %v3660 = vmax.f32 %v3418, %v3465
      %v3661 = vmax.f32 %v3421, %v3468
      %v3662 = vmax.f32 %v3424, %v3471
      %v3663 = vmax.f32 %v3427, %v3474
      %v3664 = vmax.f32 %v3430, %v3477
      %v3665 = vmax.f32 %v3433, %v3480
      %v3666 = vmax.f32 %v3436, %v3483
      %v3667 = vmax.f32 %v3439, %v3486
      %v3668 = vmax.f32 %v3442, %v3489
      %v3669 = vmax.f32 %v3590, %v3634
      %v3670 = vmax.f32 %v3593, %v3637
      %v3671 = vmax.f32 %v3596, %v3640
      %v3672 = vmax.f32 %v3599, %v3643
      %v3673 = vmax.f32 %v3602, %v3646
      %v3674 = vmax.f32 %v3605, %v3649
      %v3675 = vmax.f32 %v3608, %v3652
      %v3676 = vmax.f32 %v3611, %v3655
      %v3677 = vmax.f32 %v3614, %v3658
      %v3678 = vmax.f32 %v3660, %v3669
      %v3679 = vmax.f32 %v3661, %v3670
      %v3680 = vmax.f32 %v3662, %v3671
      %v3681 = vmax.f32 %v3663, %v3672
      %v3682 = vmax.f32 %v3664, %v3673
      %v3683 = vmax.f32 %v3665, %v3674
      %v3684 = vmax.f32 %v3666, %v3675
      %v3685 = vmax.f32 %v3667, %v3676
      %v3686 = vmax.f32 %v3668, %v3677
      %v3687 = vpack.c.bf16 %v3679, %v3678
      %v3688 = vpack.c.bf16 %v3681, %v3680
      %v3689 = vpack.c.bf16 %v3683, %v3682
      %v3690 = vpack.c.bf16 %v3685, %v3684
      %v3691 = vpack.c.bf16 %v3686, %v3686
      %v3692 = vld [vmem:[%s23] sm:$0xf]
      %v3693 = vld [vmem:[%s23 + $0x4] sm:$0xf]
      %v3694 = vld [vmem:[%s23 + $0x8] sm:$0xf]
      %v3695 = vld [vmem:[%s23 + $0xc] sm:$0xf]
      %v3696 = vld [vmem:[%s23 + $0x10] sm:$0xf]
      %v3697 = vld [vmem:[%s23 + $0x14] sm:$0xf]
      %v3698 = vld [vmem:[%s23 + $0x18] sm:$0xf]
      %v3699 = vld [vmem:[%s23 + $0x1c] sm:$0xf]
      %v3700 = vld [vmem:[%s23 + $0x20] sm:$0xf]
      %v3701 = vld [vmem:[%s23 + $0x24] sm:$0xf]
      %v3702 = vld [vmem:[%s23 + $0x28] sm:$0xf]
      %v3703 = vld [vmem:[%s23 + $0x2c] sm:$0xf]
      %v3704 = vld [vmem:[%s23 + $0x30] sm:$0xf]
      %v3705 = vld [vmem:[%s23 + $0x34] sm:$0xf]
      %v3706 = vld [vmem:[%s23 + $0x38] sm:$0xf]
      %v3707 = vld [vmem:[%s23 + $0x3c] sm:$0xf]
      %v3708 = vld [vmem:[%s23 + $0x40] sm:$0xf]
      %v3709 = vld [vmem:[%s23 + $0x44] sm:$0xf]
      %v3728 = vunpack.c.l.b16 %v3692
      %v3729 = vunpack.c.l.b16 %v3693
      %v3730 = vunpack.c.l.b16 %v3694
      %v3731 = vunpack.c.l.b16 %v3695
      %v3732 = vunpack.c.l.b16 %v3696
      %v3733 = vunpack.c.l.b16 %v3697
      %v3734 = vunpack.c.l.b16 %v3698
      %v3735 = vunpack.c.l.b16 %v3699
      %v3736 = vunpack.c.l.b16 %v3700
      %v3737 = vunpack.c.l.b16 %v3701
      %v3738 = vunpack.c.l.b16 %v3702
      %v3739 = vunpack.c.l.b16 %v3703
      %v3740 = vunpack.c.l.b16 %v3704
      %v3741 = vunpack.c.l.b16 %v3705
      %v3742 = vunpack.c.l.b16 %v3706
      %v3743 = vunpack.c.l.b16 %v3707
      %v3744 = vunpack.c.l.b16 %v3708
      %v3745 = vunpack.c.l.b16 %v3709
      %v3746 = vpack.c.b16 %v3729, %v3728
      %v3747 = vpack.c.b16 %v3731, %v3730
      %v3748 = vpack.c.b16 %v3733, %v3732
      %v3749 = vpack.c.b16 %v3735, %v3734
      %v3750 = vpack.c.b16 %v3737, %v3736
      %v3751 = vpack.c.b16 %v3739, %v3738
      %v3752 = vpack.c.b16 %v3741, %v3740
      %v3753 = vpack.c.b16 %v3743, %v3742
      %v3754 = vpack.c.b16 %v3745, %v3744
      %vm3755 = vcmask 588800
      %v3757 = vsel %vm3755, %v3746, 0
      %v3760 = vsel %vm3755, %v3747, 0
      %v3763 = vsel %vm3755, %v3748, 0
      %v3766 = vsel %vm3755, %v3749, 0
      %v3769 = vsel %vm3755, %v3750, 0
      %v3772 = vsel %vm3755, %v3751, 0
      %v3775 = vsel %vm3755, %v3752, 0
      %v3778 = vsel %vm3755, %v3753, 0
      %v3781 = vsel %vm3755, %v3754, 0
      %vm3783 = vcmask 1043456
      %v3785 = vsel %vm3783, %v3691, 0
      %3787 = vmatpush.bf16.msra.mxu0 0
      %3788 = vmatpush.bf16.msra.mxu0 0
      %3789 = vmatpush.bf16.msra.mxu0 0
      %3790 = vmatpush.bf16.msra.mxu0 %v3785
      %3791 = vmatpush.bf16.msra.mxu0 %v3690
      %3792 = vmatpush.bf16.msra.mxu0 %v3689
      %3793 = vmatpush.bf16.msra.mxu0 %v3688
      %3794 = vmatpush.bf16.msra.mxu0 %v3687
      %3795 = vmatmul.bf16.gmra.mxu0 %v3757
      %v3796 = vpop.f32.mrf.mxu0
      %v3797 = vadd.f32 0.0, %v3796
      %v3798 = vpop.f32.mrf.mxu0
      %v3799 = vadd.f32 0.0, %v3798
      %3800 = vmatmul.bf16.gmra.mxu0 %v3760
      %v3801 = vpop.f32.mrf.mxu0
      %v3802 = vadd.f32 0.0, %v3801
      %v3803 = vpop.f32.mrf.mxu0
      %v3804 = vadd.f32 0.0, %v3803
      %3805 = vmatmul.bf16.gmra.mxu0 %v3763
      %v3806 = vpop.f32.mrf.mxu0
      %v3807 = vadd.f32 0.0, %v3806
      %v3808 = vpop.f32.mrf.mxu0
      %v3809 = vadd.f32 0.0, %v3808
      %3810 = vmatmul.bf16.gmra.mxu0 %v3766
      %v3811 = vpop.f32.mrf.mxu0
      %v3812 = vadd.f32 0.0, %v3811
      %v3813 = vpop.f32.mrf.mxu0
      %v3814 = vadd.f32 0.0, %v3813
      %3815 = vmatmul.bf16.gmra.mxu0 %v3769
      %v3816 = vpop.f32.mrf.mxu0
      %v3817 = vadd.f32 0.0, %v3816
      %v3818 = vpop.f32.mrf.mxu0
      %v3819 = vadd.f32 0.0, %v3818
      %3820 = vmatmul.bf16.gmra.mxu0 %v3772
      %v3821 = vpop.f32.mrf.mxu0
      %v3822 = vadd.f32 0.0, %v3821
      %v3823 = vpop.f32.mrf.mxu0
      %v3824 = vadd.f32 0.0, %v3823
      %3825 = vmatmul.bf16.gmra.mxu0 %v3775
      %v3826 = vpop.f32.mrf.mxu0
      %v3827 = vadd.f32 0.0, %v3826
      %v3828 = vpop.f32.mrf.mxu0
      %v3829 = vadd.f32 0.0, %v3828
      %3830 = vmatmul.bf16.gmra.mxu0 %v3778
      %v3831 = vpop.f32.mrf.mxu0
      %v3832 = vadd.f32 0.0, %v3831
      %v3833 = vpop.f32.mrf.mxu0
      %v3834 = vadd.f32 0.0, %v3833
      %3835 = vmatmul.bf16.gmra.mxu0 %v3781
      %v3836 = vpop.f32.mrf.mxu0
      %v3837 = vadd.f32 0.0, %v3836
      %v3838 = vpop.f32.mrf.mxu0
      %v3839 = vadd.f32 0.0, %v3838
      %3840 = vdwg.mxu0
      %v3841 = vld [vmem:[%s25] sm:$0xff]
      %v3842 = vld [vmem:[%s25 + $0x8] sm:$0x1]
      %s3843 = scalar_lea.vmem %s23, 72
      %v3844 = vld [vmem:[%s3843] sm:$0xf]
      %v3845 = vld [vmem:[%s3843 + $0x4] sm:$0xf]
      %v3846 = vld [vmem:[%s3843 + $0x8] sm:$0xf]
      %v3847 = vld [vmem:[%s3843 + $0xc] sm:$0xf]
      %v3848 = vld [vmem:[%s3843 + $0x10] sm:$0xf]
      %v3849 = vld [vmem:[%s3843 + $0x14] sm:$0xf]
      %v3850 = vld [vmem:[%s3843 + $0x18] sm:$0xf]
      %v3851 = vld [vmem:[%s3843 + $0x1c] sm:$0xf]
      %v3852 = vld [vmem:[%s3843 + $0x20] sm:$0xf]
      %v3853 = vld [vmem:[%s3843 + $0x24] sm:$0xf]
      %v3854 = vld [vmem:[%s3843 + $0x28] sm:$0xf]
      %v3855 = vld [vmem:[%s3843 + $0x2c] sm:$0xf]
      %v3856 = vld [vmem:[%s3843 + $0x30] sm:$0xf]
      %v3857 = vld [vmem:[%s3843 + $0x34] sm:$0xf]
      %v3858 = vld [vmem:[%s3843 + $0x38] sm:$0xf]
      %v3859 = vld [vmem:[%s3843 + $0x3c] sm:$0xf]
      %v3860 = vld [vmem:[%s3843 + $0x40] sm:$0xf]
      %v3861 = vld [vmem:[%s3843 + $0x44] sm:$0xf]
      %v3880 = vunpack.c.l.b16 %v3844
      %v3881 = vunpack.c.l.b16 %v3845
      %v3882 = vunpack.c.l.b16 %v3846
      %v3883 = vunpack.c.l.b16 %v3847
      %v3884 = vunpack.c.l.b16 %v3848
      %v3885 = vunpack.c.l.b16 %v3849
      %v3886 = vunpack.c.l.b16 %v3850
      %v3887 = vunpack.c.l.b16 %v3851
      %v3888 = vunpack.c.l.b16 %v3852
      %v3889 = vunpack.c.l.b16 %v3853
      %v3890 = vunpack.c.l.b16 %v3854
      %v3891 = vunpack.c.l.b16 %v3855
      %v3892 = vunpack.c.l.b16 %v3856
      %v3893 = vunpack.c.l.b16 %v3857
      %v3894 = vunpack.c.l.b16 %v3858
      %v3895 = vunpack.c.l.b16 %v3859
      %v3896 = vunpack.c.l.b16 %v3860
      %v3897 = vunpack.c.l.b16 %v3861
      %v3898 = vpack.c.b16 %v3881, %v3880
      %v3899 = vpack.c.b16 %v3883, %v3882
      %v3900 = vpack.c.b16 %v3885, %v3884
      %v3901 = vpack.c.b16 %v3887, %v3886
      %v3902 = vpack.c.b16 %v3889, %v3888
      %v3903 = vpack.c.b16 %v3891, %v3890
      %v3904 = vpack.c.b16 %v3893, %v3892
      %v3905 = vpack.c.b16 %v3895, %v3894
      %v3906 = vpack.c.b16 %v3897, %v3896
      %v3908 = vsel %vm3755, %v3898, 0
      %v3911 = vsel %vm3755, %v3899, 0
      %v3914 = vsel %vm3755, %v3900, 0
      %v3917 = vsel %vm3755, %v3901, 0
      %v3920 = vsel %vm3755, %v3902, 0
      %v3923 = vsel %vm3755, %v3903, 0
      %v3926 = vsel %vm3755, %v3904, 0
      %v3929 = vsel %vm3755, %v3905, 0
      %v3932 = vsel %vm3755, %v3906, 0
      %3934 = vmatpush.bf16.msra.mxu0 0
      %3935 = vmatpush.bf16.msra.mxu0 0
      %3936 = vmatpush.bf16.msra.mxu0 0
      %3937 = vmatpush.bf16.msra.mxu0 %v3785
      %3938 = vmatpush.bf16.msra.mxu0 %v3690
      %3939 = vmatpush.bf16.msra.mxu0 %v3689
      %3940 = vmatpush.bf16.msra.mxu0 %v3688
      %3941 = vmatpush.bf16.msra.mxu0 %v3687
      %3942 = vmatmul.bf16.gmra.mxu0 %v3908
      %v3943 = vpop.f32.mrf.mxu0
      %v3944 = vadd.f32 0.0, %v3943
      %v3945 = vpop.f32.mrf.mxu0
      %v3946 = vadd.f32 0.0, %v3945
      %3947 = vmatmul.bf16.gmra.mxu0 %v3911
      %v3948 = vpop.f32.mrf.mxu0
      %v3949 = vadd.f32 0.0, %v3948
      %v3950 = vpop.f32.mrf.mxu0
      %v3951 = vadd.f32 0.0, %v3950
      %3952 = vmatmul.bf16.gmra.mxu0 %v3914
      %v3953 = vpop.f32.mrf.mxu0
      %v3954 = vadd.f32 0.0, %v3953
      %v3955 = vpop.f32.mrf.mxu0
      %v3956 = vadd.f32 0.0, %v3955
      %3957 = vmatmul.bf16.gmra.mxu0 %v3917
      %v3958 = vpop.f32.mrf.mxu0
      %v3959 = vadd.f32 0.0, %v3958
      %v3960 = vpop.f32.mrf.mxu0
      %v3961 = vadd.f32 0.0, %v3960
      %3962 = vmatmul.bf16.gmra.mxu0 %v3920
      %v3963 = vpop.f32.mrf.mxu0
      %v3964 = vadd.f32 0.0, %v3963
      %v3965 = vpop.f32.mrf.mxu0
      %v3966 = vadd.f32 0.0, %v3965
      %3967 = vmatmul.bf16.gmra.mxu0 %v3923
      %v3968 = vpop.f32.mrf.mxu0
      %v3969 = vadd.f32 0.0, %v3968
      %v3970 = vpop.f32.mrf.mxu0
      %v3971 = vadd.f32 0.0, %v3970
      %3972 = vmatmul.bf16.gmra.mxu0 %v3926
      %v3973 = vpop.f32.mrf.mxu0
      %v3974 = vadd.f32 0.0, %v3973
      %v3975 = vpop.f32.mrf.mxu0
      %v3976 = vadd.f32 0.0, %v3975
      %3977 = vmatmul.bf16.gmra.mxu0 %v3929
      %v3978 = vpop.f32.mrf.mxu0
      %v3979 = vadd.f32 0.0, %v3978
      %v3980 = vpop.f32.mrf.mxu0
      %v3981 = vadd.f32 0.0, %v3980
      %3982 = vmatmul.bf16.gmra.mxu0 %v3932
      %v3983 = vpop.f32.mrf.mxu0
      %v3984 = vadd.f32 0.0, %v3983
      %v3985 = vpop.f32.mrf.mxu0
      %v3986 = vadd.f32 0.0, %v3985
      %3987 = vdwg.mxu0
      %s3988 = scalar_lea.vmem %s25, 16
      %v3989 = vld [vmem:[%s3988] sm:$0xff]
      %v3990 = vld [vmem:[%s3988 + $0x8] sm:$0x1]
      %vm3991 = vcmask 72704
      %v3993 = vsel %vm3991, %v3944, 0
      %v3996 = vsel %vm3991, %v3946, 0
      %v3999 = vsel %vm3991, %v3949, 0
      %v4002 = vsel %vm3991, %v3951, 0
      %v4005 = vsel %vm3991, %v3954, 0
      %v4008 = vsel %vm3991, %v3956, 0
      %v4011 = vsel %vm3991, %v3959, 0
      %v4014 = vsel %vm3991, %v3961, 0
      %v4017 = vsel %vm3991, %v3964, 0
      %v4020 = vsel %vm3991, %v3966, 0
      %v4023 = vsel %vm3991, %v3969, 0
      %v4026 = vsel %vm3991, %v3971, 0
      %v4029 = vsel %vm3991, %v3974, 0
      %v4032 = vsel %vm3991, %v3976, 0
      %v4035 = vsel %vm3991, %v3979, 0
      %v4038 = vsel %vm3991, %v3981, 0
      %v4041 = vsel %vm3991, %v3984, 0
      %v4044 = vsel %vm3991, %v3986, 0
      %vm4046 = vcmask 1040384
      %v4048 = vsel %vm4046, %v3990, 0
      %4050 = vmatpush.msra.mxu0 0.0
      %4051 = vmatpush.msra.mxu0 0.0
      %4052 = vmatpush.msra.mxu0 0.0
      %4053 = vmatpush.msra.mxu0 0.0
      %4054 = vmatpush.msra.mxu0 0.0
      %4055 = vmatpush.msra.mxu0 0.0
      %4056 = vmatpush.msra.mxu0 0.0
      %4057 = vmatpush.msra.mxu0 0.0
      %4058 = vmatpush.msra.mxu0 0.0
      %4059 = vmatpush.msra.mxu0 0.0
      %4060 = vmatpush.msra.mxu0 0.0
      %4061 = vmatpush.msra.mxu0 0.0
      %4062 = vmatpush.msra.mxu0 0.0
      %4063 = vmatpush.msra.mxu0 0.0
      %4064 = vmatpush.msra.mxu0 %v4048
      %4065 = vmatpush.msra.mxu0 %v3989
      %4066 = vmatmul.f32.gmra.mxu0 %v3993
      %v4067 = vpop.f32.mrf.mxu0
      %v4068 = vadd.f32 0.0, %v4067
      %4069 = vmatmul.f32.gmra.mxu0 %v3996
      %v4070 = vpop.f32.mrf.mxu0
      %v4071 = vadd.f32 0.0, %v4070
      %4072 = vmatmul.f32.gmra.mxu0 %v3999
      %v4073 = vpop.f32.mrf.mxu0
      %v4074 = vadd.f32 0.0, %v4073
      %4075 = vmatmul.f32.gmra.mxu0 %v4002
      %v4076 = vpop.f32.mrf.mxu0
      %v4077 = vadd.f32 0.0, %v4076
      %4078 = vmatmul.f32.gmra.mxu0 %v4005
      %v4079 = vpop.f32.mrf.mxu0
      %v4080 = vadd.f32 0.0, %v4079
      %4081 = vmatmul.f32.gmra.mxu0 %v4008
      %v4082 = vpop.f32.mrf.mxu0
      %v4083 = vadd.f32 0.0, %v4082
      %4084 = vmatmul.f32.gmra.mxu0 %v4011
      %v4085 = vpop.f32.mrf.mxu0
      %v4086 = vadd.f32 0.0, %v4085
      %4087 = vmatmul.f32.gmra.mxu0 %v4014
      %v4088 = vpop.f32.mrf.mxu0
      %v4089 = vadd.f32 0.0, %v4088
      %4090 = vmatmul.f32.gmra.mxu0 %v4017
      %v4091 = vpop.f32.mrf.mxu0
      %v4092 = vadd.f32 0.0, %v4091
      %4093 = vmatmul.f32.gmra.mxu0 %v4020
      %v4094 = vpop.f32.mrf.mxu0
      %v4095 = vadd.f32 0.0, %v4094
      %4096 = vmatmul.f32.gmra.mxu0 %v4023
      %v4097 = vpop.f32.mrf.mxu0
      %v4098 = vadd.f32 0.0, %v4097
      %4099 = vmatmul.f32.gmra.mxu0 %v4026
      %v4100 = vpop.f32.mrf.mxu0
      %v4101 = vadd.f32 0.0, %v4100
      %4102 = vmatmul.f32.gmra.mxu0 %v4029
      %v4103 = vpop.f32.mrf.mxu0
      %v4104 = vadd.f32 0.0, %v4103
      %4105 = vmatmul.f32.gmra.mxu0 %v4032
      %v4106 = vpop.f32.mrf.mxu0
      %v4107 = vadd.f32 0.0, %v4106
      %4108 = vmatmul.f32.gmra.mxu0 %v4035
      %v4109 = vpop.f32.mrf.mxu0
      %v4110 = vadd.f32 0.0, %v4109
      %4111 = vmatmul.f32.gmra.mxu0 %v4038
      %v4112 = vpop.f32.mrf.mxu0
      %v4113 = vadd.f32 0.0, %v4112
      %4114 = vmatmul.f32.gmra.mxu0 %v4041
      %v4115 = vpop.f32.mrf.mxu0
      %v4116 = vadd.f32 0.0, %v4115
      %4117 = vmatmul.f32.gmra.mxu0 %v4044
      %v4118 = vpop.f32.mrf.mxu0
      %v4119 = vadd.f32 0.0, %v4118
      %4120 = vdwg.mxu0
      %v4122 = vsel %vm3991, %v3797, 0
      %v4125 = vsel %vm3991, %v3799, 0
      %v4128 = vsel %vm3991, %v3802, 0
      %v4131 = vsel %vm3991, %v3804, 0
      %v4134 = vsel %vm3991, %v3807, 0
      %v4137 = vsel %vm3991, %v3809, 0
      %v4140 = vsel %vm3991, %v3812, 0
      %v4143 = vsel %vm3991, %v3814, 0
      %v4146 = vsel %vm3991, %v3817, 0
      %v4149 = vsel %vm3991, %v3819, 0
      %v4152 = vsel %vm3991, %v3822, 0
      %v4155 = vsel %vm3991, %v3824, 0
      %v4158 = vsel %vm3991, %v3827, 0
      %v4161 = vsel %vm3991, %v3829, 0
      %v4164 = vsel %vm3991, %v3832, 0
      %v4167 = vsel %vm3991, %v3834, 0
      %v4170 = vsel %vm3991, %v3837, 0
      %v4173 = vsel %vm3991, %v3839, 0
      %v4176 = vsel %vm4046, %v3842, 0
      %4178 = vmatpush.msra.mxu0 0.0
      %4179 = vmatpush.msra.mxu0 0.0
      %4180 = vmatpush.msra.mxu0 0.0
      %4181 = vmatpush.msra.mxu0 0.0
      %4182 = vmatpush.msra.mxu0 0.0
      %4183 = vmatpush.msra.mxu0 0.0
      %4184 = vmatpush.msra.mxu0 0.0
      %4185 = vmatpush.msra.mxu0 0.0
      %4186 = vmatpush.msra.mxu0 0.0
      %4187 = vmatpush.msra.mxu0 0.0
      %4188 = vmatpush.msra.mxu0 0.0
      %4189 = vmatpush.msra.mxu0 0.0
      %4190 = vmatpush.msra.mxu0 0.0
      %4191 = vmatpush.msra.mxu0 0.0
      %4192 = vmatpush.msra.mxu0 %v4176
      %4193 = vmatpush.msra.mxu0 %v3841
      %4194 = vmatmul.f32.gmra.mxu0 %v4122
      %v4195 = vpop.f32.mrf.mxu0
      %v4196 = vadd.f32 %v4068, %v4195
      %4197 = vmatmul.f32.gmra.mxu0 %v4125
      %v4198 = vpop.f32.mrf.mxu0
      %v4199 = vadd.f32 %v4071, %v4198
      %4200 = vmatmul.f32.gmra.mxu0 %v4128
      %v4201 = vpop.f32.mrf.mxu0
      %v4202 = vadd.f32 %v4074, %v4201
      %4203 = vmatmul.f32.gmra.mxu0 %v4131
      %v4204 = vpop.f32.mrf.mxu0
      %v4205 = vadd.f32 %v4077, %v4204
      %4206 = vmatmul.f32.gmra.mxu0 %v4134
      %v4207 = vpop.f32.mrf.mxu0
      %v4208 = vadd.f32 %v4080, %v4207
      %4209 = vmatmul.f32.gmra.mxu0 %v4137
      %v4210 = vpop.f32.mrf.mxu0
      %v4211 = vadd.f32 %v4083, %v4210
      %4212 = vmatmul.f32.gmra.mxu0 %v4140
      %v4213 = vpop.f32.mrf.mxu0
      %v4214 = vadd.f32 %v4086, %v4213
      %4215 = vmatmul.f32.gmra.mxu0 %v4143
      %v4216 = vpop.f32.mrf.mxu0
      %v4217 = vadd.f32 %v4089, %v4216
      %4218 = vmatmul.f32.gmra.mxu0 %v4146
      %v4219 = vpop.f32.mrf.mxu0
      %v4220 = vadd.f32 %v4092, %v4219
      %4221 = vmatmul.f32.gmra.mxu0 %v4149
      %v4222 = vpop.f32.mrf.mxu0
      %v4223 = vadd.f32 %v4095, %v4222
      %4224 = vmatmul.f32.gmra.mxu0 %v4152
      %v4225 = vpop.f32.mrf.mxu0
      %v4226 = vadd.f32 %v4098, %v4225
      %4227 = vmatmul.f32.gmra.mxu0 %v4155
      %v4228 = vpop.f32.mrf.mxu0
      %v4229 = vadd.f32 %v4101, %v4228
      %4230 = vmatmul.f32.gmra.mxu0 %v4158
      %v4231 = vpop.f32.mrf.mxu0
      %v4232 = vadd.f32 %v4104, %v4231
      %4233 = vmatmul.f32.gmra.mxu0 %v4161
      %v4234 = vpop.f32.mrf.mxu0
      %v4235 = vadd.f32 %v4107, %v4234
      %4236 = vmatmul.f32.gmra.mxu0 %v4164
      %v4237 = vpop.f32.mrf.mxu0
      %v4238 = vadd.f32 %v4110, %v4237
      %4239 = vmatmul.f32.gmra.mxu0 %v4167
      %v4240 = vpop.f32.mrf.mxu0
      %v4241 = vadd.f32 %v4113, %v4240
      %4242 = vmatmul.f32.gmra.mxu0 %v4170
      %v4243 = vpop.f32.mrf.mxu0
      %v4244 = vadd.f32 %v4116, %v4243
      %4245 = vmatmul.f32.gmra.mxu0 %v4173
      %v4246 = vpop.f32.mrf.mxu0
      %v4247 = vadd.f32 %v4119, %v4246
      %4248 = vdwg.mxu0
      %s4249 = scalar_lea.vmem %s23, 144
      %v4250 = vld [vmem:[%s4249] sm:$0xf]
      %v4251 = vld [vmem:[%s4249 + $0x4] sm:$0xf]
      %v4252 = vld [vmem:[%s4249 + $0x8] sm:$0xf]
      %v4253 = vld [vmem:[%s4249 + $0xc] sm:$0xf]
      %v4254 = vld [vmem:[%s4249 + $0x10] sm:$0xf]
      %v4255 = vld [vmem:[%s4249 + $0x14] sm:$0xf]
      %v4256 = vld [vmem:[%s4249 + $0x18] sm:$0xf]
      %v4257 = vld [vmem:[%s4249 + $0x1c] sm:$0xf]
      %v4258 = vld [vmem:[%s4249 + $0x20] sm:$0xf]
      %v4259 = vld [vmem:[%s4249 + $0x24] sm:$0xf]
      %v4260 = vld [vmem:[%s4249 + $0x28] sm:$0xf]
      %v4261 = vld [vmem:[%s4249 + $0x2c] sm:$0xf]
      %v4262 = vld [vmem:[%s4249 + $0x30] sm:$0xf]
      %v4263 = vld [vmem:[%s4249 + $0x34] sm:$0xf]
      %v4264 = vld [vmem:[%s4249 + $0x38] sm:$0xf]
      %v4265 = vld [vmem:[%s4249 + $0x3c] sm:$0xf]
      %v4266 = vld [vmem:[%s4249 + $0x40] sm:$0xf]
      %v4267 = vld [vmem:[%s4249 + $0x44] sm:$0xf]
      %v4286 = vunpack.c.l.b16 %v4250
      %v4287 = vunpack.c.l.b16 %v4251
      %v4288 = vunpack.c.l.b16 %v4252
      %v4289 = vunpack.c.l.b16 %v4253
      %v4290 = vunpack.c.l.b16 %v4254
      %v4291 = vunpack.c.l.b16 %v4255
      %v4292 = vunpack.c.l.b16 %v4256
      %v4293 = vunpack.c.l.b16 %v4257
      %v4294 = vunpack.c.l.b16 %v4258
      %v4295 = vunpack.c.l.b16 %v4259
      %v4296 = vunpack.c.l.b16 %v4260
      %v4297 = vunpack.c.l.b16 %v4261
      %v4298 = vunpack.c.l.b16 %v4262
      %v4299 = vunpack.c.l.b16 %v4263
      %v4300 = vunpack.c.l.b16 %v4264
      %v4301 = vunpack.c.l.b16 %v4265
      %v4302 = vunpack.c.l.b16 %v4266
      %v4303 = vunpack.c.l.b16 %v4267
      %v4304 = vpack.c.b16 %v4287, %v4286
      %v4305 = vpack.c.b16 %v4289, %v4288
      %v4306 = vpack.c.b16 %v4291, %v4290
      %v4307 = vpack.c.b16 %v4293, %v4292
      %v4308 = vpack.c.b16 %v4295, %v4294
      %v4309 = vpack.c.b16 %v4297, %v4296
      %v4310 = vpack.c.b16 %v4299, %v4298
      %v4311 = vpack.c.b16 %v4301, %v4300
      %v4312 = vpack.c.b16 %v4303, %v4302
      %v4314 = vsel %vm3755, %v4304, 0
      %v4317 = vsel %vm3755, %v4305, 0
      %v4320 = vsel %vm3755, %v4306, 0
      %v4323 = vsel %vm3755, %v4307, 0
      %v4326 = vsel %vm3755, %v4308, 0
      %v4329 = vsel %vm3755, %v4309, 0
      %v4332 = vsel %vm3755, %v4310, 0
      %v4335 = vsel %vm3755, %v4311, 0
      %v4338 = vsel %vm3755, %v4312, 0
      %4340 = vmatpush.bf16.msra.mxu0 0
      %4341 = vmatpush.bf16.msra.mxu0 0
      %4342 = vmatpush.bf16.msra.mxu0 0
      %4343 = vmatpush.bf16.msra.mxu0 %v3785
      %4344 = vmatpush.bf16.msra.mxu0 %v3690
      %4345 = vmatpush.bf16.msra.mxu0 %v3689
      %4346 = vmatpush.bf16.msra.mxu0 %v3688
      %4347 = vmatpush.bf16.msra.mxu0 %v3687
      %4348 = vmatmul.bf16.gmra.mxu0 %v4314
      %v4349 = vpop.f32.mrf.mxu0
      %v4350 = vadd.f32 0.0, %v4349
      %v4351 = vpop.f32.mrf.mxu0
      %v4352 = vadd.f32 0.0, %v4351
      %4353 = vmatmul.bf16.gmra.mxu0 %v4317
      %v4354 = vpop.f32.mrf.mxu0
      %v4355 = vadd.f32 0.0, %v4354
      %v4356 = vpop.f32.mrf.mxu0
      %v4357 = vadd.f32 0.0, %v4356
      %4358 = vmatmul.bf16.gmra.mxu0 %v4320
      %v4359 = vpop.f32.mrf.mxu0
      %v4360 = vadd.f32 0.0, %v4359
      %v4361 = vpop.f32.mrf.mxu0
      %v4362 = vadd.f32 0.0, %v4361
      %4363 = vmatmul.bf16.gmra.mxu0 %v4323
      %v4364 = vpop.f32.mrf.mxu0
      %v4365 = vadd.f32 0.0, %v4364
      %v4366 = vpop.f32.mrf.mxu0
      %v4367 = vadd.f32 0.0, %v4366
      %4368 = vmatmul.bf16.gmra.mxu0 %v4326
      %v4369 = vpop.f32.mrf.mxu0
      %v4370 = vadd.f32 0.0, %v4369
      %v4371 = vpop.f32.mrf.mxu0
      %v4372 = vadd.f32 0.0, %v4371
      %4373 = vmatmul.bf16.gmra.mxu0 %v4329
      %v4374 = vpop.f32.mrf.mxu0
      %v4375 = vadd.f32 0.0, %v4374
      %v4376 = vpop.f32.mrf.mxu0
      %v4377 = vadd.f32 0.0, %v4376
      %4378 = vmatmul.bf16.gmra.mxu0 %v4332
      %v4379 = vpop.f32.mrf.mxu0
      %v4380 = vadd.f32 0.0, %v4379
      %v4381 = vpop.f32.mrf.mxu0
      %v4382 = vadd.f32 0.0, %v4381
      %4383 = vmatmul.bf16.gmra.mxu0 %v4335
      %v4384 = vpop.f32.mrf.mxu0
      %v4385 = vadd.f32 0.0, %v4384
      %v4386 = vpop.f32.mrf.mxu0
      %v4387 = vadd.f32 0.0, %v4386
      %4388 = vmatmul.bf16.gmra.mxu0 %v4338
      %v4389 = vpop.f32.mrf.mxu0
      %v4390 = vadd.f32 0.0, %v4389
      %v4391 = vpop.f32.mrf.mxu0
      %v4392 = vadd.f32 0.0, %v4391
      %4393 = vdwg.mxu0
      %s4394 = scalar_lea.vmem %s25, 32
      %v4395 = vld [vmem:[%s4394] sm:$0xff]
      %v4396 = vld [vmem:[%s4394 + $0x8] sm:$0x1]
      %v4398 = vsel %vm3991, %v4350, 0
      %v4401 = vsel %vm3991, %v4352, 0
      %v4404 = vsel %vm3991, %v4355, 0
      %v4407 = vsel %vm3991, %v4357, 0
      %v4410 = vsel %vm3991, %v4360, 0
      %v4413 = vsel %vm3991, %v4362, 0
      %v4416 = vsel %vm3991, %v4365, 0
      %v4419 = vsel %vm3991, %v4367, 0
      %v4422 = vsel %vm3991, %v4370, 0
      %v4425 = vsel %vm3991, %v4372, 0
      %v4428 = vsel %vm3991, %v4375, 0
      %v4431 = vsel %vm3991, %v4377, 0
      %v4434 = vsel %vm3991, %v4380, 0
      %v4437 = vsel %vm3991, %v4382, 0
      %v4440 = vsel %vm3991, %v4385, 0
      %v4443 = vsel %vm3991, %v4387, 0
      %v4446 = vsel %vm3991, %v4390, 0
      %v4449 = vsel %vm3991, %v4392, 0
      %v4452 = vsel %vm4046, %v4396, 0
      %4454 = vmatpush.msra.mxu0 0.0
      %4455 = vmatpush.msra.mxu0 0.0
      %4456 = vmatpush.msra.mxu0 0.0
      %4457 = vmatpush.msra.mxu0 0.0
      %4458 = vmatpush.msra.mxu0 0.0
      %4459 = vmatpush.msra.mxu0 0.0
      %4460 = vmatpush.msra.mxu0 0.0
      %4461 = vmatpush.msra.mxu0 0.0
      %4462 = vmatpush.msra.mxu0 0.0
      %4463 = vmatpush.msra.mxu0 0.0
      %4464 = vmatpush.msra.mxu0 0.0
      %4465 = vmatpush.msra.mxu0 0.0
      %4466 = vmatpush.msra.mxu0 0.0
      %4467 = vmatpush.msra.mxu0 0.0
      %4468 = vmatpush.msra.mxu0 %v4452
      %4469 = vmatpush.msra.mxu0 %v4395
      %4470 = vmatmul.f32.gmra.mxu0 %v4398
      %v4471 = vpop.f32.mrf.mxu0
      %v4472 = vadd.f32 0.0, %v4471
      %4473 = vmatmul.f32.gmra.mxu0 %v4401
      %v4474 = vpop.f32.mrf.mxu0
      %v4475 = vadd.f32 0.0, %v4474
      %4476 = vmatmul.f32.gmra.mxu0 %v4404
      %v4477 = vpop.f32.mrf.mxu0
      %v4478 = vadd.f32 0.0, %v4477
      %4479 = vmatmul.f32.gmra.mxu0 %v4407
      %v4480 = vpop.f32.mrf.mxu0
      %v4481 = vadd.f32 0.0, %v4480
      %4482 = vmatmul.f32.gmra.mxu0 %v4410
      %v4483 = vpop.f32.mrf.mxu0
      %v4484 = vadd.f32 0.0, %v4483
      %4485 = vmatmul.f32.gmra.mxu0 %v4413
      %v4486 = vpop.f32.mrf.mxu0
      %v4487 = vadd.f32 0.0, %v4486
      %4488 = vmatmul.f32.gmra.mxu0 %v4416
      %v4489 = vpop.f32.mrf.mxu0
      %v4490 = vadd.f32 0.0, %v4489
      %4491 = vmatmul.f32.gmra.mxu0 %v4419
      %v4492 = vpop.f32.mrf.mxu0
      %v4493 = vadd.f32 0.0, %v4492
      %4494 = vmatmul.f32.gmra.mxu0 %v4422
      %v4495 = vpop.f32.mrf.mxu0
      %v4496 = vadd.f32 0.0, %v4495
      %4497 = vmatmul.f32.gmra.mxu0 %v4425
      %v4498 = vpop.f32.mrf.mxu0
      %v4499 = vadd.f32 0.0, %v4498
      %4500 = vmatmul.f32.gmra.mxu0 %v4428
      %v4501 = vpop.f32.mrf.mxu0
      %v4502 = vadd.f32 0.0, %v4501
      %4503 = vmatmul.f32.gmra.mxu0 %v4431
      %v4504 = vpop.f32.mrf.mxu0
      %v4505 = vadd.f32 0.0, %v4504
      %4506 = vmatmul.f32.gmra.mxu0 %v4434
      %v4507 = vpop.f32.mrf.mxu0
      %v4508 = vadd.f32 0.0, %v4507
      %4509 = vmatmul.f32.gmra.mxu0 %v4437
      %v4510 = vpop.f32.mrf.mxu0
      %v4511 = vadd.f32 0.0, %v4510
      %4512 = vmatmul.f32.gmra.mxu0 %v4440
      %v4513 = vpop.f32.mrf.mxu0
      %v4514 = vadd.f32 0.0, %v4513
      %4515 = vmatmul.f32.gmra.mxu0 %v4443
      %v4516 = vpop.f32.mrf.mxu0
      %v4517 = vadd.f32 0.0, %v4516
      %4518 = vmatmul.f32.gmra.mxu0 %v4446
      %v4519 = vpop.f32.mrf.mxu0
      %v4520 = vadd.f32 0.0, %v4519
      %4521 = vmatmul.f32.gmra.mxu0 %v4449
      %v4522 = vpop.f32.mrf.mxu0
      %v4523 = vadd.f32 0.0, %v4522
      %4524 = vdwg.mxu0
      %v4525 = vadd.f32 %v4196, %v4472
      %v4526 = vadd.f32 %v4199, %v4475
      %v4527 = vadd.f32 %v4202, %v4478
      %v4528 = vadd.f32 %v4205, %v4481
      %v4529 = vadd.f32 %v4208, %v4484
      %v4530 = vadd.f32 %v4211, %v4487
      %v4531 = vadd.f32 %v4214, %v4490
      %v4532 = vadd.f32 %v4217, %v4493
      %v4533 = vadd.f32 %v4220, %v4496
      %v4534 = vadd.f32 %v4223, %v4499
      %v4535 = vadd.f32 %v4226, %v4502
      %v4536 = vadd.f32 %v4229, %v4505
      %v4537 = vadd.f32 %v4232, %v4508
      %v4538 = vadd.f32 %v4235, %v4511
      %v4539 = vadd.f32 %v4238, %v4514
      %v4540 = vadd.f32 %v4241, %v4517
      %v4541 = vadd.f32 %v4244, %v4520
      %v4542 = vadd.f32 %v4247, %v4523
      %v4543 = vld [vmem:[%s27] sm:$0xff]
      %v4544 = vld [vmem:[%s27 + $0x8] sm:$0xff]
      %v4545 = vld [vmem:[%s27 + $0x10] sm:$0xff]
      %v4546 = vld [vmem:[%s27 + $0x18] sm:$0xff]
      %v4547 = vld [vmem:[%s27 + $0x20] sm:$0xff]
      %v4548 = vld [vmem:[%s27 + $0x28] sm:$0xff]
      %v4549 = vld [vmem:[%s27 + $0x30] sm:$0xff]
      %v4550 = vld [vmem:[%s27 + $0x38] sm:$0xff]
      %v4551 = vld [vmem:[%s27 + $0x40] sm:$0xff]
      %v4552 = vld [vmem:[%s27 + $0x48] sm:$0xff]
      %v4553 = vld [vmem:[%s27 + $0x50] sm:$0xff]
      %v4554 = vld [vmem:[%s27 + $0x58] sm:$0xff]
      %v4555 = vld [vmem:[%s27 + $0x60] sm:$0xff]
      %v4556 = vld [vmem:[%s27 + $0x68] sm:$0xff]
      %v4557 = vld [vmem:[%s27 + $0x70] sm:$0xff]
      %v4558 = vld [vmem:[%s27 + $0x78] sm:$0xff]
      %v4559 = vld [vmem:[%s27 + $0x80] sm:$0xff]
      %v4560 = vld [vmem:[%s27 + $0x88] sm:$0xff]
      %4562 = vset.pattern.permute.xlu0 0
      %4563 = vperm.xlu0 %4562, %v4543
      %v4564 = vpop.permute.xlu0 %4563
      %4567 = vset.pattern.permute.xlu0 0
      %4568 = vperm.xlu0 %4567, %v4544
      %v4569 = vpop.permute.xlu0 %4568
      %4572 = vset.pattern.permute.xlu0 0
      %4573 = vperm.xlu0 %4572, %v4545
      %v4574 = vpop.permute.xlu0 %4573
      %4577 = vset.pattern.permute.xlu0 0
      %4578 = vperm.xlu0 %4577, %v4546
      %v4579 = vpop.permute.xlu0 %4578
      %4582 = vset.pattern.permute.xlu0 0
      %4583 = vperm.xlu0 %4582, %v4547
      %v4584 = vpop.permute.xlu0 %4583
      %4587 = vset.pattern.permute.xlu0 0
      %4588 = vperm.xlu0 %4587, %v4548
      %v4589 = vpop.permute.xlu0 %4588
      %4592 = vset.pattern.permute.xlu0 0
      %4593 = vperm.xlu0 %4592, %v4549
      %v4594 = vpop.permute.xlu0 %4593
      %4597 = vset.pattern.permute.xlu0 0
      %4598 = vperm.xlu0 %4597, %v4550
      %v4599 = vpop.permute.xlu0 %4598
      %4602 = vset.pattern.permute.xlu0 0
      %4603 = vperm.xlu0 %4602, %v4551
      %v4604 = vpop.permute.xlu0 %4603
      %4607 = vset.pattern.permute.xlu0 0
      %4608 = vperm.xlu0 %4607, %v4552
      %v4609 = vpop.permute.xlu0 %4608
      %4612 = vset.pattern.permute.xlu0 0
      %4613 = vperm.xlu0 %4612, %v4553
      %v4614 = vpop.permute.xlu0 %4613
      %4617 = vset.pattern.permute.xlu0 0
      %4618 = vperm.xlu0 %4617, %v4554
      %v4619 = vpop.permute.xlu0 %4618
      %4622 = vset.pattern.permute.xlu0 0
      %4623 = vperm.xlu0 %4622, %v4555
      %v4624 = vpop.permute.xlu0 %4623
      %4627 = vset.pattern.permute.xlu0 0
      %4628 = vperm.xlu0 %4627, %v4556
      %v4629 = vpop.permute.xlu0 %4628
      %4632 = vset.pattern.permute.xlu0 0
      %4633 = vperm.xlu0 %4632, %v4557
      %v4634 = vpop.permute.xlu0 %4633
      %4637 = vset.pattern.permute.xlu0 0
      %4638 = vperm.xlu0 %4637, %v4558
      %v4639 = vpop.permute.xlu0 %4638
      %4642 = vset.pattern.permute.xlu0 0
      %4643 = vperm.xlu0 %4642, %v4559
      %v4644 = vpop.permute.xlu0 %4643
      %4647 = vset.pattern.permute.xlu0 0
      %4648 = vperm.xlu0 %4647, %v4560
      %v4649 = vpop.permute.xlu0 %4648
      %v4651 = vadd.f32 %v4525, %v4564
      %v4652 = vadd.f32 %v4526, %v4569
      %v4653 = vadd.f32 %v4527, %v4574
      %v4654 = vadd.f32 %v4528, %v4579
      %v4655 = vadd.f32 %v4529, %v4584
      %v4656 = vadd.f32 %v4530, %v4589
      %v4657 = vadd.f32 %v4531, %v4594
      %v4658 = vadd.f32 %v4532, %v4599
      %v4659 = vadd.f32 %v4533, %v4604
      %v4660 = vadd.f32 %v4534, %v4609
      %v4661 = vadd.f32 %v4535, %v4614
      %v4662 = vadd.f32 %v4536, %v4619
      %v4663 = vadd.f32 %v4537, %v4624
      %v4664 = vadd.f32 %v4538, %v4629
      %v4665 = vadd.f32 %v4539, %v4634
      %v4666 = vadd.f32 %v4540, %v4639
      %v4667 = vadd.f32 %v4541, %v4644
      %v4668 = vadd.f32 %v4542, %v4649
      %v4669 = vmax.f32 %v4651, 0.0
      %v4670 = vmax.f32 %v4652, 0.0
      %v4671 = vmax.f32 %v4653, 0.0
      %v4672 = vmax.f32 %v4654, 0.0
      %v4673 = vmax.f32 %v4655, 0.0
      %v4674 = vmax.f32 %v4656, 0.0
      %v4675 = vmax.f32 %v4657, 0.0
      %v4676 = vmax.f32 %v4658, 0.0
      %v4677 = vmax.f32 %v4659, 0.0
      %v4678 = vmax.f32 %v4660, 0.0
      %v4679 = vmax.f32 %v4661, 0.0
      %v4680 = vmax.f32 %v4662, 0.0
      %v4681 = vmax.f32 %v4663, 0.0
      %v4682 = vmax.f32 %v4664, 0.0
      %v4683 = vmax.f32 %v4665, 0.0
      %v4684 = vmax.f32 %v4666, 0.0
      %v4685 = vmax.f32 %v4667, 0.0
      %v4686 = vmax.f32 %v4668, 0.0
      %v4687 = vld [vmem:[%s29] sm:$0xff]
      %v4688 = vld [vmem:[%s29 + $0x8] sm:$0xff]
      %v4689 = vld [vmem:[%s29 + $0x10] sm:$0xff]
      %v4690 = vld [vmem:[%s29 + $0x18] sm:$0xff]
      %v4691 = vld [vmem:[%s29 + $0x20] sm:$0xff]
      %v4692 = vld [vmem:[%s29 + $0x28] sm:$0xff]
      %v4693 = vld [vmem:[%s29 + $0x30] sm:$0xff]
      %v4694 = vld [vmem:[%s29 + $0x38] sm:$0xff]
      %v4695 = vld [vmem:[%s29 + $0x40] sm:$0xff]
      %v4696 = vld [vmem:[%s29 + $0x48] sm:$0xff]
      %v4697 = vld [vmem:[%s29 + $0x50] sm:$0xff]
      %v4698 = vld [vmem:[%s29 + $0x58] sm:$0xff]
      %v4699 = vld [vmem:[%s29 + $0x60] sm:$0xff]
      %v4700 = vld [vmem:[%s29 + $0x68] sm:$0xff]
      %v4701 = vld [vmem:[%s29 + $0x70] sm:$0xff]
      %v4702 = vld [vmem:[%s29 + $0x78] sm:$0xff]
      %v4703 = vld [vmem:[%s29 + $0x80] sm:$0xff]
      %v4704 = vld [vmem:[%s29 + $0x88] sm:$0xff]
      %v4705 = vld [vmem:[%s29 + $0x90] sm:$0xff]
      %v4706 = vld [vmem:[%s29 + $0x98] sm:$0xff]
      %v4708 = vsel %vm2701, %v4688, 0
      %v4711 = vsel %vm2701, %v4690, 0
      %v4714 = vsel %vm2701, %v4692, 0
      %v4717 = vsel %vm2701, %v4694, 0
      %v4720 = vsel %vm2701, %v4696, 0
      %v4723 = vsel %vm2701, %v4698, 0
      %v4726 = vsel %vm2701, %v4700, 0
      %v4729 = vsel %vm2701, %v4702, 0
      %v4732 = vsel %vm2701, %v4704, 0
      %v4735 = vsel %vm2701, %v4706, 0
      %4737 = vmatpush.msra.mxu0 %v4684
      %4738 = vmatpush.msra.mxu0 %v4683
      %4739 = vmatpush.msra.mxu0 %v4682
      %4740 = vmatpush.msra.mxu0 %v4681
      %4741 = vmatpush.msra.mxu0 %v4680
      %4742 = vmatpush.msra.mxu0 %v4679
      %4743 = vmatpush.msra.mxu0 %v4678
      %4744 = vmatpush.msra.mxu0 %v4677
      %4745 = vmatpush.msra.mxu0 %v4676
      %4746 = vmatpush.msra.mxu0 %v4675
      %4747 = vmatpush.msra.mxu0 %v4674
      %4748 = vmatpush.msra.mxu0 %v4673
      %4749 = vmatpush.msra.mxu0 %v4672
      %4750 = vmatpush.msra.mxu0 %v4671
      %4751 = vmatpush.msra.mxu0 %v4670
      %4752 = vmatpush.msra.mxu0 %v4669
      %4753 = vmatmul.f32.gmra.mxu0 %v4687
      %v4754 = vpop.f32.mrf.mxu0
      %v4755 = vadd.f32 0.0, %v4754
      %4756 = vmatmul.f32.gmra.mxu0 %v4689
      %v4757 = vpop.f32.mrf.mxu0
      %v4758 = vadd.f32 0.0, %v4757
      %4759 = vmatmul.f32.gmra.mxu0 %v4691
      %v4760 = vpop.f32.mrf.mxu0
      %v4761 = vadd.f32 0.0, %v4760
      %4762 = vmatmul.f32.gmra.mxu0 %v4693
      %v4763 = vpop.f32.mrf.mxu0
      %v4764 = vadd.f32 0.0, %v4763
      %4765 = vmatmul.f32.gmra.mxu0 %v4695
      %v4766 = vpop.f32.mrf.mxu0
      %v4767 = vadd.f32 0.0, %v4766
      %4768 = vmatmul.f32.gmra.mxu0 %v4697
      %v4769 = vpop.f32.mrf.mxu0
      %v4770 = vadd.f32 0.0, %v4769
      %4771 = vmatmul.f32.gmra.mxu0 %v4699
      %v4772 = vpop.f32.mrf.mxu0
      %v4773 = vadd.f32 0.0, %v4772
      %4774 = vmatmul.f32.gmra.mxu0 %v4701
      %v4775 = vpop.f32.mrf.mxu0
      %v4776 = vadd.f32 0.0, %v4775
      %4777 = vmatmul.f32.gmra.mxu0 %v4703
      %v4778 = vpop.f32.mrf.mxu0
      %v4779 = vadd.f32 0.0, %v4778
      %4780 = vmatmul.f32.gmra.mxu0 %v4705
      %v4781 = vpop.f32.mrf.mxu0
      %v4782 = vadd.f32 0.0, %v4781
      %4783 = vdwg.mxu0
      %4784 = vmatpush.msra.mxu0 0.0
      %4785 = vmatpush.msra.mxu0 0.0
      %4786 = vmatpush.msra.mxu0 0.0
      %4787 = vmatpush.msra.mxu0 0.0
      %4788 = vmatpush.msra.mxu0 0.0
      %4789 = vmatpush.msra.mxu0 0.0
      %4790 = vmatpush.msra.mxu0 0.0
      %4791 = vmatpush.msra.mxu0 0.0
      %4792 = vmatpush.msra.mxu0 0.0
      %4793 = vmatpush.msra.mxu0 0.0
      %4794 = vmatpush.msra.mxu0 0.0
      %4795 = vmatpush.msra.mxu0 0.0
      %4796 = vmatpush.msra.mxu0 0.0
      %4797 = vmatpush.msra.mxu0 0.0
      %4798 = vmatpush.msra.mxu0 %v4686
      %4799 = vmatpush.msra.mxu0 %v4685
      %4800 = vmatmul.f32.gmra.mxu0 %v4708
      %v4801 = vpop.f32.mrf.mxu0
      %v4802 = vadd.f32 %v4755, %v4801
      %4803 = vmatmul.f32.gmra.mxu0 %v4711
      %v4804 = vpop.f32.mrf.mxu0
      %v4805 = vadd.f32 %v4758, %v4804
      %4806 = vmatmul.f32.gmra.mxu0 %v4714
      %v4807 = vpop.f32.mrf.mxu0
      %v4808 = vadd.f32 %v4761, %v4807
      %4809 = vmatmul.f32.gmra.mxu0 %v4717
      %v4810 = vpop.f32.mrf.mxu0
      %v4811 = vadd.f32 %v4764, %v4810
      %4812 = vmatmul.f32.gmra.mxu0 %v4720
      %v4813 = vpop.f32.mrf.mxu0
      %v4814 = vadd.f32 %v4767, %v4813
      %4815 = vmatmul.f32.gmra.mxu0 %v4723
      %v4816 = vpop.f32.mrf.mxu0
      %v4817 = vadd.f32 %v4770, %v4816
      %4818 = vmatmul.f32.gmra.mxu0 %v4726
      %v4819 = vpop.f32.mrf.mxu0
      %v4820 = vadd.f32 %v4773, %v4819
      %4821 = vmatmul.f32.gmra.mxu0 %v4729
      %v4822 = vpop.f32.mrf.mxu0
      %v4823 = vadd.f32 %v4776, %v4822
      %4824 = vmatmul.f32.gmra.mxu0 %v4732
      %v4825 = vpop.f32.mrf.mxu0
      %v4826 = vadd.f32 %v4779, %v4825
      %4827 = vmatmul.f32.gmra.mxu0 %v4735
      %v4828 = vpop.f32.mrf.mxu0
      %v4829 = vadd.f32 %v4782, %v4828
      %4830 = vdwg.mxu0
      %v4831 = vld [vmem:[%s31] sm:$0xff]
      %v4832 = vld [vmem:[%s31 + $0x8] sm:$0x1]
      %v4834 = vsel %vm3991, %v4802, 0
      %v4837 = vsel %vm3991, %v4805, 0
      %v4840 = vsel %vm3991, %v4808, 0
      %v4843 = vsel %vm3991, %v4811, 0
      %v4846 = vsel %vm3991, %v4814, 0
      %v4849 = vsel %vm3991, %v4817, 0
      %v4852 = vsel %vm3991, %v4820, 0
      %v4855 = vsel %vm3991, %v4823, 0
      %v4858 = vsel %vm3991, %v4826, 0
      %v4861 = vsel %vm3991, %v4829, 0
      %v4864 = vsel %vm4046, %v4832, 0
      %4866 = vmatpush.msra.mxu0 0.0
      %4867 = vmatpush.msra.mxu0 0.0
      %4868 = vmatpush.msra.mxu0 0.0
      %4869 = vmatpush.msra.mxu0 0.0
      %4870 = vmatpush.msra.mxu0 0.0
      %4871 = vmatpush.msra.mxu0 0.0
      %4872 = vmatpush.msra.mxu0 0.0
      %4873 = vmatpush.msra.mxu0 0.0
      %4874 = vmatpush.msra.mxu0 0.0
      %4875 = vmatpush.msra.mxu0 0.0
      %4876 = vmatpush.msra.mxu0 0.0
      %4877 = vmatpush.msra.mxu0 0.0
      %4878 = vmatpush.msra.mxu0 0.0
      %4879 = vmatpush.msra.mxu0 0.0
      %4880 = vmatpush.msra.mxu0 %v4864
      %4881 = vmatpush.msra.mxu0 %v4831
      %4882 = vmatmul.f32.gmra.mxu0 %v4834
      %v4883 = vpop.f32.mrf.mxu0
      %v4884 = vadd.f32 0.0, %v4883
      %4885 = vmatmul.f32.gmra.mxu0 %v4837
      %v4886 = vpop.f32.mrf.mxu0
      %v4887 = vadd.f32 0.0, %v4886
      %4888 = vmatmul.f32.gmra.mxu0 %v4840
      %v4889 = vpop.f32.mrf.mxu0
      %v4890 = vadd.f32 0.0, %v4889
      %4891 = vmatmul.f32.gmra.mxu0 %v4843
      %v4892 = vpop.f32.mrf.mxu0
      %v4893 = vadd.f32 0.0, %v4892
      %4894 = vmatmul.f32.gmra.mxu0 %v4846
      %v4895 = vpop.f32.mrf.mxu0
      %v4896 = vadd.f32 0.0, %v4895
      %4897 = vmatmul.f32.gmra.mxu0 %v4849
      %v4898 = vpop.f32.mrf.mxu0
      %v4899 = vadd.f32 0.0, %v4898
      %4900 = vmatmul.f32.gmra.mxu0 %v4852
      %v4901 = vpop.f32.mrf.mxu0
      %v4902 = vadd.f32 0.0, %v4901
      %4903 = vmatmul.f32.gmra.mxu0 %v4855
      %v4904 = vpop.f32.mrf.mxu0
      %v4905 = vadd.f32 0.0, %v4904
      %4906 = vmatmul.f32.gmra.mxu0 %v4858
      %v4907 = vpop.f32.mrf.mxu0
      %v4908 = vadd.f32 0.0, %v4907
      %4909 = vmatmul.f32.gmra.mxu0 %v4861
      %v4910 = vpop.f32.mrf.mxu0
      %v4911 = vadd.f32 0.0, %v4910
      %4912 = vdwg.mxu0
      %s4913 = scalar_lea.vmem %s31, 16
      %v4914 = vld [vmem:[%s4913] sm:$0xff]
      %v4915 = vld [vmem:[%s4913 + $0x8] sm:$0x1]
      %v4917 = vsel %vm4046, %v4915, 0
      %4919 = vmatpush.msra.mxu0 0.0
      %4920 = vmatpush.msra.mxu0 0.0
      %4921 = vmatpush.msra.mxu0 0.0
      %4922 = vmatpush.msra.mxu0 0.0
      %4923 = vmatpush.msra.mxu0 0.0
      %4924 = vmatpush.msra.mxu0 0.0
      %4925 = vmatpush.msra.mxu0 0.0
      %4926 = vmatpush.msra.mxu0 0.0
      %4927 = vmatpush.msra.mxu0 0.0
      %4928 = vmatpush.msra.mxu0 0.0
      %4929 = vmatpush.msra.mxu0 0.0
      %4930 = vmatpush.msra.mxu0 0.0
      %4931 = vmatpush.msra.mxu0 0.0
      %4932 = vmatpush.msra.mxu0 0.0
      %4933 = vmatpush.msra.mxu0 %v4917
      %4934 = vmatpush.msra.mxu0 %v4914
      %4935 = vmatmul.f32.gmra.mxu0 %v4834
      %v4936 = vpop.f32.mrf.mxu0
      %v4937 = vadd.f32 0.0, %v4936
      %4938 = vmatmul.f32.gmra.mxu0 %v4837
      %v4939 = vpop.f32.mrf.mxu0
      %v4940 = vadd.f32 0.0, %v4939
      %4941 = vmatmul.f32.gmra.mxu0 %v4840
      %v4942 = vpop.f32.mrf.mxu0
      %v4943 = vadd.f32 0.0, %v4942
      %4944 = vmatmul.f32.gmra.mxu0 %v4843
      %v4945 = vpop.f32.mrf.mxu0
      %v4946 = vadd.f32 0.0, %v4945
      %4947 = vmatmul.f32.gmra.mxu0 %v4846
      %v4948 = vpop.f32.mrf.mxu0
      %v4949 = vadd.f32 0.0, %v4948
      %4950 = vmatmul.f32.gmra.mxu0 %v4849
      %v4951 = vpop.f32.mrf.mxu0
      %v4952 = vadd.f32 0.0, %v4951
      %4953 = vmatmul.f32.gmra.mxu0 %v4852
      %v4954 = vpop.f32.mrf.mxu0
      %v4955 = vadd.f32 0.0, %v4954
      %4956 = vmatmul.f32.gmra.mxu0 %v4855
      %v4957 = vpop.f32.mrf.mxu0
      %v4958 = vadd.f32 0.0, %v4957
      %4959 = vmatmul.f32.gmra.mxu0 %v4858
      %v4960 = vpop.f32.mrf.mxu0
      %v4961 = vadd.f32 0.0, %v4960
      %4962 = vmatmul.f32.gmra.mxu0 %v4861
      %v4963 = vpop.f32.mrf.mxu0
      %v4964 = vadd.f32 0.0, %v4963
      %4965 = vdwg.mxu0
      %s4966 = scalar_lea.vmem %s29, 160
      %v4967 = vld [vmem:[%s4966] sm:$0xff]
      %v4968 = vld [vmem:[%s4966 + $0x8] sm:$0xff]
      %v4969 = vld [vmem:[%s4966 + $0x10] sm:$0xff]
      %v4970 = vld [vmem:[%s4966 + $0x18] sm:$0xff]
      %v4971 = vld [vmem:[%s4966 + $0x20] sm:$0xff]
      %v4972 = vld [vmem:[%s4966 + $0x28] sm:$0xff]
      %v4973 = vld [vmem:[%s4966 + $0x30] sm:$0xff]
      %v4974 = vld [vmem:[%s4966 + $0x38] sm:$0xff]
      %v4975 = vld [vmem:[%s4966 + $0x40] sm:$0xff]
      %v4976 = vld [vmem:[%s4966 + $0x48] sm:$0xff]
      %v4977 = vld [vmem:[%s4966 + $0x50] sm:$0xff]
      %v4978 = vld [vmem:[%s4966 + $0x58] sm:$0xff]
      %v4979 = vld [vmem:[%s4966 + $0x60] sm:$0xff]
      %v4980 = vld [vmem:[%s4966 + $0x68] sm:$0xff]
      %v4981 = vld [vmem:[%s4966 + $0x70] sm:$0xff]
      %v4982 = vld [vmem:[%s4966 + $0x78] sm:$0xff]
      %v4983 = vld [vmem:[%s4966 + $0x80] sm:$0xff]
      %v4984 = vld [vmem:[%s4966 + $0x88] sm:$0xff]
      %v4985 = vld [vmem:[%s4966 + $0x90] sm:$0xff]
      %v4986 = vld [vmem:[%s4966 + $0x98] sm:$0xff]
      %v4988 = vsel %vm2701, %v4968, 0
      %v4991 = vsel %vm2701, %v4970, 0
      %v4994 = vsel %vm2701, %v4972, 0
      %v4997 = vsel %vm2701, %v4974, 0
      %v5000 = vsel %vm2701, %v4976, 0
      %v5003 = vsel %vm2701, %v4978, 0
      %v5006 = vsel %vm2701, %v4980, 0
      %v5009 = vsel %vm2701, %v4982, 0
      %v5012 = vsel %vm2701, %v4984, 0
      %v5015 = vsel %vm2701, %v4986, 0
      %5017 = vmatpush.msra.mxu0 %v4684
      %5018 = vmatpush.msra.mxu0 %v4683
      %5019 = vmatpush.msra.mxu0 %v4682
      %5020 = vmatpush.msra.mxu0 %v4681
      %5021 = vmatpush.msra.mxu0 %v4680
      %5022 = vmatpush.msra.mxu0 %v4679
      %5023 = vmatpush.msra.mxu0 %v4678
      %5024 = vmatpush.msra.mxu0 %v4677
      %5025 = vmatpush.msra.mxu0 %v4676
      %5026 = vmatpush.msra.mxu0 %v4675
      %5027 = vmatpush.msra.mxu0 %v4674
      %5028 = vmatpush.msra.mxu0 %v4673
      %5029 = vmatpush.msra.mxu0 %v4672
      %5030 = vmatpush.msra.mxu0 %v4671
      %5031 = vmatpush.msra.mxu0 %v4670
      %5032 = vmatpush.msra.mxu0 %v4669
      %5033 = vmatmul.f32.gmra.mxu0 %v4967
      %v5034 = vpop.f32.mrf.mxu0
      %v5035 = vadd.f32 0.0, %v5034
      %5036 = vmatmul.f32.gmra.mxu0 %v4969
      %v5037 = vpop.f32.mrf.mxu0
      %v5038 = vadd.f32 0.0, %v5037
      %5039 = vmatmul.f32.gmra.mxu0 %v4971
      %v5040 = vpop.f32.mrf.mxu0
      %v5041 = vadd.f32 0.0, %v5040
      %5042 = vmatmul.f32.gmra.mxu0 %v4973
      %v5043 = vpop.f32.mrf.mxu0
      %v5044 = vadd.f32 0.0, %v5043
      %5045 = vmatmul.f32.gmra.mxu0 %v4975
      %v5046 = vpop.f32.mrf.mxu0
      %v5047 = vadd.f32 0.0, %v5046
      %5048 = vmatmul.f32.gmra.mxu0 %v4977
      %v5049 = vpop.f32.mrf.mxu0
      %v5050 = vadd.f32 0.0, %v5049
      %5051 = vmatmul.f32.gmra.mxu0 %v4979
      %v5052 = vpop.f32.mrf.mxu0
      %v5053 = vadd.f32 0.0, %v5052
      %5054 = vmatmul.f32.gmra.mxu0 %v4981
      %v5055 = vpop.f32.mrf.mxu0
      %v5056 = vadd.f32 0.0, %v5055
      %5057 = vmatmul.f32.gmra.mxu0 %v4983
      %v5058 = vpop.f32.mrf.mxu0
      %v5059 = vadd.f32 0.0, %v5058
      %5060 = vmatmul.f32.gmra.mxu0 %v4985
      %v5061 = vpop.f32.mrf.mxu0
      %v5062 = vadd.f32 0.0, %v5061
      %5063 = vdwg.mxu0
      %5064 = vmatpush.msra.mxu0 0.0
      %5065 = vmatpush.msra.mxu0 0.0
      %5066 = vmatpush.msra.mxu0 0.0
      %5067 = vmatpush.msra.mxu0 0.0
      %5068 = vmatpush.msra.mxu0 0.0
      %5069 = vmatpush.msra.mxu0 0.0
      %5070 = vmatpush.msra.mxu0 0.0
      %5071 = vmatpush.msra.mxu0 0.0
      %5072 = vmatpush.msra.mxu0 0.0
      %5073 = vmatpush.msra.mxu0 0.0
      %5074 = vmatpush.msra.mxu0 0.0
      %5075 = vmatpush.msra.mxu0 0.0
      %5076 = vmatpush.msra.mxu0 0.0
      %5077 = vmatpush.msra.mxu0 0.0
      %5078 = vmatpush.msra.mxu0 %v4686
      %5079 = vmatpush.msra.mxu0 %v4685
      %5080 = vmatmul.f32.gmra.mxu0 %v4988
      %v5081 = vpop.f32.mrf.mxu0
      %v5082 = vadd.f32 %v5035, %v5081
      %5083 = vmatmul.f32.gmra.mxu0 %v4991
      %v5084 = vpop.f32.mrf.mxu0
      %v5085 = vadd.f32 %v5038, %v5084
      %5086 = vmatmul.f32.gmra.mxu0 %v4994
      %v5087 = vpop.f32.mrf.mxu0
      %v5088 = vadd.f32 %v5041, %v5087
      %5089 = vmatmul.f32.gmra.mxu0 %v4997
      %v5090 = vpop.f32.mrf.mxu0
      %v5091 = vadd.f32 %v5044, %v5090
      %5092 = vmatmul.f32.gmra.mxu0 %v5000
      %v5093 = vpop.f32.mrf.mxu0
      %v5094 = vadd.f32 %v5047, %v5093
      %5095 = vmatmul.f32.gmra.mxu0 %v5003
      %v5096 = vpop.f32.mrf.mxu0
      %v5097 = vadd.f32 %v5050, %v5096
      %5098 = vmatmul.f32.gmra.mxu0 %v5006
      %v5099 = vpop.f32.mrf.mxu0
      %v5100 = vadd.f32 %v5053, %v5099
      %5101 = vmatmul.f32.gmra.mxu0 %v5009
      %v5102 = vpop.f32.mrf.mxu0
      %v5103 = vadd.f32 %v5056, %v5102
      %5104 = vmatmul.f32.gmra.mxu0 %v5012
      %v5105 = vpop.f32.mrf.mxu0
      %v5106 = vadd.f32 %v5059, %v5105
      %5107 = vmatmul.f32.gmra.mxu0 %v5015
      %v5108 = vpop.f32.mrf.mxu0
      %v5109 = vadd.f32 %v5062, %v5108
      %5110 = vdwg.mxu0
      %v5112 = vsel %vm3991, %v5082, 0
      %v5115 = vsel %vm3991, %v5085, 0
      %v5118 = vsel %vm3991, %v5088, 0
      %v5121 = vsel %vm3991, %v5091, 0
      %v5124 = vsel %vm3991, %v5094, 0
      %v5127 = vsel %vm3991, %v5097, 0
      %v5130 = vsel %vm3991, %v5100, 0
      %v5133 = vsel %vm3991, %v5103, 0
      %v5136 = vsel %vm3991, %v5106, 0
      %v5139 = vsel %vm3991, %v5109, 0
      %5141 = vmatpush.msra.mxu0 0.0
      %5142 = vmatpush.msra.mxu0 0.0
      %5143 = vmatpush.msra.mxu0 0.0
      %5144 = vmatpush.msra.mxu0 0.0
      %5145 = vmatpush.msra.mxu0 0.0
      %5146 = vmatpush.msra.mxu0 0.0
      %5147 = vmatpush.msra.mxu0 0.0
      %5148 = vmatpush.msra.mxu0 0.0
      %5149 = vmatpush.msra.mxu0 0.0
      %5150 = vmatpush.msra.mxu0 0.0
      %5151 = vmatpush.msra.mxu0 0.0
      %5152 = vmatpush.msra.mxu0 0.0
      %5153 = vmatpush.msra.mxu0 0.0
      %5154 = vmatpush.msra.mxu0 0.0
      %5155 = vmatpush.msra.mxu0 %v4864
      %5156 = vmatpush.msra.mxu0 %v4831
      %5157 = vmatmul.f32.gmra.mxu0 %v5112
      %v5158 = vpop.f32.mrf.mxu0
      %v5159 = vadd.f32 0.0, %v5158
      %5160 = vmatmul.f32.gmra.mxu0 %v5115
      %v5161 = vpop.f32.mrf.mxu0
      %v5162 = vadd.f32 0.0, %v5161
      %5163 = vmatmul.f32.gmra.mxu0 %v5118
      %v5164 = vpop.f32.mrf.mxu0
      %v5165 = vadd.f32 0.0, %v5164
      %5166 = vmatmul.f32.gmra.mxu0 %v5121
      %v5167 = vpop.f32.mrf.mxu0
      %v5168 = vadd.f32 0.0, %v5167
      %5169 = vmatmul.f32.gmra.mxu0 %v5124
      %v5170 = vpop.f32.mrf.mxu0
      %v5171 = vadd.f32 0.0, %v5170
      %5172 = vmatmul.f32.gmra.mxu0 %v5127
      %v5173 = vpop.f32.mrf.mxu0
      %v5174 = vadd.f32 0.0, %v5173
      %5175 = vmatmul.f32.gmra.mxu0 %v5130
      %v5176 = vpop.f32.mrf.mxu0
      %v5177 = vadd.f32 0.0, %v5176
      %5178 = vmatmul.f32.gmra.mxu0 %v5133
      %v5179 = vpop.f32.mrf.mxu0
      %v5180 = vadd.f32 0.0, %v5179
      %5181 = vmatmul.f32.gmra.mxu0 %v5136
      %v5182 = vpop.f32.mrf.mxu0
      %v5183 = vadd.f32 0.0, %v5182
      %5184 = vmatmul.f32.gmra.mxu0 %v5139
      %v5185 = vpop.f32.mrf.mxu0
      %v5186 = vadd.f32 0.0, %v5185
      %5187 = vdwg.mxu0
      %5188 = vmatpush.msra.mxu0 0.0
      %5189 = vmatpush.msra.mxu0 0.0
      %5190 = vmatpush.msra.mxu0 0.0
      %5191 = vmatpush.msra.mxu0 0.0
      %5192 = vmatpush.msra.mxu0 0.0
      %5193 = vmatpush.msra.mxu0 0.0
      %5194 = vmatpush.msra.mxu0 0.0
      %5195 = vmatpush.msra.mxu0 0.0
      %5196 = vmatpush.msra.mxu0 0.0
      %5197 = vmatpush.msra.mxu0 0.0
      %5198 = vmatpush.msra.mxu0 0.0
      %5199 = vmatpush.msra.mxu0 0.0
      %5200 = vmatpush.msra.mxu0 0.0
      %5201 = vmatpush.msra.mxu0 0.0
      %5202 = vmatpush.msra.mxu0 %v4917
      %5203 = vmatpush.msra.mxu0 %v4914
      %5204 = vmatmul.f32.gmra.mxu0 %v5112
      %v5205 = vpop.f32.mrf.mxu0
      %v5206 = vadd.f32 0.0, %v5205
      %5207 = vmatmul.f32.gmra.mxu0 %v5115
      %v5208 = vpop.f32.mrf.mxu0
      %v5209 = vadd.f32 0.0, %v5208
      %5210 = vmatmul.f32.gmra.mxu0 %v5118
      %v5211 = vpop.f32.mrf.mxu0
      %v5212 = vadd.f32 0.0, %v5211
      %5213 = vmatmul.f32.gmra.mxu0 %v5121
      %v5214 = vpop.f32.mrf.mxu0
      %v5215 = vadd.f32 0.0, %v5214
      %5216 = vmatmul.f32.gmra.mxu0 %v5124
      %v5217 = vpop.f32.mrf.mxu0
      %v5218 = vadd.f32 0.0, %v5217
      %5219 = vmatmul.f32.gmra.mxu0 %v5127
      %v5220 = vpop.f32.mrf.mxu0
      %v5221 = vadd.f32 0.0, %v5220
      %5222 = vmatmul.f32.gmra.mxu0 %v5130
      %v5223 = vpop.f32.mrf.mxu0
      %v5224 = vadd.f32 0.0, %v5223
      %5225 = vmatmul.f32.gmra.mxu0 %v5133
      %v5226 = vpop.f32.mrf.mxu0
      %v5227 = vadd.f32 0.0, %v5226
      %5228 = vmatmul.f32.gmra.mxu0 %v5136
      %v5229 = vpop.f32.mrf.mxu0
      %v5230 = vadd.f32 0.0, %v5229
      %5231 = vmatmul.f32.gmra.mxu0 %v5139
      %v5232 = vpop.f32.mrf.mxu0
      %v5233 = vadd.f32 0.0, %v5232
      %5234 = vdwg.mxu0
      %v5235 = vmax.f32 %v4884, %v4937
      %v5236 = vmax.f32 %v4887, %v4940
      %v5237 = vmax.f32 %v4890, %v4943
      %v5238 = vmax.f32 %v4893, %v4946
      %v5239 = vmax.f32 %v4896, %v4949
      %v5240 = vmax.f32 %v4899, %v4952
      %v5241 = vmax.f32 %v4902, %v4955
      %v5242 = vmax.f32 %v4905, %v4958
      %v5243 = vmax.f32 %v4908, %v4961
      %v5244 = vmax.f32 %v4911, %v4964
      %v5245 = vmax.f32 %v5159, %v5206
      %v5246 = vmax.f32 %v5162, %v5209
      %v5247 = vmax.f32 %v5165, %v5212
      %v5248 = vmax.f32 %v5168, %v5215
      %v5249 = vmax.f32 %v5171, %v5218
      %v5250 = vmax.f32 %v5174, %v5221
      %v5251 = vmax.f32 %v5177, %v5224
      %v5252 = vmax.f32 %v5180, %v5227
      %v5253 = vmax.f32 %v5183, %v5230
      %v5254 = vmax.f32 %v5186, %v5233
      %v5255 = vmax.f32 %v5235, %v5245
      %v5256 = vmax.f32 %v5236, %v5246
      %v5257 = vmax.f32 %v5237, %v5247
      %v5258 = vmax.f32 %v5238, %v5248
      %v5259 = vmax.f32 %v5239, %v5249
      %v5260 = vmax.f32 %v5240, %v5250
      %v5261 = vmax.f32 %v5241, %v5251
      %v5262 = vmax.f32 %v5242, %v5252
      %v5263 = vmax.f32 %v5243, %v5253
      %v5264 = vmax.f32 %v5244, %v5254
      %v5265 = vpack.c.bf16 %v5256, %v5255
      %v5266 = vpack.c.bf16 %v5258, %v5257
      %v5267 = vpack.c.bf16 %v5260, %v5259
      %v5268 = vpack.c.bf16 %v5262, %v5261
      %v5269 = vpack.c.bf16 %v5264, %v5263
      %v5270 = vld [vmem:[%s33] sm:$0xf]
      %v5271 = vld [vmem:[%s33 + $0x4] sm:$0xf]
      %v5272 = vld [vmem:[%s33 + $0x8] sm:$0xf]
      %v5273 = vld [vmem:[%s33 + $0xc] sm:$0xf]
      %v5274 = vld [vmem:[%s33 + $0x10] sm:$0xf]
      %v5280 = vunpack.c.l.b16 %v5270
      %v5281 = vunpack.c.l.b16 %v5271
      %v5282 = vunpack.c.l.b16 %v5272
      %v5283 = vunpack.c.l.b16 %v5273
      %v5284 = vunpack.c.l.b16 %v5274
      %v5285 = vpack.c.b16 %v5281, %v5280
      %v5286 = vpack.c.b16 %v5283, %v5282
      %v5287 = vpack.c.b16 %v5284, %v5284
      %vm5288 = vcmask 654336
      %v5290 = vsel %vm5288, %v5285, 0
      %v5293 = vsel %vm5288, %v5286, 0
      %v5296 = vsel %vm5288, %v5287, 0
      %5298 = vmatpush.bf16.msra.mxu0 0
      %5299 = vmatpush.bf16.msra.mxu0 0
      %5300 = vmatpush.bf16.msra.mxu0 0
      %5301 = vmatpush.bf16.msra.mxu0 %v5269
      %5302 = vmatpush.bf16.msra.mxu0 %v5268
      %5303 = vmatpush.bf16.msra.mxu0 %v5267
      %5304 = vmatpush.bf16.msra.mxu0 %v5266
      %5305 = vmatpush.bf16.msra.mxu0 %v5265
      %5306 = vmatmul.bf16.gmra.mxu0 %v5290
      %v5307 = vpop.f32.mrf.mxu0
      %v5308 = vadd.f32 0.0, %v5307
      %v5309 = vpop.f32.mrf.mxu0
      %v5310 = vadd.f32 0.0, %v5309
      %5311 = vmatmul.bf16.gmra.mxu0 %v5293
      %v5312 = vpop.f32.mrf.mxu0
      %v5313 = vadd.f32 0.0, %v5312
      %v5314 = vpop.f32.mrf.mxu0
      %v5315 = vadd.f32 0.0, %v5314
      %5316 = vmatmul.bf16.gmra.mxu0 %v5296
      %v5317 = vpop.f32.mrf.mxu0
      %v5318 = vadd.f32 0.0, %v5317
      %v5319 = vpop.f32.mrf.mxu0
      %5320 = vdwg.mxu0
      %v5321 = vld [vmem:[%s35] sm:$0x1f]
      %s5322 = scalar_lea.vmem %s33, 20
      %v5323 = vld [vmem:[%s5322] sm:$0xf]
      %v5324 = vld [vmem:[%s5322 + $0x4] sm:$0xf]
      %v5325 = vld [vmem:[%s5322 + $0x8] sm:$0xf]
      %v5326 = vld [vmem:[%s5322 + $0xc] sm:$0xf]
      %v5327 = vld [vmem:[%s5322 + $0x10] sm:$0xf]
      %v5333 = vunpack.c.l.b16 %v5323
      %v5334 = vunpack.c.l.b16 %v5324
      %v5335 = vunpack.c.l.b16 %v5325
      %v5336 = vunpack.c.l.b16 %v5326
      %v5337 = vunpack.c.l.b16 %v5327
      %v5338 = vpack.c.b16 %v5334, %v5333
      %v5339 = vpack.c.b16 %v5336, %v5335
      %v5340 = vpack.c.b16 %v5337, %v5337
      %v5342 = vsel %vm5288, %v5338, 0
      %v5345 = vsel %vm5288, %v5339, 0
      %v5348 = vsel %vm5288, %v5340, 0
      %5350 = vmatpush.bf16.msra.mxu0 0
      %5351 = vmatpush.bf16.msra.mxu0 0
      %5352 = vmatpush.bf16.msra.mxu0 0
      %5353 = vmatpush.bf16.msra.mxu0 %v5269
      %5354 = vmatpush.bf16.msra.mxu0 %v5268
      %5355 = vmatpush.bf16.msra.mxu0 %v5267
      %5356 = vmatpush.bf16.msra.mxu0 %v5266
      %5357 = vmatpush.bf16.msra.mxu0 %v5265
      %5358 = vmatmul.bf16.gmra.mxu0 %v5342
      %v5359 = vpop.f32.mrf.mxu0
      %v5360 = vadd.f32 0.0, %v5359
      %v5361 = vpop.f32.mrf.mxu0
      %v5362 = vadd.f32 0.0, %v5361
      %5363 = vmatmul.bf16.gmra.mxu0 %v5345
      %v5364 = vpop.f32.mrf.mxu0
      %v5365 = vadd.f32 0.0, %v5364
      %v5366 = vpop.f32.mrf.mxu0
      %v5367 = vadd.f32 0.0, %v5366
      %5368 = vmatmul.bf16.gmra.mxu0 %v5348
      %v5369 = vpop.f32.mrf.mxu0
      %v5370 = vadd.f32 0.0, %v5369
      %v5371 = vpop.f32.mrf.mxu0
      %5372 = vdwg.mxu0
      %s5373 = scalar_lea.vmem %s35, 8
      %v5374 = vld [vmem:[%s5373] sm:$0x1f]
      %vm5375 = vcmask 39936
      %v5377 = vsel %vm5375, %v5360, 0
      %v5380 = vsel %vm5375, %v5362, 0
      %v5383 = vsel %vm5375, %v5365, 0
      %v5386 = vsel %vm5375, %v5367, 0
      %v5389 = vsel %vm5375, %v5370, 0
      %vm5391 = vcmask 1044480
      %v5393 = vsel %vm5391, %v5374, 0
      %5395 = vmatpush.msra.mxu0 0.0
      %5396 = vmatpush.msra.mxu0 0.0
      %5397 = vmatpush.msra.mxu0 0.0
      %5398 = vmatpush.msra.mxu0 0.0
      %5399 = vmatpush.msra.mxu0 0.0
      %5400 = vmatpush.msra.mxu0 0.0
      %5401 = vmatpush.msra.mxu0 0.0
      %5402 = vmatpush.msra.mxu0 0.0
      %5403 = vmatpush.msra.mxu0 0.0
      %5404 = vmatpush.msra.mxu0 0.0
      %5405 = vmatpush.msra.mxu0 0.0
      %5406 = vmatpush.msra.mxu0 0.0
      %5407 = vmatpush.msra.mxu0 0.0
      %5408 = vmatpush.msra.mxu0 0.0
      %5409 = vmatpush.msra.mxu0 0.0
      %5410 = vmatpush.msra.mxu0 %v5393
      %5411 = vmatmul.f32.gmra.mxu0 %v5377
      %v5412 = vpop.f32.mrf.mxu0
      %v5413 = vadd.f32 0.0, %v5412
      %5414 = vmatmul.f32.gmra.mxu0 %v5380
      %v5415 = vpop.f32.mrf.mxu0
      %v5416 = vadd.f32 0.0, %v5415
      %5417 = vmatmul.f32.gmra.mxu0 %v5383
      %v5418 = vpop.f32.mrf.mxu0
      %v5419 = vadd.f32 0.0, %v5418
      %5420 = vmatmul.f32.gmra.mxu0 %v5386
      %v5421 = vpop.f32.mrf.mxu0
      %v5422 = vadd.f32 0.0, %v5421
      %5423 = vmatmul.f32.gmra.mxu0 %v5389
      %v5424 = vpop.f32.mrf.mxu0
      %v5425 = vadd.f32 0.0, %v5424
      %5426 = vdwg.mxu0
      %v5428 = vsel %vm5375, %v5308, 0
      %v5431 = vsel %vm5375, %v5310, 0
      %v5434 = vsel %vm5375, %v5313, 0
      %v5437 = vsel %vm5375, %v5315, 0
      %v5440 = vsel %vm5375, %v5318, 0
      %v5443 = vsel %vm5391, %v5321, 0
      %5445 = vmatpush.msra.mxu0 0.0
      %5446 = vmatpush.msra.mxu0 0.0
      %5447 = vmatpush.msra.mxu0 0.0
      %5448 = vmatpush.msra.mxu0 0.0
      %5449 = vmatpush.msra.mxu0 0.0
      %5450 = vmatpush.msra.mxu0 0.0
      %5451 = vmatpush.msra.mxu0 0.0
      %5452 = vmatpush.msra.mxu0 0.0
      %5453 = vmatpush.msra.mxu0 0.0
      %5454 = vmatpush.msra.mxu0 0.0
      %5455 = vmatpush.msra.mxu0 0.0
      %5456 = vmatpush.msra.mxu0 0.0
      %5457 = vmatpush.msra.mxu0 0.0
      %5458 = vmatpush.msra.mxu0 0.0
      %5459 = vmatpush.msra.mxu0 0.0
      %5460 = vmatpush.msra.mxu0 %v5443
      %5461 = vmatmul.f32.gmra.mxu0 %v5428
      %v5462 = vpop.f32.mrf.mxu0
      %v5463 = vadd.f32 %v5413, %v5462
      %5464 = vmatmul.f32.gmra.mxu0 %v5431
      %v5465 = vpop.f32.mrf.mxu0
      %v5466 = vadd.f32 %v5416, %v5465
      %5467 = vmatmul.f32.gmra.mxu0 %v5434
      %v5468 = vpop.f32.mrf.mxu0
      %v5469 = vadd.f32 %v5419, %v5468
      %5470 = vmatmul.f32.gmra.mxu0 %v5437
      %v5471 = vpop.f32.mrf.mxu0
      %v5472 = vadd.f32 %v5422, %v5471
      %5473 = vmatmul.f32.gmra.mxu0 %v5440
      %v5474 = vpop.f32.mrf.mxu0
      %v5475 = vadd.f32 %v5425, %v5474
      %5476 = vdwg.mxu0
      %s5477 = scalar_lea.vmem %s33, 40
      %v5478 = vld [vmem:[%s5477] sm:$0xf]
      %v5479 = vld [vmem:[%s5477 + $0x4] sm:$0xf]
      %v5480 = vld [vmem:[%s5477 + $0x8] sm:$0xf]
      %v5481 = vld [vmem:[%s5477 + $0xc] sm:$0xf]
      %v5482 = vld [vmem:[%s5477 + $0x10] sm:$0xf]
      %v5488 = vunpack.c.l.b16 %v5478
      %v5489 = vunpack.c.l.b16 %v5479
      %v5490 = vunpack.c.l.b16 %v5480
      %v5491 = vunpack.c.l.b16 %v5481
      %v5492 = vunpack.c.l.b16 %v5482
      %v5493 = vpack.c.b16 %v5489, %v5488
      %v5494 = vpack.c.b16 %v5491, %v5490
      %v5495 = vpack.c.b16 %v5492, %v5492
      %v5497 = vsel %vm5288, %v5493, 0
      %v5500 = vsel %vm5288, %v5494, 0
      %v5503 = vsel %vm5288, %v5495, 0
      %5505 = vmatpush.bf16.msra.mxu0 0
      %5506 = vmatpush.bf16.msra.mxu0 0
      %5507 = vmatpush.bf16.msra.mxu0 0
      %5508 = vmatpush.bf16.msra.mxu0 %v5269
      %5509 = vmatpush.bf16.msra.mxu0 %v5268
      %5510 = vmatpush.bf16.msra.mxu0 %v5267
      %5511 = vmatpush.bf16.msra.mxu0 %v5266
      %5512 = vmatpush.bf16.msra.mxu0 %v5265
      %5513 = vmatmul.bf16.gmra.mxu0 %v5497
      %v5514 = vpop.f32.mrf.mxu0
      %v5515 = vadd.f32 0.0, %v5514
      %v5516 = vpop.f32.mrf.mxu0
      %v5517 = vadd.f32 0.0, %v5516
      %5518 = vmatmul.bf16.gmra.mxu0 %v5500
      %v5519 = vpop.f32.mrf.mxu0
      %v5520 = vadd.f32 0.0, %v5519
      %v5521 = vpop.f32.mrf.mxu0
      %v5522 = vadd.f32 0.0, %v5521
      %5523 = vmatmul.bf16.gmra.mxu0 %v5503
      %v5524 = vpop.f32.mrf.mxu0
      %v5525 = vadd.f32 0.0, %v5524
      %v5526 = vpop.f32.mrf.mxu0
      %5527 = vdwg.mxu0
      %s5528 = scalar_lea.vmem %s35, 16
      %v5529 = vld [vmem:[%s5528] sm:$0x1f]
      %v5531 = vsel %vm5375, %v5515, 0
      %v5534 = vsel %vm5375, %v5517, 0
      %v5537 = vsel %vm5375, %v5520, 0
      %v5540 = vsel %vm5375, %v5522, 0
      %v5543 = vsel %vm5375, %v5525, 0
      %v5546 = vsel %vm5391, %v5529, 0
      %5548 = vmatpush.msra.mxu0 0.0
      %5549 = vmatpush.msra.mxu0 0.0
      %5550 = vmatpush.msra.mxu0 0.0
      %5551 = vmatpush.msra.mxu0 0.0
      %5552 = vmatpush.msra.mxu0 0.0
      %5553 = vmatpush.msra.mxu0 0.0
      %5554 = vmatpush.msra.mxu0 0.0
      %5555 = vmatpush.msra.mxu0 0.0
      %5556 = vmatpush.msra.mxu0 0.0
      %5557 = vmatpush.msra.mxu0 0.0
      %5558 = vmatpush.msra.mxu0 0.0
      %5559 = vmatpush.msra.mxu0 0.0
      %5560 = vmatpush.msra.mxu0 0.0
      %5561 = vmatpush.msra.mxu0 0.0
      %5562 = vmatpush.msra.mxu0 0.0
      %5563 = vmatpush.msra.mxu0 %v5546
      %5564 = vmatmul.f32.gmra.mxu0 %v5531
      %v5565 = vpop.f32.mrf.mxu0
      %v5566 = vadd.f32 0.0, %v5565
      %5567 = vmatmul.f32.gmra.mxu0 %v5534
      %v5568 = vpop.f32.mrf.mxu0
      %v5569 = vadd.f32 0.0, %v5568
      %5570 = vmatmul.f32.gmra.mxu0 %v5537
      %v5571 = vpop.f32.mrf.mxu0
      %v5572 = vadd.f32 0.0, %v5571
      %5573 = vmatmul.f32.gmra.mxu0 %v5540
      %v5574 = vpop.f32.mrf.mxu0
      %v5575 = vadd.f32 0.0, %v5574
      %5576 = vmatmul.f32.gmra.mxu0 %v5543
      %v5577 = vpop.f32.mrf.mxu0
      %v5578 = vadd.f32 0.0, %v5577
      %5579 = vdwg.mxu0
      %v5580 = vadd.f32 %v5463, %v5566
      %v5581 = vadd.f32 %v5466, %v5569
      %v5582 = vadd.f32 %v5469, %v5572
      %v5583 = vadd.f32 %v5472, %v5575
      %v5584 = vadd.f32 %v5475, %v5578
      %v5585 = vld [vmem:[%s37] sm:$0xff]
      %v5586 = vld [vmem:[%s37 + $0x8] sm:$0xff]
      %v5587 = vld [vmem:[%s37 + $0x10] sm:$0xff]
      %v5588 = vld [vmem:[%s37 + $0x18] sm:$0xff]
      %v5589 = vld [vmem:[%s37 + $0x20] sm:$0xff]
      %5591 = vset.pattern.permute.xlu0 0
      %5592 = vperm.xlu0 %5591, %v5585
      %v5593 = vpop.permute.xlu0 %5592
      %5596 = vset.pattern.permute.xlu0 0
      %5597 = vperm.xlu0 %5596, %v5586
      %v5598 = vpop.permute.xlu0 %5597
      %5601 = vset.pattern.permute.xlu0 0
      %5602 = vperm.xlu0 %5601, %v5587
      %v5603 = vpop.permute.xlu0 %5602
      %5606 = vset.pattern.permute.xlu0 0
      %5607 = vperm.xlu0 %5606, %v5588
      %v5608 = vpop.permute.xlu0 %5607
      %5611 = vset.pattern.permute.xlu0 0
      %5612 = vperm.xlu0 %5611, %v5589
      %v5613 = vpop.permute.xlu0 %5612
      %v5615 = vadd.f32 %v5580, %v5593
      %v5616 = vadd.f32 %v5581, %v5598
      %v5617 = vadd.f32 %v5582, %v5603
      %v5618 = vadd.f32 %v5583, %v5608
      %v5619 = vadd.f32 %v5584, %v5613
      %v5620 = vld [vmem:[%s39] sm:$0xff]
      %v5621 = vld [vmem:[%s39 + $0x8] sm:$0xff]
      %v5622 = vld [vmem:[%s39 + $0x10] sm:$0xff]
      %v5623 = vld [vmem:[%s39 + $0x18] sm:$0xff]
      %v5624 = vld [vmem:[%s39 + $0x20] sm:$0xff]
      %v5625 = vld [vmem:[%s39 + $0x28] sm:$0xff]
      %v5626 = vld [vmem:[%s39 + $0x30] sm:$0xff]
      %v5627 = vld [vmem:[%s39 + $0x38] sm:$0xff]
      %v5628 = vld [vmem:[%s39 + $0x40] sm:$0xff]
      %vm5629 = vcmask 326656
      %v5631 = vsel %vm5629, %v5620, 0
      %v5634 = vsel %vm5629, %v5621, 0
      %v5637 = vsel %vm5629, %v5622, 0
      %v5640 = vsel %vm5629, %v5623, 0
      %v5643 = vsel %vm5629, %v5624, 0
      %v5646 = vsel %vm5629, %v5625, 0
      %v5649 = vsel %vm5629, %v5626, 0
      %v5652 = vsel %vm5629, %v5627, 0
      %v5655 = vsel %vm5629, %v5628, 0
      %5657 = vmatpush.msra.mxu0 0.0
      %5658 = vmatpush.msra.mxu0 0.0
      %5659 = vmatpush.msra.mxu0 0.0
      %5660 = vmatpush.msra.mxu0 0.0
      %5661 = vmatpush.msra.mxu0 0.0
      %5662 = vmatpush.msra.mxu0 0.0
      %5663 = vmatpush.msra.mxu0 0.0
      %5664 = vmatpush.msra.mxu0 0.0
      %5665 = vmatpush.msra.mxu0 0.0
      %5666 = vmatpush.msra.mxu0 0.0
      %5667 = vmatpush.msra.mxu0 0.0
      %5668 = vmatpush.msra.mxu0 %v5619
      %5669 = vmatpush.msra.mxu0 %v5618
      %5670 = vmatpush.msra.mxu0 %v5617
      %5671 = vmatpush.msra.mxu0 %v5616
      %5672 = vmatpush.msra.mxu0 %v5615
      %5673 = vmatmul.f32.gmra.mxu0 %v5631
      %v5674 = vpop.f32.mrf.mxu0
      %v5675 = vadd.f32 0.0, %v5674
      %5676 = vmatmul.f32.gmra.mxu0 %v5634
      %v5677 = vpop.f32.mrf.mxu0
      %v5678 = vadd.f32 0.0, %v5677
      %5679 = vmatmul.f32.gmra.mxu0 %v5637
      %v5680 = vpop.f32.mrf.mxu0
      %v5681 = vadd.f32 0.0, %v5680
      %5682 = vmatmul.f32.gmra.mxu0 %v5640
      %v5683 = vpop.f32.mrf.mxu0
      %v5684 = vadd.f32 0.0, %v5683
      %5685 = vmatmul.f32.gmra.mxu0 %v5643
      %v5686 = vpop.f32.mrf.mxu0
      %v5687 = vadd.f32 0.0, %v5686
      %5688 = vmatmul.f32.gmra.mxu0 %v5646
      %v5689 = vpop.f32.mrf.mxu0
      %v5690 = vadd.f32 0.0, %v5689
      %5691 = vmatmul.f32.gmra.mxu0 %v5649
      %v5692 = vpop.f32.mrf.mxu0
      %v5693 = vadd.f32 0.0, %v5692
      %5694 = vmatmul.f32.gmra.mxu0 %v5652
      %v5695 = vpop.f32.mrf.mxu0
      %v5696 = vadd.f32 0.0, %v5695
      %5697 = vmatmul.f32.gmra.mxu0 %v5655
      %v5698 = vpop.f32.mrf.mxu0
      %v5699 = vadd.f32 0.0, %v5698
      %5700 = vdwg.mxu0
      %v5701 = vld [vmem:[%s41] sm:$0x1f]
      %v5703 = vsel %vm5375, %v5675, 0
      %v5706 = vsel %vm5375, %v5678, 0
      %v5709 = vsel %vm5375, %v5681, 0
      %v5712 = vsel %vm5375, %v5684, 0
      %v5715 = vsel %vm5375, %v5687, 0
      %v5718 = vsel %vm5375, %v5690, 0
      %v5721 = vsel %vm5375, %v5693, 0
      %v5724 = vsel %vm5375, %v5696, 0
      %v5727 = vsel %vm5375, %v5699, 0
      %v5730 = vsel %vm5391, %v5701, 0
      %5732 = vmatpush.msra.mxu0 0.0
      %5733 = vmatpush.msra.mxu0 0.0
      %5734 = vmatpush.msra.mxu0 0.0
      %5735 = vmatpush.msra.mxu0 0.0
      %5736 = vmatpush.msra.mxu0 0.0
      %5737 = vmatpush.msra.mxu0 0.0
      %5738 = vmatpush.msra.mxu0 0.0
      %5739 = vmatpush.msra.mxu0 0.0
      %5740 = vmatpush.msra.mxu0 0.0
      %5741 = vmatpush.msra.mxu0 0.0
      %5742 = vmatpush.msra.mxu0 0.0
      %5743 = vmatpush.msra.mxu0 0.0
      %5744 = vmatpush.msra.mxu0 0.0
      %5745 = vmatpush.msra.mxu0 0.0
      %5746 = vmatpush.msra.mxu0 0.0
      %5747 = vmatpush.msra.mxu0 %v5730
      %5748 = vmatmul.f32.gmra.mxu0 %v5703
      %v5749 = vpop.f32.mrf.mxu0
      %v5750 = vadd.f32 0.0, %v5749
      %5751 = vmatmul.f32.gmra.mxu0 %v5706
      %v5752 = vpop.f32.mrf.mxu0
      %v5753 = vadd.f32 0.0, %v5752
      %5754 = vmatmul.f32.gmra.mxu0 %v5709
      %v5755 = vpop.f32.mrf.mxu0
      %v5756 = vadd.f32 0.0, %v5755
      %5757 = vmatmul.f32.gmra.mxu0 %v5712
      %v5758 = vpop.f32.mrf.mxu0
      %v5759 = vadd.f32 0.0, %v5758
      %5760 = vmatmul.f32.gmra.mxu0 %v5715
      %v5761 = vpop.f32.mrf.mxu0
      %v5762 = vadd.f32 0.0, %v5761
      %5763 = vmatmul.f32.gmra.mxu0 %v5718
      %v5764 = vpop.f32.mrf.mxu0
      %v5765 = vadd.f32 0.0, %v5764
      %5766 = vmatmul.f32.gmra.mxu0 %v5721
      %v5767 = vpop.f32.mrf.mxu0
      %v5768 = vadd.f32 0.0, %v5767
      %5769 = vmatmul.f32.gmra.mxu0 %v5724
      %v5770 = vpop.f32.mrf.mxu0
      %v5771 = vadd.f32 0.0, %v5770
      %5772 = vmatmul.f32.gmra.mxu0 %v5727
      %v5773 = vpop.f32.mrf.mxu0
      %v5774 = vadd.f32 0.0, %v5773
      %5775 = vdwg.mxu0
      %v5776 = vpack.c.bf16 %v5753, %v5750
      %v5777 = vpack.c.bf16 %v5759, %v5756
      %v5778 = vpack.c.bf16 %v5765, %v5762
      %v5779 = vpack.c.bf16 %v5771, %v5768
      %v5780 = vpack.c.bf16 %v5774, %v5774
      %v5781 = vld [vmem:[%s43] sm:$0xf]
      %v5782 = vld [vmem:[%s43 + $0x4] sm:$0xf]
      %v5783 = vld [vmem:[%s43 + $0x8] sm:$0xf]
      %v5784 = vld [vmem:[%s43 + $0xc] sm:$0xf]
      %v5785 = vld [vmem:[%s43 + $0x10] sm:$0xf]
      %v5786 = vld [vmem:[%s43 + $0x14] sm:$0xf]
      %v5787 = vld [vmem:[%s43 + $0x18] sm:$0xf]
      %v5788 = vld [vmem:[%s43 + $0x1c] sm:$0xf]
      %v5789 = vld [vmem:[%s43 + $0x20] sm:$0xf]
      %v5790 = vld [vmem:[%s43 + $0x24] sm:$0xf]
      %v5791 = vld [vmem:[%s43 + $0x28] sm:$0xf]
      %v5792 = vld [vmem:[%s43 + $0x2c] sm:$0xf]
      %v5793 = vld [vmem:[%s43 + $0x30] sm:$0xf]
      %v5794 = vld [vmem:[%s43 + $0x34] sm:$0xf]
      %v5795 = vld [vmem:[%s43 + $0x38] sm:$0xf]
      %v5796 = vld [vmem:[%s43 + $0x3c] sm:$0xf]
      %v5797 = vld [vmem:[%s43 + $0x40] sm:$0xf]
      %v5798 = vld [vmem:[%s43 + $0x44] sm:$0xf]
      %v5817 = vunpack.c.l.b16 %v5781
      %v5818 = vunpack.c.l.b16 %v5782
      %v5819 = vunpack.c.l.b16 %v5783
      %v5820 = vunpack.c.l.b16 %v5784
      %v5821 = vunpack.c.l.b16 %v5785
      %v5822 = vunpack.c.l.b16 %v5786
      %v5823 = vunpack.c.l.b16 %v5787
      %v5824 = vunpack.c.l.b16 %v5788
      %v5825 = vunpack.c.l.b16 %v5789
      %v5826 = vunpack.c.l.b16 %v5790
      %v5827 = vunpack.c.l.b16 %v5791
      %v5828 = vunpack.c.l.b16 %v5792
      %v5829 = vunpack.c.l.b16 %v5793
      %v5830 = vunpack.c.l.b16 %v5794
      %v5831 = vunpack.c.l.b16 %v5795
      %v5832 = vunpack.c.l.b16 %v5796
      %v5833 = vunpack.c.l.b16 %v5797
      %v5834 = vunpack.c.l.b16 %v5798
      %v5835 = vpack.c.b16 %v5818, %v5817
      %v5836 = vpack.c.b16 %v5820, %v5819
      %v5837 = vpack.c.b16 %v5822, %v5821
      %v5838 = vpack.c.b16 %v5824, %v5823
      %v5839 = vpack.c.b16 %v5826, %v5825
      %v5840 = vpack.c.b16 %v5828, %v5827
      %v5841 = vpack.c.b16 %v5830, %v5829
      %v5842 = vpack.c.b16 %v5832, %v5831
      %v5843 = vpack.c.b16 %v5834, %v5833
      %v5845 = vsel %vm3755, %v5835, 0
      %v5848 = vsel %vm3755, %v5836, 0
      %v5851 = vsel %vm3755, %v5837, 0
      %v5854 = vsel %vm3755, %v5838, 0
      %v5857 = vsel %vm3755, %v5839, 0
      %v5860 = vsel %vm3755, %v5840, 0
      %v5863 = vsel %vm3755, %v5841, 0
      %v5866 = vsel %vm3755, %v5842, 0
      %v5869 = vsel %vm3755, %v5843, 0
      %v5872 = vsel %vm3783, %v5780, 0
      %5874 = vmatpush.bf16.msra.mxu0 0
      %5875 = vmatpush.bf16.msra.mxu0 0
      %5876 = vmatpush.bf16.msra.mxu0 0
      %5877 = vmatpush.bf16.msra.mxu0 %v5872
      %5878 = vmatpush.bf16.msra.mxu0 %v5779
      %5879 = vmatpush.bf16.msra.mxu0 %v5778
      %5880 = vmatpush.bf16.msra.mxu0 %v5777
      %5881 = vmatpush.bf16.msra.mxu0 %v5776
      %5882 = vmatmul.bf16.gmra.mxu0 %v5845
      %v5883 = vpop.f32.mrf.mxu0
      %v5884 = vadd.f32 0.0, %v5883
      %v5885 = vpop.f32.mrf.mxu0
      %v5886 = vadd.f32 0.0, %v5885
      %5887 = vmatmul.bf16.gmra.mxu0 %v5848
      %v5888 = vpop.f32.mrf.mxu0
      %v5889 = vadd.f32 0.0, %v5888
      %v5890 = vpop.f32.mrf.mxu0
      %v5891 = vadd.f32 0.0, %v5890
      %5892 = vmatmul.bf16.gmra.mxu0 %v5851
      %v5893 = vpop.f32.mrf.mxu0
      %v5894 = vadd.f32 0.0, %v5893
      %v5895 = vpop.f32.mrf.mxu0
      %v5896 = vadd.f32 0.0, %v5895
      %5897 = vmatmul.bf16.gmra.mxu0 %v5854
      %v5898 = vpop.f32.mrf.mxu0
      %v5899 = vadd.f32 0.0, %v5898
      %v5900 = vpop.f32.mrf.mxu0
      %v5901 = vadd.f32 0.0, %v5900
      %5902 = vmatmul.bf16.gmra.mxu0 %v5857
      %v5903 = vpop.f32.mrf.mxu0
      %v5904 = vadd.f32 0.0, %v5903
      %v5905 = vpop.f32.mrf.mxu0
      %v5906 = vadd.f32 0.0, %v5905
      %5907 = vmatmul.bf16.gmra.mxu0 %v5860
      %v5908 = vpop.f32.mrf.mxu0
      %v5909 = vadd.f32 0.0, %v5908
      %v5910 = vpop.f32.mrf.mxu0
      %v5911 = vadd.f32 0.0, %v5910
      %5912 = vmatmul.bf16.gmra.mxu0 %v5863
      %v5913 = vpop.f32.mrf.mxu0
      %v5914 = vadd.f32 0.0, %v5913
      %v5915 = vpop.f32.mrf.mxu0
      %v5916 = vadd.f32 0.0, %v5915
      %5917 = vmatmul.bf16.gmra.mxu0 %v5866
      %v5918 = vpop.f32.mrf.mxu0
      %v5919 = vadd.f32 0.0, %v5918
      %v5920 = vpop.f32.mrf.mxu0
      %v5921 = vadd.f32 0.0, %v5920
      %5922 = vmatmul.bf16.gmra.mxu0 %v5869
      %v5923 = vpop.f32.mrf.mxu0
      %v5924 = vadd.f32 0.0, %v5923
      %v5925 = vpop.f32.mrf.mxu0
      %v5926 = vadd.f32 0.0, %v5925
      %5927 = vdwg.mxu0
      %v5928 = vld [vmem:[%s45] sm:$0xff]
      %v5929 = vld [vmem:[%s45 + $0x8] sm:$0x1]
      %s5930 = scalar_lea.vmem %s43, 72
      %v5931 = vld [vmem:[%s5930] sm:$0xf]
      %v5932 = vld [vmem:[%s5930 + $0x4] sm:$0xf]
      %v5933 = vld [vmem:[%s5930 + $0x8] sm:$0xf]
      %v5934 = vld [vmem:[%s5930 + $0xc] sm:$0xf]
      %v5935 = vld [vmem:[%s5930 + $0x10] sm:$0xf]
      %v5936 = vld [vmem:[%s5930 + $0x14] sm:$0xf]
      %v5937 = vld [vmem:[%s5930 + $0x18] sm:$0xf]
      %v5938 = vld [vmem:[%s5930 + $0x1c] sm:$0xf]
      %v5939 = vld [vmem:[%s5930 + $0x20] sm:$0xf]
      %v5940 = vld [vmem:[%s5930 + $0x24] sm:$0xf]
      %v5941 = vld [vmem:[%s5930 + $0x28] sm:$0xf]
      %v5942 = vld [vmem:[%s5930 + $0x2c] sm:$0xf]
      %v5943 = vld [vmem:[%s5930 + $0x30] sm:$0xf]
      %v5944 = vld [vmem:[%s5930 + $0x34] sm:$0xf]
      %v5945 = vld [vmem:[%s5930 + $0x38] sm:$0xf]
      %v5946 = vld [vmem:[%s5930 + $0x3c] sm:$0xf]
      %v5947 = vld [vmem:[%s5930 + $0x40] sm:$0xf]
      %v5948 = vld [vmem:[%s5930 + $0x44] sm:$0xf]
      %v5967 = vunpack.c.l.b16 %v5931
      %v5968 = vunpack.c.l.b16 %v5932
      %v5969 = vunpack.c.l.b16 %v5933
      %v5970 = vunpack.c.l.b16 %v5934
      %v5971 = vunpack.c.l.b16 %v5935
      %v5972 = vunpack.c.l.b16 %v5936
      %v5973 = vunpack.c.l.b16 %v5937
      %v5974 = vunpack.c.l.b16 %v5938
      %v5975 = vunpack.c.l.b16 %v5939
      %v5976 = vunpack.c.l.b16 %v5940
      %v5977 = vunpack.c.l.b16 %v5941
      %v5978 = vunpack.c.l.b16 %v5942
      %v5979 = vunpack.c.l.b16 %v5943
      %v5980 = vunpack.c.l.b16 %v5944
      %v5981 = vunpack.c.l.b16 %v5945
      %v5982 = vunpack.c.l.b16 %v5946
      %v5983 = vunpack.c.l.b16 %v5947
      %v5984 = vunpack.c.l.b16 %v5948
      %v5985 = vpack.c.b16 %v5968, %v5967
      %v5986 = vpack.c.b16 %v5970, %v5969
      %v5987 = vpack.c.b16 %v5972, %v5971
      %v5988 = vpack.c.b16 %v5974, %v5973
      %v5989 = vpack.c.b16 %v5976, %v5975
      %v5990 = vpack.c.b16 %v5978, %v5977
      %v5991 = vpack.c.b16 %v5980, %v5979
      %v5992 = vpack.c.b16 %v5982, %v5981
      %v5993 = vpack.c.b16 %v5984, %v5983
      %v5995 = vsel %vm3755, %v5985, 0
      %v5998 = vsel %vm3755, %v5986, 0
      %v6001 = vsel %vm3755, %v5987, 0
      %v6004 = vsel %vm3755, %v5988, 0
      %v6007 = vsel %vm3755, %v5989, 0
      %v6010 = vsel %vm3755, %v5990, 0
      %v6013 = vsel %vm3755, %v5991, 0
      %v6016 = vsel %vm3755, %v5992, 0
      %v6019 = vsel %vm3755, %v5993, 0
      %6021 = vmatpush.bf16.msra.mxu0 0
      %6022 = vmatpush.bf16.msra.mxu0 0
      %6023 = vmatpush.bf16.msra.mxu0 0
      %6024 = vmatpush.bf16.msra.mxu0 %v5872
      %6025 = vmatpush.bf16.msra.mxu0 %v5779
      %6026 = vmatpush.bf16.msra.mxu0 %v5778
      %6027 = vmatpush.bf16.msra.mxu0 %v5777
      %6028 = vmatpush.bf16.msra.mxu0 %v5776
      %6029 = vmatmul.bf16.gmra.mxu0 %v5995
      %v6030 = vpop.f32.mrf.mxu0
      %v6031 = vadd.f32 0.0, %v6030
      %v6032 = vpop.f32.mrf.mxu0
      %v6033 = vadd.f32 0.0, %v6032
      %6034 = vmatmul.bf16.gmra.mxu0 %v5998
      %v6035 = vpop.f32.mrf.mxu0
      %v6036 = vadd.f32 0.0, %v6035
      %v6037 = vpop.f32.mrf.mxu0
      %v6038 = vadd.f32 0.0, %v6037
      %6039 = vmatmul.bf16.gmra.mxu0 %v6001
      %v6040 = vpop.f32.mrf.mxu0
      %v6041 = vadd.f32 0.0, %v6040
      %v6042 = vpop.f32.mrf.mxu0
      %v6043 = vadd.f32 0.0, %v6042
      %6044 = vmatmul.bf16.gmra.mxu0 %v6004
      %v6045 = vpop.f32.mrf.mxu0
      %v6046 = vadd.f32 0.0, %v6045
      %v6047 = vpop.f32.mrf.mxu0
      %v6048 = vadd.f32 0.0, %v6047
      %6049 = vmatmul.bf16.gmra.mxu0 %v6007
      %v6050 = vpop.f32.mrf.mxu0
      %v6051 = vadd.f32 0.0, %v6050
      %v6052 = vpop.f32.mrf.mxu0
      %v6053 = vadd.f32 0.0, %v6052
      %6054 = vmatmul.bf16.gmra.mxu0 %v6010
      %v6055 = vpop.f32.mrf.mxu0
      %v6056 = vadd.f32 0.0, %v6055
      %v6057 = vpop.f32.mrf.mxu0
      %v6058 = vadd.f32 0.0, %v6057
      %6059 = vmatmul.bf16.gmra.mxu0 %v6013
      %v6060 = vpop.f32.mrf.mxu0
      %v6061 = vadd.f32 0.0, %v6060
      %v6062 = vpop.f32.mrf.mxu0
      %v6063 = vadd.f32 0.0, %v6062
      %6064 = vmatmul.bf16.gmra.mxu0 %v6016
      %v6065 = vpop.f32.mrf.mxu0
      %v6066 = vadd.f32 0.0, %v6065
      %v6067 = vpop.f32.mrf.mxu0
      %v6068 = vadd.f32 0.0, %v6067
      %6069 = vmatmul.bf16.gmra.mxu0 %v6019
      %v6070 = vpop.f32.mrf.mxu0
      %v6071 = vadd.f32 0.0, %v6070
      %v6072 = vpop.f32.mrf.mxu0
      %v6073 = vadd.f32 0.0, %v6072
      %6074 = vdwg.mxu0
      %s6075 = scalar_lea.vmem %s45, 16
      %v6076 = vld [vmem:[%s6075] sm:$0xff]
      %v6077 = vld [vmem:[%s6075 + $0x8] sm:$0x1]
      %v6079 = vsel %vm3991, %v6031, 0
      %v6082 = vsel %vm3991, %v6033, 0
      %v6085 = vsel %vm3991, %v6036, 0
      %v6088 = vsel %vm3991, %v6038, 0
      %v6091 = vsel %vm3991, %v6041, 0
      %v6094 = vsel %vm3991, %v6043, 0
      %v6097 = vsel %vm3991, %v6046, 0
      %v6100 = vsel %vm3991, %v6048, 0
      %v6103 = vsel %vm3991, %v6051, 0
      %v6106 = vsel %vm3991, %v6053, 0
      %v6109 = vsel %vm3991, %v6056, 0
      %v6112 = vsel %vm3991, %v6058, 0
      %v6115 = vsel %vm3991, %v6061, 0
      %v6118 = vsel %vm3991, %v6063, 0
      %v6121 = vsel %vm3991, %v6066, 0
      %v6124 = vsel %vm3991, %v6068, 0
      %v6127 = vsel %vm3991, %v6071, 0
      %v6130 = vsel %vm3991, %v6073, 0
      %v6133 = vsel %vm4046, %v6077, 0
      %6135 = vmatpush.msra.mxu0 0.0
      %6136 = vmatpush.msra.mxu0 0.0
      %6137 = vmatpush.msra.mxu0 0.0
      %6138 = vmatpush.msra.mxu0 0.0
      %6139 = vmatpush.msra.mxu0 0.0
      %6140 = vmatpush.msra.mxu0 0.0
      %6141 = vmatpush.msra.mxu0 0.0
      %6142 = vmatpush.msra.mxu0 0.0
      %6143 = vmatpush.msra.mxu0 0.0
      %6144 = vmatpush.msra.mxu0 0.0
      %6145 = vmatpush.msra.mxu0 0.0
      %6146 = vmatpush.msra.mxu0 0.0
      %6147 = vmatpush.msra.mxu0 0.0
      %6148 = vmatpush.msra.mxu0 0.0
      %6149 = vmatpush.msra.mxu0 %v6133
      %6150 = vmatpush.msra.mxu0 %v6076
      %6151 = vmatmul.f32.gmra.mxu0 %v6079
      %v6152 = vpop.f32.mrf.mxu0
      %v6153 = vadd.f32 0.0, %v6152
      %6154 = vmatmul.f32.gmra.mxu0 %v6082
      %v6155 = vpop.f32.mrf.mxu0
      %v6156 = vadd.f32 0.0, %v6155
      %6157 = vmatmul.f32.gmra.mxu0 %v6085
      %v6158 = vpop.f32.mrf.mxu0
      %v6159 = vadd.f32 0.0, %v6158
      %6160 = vmatmul.f32.gmra.mxu0 %v6088
      %v6161 = vpop.f32.mrf.mxu0
      %v6162 = vadd.f32 0.0, %v6161
      %6163 = vmatmul.f32.gmra.mxu0 %v6091
      %v6164 = vpop.f32.mrf.mxu0
      %v6165 = vadd.f32 0.0, %v6164
      %6166 = vmatmul.f32.gmra.mxu0 %v6094
      %v6167 = vpop.f32.mrf.mxu0
      %v6168 = vadd.f32 0.0, %v6167
      %6169 = vmatmul.f32.gmra.mxu0 %v6097
      %v6170 = vpop.f32.mrf.mxu0
      %v6171 = vadd.f32 0.0, %v6170
      %6172 = vmatmul.f32.gmra.mxu0 %v6100
      %v6173 = vpop.f32.mrf.mxu0
      %v6174 = vadd.f32 0.0, %v6173
      %6175 = vmatmul.f32.gmra.mxu0 %v6103
      %v6176 = vpop.f32.mrf.mxu0
      %v6177 = vadd.f32 0.0, %v6176
      %6178 = vmatmul.f32.gmra.mxu0 %v6106
      %v6179 = vpop.f32.mrf.mxu0
      %v6180 = vadd.f32 0.0, %v6179
      %6181 = vmatmul.f32.gmra.mxu0 %v6109
      %v6182 = vpop.f32.mrf.mxu0
      %v6183 = vadd.f32 0.0, %v6182
      %6184 = vmatmul.f32.gmra.mxu0 %v6112
      %v6185 = vpop.f32.mrf.mxu0
      %v6186 = vadd.f32 0.0, %v6185
      %6187 = vmatmul.f32.gmra.mxu0 %v6115
      %v6188 = vpop.f32.mrf.mxu0
      %v6189 = vadd.f32 0.0, %v6188
      %6190 = vmatmul.f32.gmra.mxu0 %v6118
      %v6191 = vpop.f32.mrf.mxu0
      %v6192 = vadd.f32 0.0, %v6191
      %6193 = vmatmul.f32.gmra.mxu0 %v6121
      %v6194 = vpop.f32.mrf.mxu0
      %v6195 = vadd.f32 0.0, %v6194
      %6196 = vmatmul.f32.gmra.mxu0 %v6124
      %v6197 = vpop.f32.mrf.mxu0
      %v6198 = vadd.f32 0.0, %v6197
      %6199 = vmatmul.f32.gmra.mxu0 %v6127
      %v6200 = vpop.f32.mrf.mxu0
      %v6201 = vadd.f32 0.0, %v6200
      %6202 = vmatmul.f32.gmra.mxu0 %v6130
      %v6203 = vpop.f32.mrf.mxu0
      %v6204 = vadd.f32 0.0, %v6203
      %6205 = vdwg.mxu0
      %v6207 = vsel %vm3991, %v5884, 0
      %v6210 = vsel %vm3991, %v5886, 0
      %v6213 = vsel %vm3991, %v5889, 0
      %v6216 = vsel %vm3991, %v5891, 0
      %v6219 = vsel %vm3991, %v5894, 0
      %v6222 = vsel %vm3991, %v5896, 0
      %v6225 = vsel %vm3991, %v5899, 0
      %v6228 = vsel %vm3991, %v5901, 0
      %v6231 = vsel %vm3991, %v5904, 0
      %v6234 = vsel %vm3991, %v5906, 0
      %v6237 = vsel %vm3991, %v5909, 0
      %v6240 = vsel %vm3991, %v5911, 0
      %v6243 = vsel %vm3991, %v5914, 0
      %v6246 = vsel %vm3991, %v5916, 0
      %v6249 = vsel %vm3991, %v5919, 0
      %v6252 = vsel %vm3991, %v5921, 0
      %v6255 = vsel %vm3991, %v5924, 0
      %v6258 = vsel %vm3991, %v5926, 0
      %v6261 = vsel %vm4046, %v5929, 0
      %6263 = vmatpush.msra.mxu0 0.0
      %6264 = vmatpush.msra.mxu0 0.0
      %6265 = vmatpush.msra.mxu0 0.0
      %6266 = vmatpush.msra.mxu0 0.0
      %6267 = vmatpush.msra.mxu0 0.0
      %6268 = vmatpush.msra.mxu0 0.0
      %6269 = vmatpush.msra.mxu0 0.0
      %6270 = vmatpush.msra.mxu0 0.0
      %6271 = vmatpush.msra.mxu0 0.0
      %6272 = vmatpush.msra.mxu0 0.0
      %6273 = vmatpush.msra.mxu0 0.0
      %6274 = vmatpush.msra.mxu0 0.0
      %6275 = vmatpush.msra.mxu0 0.0
      %6276 = vmatpush.msra.mxu0 0.0
      %6277 = vmatpush.msra.mxu0 %v6261
      %6278 = vmatpush.msra.mxu0 %v5928
      %6279 = vmatmul.f32.gmra.mxu0 %v6207
      %v6280 = vpop.f32.mrf.mxu0
      %v6281 = vadd.f32 %v6153, %v6280
      %6282 = vmatmul.f32.gmra.mxu0 %v6210
      %v6283 = vpop.f32.mrf.mxu0
      %v6284 = vadd.f32 %v6156, %v6283
      %6285 = vmatmul.f32.gmra.mxu0 %v6213
      %v6286 = vpop.f32.mrf.mxu0
      %v6287 = vadd.f32 %v6159, %v6286
      %6288 = vmatmul.f32.gmra.mxu0 %v6216
      %v6289 = vpop.f32.mrf.mxu0
      %v6290 = vadd.f32 %v6162, %v6289
      %6291 = vmatmul.f32.gmra.mxu0 %v6219
      %v6292 = vpop.f32.mrf.mxu0
      %v6293 = vadd.f32 %v6165, %v6292
      %6294 = vmatmul.f32.gmra.mxu0 %v6222
      %v6295 = vpop.f32.mrf.mxu0
      %v6296 = vadd.f32 %v6168, %v6295
      %6297 = vmatmul.f32.gmra.mxu0 %v6225
      %v6298 = vpop.f32.mrf.mxu0
      %v6299 = vadd.f32 %v6171, %v6298
      %6300 = vmatmul.f32.gmra.mxu0 %v6228
      %v6301 = vpop.f32.mrf.mxu0
      %v6302 = vadd.f32 %v6174, %v6301
      %6303 = vmatmul.f32.gmra.mxu0 %v6231
      %v6304 = vpop.f32.mrf.mxu0
      %v6305 = vadd.f32 %v6177, %v6304
      %6306 = vmatmul.f32.gmra.mxu0 %v6234
      %v6307 = vpop.f32.mrf.mxu0
      %v6308 = vadd.f32 %v6180, %v6307
      %6309 = vmatmul.f32.gmra.mxu0 %v6237
      %v6310 = vpop.f32.mrf.mxu0
      %v6311 = vadd.f32 %v6183, %v6310
      %6312 = vmatmul.f32.gmra.mxu0 %v6240
      %v6313 = vpop.f32.mrf.mxu0
      %v6314 = vadd.f32 %v6186, %v6313
      %6315 = vmatmul.f32.gmra.mxu0 %v6243
      %v6316 = vpop.f32.mrf.mxu0
      %v6317 = vadd.f32 %v6189, %v6316
      %6318 = vmatmul.f32.gmra.mxu0 %v6246
      %v6319 = vpop.f32.mrf.mxu0
      %v6320 = vadd.f32 %v6192, %v6319
      %6321 = vmatmul.f32.gmra.mxu0 %v6249
      %v6322 = vpop.f32.mrf.mxu0
      %v6323 = vadd.f32 %v6195, %v6322
      %6324 = vmatmul.f32.gmra.mxu0 %v6252
      %v6325 = vpop.f32.mrf.mxu0
      %v6326 = vadd.f32 %v6198, %v6325
      %6327 = vmatmul.f32.gmra.mxu0 %v6255
      %v6328 = vpop.f32.mrf.mxu0
      %v6329 = vadd.f32 %v6201, %v6328
      %6330 = vmatmul.f32.gmra.mxu0 %v6258
      %v6331 = vpop.f32.mrf.mxu0
      %v6332 = vadd.f32 %v6204, %v6331
      %6333 = vdwg.mxu0
      %s6334 = scalar_lea.vmem %s43, 144
      %v6335 = vld [vmem:[%s6334] sm:$0xf]
      %v6336 = vld [vmem:[%s6334 + $0x4] sm:$0xf]
      %v6337 = vld [vmem:[%s6334 + $0x8] sm:$0xf]
      %v6338 = vld [vmem:[%s6334 + $0xc] sm:$0xf]
      %v6339 = vld [vmem:[%s6334 + $0x10] sm:$0xf]
      %v6340 = vld [vmem:[%s6334 + $0x14] sm:$0xf]
      %v6341 = vld [vmem:[%s6334 + $0x18] sm:$0xf]
      %v6342 = vld [vmem:[%s6334 + $0x1c] sm:$0xf]
      %v6343 = vld [vmem:[%s6334 + $0x20] sm:$0xf]
      %v6344 = vld [vmem:[%s6334 + $0x24] sm:$0xf]
      %v6345 = vld [vmem:[%s6334 + $0x28] sm:$0xf]
      %v6346 = vld [vmem:[%s6334 + $0x2c] sm:$0xf]
      %v6347 = vld [vmem:[%s6334 + $0x30] sm:$0xf]
      %v6348 = vld [vmem:[%s6334 + $0x34] sm:$0xf]
      %v6349 = vld [vmem:[%s6334 + $0x38] sm:$0xf]
      %v6350 = vld [vmem:[%s6334 + $0x3c] sm:$0xf]
      %v6351 = vld [vmem:[%s6334 + $0x40] sm:$0xf]
      %v6352 = vld [vmem:[%s6334 + $0x44] sm:$0xf]
      %v6371 = vunpack.c.l.b16 %v6335
      %v6372 = vunpack.c.l.b16 %v6336
      %v6373 = vunpack.c.l.b16 %v6337
      %v6374 = vunpack.c.l.b16 %v6338
      %v6375 = vunpack.c.l.b16 %v6339
      %v6376 = vunpack.c.l.b16 %v6340
      %v6377 = vunpack.c.l.b16 %v6341
      %v6378 = vunpack.c.l.b16 %v6342
      %v6379 = vunpack.c.l.b16 %v6343
      %v6380 = vunpack.c.l.b16 %v6344
      %v6381 = vunpack.c.l.b16 %v6345
      %v6382 = vunpack.c.l.b16 %v6346
      %v6383 = vunpack.c.l.b16 %v6347
      %v6384 = vunpack.c.l.b16 %v6348
      %v6385 = vunpack.c.l.b16 %v6349
      %v6386 = vunpack.c.l.b16 %v6350
      %v6387 = vunpack.c.l.b16 %v6351
      %v6388 = vunpack.c.l.b16 %v6352
      %v6389 = vpack.c.b16 %v6372, %v6371
      %v6390 = vpack.c.b16 %v6374, %v6373
      %v6391 = vpack.c.b16 %v6376, %v6375
      %v6392 = vpack.c.b16 %v6378, %v6377
      %v6393 = vpack.c.b16 %v6380, %v6379
      %v6394 = vpack.c.b16 %v6382, %v6381
      %v6395 = vpack.c.b16 %v6384, %v6383
      %v6396 = vpack.c.b16 %v6386, %v6385
      %v6397 = vpack.c.b16 %v6388, %v6387
      %v6399 = vsel %vm3755, %v6389, 0
      %v6402 = vsel %vm3755, %v6390, 0
      %v6405 = vsel %vm3755, %v6391, 0
      %v6408 = vsel %vm3755, %v6392, 0
      %v6411 = vsel %vm3755, %v6393, 0
      %v6414 = vsel %vm3755, %v6394, 0
      %v6417 = vsel %vm3755, %v6395, 0
      %v6420 = vsel %vm3755, %v6396, 0
      %v6423 = vsel %vm3755, %v6397, 0
      %6425 = vmatpush.bf16.msra.mxu0 0
      %6426 = vmatpush.bf16.msra.mxu0 0
      %6427 = vmatpush.bf16.msra.mxu0 0
      %6428 = vmatpush.bf16.msra.mxu0 %v5872
      %6429 = vmatpush.bf16.msra.mxu0 %v5779
      %6430 = vmatpush.bf16.msra.mxu0 %v5778
      %6431 = vmatpush.bf16.msra.mxu0 %v5777
      %6432 = vmatpush.bf16.msra.mxu0 %v5776
      %6433 = vmatmul.bf16.gmra.mxu0 %v6399
      %v6434 = vpop.f32.mrf.mxu0
      %v6435 = vadd.f32 0.0, %v6434
      %v6436 = vpop.f32.mrf.mxu0
      %v6437 = vadd.f32 0.0, %v6436
      %6438 = vmatmul.bf16.gmra.mxu0 %v6402
      %v6439 = vpop.f32.mrf.mxu0
      %v6440 = vadd.f32 0.0, %v6439
      %v6441 = vpop.f32.mrf.mxu0
      %v6442 = vadd.f32 0.0, %v6441
      %6443 = vmatmul.bf16.gmra.mxu0 %v6405
      %v6444 = vpop.f32.mrf.mxu0
      %v6445 = vadd.f32 0.0, %v6444
      %v6446 = vpop.f32.mrf.mxu0
      %v6447 = vadd.f32 0.0, %v6446
      %6448 = vmatmul.bf16.gmra.mxu0 %v6408
      %v6449 = vpop.f32.mrf.mxu0
      %v6450 = vadd.f32 0.0, %v6449
      %v6451 = vpop.f32.mrf.mxu0
      %v6452 = vadd.f32 0.0, %v6451
      %6453 = vmatmul.bf16.gmra.mxu0 %v6411
      %v6454 = vpop.f32.mrf.mxu0
      %v6455 = vadd.f32 0.0, %v6454
      %v6456 = vpop.f32.mrf.mxu0
      %v6457 = vadd.f32 0.0, %v6456
      %6458 = vmatmul.bf16.gmra.mxu0 %v6414
      %v6459 = vpop.f32.mrf.mxu0
      %v6460 = vadd.f32 0.0, %v6459
      %v6461 = vpop.f32.mrf.mxu0
      %v6462 = vadd.f32 0.0, %v6461
      %6463 = vmatmul.bf16.gmra.mxu0 %v6417
      %v6464 = vpop.f32.mrf.mxu0
      %v6465 = vadd.f32 0.0, %v6464
      %v6466 = vpop.f32.mrf.mxu0
      %v6467 = vadd.f32 0.0, %v6466
      %6468 = vmatmul.bf16.gmra.mxu0 %v6420
      %v6469 = vpop.f32.mrf.mxu0
      %v6470 = vadd.f32 0.0, %v6469
      %v6471 = vpop.f32.mrf.mxu0
      %v6472 = vadd.f32 0.0, %v6471
      %6473 = vmatmul.bf16.gmra.mxu0 %v6423
      %v6474 = vpop.f32.mrf.mxu0
      %v6475 = vadd.f32 0.0, %v6474
      %v6476 = vpop.f32.mrf.mxu0
      %v6477 = vadd.f32 0.0, %v6476
      %6478 = vdwg.mxu0
      %s6479 = scalar_lea.vmem %s45, 32
      %v6480 = vld [vmem:[%s6479] sm:$0xff]
      %v6481 = vld [vmem:[%s6479 + $0x8] sm:$0x1]
      %v6483 = vsel %vm3991, %v6435, 0
      %v6486 = vsel %vm3991, %v6437, 0
      %v6489 = vsel %vm3991, %v6440, 0
      %v6492 = vsel %vm3991, %v6442, 0
      %v6495 = vsel %vm3991, %v6445, 0
      %v6498 = vsel %vm3991, %v6447, 0
      %v6501 = vsel %vm3991, %v6450, 0
      %v6504 = vsel %vm3991, %v6452, 0
      %v6507 = vsel %vm3991, %v6455, 0
      %v6510 = vsel %vm3991, %v6457, 0
      %v6513 = vsel %vm3991, %v6460, 0
      %v6516 = vsel %vm3991, %v6462, 0
      %v6519 = vsel %vm3991, %v6465, 0
      %v6522 = vsel %vm3991, %v6467, 0
      %v6525 = vsel %vm3991, %v6470, 0
      %v6528 = vsel %vm3991, %v6472, 0
      %v6531 = vsel %vm3991, %v6475, 0
      %v6534 = vsel %vm3991, %v6477, 0
      %v6537 = vsel %vm4046, %v6481, 0
      %6539 = vmatpush.msra.mxu0 0.0
      %6540 = vmatpush.msra.mxu0 0.0
      %6541 = vmatpush.msra.mxu0 0.0
      %6542 = vmatpush.msra.mxu0 0.0
      %6543 = vmatpush.msra.mxu0 0.0
      %6544 = vmatpush.msra.mxu0 0.0
      %6545 = vmatpush.msra.mxu0 0.0
      %6546 = vmatpush.msra.mxu0 0.0
      %6547 = vmatpush.msra.mxu0 0.0
      %6548 = vmatpush.msra.mxu0 0.0
      %6549 = vmatpush.msra.mxu0 0.0
      %6550 = vmatpush.msra.mxu0 0.0
      %6551 = vmatpush.msra.mxu0 0.0
      %6552 = vmatpush.msra.mxu0 0.0
      %6553 = vmatpush.msra.mxu0 %v6537
      %6554 = vmatpush.msra.mxu0 %v6480
      %6555 = vmatmul.f32.gmra.mxu0 %v6483
      %v6556 = vpop.f32.mrf.mxu0
      %v6557 = vadd.f32 0.0, %v6556
      %6558 = vmatmul.f32.gmra.mxu0 %v6486
      %v6559 = vpop.f32.mrf.mxu0
      %v6560 = vadd.f32 0.0, %v6559
      %6561 = vmatmul.f32.gmra.mxu0 %v6489
      %v6562 = vpop.f32.mrf.mxu0
      %v6563 = vadd.f32 0.0, %v6562
      %6564 = vmatmul.f32.gmra.mxu0 %v6492
      %v6565 = vpop.f32.mrf.mxu0
      %v6566 = vadd.f32 0.0, %v6565
      %6567 = vmatmul.f32.gmra.mxu0 %v6495
      %v6568 = vpop.f32.mrf.mxu0
      %v6569 = vadd.f32 0.0, %v6568
      %6570 = vmatmul.f32.gmra.mxu0 %v6498
      %v6571 = vpop.f32.mrf.mxu0
      %v6572 = vadd.f32 0.0, %v6571
      %6573 = vmatmul.f32.gmra.mxu0 %v6501
      %v6574 = vpop.f32.mrf.mxu0
      %v6575 = vadd.f32 0.0, %v6574
      %6576 = vmatmul.f32.gmra.mxu0 %v6504
      %v6577 = vpop.f32.mrf.mxu0
      %v6578 = vadd.f32 0.0, %v6577
      %6579 = vmatmul.f32.gmra.mxu0 %v6507
      %v6580 = vpop.f32.mrf.mxu0
      %v6581 = vadd.f32 0.0, %v6580
      %6582 = vmatmul.f32.gmra.mxu0 %v6510
      %v6583 = vpop.f32.mrf.mxu0
      %v6584 = vadd.f32 0.0, %v6583
      %6585 = vmatmul.f32.gmra.mxu0 %v6513
      %v6586 = vpop.f32.mrf.mxu0
      %v6587 = vadd.f32 0.0, %v6586
      %6588 = vmatmul.f32.gmra.mxu0 %v6516
      %v6589 = vpop.f32.mrf.mxu0
      %v6590 = vadd.f32 0.0, %v6589
      %6591 = vmatmul.f32.gmra.mxu0 %v6519
      %v6592 = vpop.f32.mrf.mxu0
      %v6593 = vadd.f32 0.0, %v6592
      %6594 = vmatmul.f32.gmra.mxu0 %v6522
      %v6595 = vpop.f32.mrf.mxu0
      %v6596 = vadd.f32 0.0, %v6595
      %6597 = vmatmul.f32.gmra.mxu0 %v6525
      %v6598 = vpop.f32.mrf.mxu0
      %v6599 = vadd.f32 0.0, %v6598
      %6600 = vmatmul.f32.gmra.mxu0 %v6528
      %v6601 = vpop.f32.mrf.mxu0
      %v6602 = vadd.f32 0.0, %v6601
      %6603 = vmatmul.f32.gmra.mxu0 %v6531
      %v6604 = vpop.f32.mrf.mxu0
      %v6605 = vadd.f32 0.0, %v6604
      %6606 = vmatmul.f32.gmra.mxu0 %v6534
      %v6607 = vpop.f32.mrf.mxu0
      %v6608 = vadd.f32 0.0, %v6607
      %6609 = vdwg.mxu0
      %v6610 = vadd.f32 %v6281, %v6557
      %v6611 = vadd.f32 %v6284, %v6560
      %v6612 = vadd.f32 %v6287, %v6563
      %v6613 = vadd.f32 %v6290, %v6566
      %v6614 = vadd.f32 %v6293, %v6569
      %v6615 = vadd.f32 %v6296, %v6572
      %v6616 = vadd.f32 %v6299, %v6575
      %v6617 = vadd.f32 %v6302, %v6578
      %v6618 = vadd.f32 %v6305, %v6581
      %v6619 = vadd.f32 %v6308, %v6584
      %v6620 = vadd.f32 %v6311, %v6587
      %v6621 = vadd.f32 %v6314, %v6590
      %v6622 = vadd.f32 %v6317, %v6593
      %v6623 = vadd.f32 %v6320, %v6596
      %v6624 = vadd.f32 %v6323, %v6599
      %v6625 = vadd.f32 %v6326, %v6602
      %v6626 = vadd.f32 %v6329, %v6605
      %v6627 = vadd.f32 %v6332, %v6608
      %v6628 = vld [vmem:[%s47] sm:$0xff]
      %v6629 = vld [vmem:[%s47 + $0x8] sm:$0xff]
      %v6630 = vld [vmem:[%s47 + $0x10] sm:$0xff]
      %v6631 = vld [vmem:[%s47 + $0x18] sm:$0xff]
      %v6632 = vld [vmem:[%s47 + $0x20] sm:$0xff]
      %v6633 = vld [vmem:[%s47 + $0x28] sm:$0xff]
      %v6634 = vld [vmem:[%s47 + $0x30] sm:$0xff]
      %v6635 = vld [vmem:[%s47 + $0x38] sm:$0xff]
      %v6636 = vld [vmem:[%s47 + $0x40] sm:$0xff]
      %v6637 = vld [vmem:[%s47 + $0x48] sm:$0xff]
      %v6638 = vld [vmem:[%s47 + $0x50] sm:$0xff]
      %v6639 = vld [vmem:[%s47 + $0x58] sm:$0xff]
      %v6640 = vld [vmem:[%s47 + $0x60] sm:$0xff]
      %v6641 = vld [vmem:[%s47 + $0x68] sm:$0xff]
      %v6642 = vld [vmem:[%s47 + $0x70] sm:$0xff]
      %v6643 = vld [vmem:[%s47 + $0x78] sm:$0xff]
      %v6644 = vld [vmem:[%s47 + $0x80] sm:$0xff]
      %v6645 = vld [vmem:[%s47 + $0x88] sm:$0xff]
      %6647 = vset.pattern.permute.xlu0 0
      %6648 = vperm.xlu0 %6647, %v6628
      %v6649 = vpop.permute.xlu0 %6648
      %6652 = vset.pattern.permute.xlu0 0
      %6653 = vperm.xlu0 %6652, %v6629
      %v6654 = vpop.permute.xlu0 %6653
      %6657 = vset.pattern.permute.xlu0 0
      %6658 = vperm.xlu0 %6657, %v6630
      %v6659 = vpop.permute.xlu0 %6658
      %6662 = vset.pattern.permute.xlu0 0
      %6663 = vperm.xlu0 %6662, %v6631
      %v6664 = vpop.permute.xlu0 %6663
      %6667 = vset.pattern.permute.xlu0 0
      %6668 = vperm.xlu0 %6667, %v6632
      %v6669 = vpop.permute.xlu0 %6668
      %6672 = vset.pattern.permute.xlu0 0
      %6673 = vperm.xlu0 %6672, %v6633
      %v6674 = vpop.permute.xlu0 %6673
      %6677 = vset.pattern.permute.xlu0 0
      %6678 = vperm.xlu0 %6677, %v6634
      %v6679 = vpop.permute.xlu0 %6678
      %6682 = vset.pattern.permute.xlu0 0
      %6683 = vperm.xlu0 %6682, %v6635
      %v6684 = vpop.permute.xlu0 %6683
      %6687 = vset.pattern.permute.xlu0 0
      %6688 = vperm.xlu0 %6687, %v6636
      %v6689 = vpop.permute.xlu0 %6688
      %6692 = vset.pattern.permute.xlu0 0
      %6693 = vperm.xlu0 %6692, %v6637
      %v6694 = vpop.permute.xlu0 %6693
      %6697 = vset.pattern.permute.xlu0 0
      %6698 = vperm.xlu0 %6697, %v6638
      %v6699 = vpop.permute.xlu0 %6698
      %6702 = vset.pattern.permute.xlu0 0
      %6703 = vperm.xlu0 %6702, %v6639
      %v6704 = vpop.permute.xlu0 %6703
      %6707 = vset.pattern.permute.xlu0 0
      %6708 = vperm.xlu0 %6707, %v6640
      %v6709 = vpop.permute.xlu0 %6708
      %6712 = vset.pattern.permute.xlu0 0
      %6713 = vperm.xlu0 %6712, %v6641
      %v6714 = vpop.permute.xlu0 %6713
      %6717 = vset.pattern.permute.xlu0 0
      %6718 = vperm.xlu0 %6717, %v6642
      %v6719 = vpop.permute.xlu0 %6718
      %6722 = vset.pattern.permute.xlu0 0
      %6723 = vperm.xlu0 %6722, %v6643
      %v6724 = vpop.permute.xlu0 %6723
      %6727 = vset.pattern.permute.xlu0 0
      %6728 = vperm.xlu0 %6727, %v6644
      %v6729 = vpop.permute.xlu0 %6728
      %6732 = vset.pattern.permute.xlu0 0
      %6733 = vperm.xlu0 %6732, %v6645
      %v6734 = vpop.permute.xlu0 %6733
      %v6736 = vadd.f32 %v6610, %v6649
      %v6737 = vadd.f32 %v6611, %v6654
      %v6738 = vadd.f32 %v6612, %v6659
      %v6739 = vadd.f32 %v6613, %v6664
      %v6740 = vadd.f32 %v6614, %v6669
      %v6741 = vadd.f32 %v6615, %v6674
      %v6742 = vadd.f32 %v6616, %v6679
      %v6743 = vadd.f32 %v6617, %v6684
      %v6744 = vadd.f32 %v6618, %v6689
      %v6745 = vadd.f32 %v6619, %v6694
      %v6746 = vadd.f32 %v6620, %v6699
      %v6747 = vadd.f32 %v6621, %v6704
      %v6748 = vadd.f32 %v6622, %v6709
      %v6749 = vadd.f32 %v6623, %v6714
      %v6750 = vadd.f32 %v6624, %v6719
      %v6751 = vadd.f32 %v6625, %v6724
      %v6752 = vadd.f32 %v6626, %v6729
      %v6753 = vadd.f32 %v6627, %v6734
      %v6754 = vmax.f32 %v6736, 0.0
      %v6755 = vmax.f32 %v6737, 0.0
      %v6756 = vmax.f32 %v6738, 0.0
      %v6757 = vmax.f32 %v6739, 0.0
      %v6758 = vmax.f32 %v6740, 0.0
      %v6759 = vmax.f32 %v6741, 0.0
      %v6760 = vmax.f32 %v6742, 0.0
      %v6761 = vmax.f32 %v6743, 0.0
      %v6762 = vmax.f32 %v6744, 0.0
      %v6763 = vmax.f32 %v6745, 0.0
      %v6764 = vmax.f32 %v6746, 0.0
      %v6765 = vmax.f32 %v6747, 0.0
      %v6766 = vmax.f32 %v6748, 0.0
      %v6767 = vmax.f32 %v6749, 0.0
      %v6768 = vmax.f32 %v6750, 0.0
      %v6769 = vmax.f32 %v6751, 0.0
      %v6770 = vmax.f32 %v6752, 0.0
      %v6771 = vmax.f32 %v6753, 0.0
      %v6772 = vld [vmem:[%s49] sm:$0xff]
      %v6773 = vld [vmem:[%s49 + $0x8] sm:$0xff]
      %v6774 = vld [vmem:[%s49 + $0x10] sm:$0xff]
      %v6775 = vld [vmem:[%s49 + $0x18] sm:$0xff]
      %v6776 = vld [vmem:[%s49 + $0x20] sm:$0xff]
      %v6777 = vld [vmem:[%s49 + $0x28] sm:$0xff]
      %v6778 = vld [vmem:[%s49 + $0x30] sm:$0xff]
      %v6779 = vld [vmem:[%s49 + $0x38] sm:$0xff]
      %v6780 = vld [vmem:[%s49 + $0x40] sm:$0xff]
      %v6781 = vld [vmem:[%s49 + $0x48] sm:$0xff]
      %v6782 = vld [vmem:[%s49 + $0x50] sm:$0xff]
      %v6783 = vld [vmem:[%s49 + $0x58] sm:$0xff]
      %v6784 = vld [vmem:[%s49 + $0x60] sm:$0xff]
      %v6785 = vld [vmem:[%s49 + $0x68] sm:$0xff]
      %v6786 = vld [vmem:[%s49 + $0x70] sm:$0xff]
      %v6787 = vld [vmem:[%s49 + $0x78] sm:$0xff]
      %v6788 = vld [vmem:[%s49 + $0x80] sm:$0xff]
      %v6789 = vld [vmem:[%s49 + $0x88] sm:$0xff]
      %v6790 = vld [vmem:[%s49 + $0x90] sm:$0xff]
      %v6791 = vld [vmem:[%s49 + $0x98] sm:$0xff]
      %v6792 = vld [vmem:[%s49 + $0xa0] sm:$0xff]
      %v6793 = vld [vmem:[%s49 + $0xa8] sm:$0xff]
      %v6794 = vld [vmem:[%s49 + $0xb0] sm:$0xff]
      %v6795 = vld [vmem:[%s49 + $0xb8] sm:$0xff]
      %v6796 = vld [vmem:[%s49 + $0xc0] sm:$0xff]
      %v6797 = vld [vmem:[%s49 + $0xc8] sm:$0xff]
      %v6798 = vld [vmem:[%s49 + $0xd0] sm:$0xff]
      %v6799 = vld [vmem:[%s49 + $0xd8] sm:$0xff]
      %v6800 = vld [vmem:[%s49 + $0xe0] sm:$0xff]
      %v6801 = vld [vmem:[%s49 + $0xe8] sm:$0xff]
      %v6802 = vld [vmem:[%s49 + $0xf0] sm:$0xff]
      %v6803 = vld [vmem:[%s49 + $0xf8] sm:$0xff]
      %v6804 = vld [vmem:[%s49 + $0x100] sm:$0xff]
      %v6805 = vld [vmem:[%s49 + $0x108] sm:$0xff]
      %v6806 = vld [vmem:[%s49 + $0x110] sm:$0xff]
      %v6807 = vld [vmem:[%s49 + $0x118] sm:$0xff]
      %v6808 = vld [vmem:[%s49 + $0x120] sm:$0xff]
      %v6809 = vld [vmem:[%s49 + $0x128] sm:$0xff]
      %v6810 = vld [vmem:[%s49 + $0x130] sm:$0xff]
      %v6811 = vld [vmem:[%s49 + $0x138] sm:$0xff]
      %v6812 = vld [vmem:[%s49 + $0x140] sm:$0xff]
      %v6813 = vld [vmem:[%s49 + $0x148] sm:$0xff]
      %v6814 = vld [vmem:[%s49 + $0x150] sm:$0xff]
      %v6815 = vld [vmem:[%s49 + $0x158] sm:$0xff]
      %v6816 = vld [vmem:[%s49 + $0x160] sm:$0xff]
      %v6817 = vld [vmem:[%s49 + $0x168] sm:$0xff]
      %v6818 = vld [vmem:[%s49 + $0x170] sm:$0xff]
      %v6819 = vld [vmem:[%s49 + $0x178] sm:$0xff]
      %v6820 = vld [vmem:[%s49 + $0x180] sm:$0xff]
      %v6821 = vld [vmem:[%s49 + $0x188] sm:$0xff]
      %v6822 = vld [vmem:[%s49 + $0x190] sm:$0xff]
      %v6823 = vld [vmem:[%s49 + $0x198] sm:$0xff]
      %v6824 = vld [vmem:[%s49 + $0x1a0] sm:$0xff]
      %v6825 = vld [vmem:[%s49 + $0x1a8] sm:$0xff]
      %v6826 = vld [vmem:[%s49 + $0x1b0] sm:$0xff]
      %v6827 = vld [vmem:[%s49 + $0x1b8] sm:$0xff]
      %v6828 = vld [vmem:[%s49 + $0x1c0] sm:$0xff]
      %v6829 = vld [vmem:[%s49 + $0x1c8] sm:$0xff]
      %v6830 = vld [vmem:[%s49 + $0x1d0] sm:$0xff]
      %v6831 = vld [vmem:[%s49 + $0x1d8] sm:$0xff]
      %v6832 = vld [vmem:[%s49 + $0x1e0] sm:$0xff]
      %v6833 = vld [vmem:[%s49 + $0x1e8] sm:$0xff]
      %v6834 = vld [vmem:[%s49 + $0x1f0] sm:$0xff]
      %v6835 = vld [vmem:[%s49 + $0x1f8] sm:$0xff]
      %v6837 = vsel %vm2701, %v6773, 0
      %v6840 = vsel %vm2701, %v6775, 0
      %v6843 = vsel %vm2701, %v6777, 0
      %v6846 = vsel %vm2701, %v6779, 0
      %v6849 = vsel %vm2701, %v6781, 0
      %v6852 = vsel %vm2701, %v6783, 0
      %v6855 = vsel %vm2701, %v6785, 0
      %v6858 = vsel %vm2701, %v6787, 0
      %v6861 = vsel %vm2701, %v6789, 0
      %v6864 = vsel %vm2701, %v6791, 0
      %v6867 = vsel %vm2701, %v6793, 0
      %v6870 = vsel %vm2701, %v6795, 0
      %v6873 = vsel %vm2701, %v6797, 0
      %v6876 = vsel %vm2701, %v6799, 0
      %v6879 = vsel %vm2701, %v6801, 0
      %v6882 = vsel %vm2701, %v6803, 0
      %v6885 = vsel %vm2701, %v6805, 0
      %v6888 = vsel %vm2701, %v6807, 0
      %v6891 = vsel %vm2701, %v6809, 0
      %v6894 = vsel %vm2701, %v6811, 0
      %v6897 = vsel %vm2701, %v6813, 0
      %v6900 = vsel %vm2701, %v6815, 0
      %v6903 = vsel %vm2701, %v6817, 0
      %v6906 = vsel %vm2701, %v6819, 0
      %v6909 = vsel %vm2701, %v6821, 0
      %v6912 = vsel %vm2701, %v6823, 0
      %v6915 = vsel %vm2701, %v6825, 0
      %v6918 = vsel %vm2701, %v6827, 0
      %v6921 = vsel %vm2701, %v6829, 0
      %v6924 = vsel %vm2701, %v6831, 0
      %v6927 = vsel %vm2701, %v6833, 0
      %v6930 = vsel %vm2701, %v6835, 0
      %6932 = vmatpush.msra.mxu0 %v6769
      %6933 = vmatpush.msra.mxu0 %v6768
      %6934 = vmatpush.msra.mxu0 %v6767
      %6935 = vmatpush.msra.mxu0 %v6766
      %6936 = vmatpush.msra.mxu0 %v6765
      %6937 = vmatpush.msra.mxu0 %v6764
      %6938 = vmatpush.msra.mxu0 %v6763
      %6939 = vmatpush.msra.mxu0 %v6762
      %6940 = vmatpush.msra.mxu0 %v6761
      %6941 = vmatpush.msra.mxu0 %v6760
      %6942 = vmatpush.msra.mxu0 %v6759
      %6943 = vmatpush.msra.mxu0 %v6758
      %6944 = vmatpush.msra.mxu0 %v6757
      %6945 = vmatpush.msra.mxu0 %v6756
      %6946 = vmatpush.msra.mxu0 %v6755
      %6947 = vmatpush.msra.mxu0 %v6754
      %6948 = vmatmul.f32.gmra.mxu0 %v6772
      %v6949 = vpop.f32.mrf.mxu0
      %v6950 = vadd.f32 0.0, %v6949
      %6951 = vmatmul.f32.gmra.mxu0 %v6774
      %v6952 = vpop.f32.mrf.mxu0
      %v6953 = vadd.f32 0.0, %v6952
      %6954 = vmatmul.f32.gmra.mxu0 %v6776
      %v6955 = vpop.f32.mrf.mxu0
      %v6956 = vadd.f32 0.0, %v6955
      %6957 = vmatmul.f32.gmra.mxu0 %v6778
      %v6958 = vpop.f32.mrf.mxu0
      %v6959 = vadd.f32 0.0, %v6958
      %6960 = vmatmul.f32.gmra.mxu0 %v6780
      %v6961 = vpop.f32.mrf.mxu0
      %v6962 = vadd.f32 0.0, %v6961
      %6963 = vmatmul.f32.gmra.mxu0 %v6782
      %v6964 = vpop.f32.mrf.mxu0
      %v6965 = vadd.f32 0.0, %v6964
      %6966 = vmatmul.f32.gmra.mxu0 %v6784
      %v6967 = vpop.f32.mrf.mxu0
      %v6968 = vadd.f32 0.0, %v6967
      %6969 = vmatmul.f32.gmra.mxu0 %v6786
      %v6970 = vpop.f32.mrf.mxu0
      %v6971 = vadd.f32 0.0, %v6970
      %6972 = vmatmul.f32.gmra.mxu0 %v6788
      %v6973 = vpop.f32.mrf.mxu0
      %v6974 = vadd.f32 0.0, %v6973
      %6975 = vmatmul.f32.gmra.mxu0 %v6790
      %v6976 = vpop.f32.mrf.mxu0
      %v6977 = vadd.f32 0.0, %v6976
      %6978 = vmatmul.f32.gmra.mxu0 %v6792
      %v6979 = vpop.f32.mrf.mxu0
      %v6980 = vadd.f32 0.0, %v6979
      %6981 = vmatmul.f32.gmra.mxu0 %v6794
      %v6982 = vpop.f32.mrf.mxu0
      %v6983 = vadd.f32 0.0, %v6982
      %6984 = vmatmul.f32.gmra.mxu0 %v6796
      %v6985 = vpop.f32.mrf.mxu0
      %v6986 = vadd.f32 0.0, %v6985
      %6987 = vmatmul.f32.gmra.mxu0 %v6798
      %v6988 = vpop.f32.mrf.mxu0
      %v6989 = vadd.f32 0.0, %v6988
      %6990 = vmatmul.f32.gmra.mxu0 %v6800
      %v6991 = vpop.f32.mrf.mxu0
      %v6992 = vadd.f32 0.0, %v6991
      %6993 = vmatmul.f32.gmra.mxu0 %v6802
      %v6994 = vpop.f32.mrf.mxu0
      %v6995 = vadd.f32 0.0, %v6994
      %6996 = vmatmul.f32.gmra.mxu0 %v6804
      %v6997 = vpop.f32.mrf.mxu0
      %v6998 = vadd.f32 0.0, %v6997
      %6999 = vmatmul.f32.gmra.mxu0 %v6806
      %v7000 = vpop.f32.mrf.mxu0
      %v7001 = vadd.f32 0.0, %v7000
      %7002 = vmatmul.f32.gmra.mxu0 %v6808
      %v7003 = vpop.f32.mrf.mxu0
      %v7004 = vadd.f32 0.0, %v7003
      %7005 = vmatmul.f32.gmra.mxu0 %v6810
      %v7006 = vpop.f32.mrf.mxu0
      %v7007 = vadd.f32 0.0, %v7006
      %7008 = vmatmul.f32.gmra.mxu0 %v6812
      %v7009 = vpop.f32.mrf.mxu0
      %v7010 = vadd.f32 0.0, %v7009
      %7011 = vmatmul.f32.gmra.mxu0 %v6814
      %v7012 = vpop.f32.mrf.mxu0
      %v7013 = vadd.f32 0.0, %v7012
      %7014 = vmatmul.f32.gmra.mxu0 %v6816
      %v7015 = vpop.f32.mrf.mxu0
      %v7016 = vadd.f32 0.0, %v7015
      %7017 = vmatmul.f32.gmra.mxu0 %v6818
      %v7018 = vpop.f32.mrf.mxu0
      %v7019 = vadd.f32 0.0, %v7018
      %7020 = vmatmul.f32.gmra.mxu0 %v6820
      %v7021 = vpop.f32.mrf.mxu0
      %v7022 = vadd.f32 0.0, %v7021
      %7023 = vmatmul.f32.gmra.mxu0 %v6822
      %v7024 = vpop.f32.mrf.mxu0
      %v7025 = vadd.f32 0.0, %v7024
      %7026 = vmatmul.f32.gmra.mxu0 %v6824
      %v7027 = vpop.f32.mrf.mxu0
      %v7028 = vadd.f32 0.0, %v7027
      %7029 = vmatmul.f32.gmra.mxu0 %v6826
      %v7030 = vpop.f32.mrf.mxu0
      %v7031 = vadd.f32 0.0, %v7030
      %7032 = vmatmul.f32.gmra.mxu0 %v6828
      %v7033 = vpop.f32.mrf.mxu0
      %v7034 = vadd.f32 0.0, %v7033
      %7035 = vmatmul.f32.gmra.mxu0 %v6830
      %v7036 = vpop.f32.mrf.mxu0
      %v7037 = vadd.f32 0.0, %v7036
      %7038 = vmatmul.f32.gmra.mxu0 %v6832
      %v7039 = vpop.f32.mrf.mxu0
      %v7040 = vadd.f32 0.0, %v7039
      %7041 = vmatmul.f32.gmra.mxu0 %v6834
      %v7042 = vpop.f32.mrf.mxu0
      %v7043 = vadd.f32 0.0, %v7042
      %7044 = vdwg.mxu0
      %7045 = vmatpush.msra.mxu0 0.0
      %7046 = vmatpush.msra.mxu0 0.0
      %7047 = vmatpush.msra.mxu0 0.0
      %7048 = vmatpush.msra.mxu0 0.0
      %7049 = vmatpush.msra.mxu0 0.0
      %7050 = vmatpush.msra.mxu0 0.0
      %7051 = vmatpush.msra.mxu0 0.0
      %7052 = vmatpush.msra.mxu0 0.0
      %7053 = vmatpush.msra.mxu0 0.0
      %7054 = vmatpush.msra.mxu0 0.0
      %7055 = vmatpush.msra.mxu0 0.0
      %7056 = vmatpush.msra.mxu0 0.0
      %7057 = vmatpush.msra.mxu0 0.0
      %7058 = vmatpush.msra.mxu0 0.0
      %7059 = vmatpush.msra.mxu0 %v6771
      %7060 = vmatpush.msra.mxu0 %v6770
      %7061 = vmatmul.f32.gmra.mxu0 %v6837
      %v7062 = vpop.f32.mrf.mxu0
      %v7063 = vadd.f32 %v6950, %v7062
      %7064 = vmatmul.f32.gmra.mxu0 %v6840
      %v7065 = vpop.f32.mrf.mxu0
      %v7066 = vadd.f32 %v6953, %v7065
      %7067 = vmatmul.f32.gmra.mxu0 %v6843
      %v7068 = vpop.f32.mrf.mxu0
      %v7069 = vadd.f32 %v6956, %v7068
      %7070 = vmatmul.f32.gmra.mxu0 %v6846
      %v7071 = vpop.f32.mrf.mxu0
      %v7072 = vadd.f32 %v6959, %v7071
      %7073 = vmatmul.f32.gmra.mxu0 %v6849
      %v7074 = vpop.f32.mrf.mxu0
      %v7075 = vadd.f32 %v6962, %v7074
      %7076 = vmatmul.f32.gmra.mxu0 %v6852
      %v7077 = vpop.f32.mrf.mxu0
      %v7078 = vadd.f32 %v6965, %v7077
      %7079 = vmatmul.f32.gmra.mxu0 %v6855
      %v7080 = vpop.f32.mrf.mxu0
      %v7081 = vadd.f32 %v6968, %v7080
      %7082 = vmatmul.f32.gmra.mxu0 %v6858
      %v7083 = vpop.f32.mrf.mxu0
      %v7084 = vadd.f32 %v6971, %v7083
      %7085 = vmatmul.f32.gmra.mxu0 %v6861
      %v7086 = vpop.f32.mrf.mxu0
      %v7087 = vadd.f32 %v6974, %v7086
      %7088 = vmatmul.f32.gmra.mxu0 %v6864
      %v7089 = vpop.f32.mrf.mxu0
      %v7090 = vadd.f32 %v6977, %v7089
      %7091 = vmatmul.f32.gmra.mxu0 %v6867
      %v7092 = vpop.f32.mrf.mxu0
      %v7093 = vadd.f32 %v6980, %v7092
      %7094 = vmatmul.f32.gmra.mxu0 %v6870
      %v7095 = vpop.f32.mrf.mxu0
      %v7096 = vadd.f32 %v6983, %v7095
      %7097 = vmatmul.f32.gmra.mxu0 %v6873
      %v7098 = vpop.f32.mrf.mxu0
      %v7099 = vadd.f32 %v6986, %v7098
      %7100 = vmatmul.f32.gmra.mxu0 %v6876
      %v7101 = vpop.f32.mrf.mxu0
      %v7102 = vadd.f32 %v6989, %v7101
      %7103 = vmatmul.f32.gmra.mxu0 %v6879
      %v7104 = vpop.f32.mrf.mxu0
      %v7105 = vadd.f32 %v6992, %v7104
      %7106 = vmatmul.f32.gmra.mxu0 %v6882
      %v7107 = vpop.f32.mrf.mxu0
      %v7108 = vadd.f32 %v6995, %v7107
      %7109 = vmatmul.f32.gmra.mxu0 %v6885
      %v7110 = vpop.f32.mrf.mxu0
      %v7111 = vadd.f32 %v6998, %v7110
      %7112 = vmatmul.f32.gmra.mxu0 %v6888
      %v7113 = vpop.f32.mrf.mxu0
      %v7114 = vadd.f32 %v7001, %v7113
      %7115 = vmatmul.f32.gmra.mxu0 %v6891
      %v7116 = vpop.f32.mrf.mxu0
      %v7117 = vadd.f32 %v7004, %v7116
      %7118 = vmatmul.f32.gmra.mxu0 %v6894
      %v7119 = vpop.f32.mrf.mxu0
      %v7120 = vadd.f32 %v7007, %v7119
      %7121 = vmatmul.f32.gmra.mxu0 %v6897
      %v7122 = vpop.f32.mrf.mxu0
      %v7123 = vadd.f32 %v7010, %v7122
      %7124 = vmatmul.f32.gmra.mxu0 %v6900
      %v7125 = vpop.f32.mrf.mxu0
      %v7126 = vadd.f32 %v7013, %v7125
      %7127 = vmatmul.f32.gmra.mxu0 %v6903
      %v7128 = vpop.f32.mrf.mxu0
      %v7129 = vadd.f32 %v7016, %v7128
      %7130 = vmatmul.f32.gmra.mxu0 %v6906
      %v7131 = vpop.f32.mrf.mxu0
      %v7132 = vadd.f32 %v7019, %v7131
      %7133 = vmatmul.f32.gmra.mxu0 %v6909
      %v7134 = vpop.f32.mrf.mxu0
      %v7135 = vadd.f32 %v7022, %v7134
      %7136 = vmatmul.f32.gmra.mxu0 %v6912
      %v7137 = vpop.f32.mrf.mxu0
      %v7138 = vadd.f32 %v7025, %v7137
      %7139 = vmatmul.f32.gmra.mxu0 %v6915
      %v7140 = vpop.f32.mrf.mxu0
      %v7141 = vadd.f32 %v7028, %v7140
      %7142 = vmatmul.f32.gmra.mxu0 %v6918
      %v7143 = vpop.f32.mrf.mxu0
      %v7144 = vadd.f32 %v7031, %v7143
      %7145 = vmatmul.f32.gmra.mxu0 %v6921
      %v7146 = vpop.f32.mrf.mxu0
      %v7147 = vadd.f32 %v7034, %v7146
      %7148 = vmatmul.f32.gmra.mxu0 %v6924
      %v7149 = vpop.f32.mrf.mxu0
      %v7150 = vadd.f32 %v7037, %v7149
      %7151 = vmatmul.f32.gmra.mxu0 %v6927
      %v7152 = vpop.f32.mrf.mxu0
      %v7153 = vadd.f32 %v7040, %v7152
      %7154 = vmatmul.f32.gmra.mxu0 %v6930
      %v7155 = vpop.f32.mrf.mxu0
      %v7156 = vadd.f32 %v7043, %v7155
      %7157 = vdwg.mxu0
      %v7158 = vld [vmem:[%s51] sm:$0xff]
      %v7159 = vld [vmem:[%s51 + $0x8] sm:$0x1]
      %v7161 = vsel %vm3991, %v7063, 0
      %v7164 = vsel %vm3991, %v7066, 0
      %v7167 = vsel %vm3991, %v7069, 0
      %v7170 = vsel %vm3991, %v7072, 0
      %v7173 = vsel %vm3991, %v7075, 0
      %v7176 = vsel %vm3991, %v7078, 0
      %v7179 = vsel %vm3991, %v7081, 0
      %v7182 = vsel %vm3991, %v7084, 0
      %v7185 = vsel %vm3991, %v7087, 0
      %v7188 = vsel %vm3991, %v7090, 0
      %v7191 = vsel %vm3991, %v7093, 0
      %v7194 = vsel %vm3991, %v7096, 0
      %v7197 = vsel %vm3991, %v7099, 0
      %v7200 = vsel %vm3991, %v7102, 0
      %v7203 = vsel %vm3991, %v7105, 0
      %v7206 = vsel %vm3991, %v7108, 0
      %v7209 = vsel %vm3991, %v7111, 0
      %v7212 = vsel %vm3991, %v7114, 0
      %v7215 = vsel %vm3991, %v7117, 0
      %v7218 = vsel %vm3991, %v7120, 0
      %v7221 = vsel %vm3991, %v7123, 0
      %v7224 = vsel %vm3991, %v7126, 0
      %v7227 = vsel %vm3991, %v7129, 0
      %v7230 = vsel %vm3991, %v7132, 0
      %v7233 = vsel %vm3991, %v7135, 0
      %v7236 = vsel %vm3991, %v7138, 0
      %v7239 = vsel %vm3991, %v7141, 0
      %v7242 = vsel %vm3991, %v7144, 0
      %v7245 = vsel %vm3991, %v7147, 0
      %v7248 = vsel %vm3991, %v7150, 0
      %v7251 = vsel %vm3991, %v7153, 0
      %v7254 = vsel %vm3991, %v7156, 0
      %v7257 = vsel %vm4046, %v7159, 0
      %7259 = vmatpush.msra.mxu0 0.0
      %7260 = vmatpush.msra.mxu0 0.0
      %7261 = vmatpush.msra.mxu0 0.0
      %7262 = vmatpush.msra.mxu0 0.0
      %7263 = vmatpush.msra.mxu0 0.0
      %7264 = vmatpush.msra.mxu0 0.0
      %7265 = vmatpush.msra.mxu0 0.0
      %7266 = vmatpush.msra.mxu0 0.0
      %7267 = vmatpush.msra.mxu0 0.0
      %7268 = vmatpush.msra.mxu0 0.0
      %7269 = vmatpush.msra.mxu0 0.0
      %7270 = vmatpush.msra.mxu0 0.0
      %7271 = vmatpush.msra.mxu0 0.0
      %7272 = vmatpush.msra.mxu0 0.0
      %7273 = vmatpush.msra.mxu0 %v7257
      %7274 = vmatpush.msra.mxu0 %v7158
      %7275 = vmatmul.f32.gmra.mxu0 %v7161
      %v7276 = vpop.f32.mrf.mxu0
      %v7277 = vadd.f32 0.0, %v7276
      %7278 = vmatmul.f32.gmra.mxu0 %v7164
      %v7279 = vpop.f32.mrf.mxu0
      %v7280 = vadd.f32 0.0, %v7279
      %7281 = vmatmul.f32.gmra.mxu0 %v7167
      %v7282 = vpop.f32.mrf.mxu0
      %v7283 = vadd.f32 0.0, %v7282
      %7284 = vmatmul.f32.gmra.mxu0 %v7170
      %v7285 = vpop.f32.mrf.mxu0
      %v7286 = vadd.f32 0.0, %v7285
      %7287 = vmatmul.f32.gmra.mxu0 %v7173
      %v7288 = vpop.f32.mrf.mxu0
      %v7289 = vadd.f32 0.0, %v7288
      %7290 = vmatmul.f32.gmra.mxu0 %v7176
      %v7291 = vpop.f32.mrf.mxu0
      %v7292 = vadd.f32 0.0, %v7291
      %7293 = vmatmul.f32.gmra.mxu0 %v7179
      %v7294 = vpop.f32.mrf.mxu0
      %v7295 = vadd.f32 0.0, %v7294
      %7296 = vmatmul.f32.gmra.mxu0 %v7182
      %v7297 = vpop.f32.mrf.mxu0
      %v7298 = vadd.f32 0.0, %v7297
      %7299 = vmatmul.f32.gmra.mxu0 %v7185
      %v7300 = vpop.f32.mrf.mxu0
      %v7301 = vadd.f32 0.0, %v7300
      %7302 = vmatmul.f32.gmra.mxu0 %v7188
      %v7303 = vpop.f32.mrf.mxu0
      %v7304 = vadd.f32 0.0, %v7303
      %7305 = vmatmul.f32.gmra.mxu0 %v7191
      %v7306 = vpop.f32.mrf.mxu0
      %v7307 = vadd.f32 0.0, %v7306
      %7308 = vmatmul.f32.gmra.mxu0 %v7194
      %v7309 = vpop.f32.mrf.mxu0
      %v7310 = vadd.f32 0.0, %v7309
      %7311 = vmatmul.f32.gmra.mxu0 %v7197
      %v7312 = vpop.f32.mrf.mxu0
      %v7313 = vadd.f32 0.0, %v7312
      %7314 = vmatmul.f32.gmra.mxu0 %v7200
      %v7315 = vpop.f32.mrf.mxu0
      %v7316 = vadd.f32 0.0, %v7315
      %7317 = vmatmul.f32.gmra.mxu0 %v7203
      %v7318 = vpop.f32.mrf.mxu0
      %v7319 = vadd.f32 0.0, %v7318
      %7320 = vmatmul.f32.gmra.mxu0 %v7206
      %v7321 = vpop.f32.mrf.mxu0
      %v7322 = vadd.f32 0.0, %v7321
      %7323 = vmatmul.f32.gmra.mxu0 %v7209
      %v7324 = vpop.f32.mrf.mxu0
      %v7325 = vadd.f32 0.0, %v7324
      %7326 = vmatmul.f32.gmra.mxu0 %v7212
      %v7327 = vpop.f32.mrf.mxu0
      %v7328 = vadd.f32 0.0, %v7327
      %7329 = vmatmul.f32.gmra.mxu0 %v7215
      %v7330 = vpop.f32.mrf.mxu0
      %v7331 = vadd.f32 0.0, %v7330
      %7332 = vmatmul.f32.gmra.mxu0 %v7218
      %v7333 = vpop.f32.mrf.mxu0
      %v7334 = vadd.f32 0.0, %v7333
      %7335 = vmatmul.f32.gmra.mxu0 %v7221
      %v7336 = vpop.f32.mrf.mxu0
      %v7337 = vadd.f32 0.0, %v7336
      %7338 = vmatmul.f32.gmra.mxu0 %v7224
      %v7339 = vpop.f32.mrf.mxu0
      %v7340 = vadd.f32 0.0, %v7339
      %7341 = vmatmul.f32.gmra.mxu0 %v7227
      %v7342 = vpop.f32.mrf.mxu0
      %v7343 = vadd.f32 0.0, %v7342
      %7344 = vmatmul.f32.gmra.mxu0 %v7230
      %v7345 = vpop.f32.mrf.mxu0
      %v7346 = vadd.f32 0.0, %v7345
      %7347 = vmatmul.f32.gmra.mxu0 %v7233
      %v7348 = vpop.f32.mrf.mxu0
      %v7349 = vadd.f32 0.0, %v7348
      %7350 = vmatmul.f32.gmra.mxu0 %v7236
      %v7351 = vpop.f32.mrf.mxu0
      %v7352 = vadd.f32 0.0, %v7351
      %7353 = vmatmul.f32.gmra.mxu0 %v7239
      %v7354 = vpop.f32.mrf.mxu0
      %v7355 = vadd.f32 0.0, %v7354
      %7356 = vmatmul.f32.gmra.mxu0 %v7242
      %v7357 = vpop.f32.mrf.mxu0
      %v7358 = vadd.f32 0.0, %v7357
      %7359 = vmatmul.f32.gmra.mxu0 %v7245
      %v7360 = vpop.f32.mrf.mxu0
      %v7361 = vadd.f32 0.0, %v7360
      %7362 = vmatmul.f32.gmra.mxu0 %v7248
      %v7363 = vpop.f32.mrf.mxu0
      %v7364 = vadd.f32 0.0, %v7363
      %7365 = vmatmul.f32.gmra.mxu0 %v7251
      %v7366 = vpop.f32.mrf.mxu0
      %v7367 = vadd.f32 0.0, %v7366
      %7368 = vmatmul.f32.gmra.mxu0 %v7254
      %v7369 = vpop.f32.mrf.mxu0
      %v7370 = vadd.f32 0.0, %v7369
      %7371 = vdwg.mxu0
      %v7372 = vpack.c.bf16 %v7280, %v7277
      %v7373 = vpack.c.bf16 %v7286, %v7283
      %v7374 = vpack.c.bf16 %v7292, %v7289
      %v7375 = vpack.c.bf16 %v7298, %v7295
      %v7376 = vpack.c.bf16 %v7304, %v7301
      %v7377 = vpack.c.bf16 %v7310, %v7307
      %v7378 = vpack.c.bf16 %v7316, %v7313
      %v7379 = vpack.c.bf16 %v7322, %v7319
      %v7380 = vpack.c.bf16 %v7328, %v7325
      %v7381 = vpack.c.bf16 %v7334, %v7331
      %v7382 = vpack.c.bf16 %v7340, %v7337
      %v7383 = vpack.c.bf16 %v7346, %v7343
      %v7384 = vpack.c.bf16 %v7352, %v7349
      %v7385 = vpack.c.bf16 %v7358, %v7355
      %v7386 = vpack.c.bf16 %v7364, %v7361
      %v7387 = vpack.c.bf16 %v7370, %v7367
      %v7388 = vld [vmem:[%s53] sm:$0xff]
      %v7389 = vld [vmem:[%s53 + $0x8] sm:$0xff]
      %v7390 = vld [vmem:[%s53 + $0x10] sm:$0xff]
      %v7391 = vld [vmem:[%s53 + $0x18] sm:$0xff]
      %v7392 = vld [vmem:[%s53 + $0x20] sm:$0xff]
      %v7393 = vld [vmem:[%s53 + $0x28] sm:$0xff]
      %v7394 = vld [vmem:[%s53 + $0x30] sm:$0xff]
      %v7395 = vld [vmem:[%s53 + $0x38] sm:$0xff]
      %v7396 = vld [vmem:[%s53 + $0x40] sm:$0xff]
      %v7397 = vld [vmem:[%s53 + $0x48] sm:$0xff]
      %v7398 = vld [vmem:[%s53 + $0x50] sm:$0xff]
      %v7399 = vld [vmem:[%s53 + $0x58] sm:$0xff]
      %v7400 = vld [vmem:[%s53 + $0x60] sm:$0xff]
      %v7401 = vld [vmem:[%s53 + $0x68] sm:$0xff]
      %v7402 = vld [vmem:[%s53 + $0x70] sm:$0xff]
      %v7403 = vld [vmem:[%s53 + $0x78] sm:$0xff]
      %v7420 = vunpack.c.l.b16 %v7388
      %v7421 = vunpack.c.h.b16 %v7388
      %v7422 = vunpack.c.l.b16 %v7389
      %v7423 = vunpack.c.h.b16 %v7389
      %v7424 = vunpack.c.l.b16 %v7390
      %v7425 = vunpack.c.h.b16 %v7390
      %v7426 = vunpack.c.l.b16 %v7391
      %v7427 = vunpack.c.h.b16 %v7391
      %v7428 = vunpack.c.l.b16 %v7392
      %v7429 = vunpack.c.h.b16 %v7392
      %v7430 = vunpack.c.l.b16 %v7393
      %v7431 = vunpack.c.h.b16 %v7393
      %v7432 = vunpack.c.l.b16 %v7394
      %v7433 = vunpack.c.h.b16 %v7394
      %v7434 = vunpack.c.l.b16 %v7395
      %v7435 = vunpack.c.h.b16 %v7395
      %v7436 = vunpack.c.l.b16 %v7396
      %v7437 = vunpack.c.h.b16 %v7396
      %v7438 = vunpack.c.l.b16 %v7397
      %v7439 = vunpack.c.h.b16 %v7397
      %v7440 = vunpack.c.l.b16 %v7398
      %v7441 = vunpack.c.h.b16 %v7398
      %v7442 = vunpack.c.l.b16 %v7399
      %v7443 = vunpack.c.h.b16 %v7399
      %v7444 = vunpack.c.l.b16 %v7400
      %v7445 = vunpack.c.h.b16 %v7400
      %v7446 = vunpack.c.l.b16 %v7401
      %v7447 = vunpack.c.h.b16 %v7401
      %v7448 = vunpack.c.l.b16 %v7402
      %v7449 = vunpack.c.h.b16 %v7402
      %v7450 = vunpack.c.l.b16 %v7403
      %v7451 = vunpack.c.h.b16 %v7403
      %v7452 = vpack.c.b16 %v7422, %v7420
      %v7453 = vpack.c.b16 %v7423, %v7421
      %v7454 = vpack.c.b16 %v7426, %v7424
      %v7455 = vpack.c.b16 %v7427, %v7425
      %v7456 = vpack.c.b16 %v7430, %v7428
      %v7457 = vpack.c.b16 %v7431, %v7429
      %v7458 = vpack.c.b16 %v7434, %v7432
      %v7459 = vpack.c.b16 %v7435, %v7433
      %v7460 = vpack.c.b16 %v7438, %v7436
      %v7461 = vpack.c.b16 %v7439, %v7437
      %v7462 = vpack.c.b16 %v7442, %v7440
      %v7463 = vpack.c.b16 %v7443, %v7441
      %v7464 = vpack.c.b16 %v7446, %v7444
      %v7465 = vpack.c.b16 %v7447, %v7445
      %v7466 = vpack.c.b16 %v7450, %v7448
      %v7467 = vpack.c.b16 %v7451, %v7449
      %7484 = vmatpush.bf16.msra.mxu0 %v7379
      %7485 = vmatpush.bf16.msra.mxu0 %v7378
      %7486 = vmatpush.bf16.msra.mxu0 %v7377
      %7487 = vmatpush.bf16.msra.mxu0 %v7376
      %7488 = vmatpush.bf16.msra.mxu0 %v7375
      %7489 = vmatpush.bf16.msra.mxu0 %v7374
      %7490 = vmatpush.bf16.msra.mxu0 %v7373
      %7491 = vmatpush.bf16.msra.mxu0 %v7372
      %7492 = vmatmul.bf16.gmra.mxu0 %v7452
      %v7493 = vpop.f32.mrf.mxu0
      %v7494 = vadd.f32 0.0, %v7493
      %v7495 = vpop.f32.mrf.mxu0
      %v7496 = vadd.f32 0.0, %v7495
      %7497 = vmatmul.bf16.gmra.mxu0 %v7454
      %v7498 = vpop.f32.mrf.mxu0
      %v7499 = vadd.f32 0.0, %v7498
      %v7500 = vpop.f32.mrf.mxu0
      %v7501 = vadd.f32 0.0, %v7500
      %7502 = vmatmul.bf16.gmra.mxu0 %v7456
      %v7503 = vpop.f32.mrf.mxu0
      %v7504 = vadd.f32 0.0, %v7503
      %v7505 = vpop.f32.mrf.mxu0
      %v7506 = vadd.f32 0.0, %v7505
      %7507 = vmatmul.bf16.gmra.mxu0 %v7458
      %v7508 = vpop.f32.mrf.mxu0
      %v7509 = vadd.f32 0.0, %v7508
      %v7510 = vpop.f32.mrf.mxu0
      %v7511 = vadd.f32 0.0, %v7510
      %7512 = vmatmul.bf16.gmra.mxu0 %v7460
      %v7513 = vpop.f32.mrf.mxu0
      %v7514 = vadd.f32 0.0, %v7513
      %v7515 = vpop.f32.mrf.mxu0
      %v7516 = vadd.f32 0.0, %v7515
      %7517 = vmatmul.bf16.gmra.mxu0 %v7462
      %v7518 = vpop.f32.mrf.mxu0
      %v7519 = vadd.f32 0.0, %v7518
      %v7520 = vpop.f32.mrf.mxu0
      %v7521 = vadd.f32 0.0, %v7520
      %7522 = vmatmul.bf16.gmra.mxu0 %v7464
      %v7523 = vpop.f32.mrf.mxu0
      %v7524 = vadd.f32 0.0, %v7523
      %v7525 = vpop.f32.mrf.mxu0
      %v7526 = vadd.f32 0.0, %v7525
      %7527 = vmatmul.bf16.gmra.mxu0 %v7466
      %v7528 = vpop.f32.mrf.mxu0
      %v7529 = vadd.f32 0.0, %v7528
      %v7530 = vpop.f32.mrf.mxu0
      %v7531 = vadd.f32 0.0, %v7530
      %7532 = vdwg.mxu0
      %7533 = vmatpush.bf16.msra.mxu0 %v7387
      %7534 = vmatpush.bf16.msra.mxu0 %v7386
      %7535 = vmatpush.bf16.msra.mxu0 %v7385
      %7536 = vmatpush.bf16.msra.mxu0 %v7384
      %7537 = vmatpush.bf16.msra.mxu0 %v7383
      %7538 = vmatpush.bf16.msra.mxu0 %v7382
      %7539 = vmatpush.bf16.msra.mxu0 %v7381
      %7540 = vmatpush.bf16.msra.mxu0 %v7380
      %7541 = vmatmul.bf16.gmra.mxu0 %v7453
      %v7542 = vpop.f32.mrf.mxu0
      %v7543 = vadd.f32 %v7494, %v7542
      %v7544 = vpop.f32.mrf.mxu0
      %v7545 = vadd.f32 %v7496, %v7544
      %7546 = vmatmul.bf16.gmra.mxu0 %v7455
      %v7547 = vpop.f32.mrf.mxu0
      %v7548 = vadd.f32 %v7499, %v7547
      %v7549 = vpop.f32.mrf.mxu0
      %v7550 = vadd.f32 %v7501, %v7549
      %7551 = vmatmul.bf16.gmra.mxu0 %v7457
      %v7552 = vpop.f32.mrf.mxu0
      %v7553 = vadd.f32 %v7504, %v7552
      %v7554 = vpop.f32.mrf.mxu0
      %v7555 = vadd.f32 %v7506, %v7554
      %7556 = vmatmul.bf16.gmra.mxu0 %v7459
      %v7557 = vpop.f32.mrf.mxu0
      %v7558 = vadd.f32 %v7509, %v7557
      %v7559 = vpop.f32.mrf.mxu0
      %v7560 = vadd.f32 %v7511, %v7559
      %7561 = vmatmul.bf16.gmra.mxu0 %v7461
      %v7562 = vpop.f32.mrf.mxu0
      %v7563 = vadd.f32 %v7514, %v7562
      %v7564 = vpop.f32.mrf.mxu0
      %v7565 = vadd.f32 %v7516, %v7564
      %7566 = vmatmul.bf16.gmra.mxu0 %v7463
      %v7567 = vpop.f32.mrf.mxu0
      %v7568 = vadd.f32 %v7519, %v7567
      %v7569 = vpop.f32.mrf.mxu0
      %v7570 = vadd.f32 %v7521, %v7569
      %7571 = vmatmul.bf16.gmra.mxu0 %v7465
      %v7572 = vpop.f32.mrf.mxu0
      %v7573 = vadd.f32 %v7524, %v7572
      %v7574 = vpop.f32.mrf.mxu0
      %v7575 = vadd.f32 %v7526, %v7574
      %7576 = vmatmul.bf16.gmra.mxu0 %v7467
      %v7577 = vpop.f32.mrf.mxu0
      %v7578 = vadd.f32 %v7529, %v7577
      %v7579 = vpop.f32.mrf.mxu0
      %v7580 = vadd.f32 %v7531, %v7579
      %7581 = vdwg.mxu0
      %v7582 = vld [vmem:[%s55] sm:$0xff]
      %v7583 = vld [vmem:[%s55 + $0x8] sm:$0xff]
      %s7584 = scalar_lea.vmem %s53, 128
      %v7585 = vld [vmem:[%s7584] sm:$0xff]
      %v7586 = vld [vmem:[%s7584 + $0x8] sm:$0xff]
      %v7587 = vld [vmem:[%s7584 + $0x10] sm:$0xff]
      %v7588 = vld [vmem:[%s7584 + $0x18] sm:$0xff]
      %v7589 = vld [vmem:[%s7584 + $0x20] sm:$0xff]
      %v7590 = vld [vmem:[%s7584 + $0x28] sm:$0xff]
      %v7591 = vld [vmem:[%s7584 + $0x30] sm:$0xff]
      %v7592 = vld [vmem:[%s7584 + $0x38] sm:$0xff]
      %v7593 = vld [vmem:[%s7584 + $0x40] sm:$0xff]
      %v7594 = vld [vmem:[%s7584 + $0x48] sm:$0xff]
      %v7595 = vld [vmem:[%s7584 + $0x50] sm:$0xff]
      %v7596 = vld [vmem:[%s7584 + $0x58] sm:$0xff]
      %v7597 = vld [vmem:[%s7584 + $0x60] sm:$0xff]
      %v7598 = vld [vmem:[%s7584 + $0x68] sm:$0xff]
      %v7599 = vld [vmem:[%s7584 + $0x70] sm:$0xff]
      %v7600 = vld [vmem:[%s7584 + $0x78] sm:$0xff]
      %v7617 = vunpack.c.l.b16 %v7585
      %v7618 = vunpack.c.h.b16 %v7585
      %v7619 = vunpack.c.l.b16 %v7586
      %v7620 = vunpack.c.h.b16 %v7586
      %v7621 = vunpack.c.l.b16 %v7587
      %v7622 = vunpack.c.h.b16 %v7587
      %v7623 = vunpack.c.l.b16 %v7588
      %v7624 = vunpack.c.h.b16 %v7588
      %v7625 = vunpack.c.l.b16 %v7589
      %v7626 = vunpack.c.h.b16 %v7589
      %v7627 = vunpack.c.l.b16 %v7590
      %v7628 = vunpack.c.h.b16 %v7590
      %v7629 = vunpack.c.l.b16 %v7591
      %v7630 = vunpack.c.h.b16 %v7591
      %v7631 = vunpack.c.l.b16 %v7592
      %v7632 = vunpack.c.h.b16 %v7592
      %v7633 = vunpack.c.l.b16 %v7593
      %v7634 = vunpack.c.h.b16 %v7593
      %v7635 = vunpack.c.l.b16 %v7594
      %v7636 = vunpack.c.h.b16 %v7594
      %v7637 = vunpack.c.l.b16 %v7595
      %v7638 = vunpack.c.h.b16 %v7595
      %v7639 = vunpack.c.l.b16 %v7596
      %v7640 = vunpack.c.h.b16 %v7596
      %v7641 = vunpack.c.l.b16 %v7597
      %v7642 = vunpack.c.h.b16 %v7597
      %v7643 = vunpack.c.l.b16 %v7598
      %v7644 = vunpack.c.h.b16 %v7598
      %v7645 = vunpack.c.l.b16 %v7599
      %v7646 = vunpack.c.h.b16 %v7599
      %v7647 = vunpack.c.l.b16 %v7600
      %v7648 = vunpack.c.h.b16 %v7600
      %v7649 = vpack.c.b16 %v7619, %v7617
      %v7650 = vpack.c.b16 %v7620, %v7618
      %v7651 = vpack.c.b16 %v7623, %v7621
      %v7652 = vpack.c.b16 %v7624, %v7622
      %v7653 = vpack.c.b16 %v7627, %v7625
      %v7654 = vpack.c.b16 %v7628, %v7626
      %v7655 = vpack.c.b16 %v7631, %v7629
      %v7656 = vpack.c.b16 %v7632, %v7630
      %v7657 = vpack.c.b16 %v7635, %v7633
      %v7658 = vpack.c.b16 %v7636, %v7634
      %v7659 = vpack.c.b16 %v7639, %v7637
      %v7660 = vpack.c.b16 %v7640, %v7638
      %v7661 = vpack.c.b16 %v7643, %v7641
      %v7662 = vpack.c.b16 %v7644, %v7642
      %v7663 = vpack.c.b16 %v7647, %v7645
      %v7664 = vpack.c.b16 %v7648, %v7646
      %7681 = vmatpush.bf16.msra.mxu0 %v7379
      %7682 = vmatpush.bf16.msra.mxu0 %v7378
      %7683 = vmatpush.bf16.msra.mxu0 %v7377
      %7684 = vmatpush.bf16.msra.mxu0 %v7376
      %7685 = vmatpush.bf16.msra.mxu0 %v7375
      %7686 = vmatpush.bf16.msra.mxu0 %v7374
      %7687 = vmatpush.bf16.msra.mxu0 %v7373
      %7688 = vmatpush.bf16.msra.mxu0 %v7372
      %7689 = vmatmul.bf16.gmra.mxu0 %v7649
      %v7690 = vpop.f32.mrf.mxu0
      %v7691 = vadd.f32 0.0, %v7690
      %v7692 = vpop.f32.mrf.mxu0
      %v7693 = vadd.f32 0.0, %v7692
      %7694 = vmatmul.bf16.gmra.mxu0 %v7651
      %v7695 = vpop.f32.mrf.mxu0
      %v7696 = vadd.f32 0.0, %v7695
      %v7697 = vpop.f32.mrf.mxu0
      %v7698 = vadd.f32 0.0, %v7697
      %7699 = vmatmul.bf16.gmra.mxu0 %v7653
      %v7700 = vpop.f32.mrf.mxu0
      %v7701 = vadd.f32 0.0, %v7700
      %v7702 = vpop.f32.mrf.mxu0
      %v7703 = vadd.f32 0.0, %v7702
      %7704 = vmatmul.bf16.gmra.mxu0 %v7655
      %v7705 = vpop.f32.mrf.mxu0
      %v7706 = vadd.f32 0.0, %v7705
      %v7707 = vpop.f32.mrf.mxu0
      %v7708 = vadd.f32 0.0, %v7707
      %7709 = vmatmul.bf16.gmra.mxu0 %v7657
      %v7710 = vpop.f32.mrf.mxu0
      %v7711 = vadd.f32 0.0, %v7710
      %v7712 = vpop.f32.mrf.mxu0
      %v7713 = vadd.f32 0.0, %v7712
      %7714 = vmatmul.bf16.gmra.mxu0 %v7659
      %v7715 = vpop.f32.mrf.mxu0
      %v7716 = vadd.f32 0.0, %v7715
      %v7717 = vpop.f32.mrf.mxu0
      %v7718 = vadd.f32 0.0, %v7717
      %7719 = vmatmul.bf16.gmra.mxu0 %v7661
      %v7720 = vpop.f32.mrf.mxu0
      %v7721 = vadd.f32 0.0, %v7720
      %v7722 = vpop.f32.mrf.mxu0
      %v7723 = vadd.f32 0.0, %v7722
      %7724 = vmatmul.bf16.gmra.mxu0 %v7663
      %v7725 = vpop.f32.mrf.mxu0
      %v7726 = vadd.f32 0.0, %v7725
      %v7727 = vpop.f32.mrf.mxu0
      %v7728 = vadd.f32 0.0, %v7727
      %7729 = vdwg.mxu0
      %7730 = vmatpush.bf16.msra.mxu0 %v7387
      %7731 = vmatpush.bf16.msra.mxu0 %v7386
      %7732 = vmatpush.bf16.msra.mxu0 %v7385
      %7733 = vmatpush.bf16.msra.mxu0 %v7384
      %7734 = vmatpush.bf16.msra.mxu0 %v7383
      %7735 = vmatpush.bf16.msra.mxu0 %v7382
      %7736 = vmatpush.bf16.msra.mxu0 %v7381
      %7737 = vmatpush.bf16.msra.mxu0 %v7380
      %7738 = vmatmul.bf16.gmra.mxu0 %v7650
      %v7739 = vpop.f32.mrf.mxu0
      %v7740 = vadd.f32 %v7691, %v7739
      %v7741 = vpop.f32.mrf.mxu0
      %v7742 = vadd.f32 %v7693, %v7741
      %7743 = vmatmul.bf16.gmra.mxu0 %v7652
      %v7744 = vpop.f32.mrf.mxu0
      %v7745 = vadd.f32 %v7696, %v7744
      %v7746 = vpop.f32.mrf.mxu0
      %v7747 = vadd.f32 %v7698, %v7746
      %7748 = vmatmul.bf16.gmra.mxu0 %v7654
      %v7749 = vpop.f32.mrf.mxu0
      %v7750 = vadd.f32 %v7701, %v7749
      %v7751 = vpop.f32.mrf.mxu0
      %v7752 = vadd.f32 %v7703, %v7751
      %7753 = vmatmul.bf16.gmra.mxu0 %v7656
      %v7754 = vpop.f32.mrf.mxu0
      %v7755 = vadd.f32 %v7706, %v7754
      %v7756 = vpop.f32.mrf.mxu0
      %v7757 = vadd.f32 %v7708, %v7756
      %7758 = vmatmul.bf16.gmra.mxu0 %v7658
      %v7759 = vpop.f32.mrf.mxu0
      %v7760 = vadd.f32 %v7711, %v7759
      %v7761 = vpop.f32.mrf.mxu0
      %v7762 = vadd.f32 %v7713, %v7761
      %7763 = vmatmul.bf16.gmra.mxu0 %v7660
      %v7764 = vpop.f32.mrf.mxu0
      %v7765 = vadd.f32 %v7716, %v7764
      %v7766 = vpop.f32.mrf.mxu0
      %v7767 = vadd.f32 %v7718, %v7766
      %7768 = vmatmul.bf16.gmra.mxu0 %v7662
      %v7769 = vpop.f32.mrf.mxu0
      %v7770 = vadd.f32 %v7721, %v7769
      %v7771 = vpop.f32.mrf.mxu0
      %v7772 = vadd.f32 %v7723, %v7771
      %7773 = vmatmul.bf16.gmra.mxu0 %v7664
      %v7774 = vpop.f32.mrf.mxu0
      %v7775 = vadd.f32 %v7726, %v7774
      %v7776 = vpop.f32.mrf.mxu0
      %v7777 = vadd.f32 %v7728, %v7776
      %7778 = vdwg.mxu0
      %s7779 = scalar_lea.vmem %s55, 16
      %v7780 = vld [vmem:[%s7779] sm:$0xff]
      %v7781 = vld [vmem:[%s7779 + $0x8] sm:$0xff]
      %v7783 = vsel %vm2701, %v7740, 0
      %v7786 = vsel %vm2701, %v7742, 0
      %v7789 = vsel %vm2701, %v7745, 0
      %v7792 = vsel %vm2701, %v7747, 0
      %v7795 = vsel %vm2701, %v7750, 0
      %v7798 = vsel %vm2701, %v7752, 0
      %v7801 = vsel %vm2701, %v7755, 0
      %v7804 = vsel %vm2701, %v7757, 0
      %v7807 = vsel %vm2701, %v7760, 0
      %v7810 = vsel %vm2701, %v7762, 0
      %v7813 = vsel %vm2701, %v7765, 0
      %v7816 = vsel %vm2701, %v7767, 0
      %v7819 = vsel %vm2701, %v7770, 0
      %v7822 = vsel %vm2701, %v7772, 0
      %v7825 = vsel %vm2701, %v7775, 0
      %v7828 = vsel %vm2701, %v7777, 0
      %7830 = vmatpush.msra.mxu0 0.0
      %7831 = vmatpush.msra.mxu0 0.0
      %7832 = vmatpush.msra.mxu0 0.0
      %7833 = vmatpush.msra.mxu0 0.0
      %7834 = vmatpush.msra.mxu0 0.0
      %7835 = vmatpush.msra.mxu0 0.0
      %7836 = vmatpush.msra.mxu0 0.0
      %7837 = vmatpush.msra.mxu0 0.0
      %7838 = vmatpush.msra.mxu0 0.0
      %7839 = vmatpush.msra.mxu0 0.0
      %7840 = vmatpush.msra.mxu0 0.0
      %7841 = vmatpush.msra.mxu0 0.0
      %7842 = vmatpush.msra.mxu0 0.0
      %7843 = vmatpush.msra.mxu0 0.0
      %7844 = vmatpush.msra.mxu0 %v7781
      %7845 = vmatpush.msra.mxu0 %v7780
      %7846 = vmatmul.f32.gmra.mxu0 %v7783
      %v7847 = vpop.f32.mrf.mxu0
      %v7848 = vadd.f32 0.0, %v7847
      %7849 = vmatmul.f32.gmra.mxu0 %v7786
      %v7850 = vpop.f32.mrf.mxu0
      %v7851 = vadd.f32 0.0, %v7850
      %7852 = vmatmul.f32.gmra.mxu0 %v7789
      %v7853 = vpop.f32.mrf.mxu0
      %v7854 = vadd.f32 0.0, %v7853
      %7855 = vmatmul.f32.gmra.mxu0 %v7792
      %v7856 = vpop.f32.mrf.mxu0
      %v7857 = vadd.f32 0.0, %v7856
      %7858 = vmatmul.f32.gmra.mxu0 %v7795
      %v7859 = vpop.f32.mrf.mxu0
      %v7860 = vadd.f32 0.0, %v7859
      %7861 = vmatmul.f32.gmra.mxu0 %v7798
      %v7862 = vpop.f32.mrf.mxu0
      %v7863 = vadd.f32 0.0, %v7862
      %7864 = vmatmul.f32.gmra.mxu0 %v7801
      %v7865 = vpop.f32.mrf.mxu0
      %v7866 = vadd.f32 0.0, %v7865
      %7867 = vmatmul.f32.gmra.mxu0 %v7804
      %v7868 = vpop.f32.mrf.mxu0
      %v7869 = vadd.f32 0.0, %v7868
      %7870 = vmatmul.f32.gmra.mxu0 %v7807
      %v7871 = vpop.f32.mrf.mxu0
      %v7872 = vadd.f32 0.0, %v7871
      %7873 = vmatmul.f32.gmra.mxu0 %v7810
      %v7874 = vpop.f32.mrf.mxu0
      %v7875 = vadd.f32 0.0, %v7874
      %7876 = vmatmul.f32.gmra.mxu0 %v7813
      %v7877 = vpop.f32.mrf.mxu0
      %v7878 = vadd.f32 0.0, %v7877
      %7879 = vmatmul.f32.gmra.mxu0 %v7816
      %v7880 = vpop.f32.mrf.mxu0
      %v7881 = vadd.f32 0.0, %v7880
      %7882 = vmatmul.f32.gmra.mxu0 %v7819
      %v7883 = vpop.f32.mrf.mxu0
      %v7884 = vadd.f32 0.0, %v7883
      %7885 = vmatmul.f32.gmra.mxu0 %v7822
      %v7886 = vpop.f32.mrf.mxu0
      %v7887 = vadd.f32 0.0, %v7886
      %7888 = vmatmul.f32.gmra.mxu0 %v7825
      %v7889 = vpop.f32.mrf.mxu0
      %v7890 = vadd.f32 0.0, %v7889
      %7891 = vmatmul.f32.gmra.mxu0 %v7828
      %v7892 = vpop.f32.mrf.mxu0
      %v7893 = vadd.f32 0.0, %v7892
      %7894 = vdwg.mxu0
      %v7896 = vsel %vm2701, %v7543, 0
      %v7899 = vsel %vm2701, %v7545, 0
      %v7902 = vsel %vm2701, %v7548, 0
      %v7905 = vsel %vm2701, %v7550, 0
      %v7908 = vsel %vm2701, %v7553, 0
      %v7911 = vsel %vm2701, %v7555, 0
      %v7914 = vsel %vm2701, %v7558, 0
      %v7917 = vsel %vm2701, %v7560, 0
      %v7920 = vsel %vm2701, %v7563, 0
      %v7923 = vsel %vm2701, %v7565, 0
      %v7926 = vsel %vm2701, %v7568, 0
      %v7929 = vsel %vm2701, %v7570, 0
      %v7932 = vsel %vm2701, %v7573, 0
      %v7935 = vsel %vm2701, %v7575, 0
      %v7938 = vsel %vm2701, %v7578, 0
      %v7941 = vsel %vm2701, %v7580, 0
      %7943 = vmatpush.msra.mxu0 0.0
      %7944 = vmatpush.msra.mxu0 0.0
      %7945 = vmatpush.msra.mxu0 0.0
      %7946 = vmatpush.msra.mxu0 0.0
      %7947 = vmatpush.msra.mxu0 0.0
      %7948 = vmatpush.msra.mxu0 0.0
      %7949 = vmatpush.msra.mxu0 0.0
      %7950 = vmatpush.msra.mxu0 0.0
      %7951 = vmatpush.msra.mxu0 0.0
      %7952 = vmatpush.msra.mxu0 0.0
      %7953 = vmatpush.msra.mxu0 0.0
      %7954 = vmatpush.msra.mxu0 0.0
      %7955 = vmatpush.msra.mxu0 0.0
      %7956 = vmatpush.msra.mxu0 0.0
      %7957 = vmatpush.msra.mxu0 %v7583
      %7958 = vmatpush.msra.mxu0 %v7582
      %7959 = vmatmul.f32.gmra.mxu0 %v7896
      %v7960 = vpop.f32.mrf.mxu0
      %v7961 = vadd.f32 %v7848, %v7960
      %7962 = vmatmul.f32.gmra.mxu0 %v7899
      %v7963 = vpop.f32.mrf.mxu0
      %v7964 = vadd.f32 %v7851, %v7963
      %7965 = vmatmul.f32.gmra.mxu0 %v7902
      %v7966 = vpop.f32.mrf.mxu0
      %v7967 = vadd.f32 %v7854, %v7966
      %7968 = vmatmul.f32.gmra.mxu0 %v7905
      %v7969 = vpop.f32.mrf.mxu0
      %v7970 = vadd.f32 %v7857, %v7969
      %7971 = vmatmul.f32.gmra.mxu0 %v7908
      %v7972 = vpop.f32.mrf.mxu0
      %v7973 = vadd.f32 %v7860, %v7972
      %7974 = vmatmul.f32.gmra.mxu0 %v7911
      %v7975 = vpop.f32.mrf.mxu0
      %v7976 = vadd.f32 %v7863, %v7975
      %7977 = vmatmul.f32.gmra.mxu0 %v7914
      %v7978 = vpop.f32.mrf.mxu0
      %v7979 = vadd.f32 %v7866, %v7978
      %7980 = vmatmul.f32.gmra.mxu0 %v7917
      %v7981 = vpop.f32.mrf.mxu0
      %v7982 = vadd.f32 %v7869, %v7981
      %7983 = vmatmul.f32.gmra.mxu0 %v7920
      %v7984 = vpop.f32.mrf.mxu0
      %v7985 = vadd.f32 %v7872, %v7984
      %7986 = vmatmul.f32.gmra.mxu0 %v7923
      %v7987 = vpop.f32.mrf.mxu0
      %v7988 = vadd.f32 %v7875, %v7987
      %7989 = vmatmul.f32.gmra.mxu0 %v7926
      %v7990 = vpop.f32.mrf.mxu0
      %v7991 = vadd.f32 %v7878, %v7990
      %7992 = vmatmul.f32.gmra.mxu0 %v7929
      %v7993 = vpop.f32.mrf.mxu0
      %v7994 = vadd.f32 %v7881, %v7993
      %7995 = vmatmul.f32.gmra.mxu0 %v7932
      %v7996 = vpop.f32.mrf.mxu0
      %v7997 = vadd.f32 %v7884, %v7996
      %7998 = vmatmul.f32.gmra.mxu0 %v7935
      %v7999 = vpop.f32.mrf.mxu0
      %v8000 = vadd.f32 %v7887, %v7999
      %8001 = vmatmul.f32.gmra.mxu0 %v7938
      %v8002 = vpop.f32.mrf.mxu0
      %v8003 = vadd.f32 %v7890, %v8002
      %8004 = vmatmul.f32.gmra.mxu0 %v7941
      %v8005 = vpop.f32.mrf.mxu0
      %v8006 = vadd.f32 %v7893, %v8005
      %8007 = vdwg.mxu0
      %s8008 = scalar_lea.vmem %s53, 256
      %v8009 = vld [vmem:[%s8008] sm:$0xff]
      %v8010 = vld [vmem:[%s8008 + $0x8] sm:$0xff]
      %v8011 = vld [vmem:[%s8008 + $0x10] sm:$0xff]
      %v8012 = vld [vmem:[%s8008 + $0x18] sm:$0xff]
      %v8013 = vld [vmem:[%s8008 + $0x20] sm:$0xff]
      %v8014 = vld [vmem:[%s8008 + $0x28] sm:$0xff]
      %v8015 = vld [vmem:[%s8008 + $0x30] sm:$0xff]
      %v8016 = vld [vmem:[%s8008 + $0x38] sm:$0xff]
      %v8017 = vld [vmem:[%s8008 + $0x40] sm:$0xff]
      %v8018 = vld [vmem:[%s8008 + $0x48] sm:$0xff]
      %v8019 = vld [vmem:[%s8008 + $0x50] sm:$0xff]
      %v8020 = vld [vmem:[%s8008 + $0x58] sm:$0xff]
      %v8021 = vld [vmem:[%s8008 + $0x60] sm:$0xff]
      %v8022 = vld [vmem:[%s8008 + $0x68] sm:$0xff]
      %v8023 = vld [vmem:[%s8008 + $0x70] sm:$0xff]
      %v8024 = vld [vmem:[%s8008 + $0x78] sm:$0xff]
      %v8041 = vunpack.c.l.b16 %v8009
      %v8042 = vunpack.c.h.b16 %v8009
      %v8043 = vunpack.c.l.b16 %v8010
      %v8044 = vunpack.c.h.b16 %v8010
      %v8045 = vunpack.c.l.b16 %v8011
      %v8046 = vunpack.c.h.b16 %v8011
      %v8047 = vunpack.c.l.b16 %v8012
      %v8048 = vunpack.c.h.b16 %v8012
      %v8049 = vunpack.c.l.b16 %v8013
      %v8050 = vunpack.c.h.b16 %v8013
      %v8051 = vunpack.c.l.b16 %v8014
      %v8052 = vunpack.c.h.b16 %v8014
      %v8053 = vunpack.c.l.b16 %v8015
      %v8054 = vunpack.c.h.b16 %v8015
      %v8055 = vunpack.c.l.b16 %v8016
      %v8056 = vunpack.c.h.b16 %v8016
      %v8057 = vunpack.c.l.b16 %v8017
      %v8058 = vunpack.c.h.b16 %v8017
      %v8059 = vunpack.c.l.b16 %v8018
      %v8060 = vunpack.c.h.b16 %v8018
      %v8061 = vunpack.c.l.b16 %v8019
      %v8062 = vunpack.c.h.b16 %v8019
      %v8063 = vunpack.c.l.b16 %v8020
      %v8064 = vunpack.c.h.b16 %v8020
      %v8065 = vunpack.c.l.b16 %v8021
      %v8066 = vunpack.c.h.b16 %v8021
      %v8067 = vunpack.c.l.b16 %v8022
      %v8068 = vunpack.c.h.b16 %v8022
      %v8069 = vunpack.c.l.b16 %v8023
      %v8070 = vunpack.c.h.b16 %v8023
      %v8071 = vunpack.c.l.b16 %v8024
      %v8072 = vunpack.c.h.b16 %v8024
      %v8073 = vpack.c.b16 %v8043, %v8041
      %v8074 = vpack.c.b16 %v8044, %v8042
      %v8075 = vpack.c.b16 %v8047, %v8045
      %v8076 = vpack.c.b16 %v8048, %v8046
      %v8077 = vpack.c.b16 %v8051, %v8049
      %v8078 = vpack.c.b16 %v8052, %v8050
      %v8079 = vpack.c.b16 %v8055, %v8053
      %v8080 = vpack.c.b16 %v8056, %v8054
      %v8081 = vpack.c.b16 %v8059, %v8057
      %v8082 = vpack.c.b16 %v8060, %v8058
      %v8083 = vpack.c.b16 %v8063, %v8061
      %v8084 = vpack.c.b16 %v8064, %v8062
      %v8085 = vpack.c.b16 %v8067, %v8065
      %v8086 = vpack.c.b16 %v8068, %v8066
      %v8087 = vpack.c.b16 %v8071, %v8069
      %v8088 = vpack.c.b16 %v8072, %v8070
      %8105 = vmatpush.bf16.msra.mxu0 %v7379
      %8106 = vmatpush.bf16.msra.mxu0 %v7378
      %8107 = vmatpush.bf16.msra.mxu0 %v7377
      %8108 = vmatpush.bf16.msra.mxu0 %v7376
      %8109 = vmatpush.bf16.msra.mxu0 %v7375
      %8110 = vmatpush.bf16.msra.mxu0 %v7374
      %8111 = vmatpush.bf16.msra.mxu0 %v7373
      %8112 = vmatpush.bf16.msra.mxu0 %v7372
      %8113 = vmatmul.bf16.gmra.mxu0 %v8073
      %v8114 = vpop.f32.mrf.mxu0
      %v8115 = vadd.f32 0.0, %v8114
      %v8116 = vpop.f32.mrf.mxu0
      %v8117 = vadd.f32 0.0, %v8116
      %8118 = vmatmul.bf16.gmra.mxu0 %v8075
      %v8119 = vpop.f32.mrf.mxu0
      %v8120 = vadd.f32 0.0, %v8119
      %v8121 = vpop.f32.mrf.mxu0
      %v8122 = vadd.f32 0.0, %v8121
      %8123 = vmatmul.bf16.gmra.mxu0 %v8077
      %v8124 = vpop.f32.mrf.mxu0
      %v8125 = vadd.f32 0.0, %v8124
      %v8126 = vpop.f32.mrf.mxu0
      %v8127 = vadd.f32 0.0, %v8126
      %8128 = vmatmul.bf16.gmra.mxu0 %v8079
      %v8129 = vpop.f32.mrf.mxu0
      %v8130 = vadd.f32 0.0, %v8129
      %v8131 = vpop.f32.mrf.mxu0
      %v8132 = vadd.f32 0.0, %v8131
      %8133 = vmatmul.bf16.gmra.mxu0 %v8081
      %v8134 = vpop.f32.mrf.mxu0
      %v8135 = vadd.f32 0.0, %v8134
      %v8136 = vpop.f32.mrf.mxu0
      %v8137 = vadd.f32 0.0, %v8136
      %8138 = vmatmul.bf16.gmra.mxu0 %v8083
      %v8139 = vpop.f32.mrf.mxu0
      %v8140 = vadd.f32 0.0, %v8139
      %v8141 = vpop.f32.mrf.mxu0
      %v8142 = vadd.f32 0.0, %v8141
      %8143 = vmatmul.bf16.gmra.mxu0 %v8085
      %v8144 = vpop.f32.mrf.mxu0
      %v8145 = vadd.f32 0.0, %v8144
      %v8146 = vpop.f32.mrf.mxu0
      %v8147 = vadd.f32 0.0, %v8146
      %8148 = vmatmul.bf16.gmra.mxu0 %v8087
      %v8149 = vpop.f32.mrf.mxu0
      %v8150 = vadd.f32 0.0, %v8149
      %v8151 = vpop.f32.mrf.mxu0
      %v8152 = vadd.f32 0.0, %v8151
      %8153 = vdwg.mxu0
      %8154 = vmatpush.bf16.msra.mxu0 %v7387
      %8155 = vmatpush.bf16.msra.mxu0 %v7386
      %8156 = vmatpush.bf16.msra.mxu0 %v7385
      %8157 = vmatpush.bf16.msra.mxu0 %v7384
      %8158 = vmatpush.bf16.msra.mxu0 %v7383
      %8159 = vmatpush.bf16.msra.mxu0 %v7382
      %8160 = vmatpush.bf16.msra.mxu0 %v7381
      %8161 = vmatpush.bf16.msra.mxu0 %v7380
      %8162 = vmatmul.bf16.gmra.mxu0 %v8074
      %v8163 = vpop.f32.mrf.mxu0
      %v8164 = vadd.f32 %v8115, %v8163
      %v8165 = vpop.f32.mrf.mxu0
      %v8166 = vadd.f32 %v8117, %v8165
      %8167 = vmatmul.bf16.gmra.mxu0 %v8076
      %v8168 = vpop.f32.mrf.mxu0
      %v8169 = vadd.f32 %v8120, %v8168
      %v8170 = vpop.f32.mrf.mxu0
      %v8171 = vadd.f32 %v8122, %v8170
      %8172 = vmatmul.bf16.gmra.mxu0 %v8078
      %v8173 = vpop.f32.mrf.mxu0
      %v8174 = vadd.f32 %v8125, %v8173
      %v8175 = vpop.f32.mrf.mxu0
      %v8176 = vadd.f32 %v8127, %v8175
      %8177 = vmatmul.bf16.gmra.mxu0 %v8080
      %v8178 = vpop.f32.mrf.mxu0
      %v8179 = vadd.f32 %v8130, %v8178
      %v8180 = vpop.f32.mrf.mxu0
      %v8181 = vadd.f32 %v8132, %v8180
      %8182 = vmatmul.bf16.gmra.mxu0 %v8082
      %v8183 = vpop.f32.mrf.mxu0
      %v8184 = vadd.f32 %v8135, %v8183
      %v8185 = vpop.f32.mrf.mxu0
      %v8186 = vadd.f32 %v8137, %v8185
      %8187 = vmatmul.bf16.gmra.mxu0 %v8084
      %v8188 = vpop.f32.mrf.mxu0
      %v8189 = vadd.f32 %v8140, %v8188
      %v8190 = vpop.f32.mrf.mxu0
      %v8191 = vadd.f32 %v8142, %v8190
      %8192 = vmatmul.bf16.gmra.mxu0 %v8086
      %v8193 = vpop.f32.mrf.mxu0
      %v8194 = vadd.f32 %v8145, %v8193
      %v8195 = vpop.f32.mrf.mxu0
      %v8196 = vadd.f32 %v8147, %v8195
      %8197 = vmatmul.bf16.gmra.mxu0 %v8088
      %v8198 = vpop.f32.mrf.mxu0
      %v8199 = vadd.f32 %v8150, %v8198
      %v8200 = vpop.f32.mrf.mxu0
      %v8201 = vadd.f32 %v8152, %v8200
      %8202 = vdwg.mxu0
      %s8203 = scalar_lea.vmem %s55, 32
      %v8204 = vld [vmem:[%s8203] sm:$0xff]
      %v8205 = vld [vmem:[%s8203 + $0x8] sm:$0xff]
      %v8207 = vsel %vm2701, %v8164, 0
      %v8210 = vsel %vm2701, %v8166, 0
      %v8213 = vsel %vm2701, %v8169, 0
      %v8216 = vsel %vm2701, %v8171, 0
      %v8219 = vsel %vm2701, %v8174, 0
      %v8222 = vsel %vm2701, %v8176, 0
      %v8225 = vsel %vm2701, %v8179, 0
      %v8228 = vsel %vm2701, %v8181, 0
      %v8231 = vsel %vm2701, %v8184, 0
      %v8234 = vsel %vm2701, %v8186, 0
      %v8237 = vsel %vm2701, %v8189, 0
      %v8240 = vsel %vm2701, %v8191, 0
      %v8243 = vsel %vm2701, %v8194, 0
      %v8246 = vsel %vm2701, %v8196, 0
      %v8249 = vsel %vm2701, %v8199, 0
      %v8252 = vsel %vm2701, %v8201, 0
      %8254 = vmatpush.msra.mxu0 0.0
      %8255 = vmatpush.msra.mxu0 0.0
      %8256 = vmatpush.msra.mxu0 0.0
      %8257 = vmatpush.msra.mxu0 0.0
      %8258 = vmatpush.msra.mxu0 0.0
      %8259 = vmatpush.msra.mxu0 0.0
      %8260 = vmatpush.msra.mxu0 0.0
      %8261 = vmatpush.msra.mxu0 0.0
      %8262 = vmatpush.msra.mxu0 0.0
      %8263 = vmatpush.msra.mxu0 0.0
      %8264 = vmatpush.msra.mxu0 0.0
      %8265 = vmatpush.msra.mxu0 0.0
      %8266 = vmatpush.msra.mxu0 0.0
      %8267 = vmatpush.msra.mxu0 0.0
      %8268 = vmatpush.msra.mxu0 %v8205
      %8269 = vmatpush.msra.mxu0 %v8204
      %8270 = vmatmul.f32.gmra.mxu0 %v8207
      %v8271 = vpop.f32.mrf.mxu0
      %v8272 = vadd.f32 0.0, %v8271
      %8273 = vmatmul.f32.gmra.mxu0 %v8210
      %v8274 = vpop.f32.mrf.mxu0
      %v8275 = vadd.f32 0.0, %v8274
      %8276 = vmatmul.f32.gmra.mxu0 %v8213
      %v8277 = vpop.f32.mrf.mxu0
      %v8278 = vadd.f32 0.0, %v8277
      %8279 = vmatmul.f32.gmra.mxu0 %v8216
      %v8280 = vpop.f32.mrf.mxu0
      %v8281 = vadd.f32 0.0, %v8280
      %8282 = vmatmul.f32.gmra.mxu0 %v8219
      %v8283 = vpop.f32.mrf.mxu0
      %v8284 = vadd.f32 0.0, %v8283
      %8285 = vmatmul.f32.gmra.mxu0 %v8222
      %v8286 = vpop.f32.mrf.mxu0
      %v8287 = vadd.f32 0.0, %v8286
      %8288 = vmatmul.f32.gmra.mxu0 %v8225
      %v8289 = vpop.f32.mrf.mxu0
      %v8290 = vadd.f32 0.0, %v8289
      %8291 = vmatmul.f32.gmra.mxu0 %v8228
      %v8292 = vpop.f32.mrf.mxu0
      %v8293 = vadd.f32 0.0, %v8292
      %8294 = vmatmul.f32.gmra.mxu0 %v8231
      %v8295 = vpop.f32.mrf.mxu0
      %v8296 = vadd.f32 0.0, %v8295
      %8297 = vmatmul.f32.gmra.mxu0 %v8234
      %v8298 = vpop.f32.mrf.mxu0
      %v8299 = vadd.f32 0.0, %v8298
      %8300 = vmatmul.f32.gmra.mxu0 %v8237
      %v8301 = vpop.f32.mrf.mxu0
      %v8302 = vadd.f32 0.0, %v8301
      %8303 = vmatmul.f32.gmra.mxu0 %v8240
      %v8304 = vpop.f32.mrf.mxu0
      %v8305 = vadd.f32 0.0, %v8304
      %8306 = vmatmul.f32.gmra.mxu0 %v8243
      %v8307 = vpop.f32.mrf.mxu0
      %v8308 = vadd.f32 0.0, %v8307
      %8309 = vmatmul.f32.gmra.mxu0 %v8246
      %v8310 = vpop.f32.mrf.mxu0
      %v8311 = vadd.f32 0.0, %v8310
      %8312 = vmatmul.f32.gmra.mxu0 %v8249
      %v8313 = vpop.f32.mrf.mxu0
      %v8314 = vadd.f32 0.0, %v8313
      %8315 = vmatmul.f32.gmra.mxu0 %v8252
      %v8316 = vpop.f32.mrf.mxu0
      %v8317 = vadd.f32 0.0, %v8316
      %8318 = vdwg.mxu0
      %v8319 = vadd.f32 %v7961, %v8272
      %v8320 = vadd.f32 %v7964, %v8275
      %v8321 = vadd.f32 %v7967, %v8278
      %v8322 = vadd.f32 %v7970, %v8281
      %v8323 = vadd.f32 %v7973, %v8284
      %v8324 = vadd.f32 %v7976, %v8287
      %v8325 = vadd.f32 %v7979, %v8290
      %v8326 = vadd.f32 %v7982, %v8293
      %v8327 = vadd.f32 %v7985, %v8296
      %v8328 = vadd.f32 %v7988, %v8299
      %v8329 = vadd.f32 %v7991, %v8302
      %v8330 = vadd.f32 %v7994, %v8305
      %v8331 = vadd.f32 %v7997, %v8308
      %v8332 = vadd.f32 %v8000, %v8311
      %v8333 = vadd.f32 %v8003, %v8314
      %v8334 = vadd.f32 %v8006, %v8317
      %v8335 = vld [vmem:[%s57] sm:$0xff]
      %v8336 = vld [vmem:[%s57 + $0x8] sm:$0xff]
      %v8337 = vld [vmem:[%s57 + $0x10] sm:$0xff]
      %v8338 = vld [vmem:[%s57 + $0x18] sm:$0xff]
      %v8339 = vld [vmem:[%s57 + $0x20] sm:$0xff]
      %v8340 = vld [vmem:[%s57 + $0x28] sm:$0xff]
      %v8341 = vld [vmem:[%s57 + $0x30] sm:$0xff]
      %v8342 = vld [vmem:[%s57 + $0x38] sm:$0xff]
      %v8343 = vld [vmem:[%s57 + $0x40] sm:$0xff]
      %v8344 = vld [vmem:[%s57 + $0x48] sm:$0xff]
      %v8345 = vld [vmem:[%s57 + $0x50] sm:$0xff]
      %v8346 = vld [vmem:[%s57 + $0x58] sm:$0xff]
      %v8347 = vld [vmem:[%s57 + $0x60] sm:$0xff]
      %v8348 = vld [vmem:[%s57 + $0x68] sm:$0xff]
      %v8349 = vld [vmem:[%s57 + $0x70] sm:$0xff]
      %v8350 = vld [vmem:[%s57 + $0x78] sm:$0xff]
      %8352 = vset.pattern.permute.xlu0 0
      %8353 = vperm.xlu0 %8352, %v8335
      %v8354 = vpop.permute.xlu0 %8353
      %8357 = vset.pattern.permute.xlu0 0
      %8358 = vperm.xlu0 %8357, %v8336
      %v8359 = vpop.permute.xlu0 %8358
      %8362 = vset.pattern.permute.xlu0 0
      %8363 = vperm.xlu0 %8362, %v8337
      %v8364 = vpop.permute.xlu0 %8363
      %8367 = vset.pattern.permute.xlu0 0
      %8368 = vperm.xlu0 %8367, %v8338
      %v8369 = vpop.permute.xlu0 %8368
      %8372 = vset.pattern.permute.xlu0 0
      %8373 = vperm.xlu0 %8372, %v8339
      %v8374 = vpop.permute.xlu0 %8373
      %8377 = vset.pattern.permute.xlu0 0
      %8378 = vperm.xlu0 %8377, %v8340
      %v8379 = vpop.permute.xlu0 %8378
      %8382 = vset.pattern.permute.xlu0 0
      %8383 = vperm.xlu0 %8382, %v8341
      %v8384 = vpop.permute.xlu0 %8383
      %8387 = vset.pattern.permute.xlu0 0
      %8388 = vperm.xlu0 %8387, %v8342
      %v8389 = vpop.permute.xlu0 %8388
      %8392 = vset.pattern.permute.xlu0 0
      %8393 = vperm.xlu0 %8392, %v8343
      %v8394 = vpop.permute.xlu0 %8393
      %8397 = vset.pattern.permute.xlu0 0
      %8398 = vperm.xlu0 %8397, %v8344
      %v8399 = vpop.permute.xlu0 %8398
      %8402 = vset.pattern.permute.xlu0 0
      %8403 = vperm.xlu0 %8402, %v8345
      %v8404 = vpop.permute.xlu0 %8403
      %8407 = vset.pattern.permute.xlu0 0
      %8408 = vperm.xlu0 %8407, %v8346
      %v8409 = vpop.permute.xlu0 %8408
      %8412 = vset.pattern.permute.xlu0 0
      %8413 = vperm.xlu0 %8412, %v8347
      %v8414 = vpop.permute.xlu0 %8413
      %8417 = vset.pattern.permute.xlu0 0
      %8418 = vperm.xlu0 %8417, %v8348
      %v8419 = vpop.permute.xlu0 %8418
      %8422 = vset.pattern.permute.xlu0 0
      %8423 = vperm.xlu0 %8422, %v8349
      %v8424 = vpop.permute.xlu0 %8423
      %8427 = vset.pattern.permute.xlu0 0
      %8428 = vperm.xlu0 %8427, %v8350
      %v8429 = vpop.permute.xlu0 %8428
      %v8431 = vadd.f32 %v8319, %v8354
      %v8432 = vadd.f32 %v8320, %v8359
      %v8433 = vadd.f32 %v8321, %v8364
      %v8434 = vadd.f32 %v8322, %v8369
      %v8435 = vadd.f32 %v8323, %v8374
      %v8436 = vadd.f32 %v8324, %v8379
      %v8437 = vadd.f32 %v8325, %v8384
      %v8438 = vadd.f32 %v8326, %v8389
      %v8439 = vadd.f32 %v8327, %v8394
      %v8440 = vadd.f32 %v8328, %v8399
      %v8441 = vadd.f32 %v8329, %v8404
      %v8442 = vadd.f32 %v8330, %v8409
      %v8443 = vadd.f32 %v8331, %v8414
      %v8444 = vadd.f32 %v8332, %v8419
      %v8445 = vadd.f32 %v8333, %v8424
      %v8446 = vadd.f32 %v8334, %v8429
      %v8447 = vmax.f32 %v8431, 0.0
      %v8448 = vmax.f32 %v8432, 0.0
      %v8449 = vmax.f32 %v8433, 0.0
      %v8450 = vmax.f32 %v8434, 0.0
      %v8451 = vmax.f32 %v8435, 0.0
      %v8452 = vmax.f32 %v8436, 0.0
      %v8453 = vmax.f32 %v8437, 0.0
      %v8454 = vmax.f32 %v8438, 0.0
      %v8455 = vmax.f32 %v8439, 0.0
      %v8456 = vmax.f32 %v8440, 0.0
      %v8457 = vmax.f32 %v8441, 0.0
      %v8458 = vmax.f32 %v8442, 0.0
      %v8459 = vmax.f32 %v8443, 0.0
      %v8460 = vmax.f32 %v8444, 0.0
      %v8461 = vmax.f32 %v8445, 0.0
      %v8462 = vmax.f32 %v8446, 0.0
      %v8463 = vld [vmem:[%s59] sm:$0xff]
      %v8464 = vld [vmem:[%s59 + $0x8] sm:$0xff]
      %v8465 = vld [vmem:[%s59 + $0x10] sm:$0xff]
      %v8466 = vld [vmem:[%s59 + $0x18] sm:$0xff]
      %v8467 = vld [vmem:[%s59 + $0x20] sm:$0xff]
      %v8468 = vld [vmem:[%s59 + $0x28] sm:$0xff]
      %v8469 = vld [vmem:[%s59 + $0x30] sm:$0xff]
      %v8470 = vld [vmem:[%s59 + $0x38] sm:$0xff]
      %v8471 = vld [vmem:[%s59 + $0x40] sm:$0xff]
      %v8472 = vld [vmem:[%s59 + $0x48] sm:$0xff]
      %v8473 = vld [vmem:[%s59 + $0x50] sm:$0xff]
      %v8474 = vld [vmem:[%s59 + $0x58] sm:$0xff]
      %v8475 = vld [vmem:[%s59 + $0x60] sm:$0xff]
      %v8476 = vld [vmem:[%s59 + $0x68] sm:$0xff]
      %v8477 = vld [vmem:[%s59 + $0x70] sm:$0xff]
      %v8478 = vld [vmem:[%s59 + $0x78] sm:$0xff]
      %v8479 = vld [vmem:[%s59 + $0x80] sm:$0xff]
      %v8480 = vld [vmem:[%s59 + $0x88] sm:$0xff]
      %v8481 = vld [vmem:[%s59 + $0x90] sm:$0xff]
      %v8482 = vld [vmem:[%s59 + $0x98] sm:$0xff]
      %v8483 = vld [vmem:[%s59 + $0xa0] sm:$0xff]
      %v8484 = vld [vmem:[%s59 + $0xa8] sm:$0xff]
      %v8485 = vld [vmem:[%s59 + $0xb0] sm:$0xff]
      %v8486 = vld [vmem:[%s59 + $0xb8] sm:$0xff]
      %v8487 = vld [vmem:[%s59 + $0xc0] sm:$0xff]
      %v8488 = vld [vmem:[%s59 + $0xc8] sm:$0xff]
      %v8489 = vld [vmem:[%s59 + $0xd0] sm:$0xff]
      %v8490 = vld [vmem:[%s59 + $0xd8] sm:$0xff]
      %v8491 = vld [vmem:[%s59 + $0xe0] sm:$0xff]
      %v8492 = vld [vmem:[%s59 + $0xe8] sm:$0xff]
      %8493 = vmatpush.msra.mxu0 %v8462
      %8494 = vmatpush.msra.mxu0 %v8461
      %8495 = vmatpush.msra.mxu0 %v8460
      %8496 = vmatpush.msra.mxu0 %v8459
      %8497 = vmatpush.msra.mxu0 %v8458
      %8498 = vmatpush.msra.mxu0 %v8457
      %8499 = vmatpush.msra.mxu0 %v8456
      %8500 = vmatpush.msra.mxu0 %v8455
      %8501 = vmatpush.msra.mxu0 %v8454
      %8502 = vmatpush.msra.mxu0 %v8453
      %8503 = vmatpush.msra.mxu0 %v8452
      %8504 = vmatpush.msra.mxu0 %v8451
      %8505 = vmatpush.msra.mxu0 %v8450
      %8506 = vmatpush.msra.mxu0 %v8449
      %8507 = vmatpush.msra.mxu0 %v8448
      %8508 = vmatpush.msra.mxu0 %v8447
      %8509 = vmatmul.f32.gmra.mxu0 %v8463
      %v8510 = vpop.f32.mrf.mxu0
      %v8511 = vadd.f32 0.0, %v8510
      %8512 = vmatmul.f32.gmra.mxu0 %v8464
      %v8513 = vpop.f32.mrf.mxu0
      %v8514 = vadd.f32 0.0, %v8513
      %8515 = vmatmul.f32.gmra.mxu0 %v8465
      %v8516 = vpop.f32.mrf.mxu0
      %v8517 = vadd.f32 0.0, %v8516
      %8518 = vmatmul.f32.gmra.mxu0 %v8466
      %v8519 = vpop.f32.mrf.mxu0
      %v8520 = vadd.f32 0.0, %v8519
      %8521 = vmatmul.f32.gmra.mxu0 %v8467
      %v8522 = vpop.f32.mrf.mxu0
      %v8523 = vadd.f32 0.0, %v8522
      %8524 = vmatmul.f32.gmra.mxu0 %v8468
      %v8525 = vpop.f32.mrf.mxu0
      %v8526 = vadd.f32 0.0, %v8525
      %8527 = vmatmul.f32.gmra.mxu0 %v8469
      %v8528 = vpop.f32.mrf.mxu0
      %v8529 = vadd.f32 0.0, %v8528
      %8530 = vmatmul.f32.gmra.mxu0 %v8470
      %v8531 = vpop.f32.mrf.mxu0
      %v8532 = vadd.f32 0.0, %v8531
      %8533 = vmatmul.f32.gmra.mxu0 %v8471
      %v8534 = vpop.f32.mrf.mxu0
      %v8535 = vadd.f32 0.0, %v8534
      %8536 = vmatmul.f32.gmra.mxu0 %v8472
      %v8537 = vpop.f32.mrf.mxu0
      %v8538 = vadd.f32 0.0, %v8537
      %8539 = vmatmul.f32.gmra.mxu0 %v8473
      %v8540 = vpop.f32.mrf.mxu0
      %v8541 = vadd.f32 0.0, %v8540
      %8542 = vmatmul.f32.gmra.mxu0 %v8474
      %v8543 = vpop.f32.mrf.mxu0
      %v8544 = vadd.f32 0.0, %v8543
      %8545 = vmatmul.f32.gmra.mxu0 %v8475
      %v8546 = vpop.f32.mrf.mxu0
      %v8547 = vadd.f32 0.0, %v8546
      %8548 = vmatmul.f32.gmra.mxu0 %v8476
      %v8549 = vpop.f32.mrf.mxu0
      %v8550 = vadd.f32 0.0, %v8549
      %8551 = vmatmul.f32.gmra.mxu0 %v8477
      %v8552 = vpop.f32.mrf.mxu0
      %v8553 = vadd.f32 0.0, %v8552
      %8554 = vmatmul.f32.gmra.mxu0 %v8478
      %v8555 = vpop.f32.mrf.mxu0
      %v8556 = vadd.f32 0.0, %v8555
      %8557 = vmatmul.f32.gmra.mxu0 %v8479
      %v8558 = vpop.f32.mrf.mxu0
      %v8559 = vadd.f32 0.0, %v8558
      %8560 = vmatmul.f32.gmra.mxu0 %v8480
      %v8561 = vpop.f32.mrf.mxu0
      %v8562 = vadd.f32 0.0, %v8561
      %8563 = vmatmul.f32.gmra.mxu0 %v8481
      %v8564 = vpop.f32.mrf.mxu0
      %v8565 = vadd.f32 0.0, %v8564
      %8566 = vmatmul.f32.gmra.mxu0 %v8482
      %v8567 = vpop.f32.mrf.mxu0
      %v8568 = vadd.f32 0.0, %v8567
      %8569 = vmatmul.f32.gmra.mxu0 %v8483
      %v8570 = vpop.f32.mrf.mxu0
      %v8571 = vadd.f32 0.0, %v8570
      %8572 = vmatmul.f32.gmra.mxu0 %v8484
      %v8573 = vpop.f32.mrf.mxu0
      %v8574 = vadd.f32 0.0, %v8573
      %8575 = vmatmul.f32.gmra.mxu0 %v8485
      %v8576 = vpop.f32.mrf.mxu0
      %v8577 = vadd.f32 0.0, %v8576
      %8578 = vmatmul.f32.gmra.mxu0 %v8486
      %v8579 = vpop.f32.mrf.mxu0
      %v8580 = vadd.f32 0.0, %v8579
      %8581 = vmatmul.f32.gmra.mxu0 %v8487
      %v8582 = vpop.f32.mrf.mxu0
      %v8583 = vadd.f32 0.0, %v8582
      %8584 = vmatmul.f32.gmra.mxu0 %v8488
      %v8585 = vpop.f32.mrf.mxu0
      %v8586 = vadd.f32 0.0, %v8585
      %8587 = vmatmul.f32.gmra.mxu0 %v8489
      %v8588 = vpop.f32.mrf.mxu0
      %v8589 = vadd.f32 0.0, %v8588
      %8590 = vmatmul.f32.gmra.mxu0 %v8490
      %v8591 = vpop.f32.mrf.mxu0
      %v8592 = vadd.f32 0.0, %v8591
      %8593 = vmatmul.f32.gmra.mxu0 %v8491
      %v8594 = vpop.f32.mrf.mxu0
      %v8595 = vadd.f32 0.0, %v8594
      %8596 = vmatmul.f32.gmra.mxu0 %v8492
      %v8597 = vpop.f32.mrf.mxu0
      %v8598 = vadd.f32 0.0, %v8597
      %8599 = vdwg.mxu0
      %v8600 = vld [vmem:[%s61] sm:$0xff]
      %v8601 = vld [vmem:[%s61 + $0x8] sm:$0xff]
      %v8603 = vsel %vm2701, %v8511, 0
      %v8606 = vsel %vm2701, %v8514, 0
      %v8609 = vsel %vm2701, %v8517, 0
      %v8612 = vsel %vm2701, %v8520, 0
      %v8615 = vsel %vm2701, %v8523, 0
      %v8618 = vsel %vm2701, %v8526, 0
      %v8621 = vsel %vm2701, %v8529, 0
      %v8624 = vsel %vm2701, %v8532, 0
      %v8627 = vsel %vm2701, %v8535, 0
      %v8630 = vsel %vm2701, %v8538, 0
      %v8633 = vsel %vm2701, %v8541, 0
      %v8636 = vsel %vm2701, %v8544, 0
      %v8639 = vsel %vm2701, %v8547, 0
      %v8642 = vsel %vm2701, %v8550, 0
      %v8645 = vsel %vm2701, %v8553, 0
      %v8648 = vsel %vm2701, %v8556, 0
      %v8651 = vsel %vm2701, %v8559, 0
      %v8654 = vsel %vm2701, %v8562, 0
      %v8657 = vsel %vm2701, %v8565, 0
      %v8660 = vsel %vm2701, %v8568, 0
      %v8663 = vsel %vm2701, %v8571, 0
      %v8666 = vsel %vm2701, %v8574, 0
      %v8669 = vsel %vm2701, %v8577, 0
      %v8672 = vsel %vm2701, %v8580, 0
      %v8675 = vsel %vm2701, %v8583, 0
      %v8678 = vsel %vm2701, %v8586, 0
      %v8681 = vsel %vm2701, %v8589, 0
      %v8684 = vsel %vm2701, %v8592, 0
      %v8687 = vsel %vm2701, %v8595, 0
      %v8690 = vsel %vm2701, %v8598, 0
      %8692 = vmatpush.msra.mxu0 0.0
      %8693 = vmatpush.msra.mxu0 0.0
      %8694 = vmatpush.msra.mxu0 0.0
      %8695 = vmatpush.msra.mxu0 0.0
      %8696 = vmatpush.msra.mxu0 0.0
      %8697 = vmatpush.msra.mxu0 0.0
      %8698 = vmatpush.msra.mxu0 0.0
      %8699 = vmatpush.msra.mxu0 0.0
      %8700 = vmatpush.msra.mxu0 0.0
      %8701 = vmatpush.msra.mxu0 0.0
      %8702 = vmatpush.msra.mxu0 0.0
      %8703 = vmatpush.msra.mxu0 0.0
      %8704 = vmatpush.msra.mxu0 0.0
      %8705 = vmatpush.msra.mxu0 0.0
      %8706 = vmatpush.msra.mxu0 %v8601
      %8707 = vmatpush.msra.mxu0 %v8600
      %8708 = vmatmul.f32.gmra.mxu0 %v8603
      %v8709 = vpop.f32.mrf.mxu0
      %v8710 = vadd.f32 0.0, %v8709
      %8711 = vmatmul.f32.gmra.mxu0 %v8606
      %v8712 = vpop.f32.mrf.mxu0
      %v8713 = vadd.f32 0.0, %v8712
      %8714 = vmatmul.f32.gmra.mxu0 %v8609
      %v8715 = vpop.f32.mrf.mxu0
      %v8716 = vadd.f32 0.0, %v8715
      %8717 = vmatmul.f32.gmra.mxu0 %v8612
      %v8718 = vpop.f32.mrf.mxu0
      %v8719 = vadd.f32 0.0, %v8718
      %8720 = vmatmul.f32.gmra.mxu0 %v8615
      %v8721 = vpop.f32.mrf.mxu0
      %v8722 = vadd.f32 0.0, %v8721
      %8723 = vmatmul.f32.gmra.mxu0 %v8618
      %v8724 = vpop.f32.mrf.mxu0
      %v8725 = vadd.f32 0.0, %v8724
      %8726 = vmatmul.f32.gmra.mxu0 %v8621
      %v8727 = vpop.f32.mrf.mxu0
      %v8728 = vadd.f32 0.0, %v8727
      %8729 = vmatmul.f32.gmra.mxu0 %v8624
      %v8730 = vpop.f32.mrf.mxu0
      %v8731 = vadd.f32 0.0, %v8730
      %8732 = vmatmul.f32.gmra.mxu0 %v8627
      %v8733 = vpop.f32.mrf.mxu0
      %v8734 = vadd.f32 0.0, %v8733
      %8735 = vmatmul.f32.gmra.mxu0 %v8630
      %v8736 = vpop.f32.mrf.mxu0
      %v8737 = vadd.f32 0.0, %v8736
      %8738 = vmatmul.f32.gmra.mxu0 %v8633
      %v8739 = vpop.f32.mrf.mxu0
      %v8740 = vadd.f32 0.0, %v8739
      %8741 = vmatmul.f32.gmra.mxu0 %v8636
      %v8742 = vpop.f32.mrf.mxu0
      %v8743 = vadd.f32 0.0, %v8742
      %8744 = vmatmul.f32.gmra.mxu0 %v8639
      %v8745 = vpop.f32.mrf.mxu0
      %v8746 = vadd.f32 0.0, %v8745
      %8747 = vmatmul.f32.gmra.mxu0 %v8642
      %v8748 = vpop.f32.mrf.mxu0
      %v8749 = vadd.f32 0.0, %v8748
      %8750 = vmatmul.f32.gmra.mxu0 %v8645
      %v8751 = vpop.f32.mrf.mxu0
      %v8752 = vadd.f32 0.0, %v8751
      %8753 = vmatmul.f32.gmra.mxu0 %v8648
      %v8754 = vpop.f32.mrf.mxu0
      %v8755 = vadd.f32 0.0, %v8754
      %8756 = vmatmul.f32.gmra.mxu0 %v8651
      %v8757 = vpop.f32.mrf.mxu0
      %v8758 = vadd.f32 0.0, %v8757
      %8759 = vmatmul.f32.gmra.mxu0 %v8654
      %v8760 = vpop.f32.mrf.mxu0
      %v8761 = vadd.f32 0.0, %v8760
      %8762 = vmatmul.f32.gmra.mxu0 %v8657
      %v8763 = vpop.f32.mrf.mxu0
      %v8764 = vadd.f32 0.0, %v8763
      %8765 = vmatmul.f32.gmra.mxu0 %v8660
      %v8766 = vpop.f32.mrf.mxu0
      %v8767 = vadd.f32 0.0, %v8766
      %8768 = vmatmul.f32.gmra.mxu0 %v8663
      %v8769 = vpop.f32.mrf.mxu0
      %v8770 = vadd.f32 0.0, %v8769
      %8771 = vmatmul.f32.gmra.mxu0 %v8666
      %v8772 = vpop.f32.mrf.mxu0
      %v8773 = vadd.f32 0.0, %v8772
      %8774 = vmatmul.f32.gmra.mxu0 %v8669
      %v8775 = vpop.f32.mrf.mxu0
      %v8776 = vadd.f32 0.0, %v8775
      %8777 = vmatmul.f32.gmra.mxu0 %v8672
      %v8778 = vpop.f32.mrf.mxu0
      %v8779 = vadd.f32 0.0, %v8778
      %8780 = vmatmul.f32.gmra.mxu0 %v8675
      %v8781 = vpop.f32.mrf.mxu0
      %v8782 = vadd.f32 0.0, %v8781
      %8783 = vmatmul.f32.gmra.mxu0 %v8678
      %v8784 = vpop.f32.mrf.mxu0
      %v8785 = vadd.f32 0.0, %v8784
      %8786 = vmatmul.f32.gmra.mxu0 %v8681
      %v8787 = vpop.f32.mrf.mxu0
      %v8788 = vadd.f32 0.0, %v8787
      %8789 = vmatmul.f32.gmra.mxu0 %v8684
      %v8790 = vpop.f32.mrf.mxu0
      %v8791 = vadd.f32 0.0, %v8790
      %8792 = vmatmul.f32.gmra.mxu0 %v8687
      %v8793 = vpop.f32.mrf.mxu0
      %v8794 = vadd.f32 0.0, %v8793
      %8795 = vmatmul.f32.gmra.mxu0 %v8690
      %v8796 = vpop.f32.mrf.mxu0
      %v8797 = vadd.f32 0.0, %v8796
      %8798 = vdwg.mxu0
      %v8799 = vpack.c.bf16 %v8713, %v8710
      %v8800 = vpack.c.bf16 %v8719, %v8716
      %v8801 = vpack.c.bf16 %v8725, %v8722
      %v8802 = vpack.c.bf16 %v8731, %v8728
      %v8803 = vpack.c.bf16 %v8737, %v8734
      %v8804 = vpack.c.bf16 %v8743, %v8740
      %v8805 = vpack.c.bf16 %v8749, %v8746
      %v8806 = vpack.c.bf16 %v8755, %v8752
      %v8807 = vpack.c.bf16 %v8761, %v8758
      %v8808 = vpack.c.bf16 %v8767, %v8764
      %v8809 = vpack.c.bf16 %v8773, %v8770
      %v8810 = vpack.c.bf16 %v8779, %v8776
      %v8811 = vpack.c.bf16 %v8785, %v8782
      %v8812 = vpack.c.bf16 %v8791, %v8788
      %v8813 = vpack.c.bf16 %v8797, %v8794
      %v8814 = vld [vmem:[%s63] sm:$0xff]
      %v8815 = vld [vmem:[%s63 + $0x8] sm:$0xff]
      %v8816 = vld [vmem:[%s63 + $0x10] sm:$0xff]
      %v8817 = vld [vmem:[%s63 + $0x18] sm:$0xff]
      %v8818 = vld [vmem:[%s63 + $0x20] sm:$0xff]
      %v8819 = vld [vmem:[%s63 + $0x28] sm:$0xff]
      %v8820 = vld [vmem:[%s63 + $0x30] sm:$0xff]
      %v8821 = vld [vmem:[%s63 + $0x38] sm:$0xff]
      %v8822 = vld [vmem:[%s63 + $0x40] sm:$0xff]
      %v8823 = vld [vmem:[%s63 + $0x48] sm:$0xff]
      %v8824 = vld [vmem:[%s63 + $0x50] sm:$0xff]
      %v8825 = vld [vmem:[%s63 + $0x58] sm:$0xff]
      %v8826 = vld [vmem:[%s63 + $0x60] sm:$0xff]
      %v8827 = vld [vmem:[%s63 + $0x68] sm:$0xff]
      %v8828 = vld [vmem:[%s63 + $0x70] sm:$0xff]
      %v8844 = vunpack.c.l.b16 %v8814
      %v8845 = vunpack.c.h.b16 %v8814
      %v8846 = vunpack.c.l.b16 %v8815
      %v8847 = vunpack.c.h.b16 %v8815
      %v8848 = vunpack.c.l.b16 %v8816
      %v8849 = vunpack.c.h.b16 %v8816
      %v8850 = vunpack.c.l.b16 %v8817
      %v8851 = vunpack.c.h.b16 %v8817
      %v8852 = vunpack.c.l.b16 %v8818
      %v8853 = vunpack.c.h.b16 %v8818
      %v8854 = vunpack.c.l.b16 %v8819
      %v8855 = vunpack.c.h.b16 %v8819
      %v8856 = vunpack.c.l.b16 %v8820
      %v8857 = vunpack.c.h.b16 %v8820
      %v8858 = vunpack.c.l.b16 %v8821
      %v8859 = vunpack.c.h.b16 %v8821
      %v8860 = vunpack.c.l.b16 %v8822
      %v8861 = vunpack.c.h.b16 %v8822
      %v8862 = vunpack.c.l.b16 %v8823
      %v8863 = vunpack.c.h.b16 %v8823
      %v8864 = vunpack.c.l.b16 %v8824
      %v8865 = vunpack.c.h.b16 %v8824
      %v8866 = vunpack.c.l.b16 %v8825
      %v8867 = vunpack.c.h.b16 %v8825
      %v8868 = vunpack.c.l.b16 %v8826
      %v8869 = vunpack.c.h.b16 %v8826
      %v8870 = vunpack.c.l.b16 %v8827
      %v8871 = vunpack.c.h.b16 %v8827
      %v8872 = vunpack.c.l.b16 %v8828
      %v8873 = vunpack.c.h.b16 %v8828
      %v8874 = vpack.c.b16 %v8846, %v8844
      %v8875 = vpack.c.b16 %v8847, %v8845
      %v8876 = vpack.c.b16 %v8850, %v8848
      %v8877 = vpack.c.b16 %v8851, %v8849
      %v8878 = vpack.c.b16 %v8854, %v8852
      %v8879 = vpack.c.b16 %v8855, %v8853
      %v8880 = vpack.c.b16 %v8858, %v8856
      %v8881 = vpack.c.b16 %v8859, %v8857
      %v8882 = vpack.c.b16 %v8862, %v8860
      %v8883 = vpack.c.b16 %v8863, %v8861
      %v8884 = vpack.c.b16 %v8866, %v8864
      %v8885 = vpack.c.b16 %v8867, %v8865
      %v8886 = vpack.c.b16 %v8870, %v8868
      %v8887 = vpack.c.b16 %v8871, %v8869
      %v8888 = vpack.c.b16 %v8872, %v8872
      %v8889 = vpack.c.b16 %v8873, %v8873
      %vm8898 = vcmask 916480
      %v8900 = vsel %vm8898, %v8875, 0
      %v8903 = vsel %vm8898, %v8877, 0
      %v8906 = vsel %vm8898, %v8879, 0
      %v8909 = vsel %vm8898, %v8881, 0
      %v8912 = vsel %vm8898, %v8883, 0
      %v8915 = vsel %vm8898, %v8885, 0
      %v8918 = vsel %vm8898, %v8887, 0
      %v8921 = vsel %vm8898, %v8889, 0
      %8923 = vmatpush.bf16.msra.mxu0 %v8806
      %8924 = vmatpush.bf16.msra.mxu0 %v8805
      %8925 = vmatpush.bf16.msra.mxu0 %v8804
      %8926 = vmatpush.bf16.msra.mxu0 %v8803
      %8927 = vmatpush.bf16.msra.mxu0 %v8802
      %8928 = vmatpush.bf16.msra.mxu0 %v8801
      %8929 = vmatpush.bf16.msra.mxu0 %v8800
      %8930 = vmatpush.bf16.msra.mxu0 %v8799
      %8931 = vmatmul.bf16.gmra.mxu0 %v8874
      %v8932 = vpop.f32.mrf.mxu0
      %v8933 = vadd.f32 0.0, %v8932
      %v8934 = vpop.f32.mrf.mxu0
      %v8935 = vadd.f32 0.0, %v8934
      %8936 = vmatmul.bf16.gmra.mxu0 %v8876
      %v8937 = vpop.f32.mrf.mxu0
      %v8938 = vadd.f32 0.0, %v8937
      %v8939 = vpop.f32.mrf.mxu0
      %v8940 = vadd.f32 0.0, %v8939
      %8941 = vmatmul.bf16.gmra.mxu0 %v8878
      %v8942 = vpop.f32.mrf.mxu0
      %v8943 = vadd.f32 0.0, %v8942
      %v8944 = vpop.f32.mrf.mxu0
      %v8945 = vadd.f32 0.0, %v8944
      %8946 = vmatmul.bf16.gmra.mxu0 %v8880
      %v8947 = vpop.f32.mrf.mxu0
      %v8948 = vadd.f32 0.0, %v8947
      %v8949 = vpop.f32.mrf.mxu0
      %v8950 = vadd.f32 0.0, %v8949
      %8951 = vmatmul.bf16.gmra.mxu0 %v8882
      %v8952 = vpop.f32.mrf.mxu0
      %v8953 = vadd.f32 0.0, %v8952
      %v8954 = vpop.f32.mrf.mxu0
      %v8955 = vadd.f32 0.0, %v8954
      %8956 = vmatmul.bf16.gmra.mxu0 %v8884
      %v8957 = vpop.f32.mrf.mxu0
      %v8958 = vadd.f32 0.0, %v8957
      %v8959 = vpop.f32.mrf.mxu0
      %v8960 = vadd.f32 0.0, %v8959
      %8961 = vmatmul.bf16.gmra.mxu0 %v8886
      %v8962 = vpop.f32.mrf.mxu0
      %v8963 = vadd.f32 0.0, %v8962
      %v8964 = vpop.f32.mrf.mxu0
      %v8965 = vadd.f32 0.0, %v8964
      %8966 = vmatmul.bf16.gmra.mxu0 %v8888
      %v8967 = vpop.f32.mrf.mxu0
      %v8968 = vadd.f32 0.0, %v8967
      %v8969 = vpop.f32.mrf.mxu0
      %8970 = vdwg.mxu0
      %8971 = vmatpush.bf16.msra.mxu0 0
      %8972 = vmatpush.bf16.msra.mxu0 %v8813
      %8973 = vmatpush.bf16.msra.mxu0 %v8812
      %8974 = vmatpush.bf16.msra.mxu0 %v8811
      %8975 = vmatpush.bf16.msra.mxu0 %v8810
      %8976 = vmatpush.bf16.msra.mxu0 %v8809
      %8977 = vmatpush.bf16.msra.mxu0 %v8808
      %8978 = vmatpush.bf16.msra.mxu0 %v8807
      %8979 = vmatmul.bf16.gmra.mxu0 %v8900
      %v8980 = vpop.f32.mrf.mxu0
      %v8981 = vadd.f32 %v8933, %v8980
      %v8982 = vpop.f32.mrf.mxu0
      %v8983 = vadd.f32 %v8935, %v8982
      %8984 = vmatmul.bf16.gmra.mxu0 %v8903
      %v8985 = vpop.f32.mrf.mxu0
      %v8986 = vadd.f32 %v8938, %v8985
      %v8987 = vpop.f32.mrf.mxu0
      %v8988 = vadd.f32 %v8940, %v8987
      %8989 = vmatmul.bf16.gmra.mxu0 %v8906
      %v8990 = vpop.f32.mrf.mxu0
      %v8991 = vadd.f32 %v8943, %v8990
      %v8992 = vpop.f32.mrf.mxu0
      %v8993 = vadd.f32 %v8945, %v8992
      %8994 = vmatmul.bf16.gmra.mxu0 %v8909
      %v8995 = vpop.f32.mrf.mxu0
      %v8996 = vadd.f32 %v8948, %v8995
      %v8997 = vpop.f32.mrf.mxu0
      %v8998 = vadd.f32 %v8950, %v8997
      %8999 = vmatmul.bf16.gmra.mxu0 %v8912
      %v9000 = vpop.f32.mrf.mxu0
      %v9001 = vadd.f32 %v8953, %v9000
      %v9002 = vpop.f32.mrf.mxu0
      %v9003 = vadd.f32 %v8955, %v9002
      %9004 = vmatmul.bf16.gmra.mxu0 %v8915
      %v9005 = vpop.f32.mrf.mxu0
      %v9006 = vadd.f32 %v8958, %v9005
      %v9007 = vpop.f32.mrf.mxu0
      %v9008 = vadd.f32 %v8960, %v9007
      %9009 = vmatmul.bf16.gmra.mxu0 %v8918
      %v9010 = vpop.f32.mrf.mxu0
      %v9011 = vadd.f32 %v8963, %v9010
      %v9012 = vpop.f32.mrf.mxu0
      %v9013 = vadd.f32 %v8965, %v9012
      %9014 = vmatmul.bf16.gmra.mxu0 %v8921
      %v9015 = vpop.f32.mrf.mxu0
      %v9016 = vadd.f32 %v8968, %v9015
      %v9017 = vpop.f32.mrf.mxu0
      %9018 = vdwg.mxu0
      %v9019 = vld [vmem:[%s65] sm:$0xff]
      %v9020 = vld [vmem:[%s65 + $0x8] sm:$0xff]
      %v9021 = vld [vmem:[%s65 + $0x10] sm:$0xff]
      %v9022 = vld [vmem:[%s65 + $0x18] sm:$0x3f]
      %s9023 = scalar_lea.vmem %s63, 120
      %v9024 = vld [vmem:[%s9023] sm:$0xff]
      %v9025 = vld [vmem:[%s9023 + $0x8] sm:$0xff]
      %v9026 = vld [vmem:[%s9023 + $0x10] sm:$0xff]
      %v9027 = vld [vmem:[%s9023 + $0x18] sm:$0xff]
      %v9028 = vld [vmem:[%s9023 + $0x20] sm:$0xff]
      %v9029 = vld [vmem:[%s9023 + $0x28] sm:$0xff]
      %v9030 = vld [vmem:[%s9023 + $0x30] sm:$0xff]
      %v9031 = vld [vmem:[%s9023 + $0x38] sm:$0xff]
      %v9032 = vld [vmem:[%s9023 + $0x40] sm:$0xff]
      %v9033 = vld [vmem:[%s9023 + $0x48] sm:$0xff]
      %v9034 = vld [vmem:[%s9023 + $0x50] sm:$0xff]
      %v9035 = vld [vmem:[%s9023 + $0x58] sm:$0xff]
      %v9036 = vld [vmem:[%s9023 + $0x60] sm:$0xff]
      %v9037 = vld [vmem:[%s9023 + $0x68] sm:$0xff]
      %v9038 = vld [vmem:[%s9023 + $0x70] sm:$0xff]
      %v9054 = vunpack.c.l.b16 %v9024
      %v9055 = vunpack.c.h.b16 %v9024
      %v9056 = vunpack.c.l.b16 %v9025
      %v9057 = vunpack.c.h.b16 %v9025
      %v9058 = vunpack.c.l.b16 %v9026
      %v9059 = vunpack.c.h.b16 %v9026
      %v9060 = vunpack.c.l.b16 %v9027
      %v9061 = vunpack.c.h.b16 %v9027
      %v9062 = vunpack.c.l.b16 %v9028
      %v9063 = vunpack.c.h.b16 %v9028
      %v9064 = vunpack.c.l.b16 %v9029
      %v9065 = vunpack.c.h.b16 %v9029
      %v9066 = vunpack.c.l.b16 %v9030
      %v9067 = vunpack.c.h.b16 %v9030
      %v9068 = vunpack.c.l.b16 %v9031
      %v9069 = vunpack.c.h.b16 %v9031
      %v9070 = vunpack.c.l.b16 %v9032
      %v9071 = vunpack.c.h.b16 %v9032
      %v9072 = vunpack.c.l.b16 %v9033
      %v9073 = vunpack.c.h.b16 %v9033
      %v9074 = vunpack.c.l.b16 %v9034
      %v9075 = vunpack.c.h.b16 %v9034
      %v9076 = vunpack.c.l.b16 %v9035
      %v9077 = vunpack.c.h.b16 %v9035
      %v9078 = vunpack.c.l.b16 %v9036
      %v9079 = vunpack.c.h.b16 %v9036
      %v9080 = vunpack.c.l.b16 %v9037
      %v9081 = vunpack.c.h.b16 %v9037
      %v9082 = vunpack.c.l.b16 %v9038
      %v9083 = vunpack.c.h.b16 %v9038
      %v9084 = vpack.c.b16 %v9056, %v9054
      %v9085 = vpack.c.b16 %v9057, %v9055
      %v9086 = vpack.c.b16 %v9060, %v9058
      %v9087 = vpack.c.b16 %v9061, %v9059
      %v9088 = vpack.c.b16 %v9064, %v9062
      %v9089 = vpack.c.b16 %v9065, %v9063
      %v9090 = vpack.c.b16 %v9068, %v9066
      %v9091 = vpack.c.b16 %v9069, %v9067
      %v9092 = vpack.c.b16 %v9072, %v9070
      %v9093 = vpack.c.b16 %v9073, %v9071
      %v9094 = vpack.c.b16 %v9076, %v9074
      %v9095 = vpack.c.b16 %v9077, %v9075
      %v9096 = vpack.c.b16 %v9080, %v9078
      %v9097 = vpack.c.b16 %v9081, %v9079
      %v9098 = vpack.c.b16 %v9082, %v9082
      %v9099 = vpack.c.b16 %v9083, %v9083
      %v9109 = vsel %vm8898, %v9085, 0
      %v9112 = vsel %vm8898, %v9087, 0
      %v9115 = vsel %vm8898, %v9089, 0
      %v9118 = vsel %vm8898, %v9091, 0
      %v9121 = vsel %vm8898, %v9093, 0
      %v9124 = vsel %vm8898, %v9095, 0
      %v9127 = vsel %vm8898, %v9097, 0
      %v9130 = vsel %vm8898, %v9099, 0
      %9132 = vmatpush.bf16.msra.mxu0 %v8806
      %9133 = vmatpush.bf16.msra.mxu0 %v8805
      %9134 = vmatpush.bf16.msra.mxu0 %v8804
      %9135 = vmatpush.bf16.msra.mxu0 %v8803
      %9136 = vmatpush.bf16.msra.mxu0 %v8802
      %9137 = vmatpush.bf16.msra.mxu0 %v8801
      %9138 = vmatpush.bf16.msra.mxu0 %v8800
      %9139 = vmatpush.bf16.msra.mxu0 %v8799
      %9140 = vmatmul.bf16.gmra.mxu0 %v9084
      %v9141 = vpop.f32.mrf.mxu0
      %v9142 = vadd.f32 0.0, %v9141
      %v9143 = vpop.f32.mrf.mxu0
      %v9144 = vadd.f32 0.0, %v9143
      %9145 = vmatmul.bf16.gmra.mxu0 %v9086
      %v9146 = vpop.f32.mrf.mxu0
      %v9147 = vadd.f32 0.0, %v9146
      %v9148 = vpop.f32.mrf.mxu0
      %v9149 = vadd.f32 0.0, %v9148
      %9150 = vmatmul.bf16.gmra.mxu0 %v9088
      %v9151 = vpop.f32.mrf.mxu0
      %v9152 = vadd.f32 0.0, %v9151
      %v9153 = vpop.f32.mrf.mxu0
      %v9154 = vadd.f32 0.0, %v9153
      %9155 = vmatmul.bf16.gmra.mxu0 %v9090
      %v9156 = vpop.f32.mrf.mxu0
      %v9157 = vadd.f32 0.0, %v9156
      %v9158 = vpop.f32.mrf.mxu0
      %v9159 = vadd.f32 0.0, %v9158
      %9160 = vmatmul.bf16.gmra.mxu0 %v9092
      %v9161 = vpop.f32.mrf.mxu0
      %v9162 = vadd.f32 0.0, %v9161
      %v9163 = vpop.f32.mrf.mxu0
      %v9164 = vadd.f32 0.0, %v9163
      %9165 = vmatmul.bf16.gmra.mxu0 %v9094
      %v9166 = vpop.f32.mrf.mxu0
      %v9167 = vadd.f32 0.0, %v9166
      %v9168 = vpop.f32.mrf.mxu0
      %v9169 = vadd.f32 0.0, %v9168
      %9170 = vmatmul.bf16.gmra.mxu0 %v9096
      %v9171 = vpop.f32.mrf.mxu0
      %v9172 = vadd.f32 0.0, %v9171
      %v9173 = vpop.f32.mrf.mxu0
      %v9174 = vadd.f32 0.0, %v9173
      %9175 = vmatmul.bf16.gmra.mxu0 %v9098
      %v9176 = vpop.f32.mrf.mxu0
      %v9177 = vadd.f32 0.0, %v9176
      %v9178 = vpop.f32.mrf.mxu0
      %9179 = vdwg.mxu0
      %9180 = vmatpush.bf16.msra.mxu0 0
      %9181 = vmatpush.bf16.msra.mxu0 %v8813
      %9182 = vmatpush.bf16.msra.mxu0 %v8812
      %9183 = vmatpush.bf16.msra.mxu0 %v8811
      %9184 = vmatpush.bf16.msra.mxu0 %v8810
      %9185 = vmatpush.bf16.msra.mxu0 %v8809
      %9186 = vmatpush.bf16.msra.mxu0 %v8808
      %9187 = vmatpush.bf16.msra.mxu0 %v8807
      %9188 = vmatmul.bf16.gmra.mxu0 %v9109
      %v9189 = vpop.f32.mrf.mxu0
      %v9190 = vadd.f32 %v9142, %v9189
      %v9191 = vpop.f32.mrf.mxu0
      %v9192 = vadd.f32 %v9144, %v9191
      %9193 = vmatmul.bf16.gmra.mxu0 %v9112
      %v9194 = vpop.f32.mrf.mxu0
      %v9195 = vadd.f32 %v9147, %v9194
      %v9196 = vpop.f32.mrf.mxu0
      %v9197 = vadd.f32 %v9149, %v9196
      %9198 = vmatmul.bf16.gmra.mxu0 %v9115
      %v9199 = vpop.f32.mrf.mxu0
      %v9200 = vadd.f32 %v9152, %v9199
      %v9201 = vpop.f32.mrf.mxu0
      %v9202 = vadd.f32 %v9154, %v9201
      %9203 = vmatmul.bf16.gmra.mxu0 %v9118
      %v9204 = vpop.f32.mrf.mxu0
      %v9205 = vadd.f32 %v9157, %v9204
      %v9206 = vpop.f32.mrf.mxu0
      %v9207 = vadd.f32 %v9159, %v9206
      %9208 = vmatmul.bf16.gmra.mxu0 %v9121
      %v9209 = vpop.f32.mrf.mxu0
      %v9210 = vadd.f32 %v9162, %v9209
      %v9211 = vpop.f32.mrf.mxu0
      %v9212 = vadd.f32 %v9164, %v9211
      %9213 = vmatmul.bf16.gmra.mxu0 %v9124
      %v9214 = vpop.f32.mrf.mxu0
      %v9215 = vadd.f32 %v9167, %v9214
      %v9216 = vpop.f32.mrf.mxu0
      %v9217 = vadd.f32 %v9169, %v9216
      %9218 = vmatmul.bf16.gmra.mxu0 %v9127
      %v9219 = vpop.f32.mrf.mxu0
      %v9220 = vadd.f32 %v9172, %v9219
      %v9221 = vpop.f32.mrf.mxu0
      %v9222 = vadd.f32 %v9174, %v9221
      %9223 = vmatmul.bf16.gmra.mxu0 %v9130
      %v9224 = vpop.f32.mrf.mxu0
      %v9225 = vadd.f32 %v9177, %v9224
      %v9226 = vpop.f32.mrf.mxu0
      %9227 = vdwg.mxu0
      %s9228 = scalar_lea.vmem %s65, 32
      %v9229 = vld [vmem:[%s9228] sm:$0xff]
      %v9230 = vld [vmem:[%s9228 + $0x8] sm:$0xff]
      %v9231 = vld [vmem:[%s9228 + $0x10] sm:$0xff]
      %v9232 = vld [vmem:[%s9228 + $0x18] sm:$0x3f]
      %v9234 = vsel %vm1224, %v9190, 0
      %v9237 = vsel %vm1224, %v9192, 0
      %v9240 = vsel %vm1224, %v9195, 0
      %v9243 = vsel %vm1224, %v9197, 0
      %v9246 = vsel %vm1224, %v9200, 0
      %v9249 = vsel %vm1224, %v9202, 0
      %v9252 = vsel %vm1224, %v9205, 0
      %v9255 = vsel %vm1224, %v9207, 0
      %v9258 = vsel %vm1224, %v9210, 0
      %v9261 = vsel %vm1224, %v9212, 0
      %v9264 = vsel %vm1224, %v9215, 0
      %v9267 = vsel %vm1224, %v9217, 0
      %v9270 = vsel %vm1224, %v9220, 0
      %v9273 = vsel %vm1224, %v9222, 0
      %v9276 = vsel %vm1224, %v9225, 0
      %v9279 = vsel %vm1481, %v9232, 0
      %9281 = vmatpush.msra.mxu0 0.0
      %9282 = vmatpush.msra.mxu0 0.0
      %9283 = vmatpush.msra.mxu0 0.0
      %9284 = vmatpush.msra.mxu0 0.0
      %9285 = vmatpush.msra.mxu0 0.0
      %9286 = vmatpush.msra.mxu0 0.0
      %9287 = vmatpush.msra.mxu0 0.0
      %9288 = vmatpush.msra.mxu0 0.0
      %9289 = vmatpush.msra.mxu0 0.0
      %9290 = vmatpush.msra.mxu0 0.0
      %9291 = vmatpush.msra.mxu0 0.0
      %9292 = vmatpush.msra.mxu0 0.0
      %9293 = vmatpush.msra.mxu0 %v9279
      %9294 = vmatpush.msra.mxu0 %v9231
      %9295 = vmatpush.msra.mxu0 %v9230
      %9296 = vmatpush.msra.mxu0 %v9229
      %9297 = vmatmul.f32.gmra.mxu0 %v9234
      %v9298 = vpop.f32.mrf.mxu0
      %v9299 = vadd.f32 0.0, %v9298
      %9300 = vmatmul.f32.gmra.mxu0 %v9237
      %v9301 = vpop.f32.mrf.mxu0
      %v9302 = vadd.f32 0.0, %v9301
      %9303 = vmatmul.f32.gmra.mxu0 %v9240
      %v9304 = vpop.f32.mrf.mxu0
      %v9305 = vadd.f32 0.0, %v9304
      %9306 = vmatmul.f32.gmra.mxu0 %v9243
      %v9307 = vpop.f32.mrf.mxu0
      %v9308 = vadd.f32 0.0, %v9307
      %9309 = vmatmul.f32.gmra.mxu0 %v9246
      %v9310 = vpop.f32.mrf.mxu0
      %v9311 = vadd.f32 0.0, %v9310
      %9312 = vmatmul.f32.gmra.mxu0 %v9249
      %v9313 = vpop.f32.mrf.mxu0
      %v9314 = vadd.f32 0.0, %v9313
      %9315 = vmatmul.f32.gmra.mxu0 %v9252
      %v9316 = vpop.f32.mrf.mxu0
      %v9317 = vadd.f32 0.0, %v9316
      %9318 = vmatmul.f32.gmra.mxu0 %v9255
      %v9319 = vpop.f32.mrf.mxu0
      %v9320 = vadd.f32 0.0, %v9319
      %9321 = vmatmul.f32.gmra.mxu0 %v9258
      %v9322 = vpop.f32.mrf.mxu0
      %v9323 = vadd.f32 0.0, %v9322
      %9324 = vmatmul.f32.gmra.mxu0 %v9261
      %v9325 = vpop.f32.mrf.mxu0
      %v9326 = vadd.f32 0.0, %v9325
      %9327 = vmatmul.f32.gmra.mxu0 %v9264
      %v9328 = vpop.f32.mrf.mxu0
      %v9329 = vadd.f32 0.0, %v9328
      %9330 = vmatmul.f32.gmra.mxu0 %v9267
      %v9331 = vpop.f32.mrf.mxu0
      %v9332 = vadd.f32 0.0, %v9331
      %9333 = vmatmul.f32.gmra.mxu0 %v9270
      %v9334 = vpop.f32.mrf.mxu0
      %v9335 = vadd.f32 0.0, %v9334
      %9336 = vmatmul.f32.gmra.mxu0 %v9273
      %v9337 = vpop.f32.mrf.mxu0
      %v9338 = vadd.f32 0.0, %v9337
      %9339 = vmatmul.f32.gmra.mxu0 %v9276
      %v9340 = vpop.f32.mrf.mxu0
      %v9341 = vadd.f32 0.0, %v9340
      %9342 = vdwg.mxu0
      %v9344 = vsel %vm1224, %v8981, 0
      %v9347 = vsel %vm1224, %v8983, 0
      %v9350 = vsel %vm1224, %v8986, 0
      %v9353 = vsel %vm1224, %v8988, 0
      %v9356 = vsel %vm1224, %v8991, 0
      %v9359 = vsel %vm1224, %v8993, 0
      %v9362 = vsel %vm1224, %v8996, 0
      %v9365 = vsel %vm1224, %v8998, 0
      %v9368 = vsel %vm1224, %v9001, 0
      %v9371 = vsel %vm1224, %v9003, 0
      %v9374 = vsel %vm1224, %v9006, 0
      %v9377 = vsel %vm1224, %v9008, 0
      %v9380 = vsel %vm1224, %v9011, 0
      %v9383 = vsel %vm1224, %v9013, 0
      %v9386 = vsel %vm1224, %v9016, 0
      %v9389 = vsel %vm1481, %v9022, 0
      %9391 = vmatpush.msra.mxu0 0.0
      %9392 = vmatpush.msra.mxu0 0.0
      %9393 = vmatpush.msra.mxu0 0.0
      %9394 = vmatpush.msra.mxu0 0.0
      %9395 = vmatpush.msra.mxu0 0.0
      %9396 = vmatpush.msra.mxu0 0.0
      %9397 = vmatpush.msra.mxu0 0.0
      %9398 = vmatpush.msra.mxu0 0.0
      %9399 = vmatpush.msra.mxu0 0.0
      %9400 = vmatpush.msra.mxu0 0.0
      %9401 = vmatpush.msra.mxu0 0.0
      %9402 = vmatpush.msra.mxu0 0.0
      %9403 = vmatpush.msra.mxu0 %v9389
      %9404 = vmatpush.msra.mxu0 %v9021
      %9405 = vmatpush.msra.mxu0 %v9020
      %9406 = vmatpush.msra.mxu0 %v9019
      %9407 = vmatmul.f32.gmra.mxu0 %v9344
      %v9408 = vpop.f32.mrf.mxu0
      %v9409 = vadd.f32 %v9299, %v9408
      %9410 = vmatmul.f32.gmra.mxu0 %v9347
      %v9411 = vpop.f32.mrf.mxu0
      %v9412 = vadd.f32 %v9302, %v9411
      %9413 = vmatmul.f32.gmra.mxu0 %v9350
      %v9414 = vpop.f32.mrf.mxu0
      %v9415 = vadd.f32 %v9305, %v9414
      %9416 = vmatmul.f32.gmra.mxu0 %v9353
      %v9417 = vpop.f32.mrf.mxu0
      %v9418 = vadd.f32 %v9308, %v9417
      %9419 = vmatmul.f32.gmra.mxu0 %v9356
      %v9420 = vpop.f32.mrf.mxu0
      %v9421 = vadd.f32 %v9311, %v9420
      %9422 = vmatmul.f32.gmra.mxu0 %v9359
      %v9423 = vpop.f32.mrf.mxu0
      %v9424 = vadd.f32 %v9314, %v9423
      %9425 = vmatmul.f32.gmra.mxu0 %v9362
      %v9426 = vpop.f32.mrf.mxu0
      %v9427 = vadd.f32 %v9317, %v9426
      %9428 = vmatmul.f32.gmra.mxu0 %v9365
      %v9429 = vpop.f32.mrf.mxu0
      %v9430 = vadd.f32 %v9320, %v9429
      %9431 = vmatmul.f32.gmra.mxu0 %v9368
      %v9432 = vpop.f32.mrf.mxu0
      %v9433 = vadd.f32 %v9323, %v9432
      %9434 = vmatmul.f32.gmra.mxu0 %v9371
      %v9435 = vpop.f32.mrf.mxu0
      %v9436 = vadd.f32 %v9326, %v9435
      %9437 = vmatmul.f32.gmra.mxu0 %v9374
      %v9438 = vpop.f32.mrf.mxu0
      %v9439 = vadd.f32 %v9329, %v9438
      %9440 = vmatmul.f32.gmra.mxu0 %v9377
      %v9441 = vpop.f32.mrf.mxu0
      %v9442 = vadd.f32 %v9332, %v9441
      %9443 = vmatmul.f32.gmra.mxu0 %v9380
      %v9444 = vpop.f32.mrf.mxu0
      %v9445 = vadd.f32 %v9335, %v9444
      %9446 = vmatmul.f32.gmra.mxu0 %v9383
      %v9447 = vpop.f32.mrf.mxu0
      %v9448 = vadd.f32 %v9338, %v9447
      %9449 = vmatmul.f32.gmra.mxu0 %v9386
      %v9450 = vpop.f32.mrf.mxu0
      %v9451 = vadd.f32 %v9341, %v9450
      %9452 = vdwg.mxu0
      %s9453 = scalar_lea.vmem %s63, 240
      %v9454 = vld [vmem:[%s9453] sm:$0xff]
      %v9455 = vld [vmem:[%s9453 + $0x8] sm:$0xff]
      %v9456 = vld [vmem:[%s9453 + $0x10] sm:$0xff]
      %v9457 = vld [vmem:[%s9453 + $0x18] sm:$0xff]
      %v9458 = vld [vmem:[%s9453 + $0x20] sm:$0xff]
      %v9459 = vld [vmem:[%s9453 + $0x28] sm:$0xff]
      %v9460 = vld [vmem:[%s9453 + $0x30] sm:$0xff]
      %v9461 = vld [vmem:[%s9453 + $0x38] sm:$0xff]
      %v9462 = vld [vmem:[%s9453 + $0x40] sm:$0xff]
      %v9463 = vld [vmem:[%s9453 + $0x48] sm:$0xff]
      %v9464 = vld [vmem:[%s9453 + $0x50] sm:$0xff]
      %v9465 = vld [vmem:[%s9453 + $0x58] sm:$0xff]
      %v9466 = vld [vmem:[%s9453 + $0x60] sm:$0xff]
      %v9467 = vld [vmem:[%s9453 + $0x68] sm:$0xff]
      %v9468 = vld [vmem:[%s9453 + $0x70] sm:$0xff]
      %v9484 = vunpack.c.l.b16 %v9454
      %v9485 = vunpack.c.h.b16 %v9454
      %v9486 = vunpack.c.l.b16 %v9455
      %v9487 = vunpack.c.h.b16 %v9455
      %v9488 = vunpack.c.l.b16 %v9456
      %v9489 = vunpack.c.h.b16 %v9456
      %v9490 = vunpack.c.l.b16 %v9457
      %v9491 = vunpack.c.h.b16 %v9457
      %v9492 = vunpack.c.l.b16 %v9458
      %v9493 = vunpack.c.h.b16 %v9458
      %v9494 = vunpack.c.l.b16 %v9459
      %v9495 = vunpack.c.h.b16 %v9459
      %v9496 = vunpack.c.l.b16 %v9460
      %v9497 = vunpack.c.h.b16 %v9460
      %v9498 = vunpack.c.l.b16 %v9461
      %v9499 = vunpack.c.h.b16 %v9461
      %v9500 = vunpack.c.l.b16 %v9462
      %v9501 = vunpack.c.h.b16 %v9462
      %v9502 = vunpack.c.l.b16 %v9463
      %v9503 = vunpack.c.h.b16 %v9463
      %v9504 = vunpack.c.l.b16 %v9464
      %v9505 = vunpack.c.h.b16 %v9464
      %v9506 = vunpack.c.l.b16 %v9465
      %v9507 = vunpack.c.h.b16 %v9465
      %v9508 = vunpack.c.l.b16 %v9466
      %v9509 = vunpack.c.h.b16 %v9466
      %v9510 = vunpack.c.l.b16 %v9467
      %v9511 = vunpack.c.h.b16 %v9467
      %v9512 = vunpack.c.l.b16 %v9468
      %v9513 = vunpack.c.h.b16 %v9468
      %v9514 = vpack.c.b16 %v9486, %v9484
      %v9515 = vpack.c.b16 %v9487, %v9485
      %v9516 = vpack.c.b16 %v9490, %v9488
      %v9517 = vpack.c.b16 %v9491, %v9489
      %v9518 = vpack.c.b16 %v9494, %v9492
      %v9519 = vpack.c.b16 %v9495, %v9493
      %v9520 = vpack.c.b16 %v9498, %v9496
      %v9521 = vpack.c.b16 %v9499, %v9497
      %v9522 = vpack.c.b16 %v9502, %v9500
      %v9523 = vpack.c.b16 %v9503, %v9501
      %v9524 = vpack.c.b16 %v9506, %v9504
      %v9525 = vpack.c.b16 %v9507, %v9505
      %v9526 = vpack.c.b16 %v9510, %v9508
      %v9527 = vpack.c.b16 %v9511, %v9509
      %v9528 = vpack.c.b16 %v9512, %v9512
      %v9529 = vpack.c.b16 %v9513, %v9513
      %v9539 = vsel %vm8898, %v9515, 0
      %v9542 = vsel %vm8898, %v9517, 0
      %v9545 = vsel %vm8898, %v9519, 0
      %v9548 = vsel %vm8898, %v9521, 0
      %v9551 = vsel %vm8898, %v9523, 0
      %v9554 = vsel %vm8898, %v9525, 0
      %v9557 = vsel %vm8898, %v9527, 0
      %v9560 = vsel %vm8898, %v9529, 0
      %9562 = vmatpush.bf16.msra.mxu0 %v8806
      %9563 = vmatpush.bf16.msra.mxu0 %v8805
      %9564 = vmatpush.bf16.msra.mxu0 %v8804
      %9565 = vmatpush.bf16.msra.mxu0 %v8803
      %9566 = vmatpush.bf16.msra.mxu0 %v8802
      %9567 = vmatpush.bf16.msra.mxu0 %v8801
      %9568 = vmatpush.bf16.msra.mxu0 %v8800
      %9569 = vmatpush.bf16.msra.mxu0 %v8799
      %9570 = vmatmul.bf16.gmra.mxu0 %v9514
      %v9571 = vpop.f32.mrf.mxu0
      %v9572 = vadd.f32 0.0, %v9571
      %v9573 = vpop.f32.mrf.mxu0
      %v9574 = vadd.f32 0.0, %v9573
      %9575 = vmatmul.bf16.gmra.mxu0 %v9516
      %v9576 = vpop.f32.mrf.mxu0
      %v9577 = vadd.f32 0.0, %v9576
      %v9578 = vpop.f32.mrf.mxu0
      %v9579 = vadd.f32 0.0, %v9578
      %9580 = vmatmul.bf16.gmra.mxu0 %v9518
      %v9581 = vpop.f32.mrf.mxu0
      %v9582 = vadd.f32 0.0, %v9581
      %v9583 = vpop.f32.mrf.mxu0
      %v9584 = vadd.f32 0.0, %v9583
      %9585 = vmatmul.bf16.gmra.mxu0 %v9520
      %v9586 = vpop.f32.mrf.mxu0
      %v9587 = vadd.f32 0.0, %v9586
      %v9588 = vpop.f32.mrf.mxu0
      %v9589 = vadd.f32 0.0, %v9588
      %9590 = vmatmul.bf16.gmra.mxu0 %v9522
      %v9591 = vpop.f32.mrf.mxu0
      %v9592 = vadd.f32 0.0, %v9591
      %v9593 = vpop.f32.mrf.mxu0
      %v9594 = vadd.f32 0.0, %v9593
      %9595 = vmatmul.bf16.gmra.mxu0 %v9524
      %v9596 = vpop.f32.mrf.mxu0
      %v9597 = vadd.f32 0.0, %v9596
      %v9598 = vpop.f32.mrf.mxu0
      %v9599 = vadd.f32 0.0, %v9598
      %9600 = vmatmul.bf16.gmra.mxu0 %v9526
      %v9601 = vpop.f32.mrf.mxu0
      %v9602 = vadd.f32 0.0, %v9601
      %v9603 = vpop.f32.mrf.mxu0
      %v9604 = vadd.f32 0.0, %v9603
      %9605 = vmatmul.bf16.gmra.mxu0 %v9528
      %v9606 = vpop.f32.mrf.mxu0
      %v9607 = vadd.f32 0.0, %v9606
      %v9608 = vpop.f32.mrf.mxu0
      %9609 = vdwg.mxu0
      %9610 = vmatpush.bf16.msra.mxu0 0
      %9611 = vmatpush.bf16.msra.mxu0 %v8813
      %9612 = vmatpush.bf16.msra.mxu0 %v8812
      %9613 = vmatpush.bf16.msra.mxu0 %v8811
      %9614 = vmatpush.bf16.msra.mxu0 %v8810
      %9615 = vmatpush.bf16.msra.mxu0 %v8809
      %9616 = vmatpush.bf16.msra.mxu0 %v8808
      %9617 = vmatpush.bf16.msra.mxu0 %v8807
      %9618 = vmatmul.bf16.gmra.mxu0 %v9539
      %v9619 = vpop.f32.mrf.mxu0
      %v9620 = vadd.f32 %v9572, %v9619
      %v9621 = vpop.f32.mrf.mxu0
      %v9622 = vadd.f32 %v9574, %v9621
      %9623 = vmatmul.bf16.gmra.mxu0 %v9542
      %v9624 = vpop.f32.mrf.mxu0
      %v9625 = vadd.f32 %v9577, %v9624
      %v9626 = vpop.f32.mrf.mxu0
      %v9627 = vadd.f32 %v9579, %v9626
      %9628 = vmatmul.bf16.gmra.mxu0 %v9545
      %v9629 = vpop.f32.mrf.mxu0
      %v9630 = vadd.f32 %v9582, %v9629
      %v9631 = vpop.f32.mrf.mxu0
      %v9632 = vadd.f32 %v9584, %v9631
      %9633 = vmatmul.bf16.gmra.mxu0 %v9548
      %v9634 = vpop.f32.mrf.mxu0
      %v9635 = vadd.f32 %v9587, %v9634
      %v9636 = vpop.f32.mrf.mxu0
      %v9637 = vadd.f32 %v9589, %v9636
      %9638 = vmatmul.bf16.gmra.mxu0 %v9551
      %v9639 = vpop.f32.mrf.mxu0
      %v9640 = vadd.f32 %v9592, %v9639
      %v9641 = vpop.f32.mrf.mxu0
      %v9642 = vadd.f32 %v9594, %v9641
      %9643 = vmatmul.bf16.gmra.mxu0 %v9554
      %v9644 = vpop.f32.mrf.mxu0
      %v9645 = vadd.f32 %v9597, %v9644
      %v9646 = vpop.f32.mrf.mxu0
      %v9647 = vadd.f32 %v9599, %v9646
      %9648 = vmatmul.bf16.gmra.mxu0 %v9557
      %v9649 = vpop.f32.mrf.mxu0
      %v9650 = vadd.f32 %v9602, %v9649
      %v9651 = vpop.f32.mrf.mxu0
      %v9652 = vadd.f32 %v9604, %v9651
      %9653 = vmatmul.bf16.gmra.mxu0 %v9560
      %v9654 = vpop.f32.mrf.mxu0
      %v9655 = vadd.f32 %v9607, %v9654
      %v9656 = vpop.f32.mrf.mxu0
      %9657 = vdwg.mxu0
      %s9658 = scalar_lea.vmem %s65, 64
      %v9659 = vld [vmem:[%s9658] sm:$0xff]
      %v9660 = vld [vmem:[%s9658 + $0x8] sm:$0xff]
      %v9661 = vld [vmem:[%s9658 + $0x10] sm:$0xff]
      %v9662 = vld [vmem:[%s9658 + $0x18] sm:$0x3f]
      %v9664 = vsel %vm1224, %v9620, 0
      %v9667 = vsel %vm1224, %v9622, 0
      %v9670 = vsel %vm1224, %v9625, 0
      %v9673 = vsel %vm1224, %v9627, 0
      %v9676 = vsel %vm1224, %v9630, 0
      %v9679 = vsel %vm1224, %v9632, 0
      %v9682 = vsel %vm1224, %v9635, 0
      %v9685 = vsel %vm1224, %v9637, 0
      %v9688 = vsel %vm1224, %v9640, 0
      %v9691 = vsel %vm1224, %v9642, 0
      %v9694 = vsel %vm1224, %v9645, 0
      %v9697 = vsel %vm1224, %v9647, 0
      %v9700 = vsel %vm1224, %v9650, 0
      %v9703 = vsel %vm1224, %v9652, 0
      %v9706 = vsel %vm1224, %v9655, 0
      %v9709 = vsel %vm1481, %v9662, 0
      %9711 = vmatpush.msra.mxu0 0.0
      %9712 = vmatpush.msra.mxu0 0.0
      %9713 = vmatpush.msra.mxu0 0.0
      %9714 = vmatpush.msra.mxu0 0.0
      %9715 = vmatpush.msra.mxu0 0.0
      %9716 = vmatpush.msra.mxu0 0.0
      %9717 = vmatpush.msra.mxu0 0.0
      %9718 = vmatpush.msra.mxu0 0.0
      %9719 = vmatpush.msra.mxu0 0.0
      %9720 = vmatpush.msra.mxu0 0.0
      %9721 = vmatpush.msra.mxu0 0.0
      %9722 = vmatpush.msra.mxu0 0.0
      %9723 = vmatpush.msra.mxu0 %v9709
      %9724 = vmatpush.msra.mxu0 %v9661
      %9725 = vmatpush.msra.mxu0 %v9660
      %9726 = vmatpush.msra.mxu0 %v9659
      %9727 = vmatmul.f32.gmra.mxu0 %v9664
      %v9728 = vpop.f32.mrf.mxu0
      %v9729 = vadd.f32 0.0, %v9728
      %9730 = vmatmul.f32.gmra.mxu0 %v9667
      %v9731 = vpop.f32.mrf.mxu0
      %v9732 = vadd.f32 0.0, %v9731
      %9733 = vmatmul.f32.gmra.mxu0 %v9670
      %v9734 = vpop.f32.mrf.mxu0
      %v9735 = vadd.f32 0.0, %v9734
      %9736 = vmatmul.f32.gmra.mxu0 %v9673
      %v9737 = vpop.f32.mrf.mxu0
      %v9738 = vadd.f32 0.0, %v9737
      %9739 = vmatmul.f32.gmra.mxu0 %v9676
      %v9740 = vpop.f32.mrf.mxu0
      %v9741 = vadd.f32 0.0, %v9740
      %9742 = vmatmul.f32.gmra.mxu0 %v9679
      %v9743 = vpop.f32.mrf.mxu0
      %v9744 = vadd.f32 0.0, %v9743
      %9745 = vmatmul.f32.gmra.mxu0 %v9682
      %v9746 = vpop.f32.mrf.mxu0
      %v9747 = vadd.f32 0.0, %v9746
      %9748 = vmatmul.f32.gmra.mxu0 %v9685
      %v9749 = vpop.f32.mrf.mxu0
      %v9750 = vadd.f32 0.0, %v9749
      %9751 = vmatmul.f32.gmra.mxu0 %v9688
      %v9752 = vpop.f32.mrf.mxu0
      %v9753 = vadd.f32 0.0, %v9752
      %9754 = vmatmul.f32.gmra.mxu0 %v9691
      %v9755 = vpop.f32.mrf.mxu0
      %v9756 = vadd.f32 0.0, %v9755
      %9757 = vmatmul.f32.gmra.mxu0 %v9694
      %v9758 = vpop.f32.mrf.mxu0
      %v9759 = vadd.f32 0.0, %v9758
      %9760 = vmatmul.f32.gmra.mxu0 %v9697
      %v9761 = vpop.f32.mrf.mxu0
      %v9762 = vadd.f32 0.0, %v9761
      %9763 = vmatmul.f32.gmra.mxu0 %v9700
      %v9764 = vpop.f32.mrf.mxu0
      %v9765 = vadd.f32 0.0, %v9764
      %9766 = vmatmul.f32.gmra.mxu0 %v9703
      %v9767 = vpop.f32.mrf.mxu0
      %v9768 = vadd.f32 0.0, %v9767
      %9769 = vmatmul.f32.gmra.mxu0 %v9706
      %v9770 = vpop.f32.mrf.mxu0
      %v9771 = vadd.f32 0.0, %v9770
      %9772 = vdwg.mxu0
      %v9773 = vadd.f32 %v9409, %v9729
      %v9774 = vadd.f32 %v9412, %v9732
      %v9775 = vadd.f32 %v9415, %v9735
      %v9776 = vadd.f32 %v9418, %v9738
      %v9777 = vadd.f32 %v9421, %v9741
      %v9778 = vadd.f32 %v9424, %v9744
      %v9779 = vadd.f32 %v9427, %v9747
      %v9780 = vadd.f32 %v9430, %v9750
      %v9781 = vadd.f32 %v9433, %v9753
      %v9782 = vadd.f32 %v9436, %v9756
      %v9783 = vadd.f32 %v9439, %v9759
      %v9784 = vadd.f32 %v9442, %v9762
      %v9785 = vadd.f32 %v9445, %v9765
      %v9786 = vadd.f32 %v9448, %v9768
      %v9787 = vadd.f32 %v9451, %v9771
      %v9788 = vld [vmem:[%s67] sm:$0xff]
      %v9789 = vld [vmem:[%s67 + $0x8] sm:$0xff]
      %v9790 = vld [vmem:[%s67 + $0x10] sm:$0xff]
      %v9791 = vld [vmem:[%s67 + $0x18] sm:$0xff]
      %v9792 = vld [vmem:[%s67 + $0x20] sm:$0xff]
      %v9793 = vld [vmem:[%s67 + $0x28] sm:$0xff]
      %v9794 = vld [vmem:[%s67 + $0x30] sm:$0xff]
      %v9795 = vld [vmem:[%s67 + $0x38] sm:$0xff]
      %v9796 = vld [vmem:[%s67 + $0x40] sm:$0xff]
      %v9797 = vld [vmem:[%s67 + $0x48] sm:$0xff]
      %v9798 = vld [vmem:[%s67 + $0x50] sm:$0xff]
      %v9799 = vld [vmem:[%s67 + $0x58] sm:$0xff]
      %v9800 = vld [vmem:[%s67 + $0x60] sm:$0xff]
      %v9801 = vld [vmem:[%s67 + $0x68] sm:$0xff]
      %v9802 = vld [vmem:[%s67 + $0x70] sm:$0xff]
      %9804 = vset.pattern.permute.xlu0 0
      %9805 = vperm.xlu0 %9804, %v9788
      %v9806 = vpop.permute.xlu0 %9805
      %9809 = vset.pattern.permute.xlu0 0
      %9810 = vperm.xlu0 %9809, %v9789
      %v9811 = vpop.permute.xlu0 %9810
      %9814 = vset.pattern.permute.xlu0 0
      %9815 = vperm.xlu0 %9814, %v9790
      %v9816 = vpop.permute.xlu0 %9815
      %9819 = vset.pattern.permute.xlu0 0
      %9820 = vperm.xlu0 %9819, %v9791
      %v9821 = vpop.permute.xlu0 %9820
      %9824 = vset.pattern.permute.xlu0 0
      %9825 = vperm.xlu0 %9824, %v9792
      %v9826 = vpop.permute.xlu0 %9825
      %9829 = vset.pattern.permute.xlu0 0
      %9830 = vperm.xlu0 %9829, %v9793
      %v9831 = vpop.permute.xlu0 %9830
      %9834 = vset.pattern.permute.xlu0 0
      %9835 = vperm.xlu0 %9834, %v9794
      %v9836 = vpop.permute.xlu0 %9835
      %9839 = vset.pattern.permute.xlu0 0
      %9840 = vperm.xlu0 %9839, %v9795
      %v9841 = vpop.permute.xlu0 %9840
      %9844 = vset.pattern.permute.xlu0 0
      %9845 = vperm.xlu0 %9844, %v9796
      %v9846 = vpop.permute.xlu0 %9845
      %9849 = vset.pattern.permute.xlu0 0
      %9850 = vperm.xlu0 %9849, %v9797
      %v9851 = vpop.permute.xlu0 %9850
      %9854 = vset.pattern.permute.xlu0 0
      %9855 = vperm.xlu0 %9854, %v9798
      %v9856 = vpop.permute.xlu0 %9855
      %9859 = vset.pattern.permute.xlu0 0
      %9860 = vperm.xlu0 %9859, %v9799
      %v9861 = vpop.permute.xlu0 %9860
      %9864 = vset.pattern.permute.xlu0 0
      %9865 = vperm.xlu0 %9864, %v9800
      %v9866 = vpop.permute.xlu0 %9865
      %9869 = vset.pattern.permute.xlu0 0
      %9870 = vperm.xlu0 %9869, %v9801
      %v9871 = vpop.permute.xlu0 %9870
      %9874 = vset.pattern.permute.xlu0 0
      %9875 = vperm.xlu0 %9874, %v9802
      %v9876 = vpop.permute.xlu0 %9875
      %v9878 = vadd.f32 %v9773, %v9806
      %v9879 = vadd.f32 %v9774, %v9811
      %v9880 = vadd.f32 %v9775, %v9816
      %v9881 = vadd.f32 %v9776, %v9821
      %v9882 = vadd.f32 %v9777, %v9826
      %v9883 = vadd.f32 %v9778, %v9831
      %v9884 = vadd.f32 %v9779, %v9836
      %v9885 = vadd.f32 %v9780, %v9841
      %v9886 = vadd.f32 %v9781, %v9846
      %v9887 = vadd.f32 %v9782, %v9851
      %v9888 = vadd.f32 %v9783, %v9856
      %v9889 = vadd.f32 %v9784, %v9861
      %v9890 = vadd.f32 %v9785, %v9866
      %v9891 = vadd.f32 %v9786, %v9871
      %v9892 = vadd.f32 %v9787, %v9876
      %v9893 = vmax.f32 %v9878, 0.0
      %v9894 = vmax.f32 %v9879, 0.0
      %v9895 = vmax.f32 %v9880, 0.0
      %v9896 = vmax.f32 %v9881, 0.0
      %v9897 = vmax.f32 %v9882, 0.0
      %v9898 = vmax.f32 %v9883, 0.0
      %v9899 = vmax.f32 %v9884, 0.0
      %v9900 = vmax.f32 %v9885, 0.0
      %v9901 = vmax.f32 %v9886, 0.0
      %v9902 = vmax.f32 %v9887, 0.0
      %v9903 = vmax.f32 %v9888, 0.0
      %v9904 = vmax.f32 %v9889, 0.0
      %v9905 = vmax.f32 %v9890, 0.0
      %v9906 = vmax.f32 %v9891, 0.0
      %v9907 = vmax.f32 %v9892, 0.0
      %v9908 = vld [vmem:[%s69] sm:$0xff]
      %v9909 = vld [vmem:[%s69 + $0x8] sm:$0xff]
      %v9910 = vld [vmem:[%s69 + $0x10] sm:$0xff]
      %v9911 = vld [vmem:[%s69 + $0x18] sm:$0xff]
      %v9912 = vld [vmem:[%s69 + $0x20] sm:$0xff]
      %v9913 = vld [vmem:[%s69 + $0x28] sm:$0xff]
      %v9914 = vld [vmem:[%s69 + $0x30] sm:$0xff]
      %v9915 = vld [vmem:[%s69 + $0x38] sm:$0xff]
      %v9916 = vld [vmem:[%s69 + $0x40] sm:$0xff]
      %v9917 = vld [vmem:[%s69 + $0x48] sm:$0xff]
      %v9918 = vld [vmem:[%s69 + $0x50] sm:$0xff]
      %v9919 = vld [vmem:[%s69 + $0x58] sm:$0xff]
      %v9920 = vld [vmem:[%s69 + $0x60] sm:$0xff]
      %v9921 = vld [vmem:[%s69 + $0x68] sm:$0xff]
      %v9922 = vld [vmem:[%s69 + $0x70] sm:$0xff]
      %v9923 = vmul.f32 %v9893, %v9908
      %v9924 = vmul.f32 %v9894, %v9909
      %v9925 = vmul.f32 %v9895, %v9910
      %v9926 = vmul.f32 %v9896, %v9911
      %v9927 = vmul.f32 %v9897, %v9912
      %v9928 = vmul.f32 %v9898, %v9913
      %v9929 = vmul.f32 %v9899, %v9914
      %v9930 = vmul.f32 %v9900, %v9915
      %v9931 = vmul.f32 %v9901, %v9916
      %v9932 = vmul.f32 %v9902, %v9917
      %v9933 = vmul.f32 %v9903, %v9918
      %v9934 = vmul.f32 %v9904, %v9919
      %v9935 = vmul.f32 %v9905, %v9920
      %v9936 = vmul.f32 %v9906, %v9921
      %v9937 = vmul.f32 %v9907, %v9922
      %v9938 = vpack.c.bf16 %v9924, %v9923
      %v9939 = vpack.c.bf16 %v9926, %v9925
      %v9940 = vpack.c.bf16 %v9928, %v9927
      %v9941 = vpack.c.bf16 %v9930, %v9929
      %v9942 = vpack.c.bf16 %v9932, %v9931
      %v9943 = vpack.c.bf16 %v9934, %v9933
      %v9944 = vpack.c.bf16 %v9936, %v9935
      %v9945 = vpack.c.bf16 %v9937, %v9937
      %v9946 = vld [vmem:[%s71] sm:$0xf]
      %v9947 = vld [vmem:[%s71 + $0x4] sm:$0xf]
      %v9948 = vld [vmem:[%s71 + $0x8] sm:$0xf]
      %v9949 = vld [vmem:[%s71 + $0xc] sm:$0x7]
      %v9954 = vunpack.c.l.b16 %v9946
      %v9955 = vunpack.c.l.b16 %v9947
      %v9956 = vunpack.c.l.b16 %v9948
      %v9957 = vunpack.c.l.b16 %v9949
      %v9958 = vpack.c.b16 %v9955, %v9954
      %v9959 = vpack.c.b16 %v9957, %v9956
      %v9961 = vsel %vm2041, %v9958, 0
      %v9964 = vsel %vm2041, %v9959, 0
      %v9967 = vsel %vm3783, %v9945, 0
      %9969 = vmatpush.bf16.msra.mxu0 %v9967
      %9970 = vmatpush.bf16.msra.mxu0 %v9944
      %9971 = vmatpush.bf16.msra.mxu0 %v9943
      %9972 = vmatpush.bf16.msra.mxu0 %v9942
      %9973 = vmatpush.bf16.msra.mxu0 %v9941
      %9974 = vmatpush.bf16.msra.mxu0 %v9940
      %9975 = vmatpush.bf16.msra.mxu0 %v9939
      %9976 = vmatpush.bf16.msra.mxu0 %v9938
      %9977 = vmatmul.bf16.gmra.mxu0 %v9961
      %v9978 = vpop.f32.mrf.mxu0
      %v9979 = vadd.f32 0.0, %v9978
      %v9980 = vpop.f32.mrf.mxu0
      %v9981 = vadd.f32 0.0, %v9980
      %9982 = vmatmul.bf16.gmra.mxu0 %v9964
      %v9983 = vpop.f32.mrf.mxu0
      %v9984 = vadd.f32 0.0, %v9983
      %v9985 = vpop.f32.mrf.mxu0
      %v9986 = vadd.f32 0.0, %v9985
      %9987 = vdwg.mxu0
      %v9988 = vld [vmem:[%s73] sm:$0xff]
      %v9989 = vld [vmem:[%s73 + $0x8] sm:$0xff]
      %v9990 = vld [vmem:[%s73 + $0x10] sm:$0xff]
      %v9991 = vld [vmem:[%s73 + $0x18] sm:$0x3f]
      %s9992 = scalar_lea.vmem %s71, 16
      %v9993 = vld [vmem:[%s9992] sm:$0xf]
      %v9994 = vld [vmem:[%s9992 + $0x4] sm:$0xf]
      %v9995 = vld [vmem:[%s9992 + $0x8] sm:$0xf]
      %v9996 = vld [vmem:[%s9992 + $0xc] sm:$0x7]
      %v10001 = vunpack.c.l.b16 %v9993
      %v10002 = vunpack.c.l.b16 %v9994
      %v10003 = vunpack.c.l.b16 %v9995
      %v10004 = vunpack.c.l.b16 %v9996
      %v10005 = vpack.c.b16 %v10002, %v10001
      %v10006 = vpack.c.b16 %v10004, %v10003
      %v10008 = vsel %vm2041, %v10005, 0
      %v10011 = vsel %vm2041, %v10006, 0
      %10013 = vmatpush.bf16.msra.mxu0 %v9967
      %10014 = vmatpush.bf16.msra.mxu0 %v9944
      %10015 = vmatpush.bf16.msra.mxu0 %v9943
      %10016 = vmatpush.bf16.msra.mxu0 %v9942
      %10017 = vmatpush.bf16.msra.mxu0 %v9941
      %10018 = vmatpush.bf16.msra.mxu0 %v9940
      %10019 = vmatpush.bf16.msra.mxu0 %v9939
      %10020 = vmatpush.bf16.msra.mxu0 %v9938
      %10021 = vmatmul.bf16.gmra.mxu0 %v10008
      %v10022 = vpop.f32.mrf.mxu0
      %v10023 = vadd.f32 0.0, %v10022
      %v10024 = vpop.f32.mrf.mxu0
      %v10025 = vadd.f32 0.0, %v10024
      %10026 = vmatmul.bf16.gmra.mxu0 %v10011
      %v10027 = vpop.f32.mrf.mxu0
      %v10028 = vadd.f32 0.0, %v10027
      %v10029 = vpop.f32.mrf.mxu0
      %v10030 = vadd.f32 0.0, %v10029
      %10031 = vdwg.mxu0
      %s10032 = scalar_lea.vmem %s73, 32
      %v10033 = vld [vmem:[%s10032] sm:$0xff]
      %v10034 = vld [vmem:[%s10032 + $0x8] sm:$0xff]
      %v10035 = vld [vmem:[%s10032 + $0x10] sm:$0xff]
      %v10036 = vld [vmem:[%s10032 + $0x18] sm:$0x3f]
      %v10038 = vsel %vm1224, %v10023, 0
      %v10041 = vsel %vm1224, %v10025, 0
      %v10044 = vsel %vm1224, %v10028, 0
      %v10047 = vsel %vm1224, %v10030, 0
      %v10050 = vsel %vm1481, %v10036, 0
      %10052 = vmatpush.msra.mxu0 0.0
      %10053 = vmatpush.msra.mxu0 0.0
      %10054 = vmatpush.msra.mxu0 0.0
      %10055 = vmatpush.msra.mxu0 0.0
      %10056 = vmatpush.msra.mxu0 0.0
      %10057 = vmatpush.msra.mxu0 0.0
      %10058 = vmatpush.msra.mxu0 0.0
      %10059 = vmatpush.msra.mxu0 0.0
      %10060 = vmatpush.msra.mxu0 0.0
      %10061 = vmatpush.msra.mxu0 0.0
      %10062 = vmatpush.msra.mxu0 0.0
      %10063 = vmatpush.msra.mxu0 0.0
      %10064 = vmatpush.msra.mxu0 %v10050
      %10065 = vmatpush.msra.mxu0 %v10035
      %10066 = vmatpush.msra.mxu0 %v10034
      %10067 = vmatpush.msra.mxu0 %v10033
      %10068 = vmatmul.f32.gmra.mxu0 %v10038
      %v10069 = vpop.f32.mrf.mxu0
      %v10070 = vadd.f32 0.0, %v10069
      %10071 = vmatmul.f32.gmra.mxu0 %v10041
      %v10072 = vpop.f32.mrf.mxu0
      %v10073 = vadd.f32 0.0, %v10072
      %10074 = vmatmul.f32.gmra.mxu0 %v10044
      %v10075 = vpop.f32.mrf.mxu0
      %v10076 = vadd.f32 0.0, %v10075
      %10077 = vmatmul.f32.gmra.mxu0 %v10047
      %v10078 = vpop.f32.mrf.mxu0
      %v10079 = vadd.f32 0.0, %v10078
      %10080 = vdwg.mxu0
      %v10082 = vsel %vm1224, %v9979, 0
      %v10085 = vsel %vm1224, %v9981, 0
      %v10088 = vsel %vm1224, %v9984, 0
      %v10091 = vsel %vm1224, %v9986, 0
      %v10094 = vsel %vm1481, %v9991, 0
      %10096 = vmatpush.msra.mxu0 0.0
      %10097 = vmatpush.msra.mxu0 0.0
      %10098 = vmatpush.msra.mxu0 0.0
      %10099 = vmatpush.msra.mxu0 0.0
      %10100 = vmatpush.msra.mxu0 0.0
      %10101 = vmatpush.msra.mxu0 0.0
      %10102 = vmatpush.msra.mxu0 0.0
      %10103 = vmatpush.msra.mxu0 0.0
      %10104 = vmatpush.msra.mxu0 0.0
      %10105 = vmatpush.msra.mxu0 0.0
      %10106 = vmatpush.msra.mxu0 0.0
      %10107 = vmatpush.msra.mxu0 0.0
      %10108 = vmatpush.msra.mxu0 %v10094
      %10109 = vmatpush.msra.mxu0 %v9990
      %10110 = vmatpush.msra.mxu0 %v9989
      %10111 = vmatpush.msra.mxu0 %v9988
      %10112 = vmatmul.f32.gmra.mxu0 %v10082
      %v10113 = vpop.f32.mrf.mxu0
      %v10114 = vadd.f32 %v10070, %v10113
      %10115 = vmatmul.f32.gmra.mxu0 %v10085
      %v10116 = vpop.f32.mrf.mxu0
      %v10117 = vadd.f32 %v10073, %v10116
      %10118 = vmatmul.f32.gmra.mxu0 %v10088
      %v10119 = vpop.f32.mrf.mxu0
      %v10120 = vadd.f32 %v10076, %v10119
      %10121 = vmatmul.f32.gmra.mxu0 %v10091
      %v10122 = vpop.f32.mrf.mxu0
      %v10123 = vadd.f32 %v10079, %v10122
      %10124 = vdwg.mxu0
      %s10125 = scalar_lea.vmem %s71, 32
      %v10126 = vld [vmem:[%s10125] sm:$0xf]
      %v10127 = vld [vmem:[%s10125 + $0x4] sm:$0xf]
      %v10128 = vld [vmem:[%s10125 + $0x8] sm:$0xf]
      %v10129 = vld [vmem:[%s10125 + $0xc] sm:$0x7]
      %v10134 = vunpack.c.l.b16 %v10126
      %v10135 = vunpack.c.l.b16 %v10127
      %v10136 = vunpack.c.l.b16 %v10128
      %v10137 = vunpack.c.l.b16 %v10129
      %v10138 = vpack.c.b16 %v10135, %v10134
      %v10139 = vpack.c.b16 %v10137, %v10136
      %v10141 = vsel %vm2041, %v10138, 0
      %v10144 = vsel %vm2041, %v10139, 0
      %10146 = vmatpush.bf16.msra.mxu0 %v9967
      %10147 = vmatpush.bf16.msra.mxu0 %v9944
      %10148 = vmatpush.bf16.msra.mxu0 %v9943
      %10149 = vmatpush.bf16.msra.mxu0 %v9942
      %10150 = vmatpush.bf16.msra.mxu0 %v9941
      %10151 = vmatpush.bf16.msra.mxu0 %v9940
      %10152 = vmatpush.bf16.msra.mxu0 %v9939
      %10153 = vmatpush.bf16.msra.mxu0 %v9938
      %10154 = vmatmul.bf16.gmra.mxu0 %v10141
      %v10155 = vpop.f32.mrf.mxu0
      %v10156 = vadd.f32 0.0, %v10155
      %v10157 = vpop.f32.mrf.mxu0
      %v10158 = vadd.f32 0.0, %v10157
      %10159 = vmatmul.bf16.gmra.mxu0 %v10144
      %v10160 = vpop.f32.mrf.mxu0
      %v10161 = vadd.f32 0.0, %v10160
      %v10162 = vpop.f32.mrf.mxu0
      %v10163 = vadd.f32 0.0, %v10162
      %10164 = vdwg.mxu0
      %s10165 = scalar_lea.vmem %s73, 64
      %v10166 = vld [vmem:[%s10165] sm:$0xff]
      %v10167 = vld [vmem:[%s10165 + $0x8] sm:$0xff]
      %v10168 = vld [vmem:[%s10165 + $0x10] sm:$0xff]
      %v10169 = vld [vmem:[%s10165 + $0x18] sm:$0x3f]
      %v10171 = vsel %vm1224, %v10156, 0
      %v10174 = vsel %vm1224, %v10158, 0
      %v10177 = vsel %vm1224, %v10161, 0
      %v10180 = vsel %vm1224, %v10163, 0
      %v10183 = vsel %vm1481, %v10169, 0
      %10185 = vmatpush.msra.mxu0 0.0
      %10186 = vmatpush.msra.mxu0 0.0
      %10187 = vmatpush.msra.mxu0 0.0
      %10188 = vmatpush.msra.mxu0 0.0
      %10189 = vmatpush.msra.mxu0 0.0
      %10190 = vmatpush.msra.mxu0 0.0
      %10191 = vmatpush.msra.mxu0 0.0
      %10192 = vmatpush.msra.mxu0 0.0
      %10193 = vmatpush.msra.mxu0 0.0
      %10194 = vmatpush.msra.mxu0 0.0
      %10195 = vmatpush.msra.mxu0 0.0
      %10196 = vmatpush.msra.mxu0 0.0
      %10197 = vmatpush.msra.mxu0 %v10183
      %10198 = vmatpush.msra.mxu0 %v10168
      %10199 = vmatpush.msra.mxu0 %v10167
      %10200 = vmatpush.msra.mxu0 %v10166
      %10201 = vmatmul.f32.gmra.mxu0 %v10171
      %v10202 = vpop.f32.mrf.mxu0
      %v10203 = vadd.f32 0.0, %v10202
      %10204 = vmatmul.f32.gmra.mxu0 %v10174
      %v10205 = vpop.f32.mrf.mxu0
      %v10206 = vadd.f32 0.0, %v10205
      %10207 = vmatmul.f32.gmra.mxu0 %v10177
      %v10208 = vpop.f32.mrf.mxu0
      %v10209 = vadd.f32 0.0, %v10208
      %10210 = vmatmul.f32.gmra.mxu0 %v10180
      %v10211 = vpop.f32.mrf.mxu0
      %v10212 = vadd.f32 0.0, %v10211
      %10213 = vdwg.mxu0
      %v10214 = vadd.f32 %v10114, %v10203
      %v10215 = vadd.f32 %v10117, %v10206
      %v10216 = vadd.f32 %v10120, %v10209
      %v10217 = vadd.f32 %v10123, %v10212
      %v10218 = vld [vmem:[%s75] sm:$0xff]
      %v10219 = vld [vmem:[%s75 + $0x8] sm:$0xff]
      %v10220 = vld [vmem:[%s75 + $0x10] sm:$0xff]
      %v10221 = vld [vmem:[%s75 + $0x18] sm:$0x3f]
      %10223 = vset.pattern.permute.xlu0 0
      %10224 = vperm.xlu0 %10223, %v10218
      %v10225 = vpop.permute.xlu0 %10224
      %10228 = vset.pattern.permute.xlu0 0
      %10229 = vperm.xlu0 %10228, %v10219
      %v10230 = vpop.permute.xlu0 %10229
      %10233 = vset.pattern.permute.xlu0 0
      %10234 = vperm.xlu0 %10233, %v10220
      %v10235 = vpop.permute.xlu0 %10234
      %10238 = vset.pattern.permute.xlu0 0
      %10239 = vperm.xlu0 %10238, %v10221
      %v10240 = vpop.permute.xlu0 %10239
      %v10242 = vadd.f32 %v10214, %v10225
      %v10243 = vadd.f32 %v10215, %v10230
      %v10244 = vadd.f32 %v10216, %v10235
      %v10245 = vadd.f32 %v10217, %v10240
      %v10246 = vxor.u32 %v10242, 2147483648
      %v10247 = vxor.u32 %v10243, 2147483648
      %v10248 = vxor.u32 %v10244, 2147483648
      %v10249 = vxor.u32 %v10245, 2147483648
      %v10250 = vmul.f32 %v10246, 1.442695
      %v10251 = vpow.pop %v10250
      %v10252 = vmul.f32 %v10247, 1.442695
      %v10253 = vpow.pop %v10252
      %v10254 = vmul.f32 %v10248, 1.442695
      %v10255 = vpow.pop %v10254
      %v10256 = vmul.f32 %v10249, 1.442695
      %v10257 = vpow.pop %v10256
      %v10258 = vadd.f32 %v10251, 1.0
      %v10259 = vadd.f32 %v10253, 1.0
      %v10260 = vadd.f32 %v10255, 1.0
      %v10261 = vadd.f32 %v10257, 1.0
      %v10262 = vrcp.pop %v10258
      %v10263 = vmul.f32 %v10258, %v10262
      %v10264 = vsub.f32 1.0, %v10263
      %v10265 = vmul.f32 %v10262, %v10264
      %v10266 = vadd.f32 %v10262, %v10265
      %vm10267 = vweird.f32 %v10258
      %vm10268 = vweird.f32 %v10262
      %vm10269 = vmor %vm10267, %vm10268
      %v10270 = vsel %vm10269, %v10262, %v10266
      %v10271 = vand.u32 2147483647, %v10258
      %vm10272 = vcmp.eq.f32.partialorder %v10271, 8.507059e+37
      %v10273 = vand.u32 %v10258, 2147483648
      %v10274 = vor.u32 1.1754944e-38, %v10273
      %v10275 = vsel %vm10272, %v10274, %v10270
      %v10276 = vmul.f32 1.0, %v10275
      %v10277 = vrcp.pop %v10259
      %v10278 = vmul.f32 %v10259, %v10277
      %v10279 = vsub.f32 1.0, %v10278
      %v10280 = vmul.f32 %v10277, %v10279
      %v10281 = vadd.f32 %v10277, %v10280
      %vm10282 = vweird.f32 %v10259
      %vm10283 = vweird.f32 %v10277
      %vm10284 = vmor %vm10282, %vm10283
      %v10285 = vsel %vm10284, %v10277, %v10281
      %v10286 = vand.u32 2147483647, %v10259
      %vm10287 = vcmp.eq.f32.partialorder %v10286, 8.507059e+37
      %v10288 = vand.u32 %v10259, 2147483648
      %v10289 = vor.u32 1.1754944e-38, %v10288
      %v10290 = vsel %vm10287, %v10289, %v10285
      %v10291 = vmul.f32 1.0, %v10290
      %v10292 = vrcp.pop %v10260
      %v10293 = vmul.f32 %v10260, %v10292
      %v10294 = vsub.f32 1.0, %v10293
      %v10295 = vmul.f32 %v10292, %v10294
      %v10296 = vadd.f32 %v10292, %v10295
      %vm10297 = vweird.f32 %v10260
      %vm10298 = vweird.f32 %v10292
      %vm10299 = vmor %vm10297, %vm10298
      %v10300 = vsel %vm10299, %v10292, %v10296
      %v10301 = vand.u32 2147483647, %v10260
      %vm10302 = vcmp.eq.f32.partialorder %v10301, 8.507059e+37
      %v10303 = vand.u32 %v10260, 2147483648
      %v10304 = vor.u32 1.1754944e-38, %v10303
      %v10305 = vsel %vm10302, %v10304, %v10300
      %v10306 = vmul.f32 1.0, %v10305
      %v10307 = vrcp.pop %v10261
      %v10308 = vmul.f32 %v10261, %v10307
      %v10309 = vsub.f32 1.0, %v10308
      %v10310 = vmul.f32 %v10307, %v10309
      %v10311 = vadd.f32 %v10307, %v10310
      %vm10312 = vweird.f32 %v10261
      %vm10313 = vweird.f32 %v10307
      %vm10314 = vmor %vm10312, %vm10313
      %v10315 = vsel %vm10314, %v10307, %v10311
      %v10316 = vand.u32 2147483647, %v10261
      %vm10317 = vcmp.eq.f32.partialorder %v10316, 8.507059e+37
      %v10318 = vand.u32 %v10261, 2147483648
      %v10319 = vor.u32 1.1754944e-38, %v10318
      %v10320 = vsel %vm10317, %v10319, %v10315
      %v10321 = vmul.f32 1.0, %v10320
      %10322 = vst.msk [vmem:[%s1154] sm:$0xff] %vm1224, %v10276
      %10323 = vst.msk [vmem:[%s1154 + $0x8] sm:$0xff] %vm1224, %v10291
      %10324 = vst.msk [vmem:[%s1154 + $0x10] sm:$0xff] %vm1224, %v10306
      %vm10325 = vcmask 242688
      %10326 = vst.msk [vmem:[%s1154 + $0x18] sm:$0x3f] %vm10325, %v10321
      %p10327 = scmp.lt.s32.totalorder %s88, 1
      %s10328 = scalar_select %p10327, %s88, 1
      %s10329 = smul.addr %s10328, 4
      %s10330 = smul.addr %s10329, 8
      %s10331 = scalar_lea.vmem %s77, %s10330
      // Predicated region
      $region173: #{cnn_ae_forward.1} parent=171 // pred_check
        %p10332 = pneg %p909
      $region174: #{cnn_ae_forward.1} parent=171 // pred_check_branch
        %10334 = sbr.rel (%p10332) target = $region176
      $region175: #{cnn_ae_forward.1} parent=171 // pred_region
        _
      $region176: #{cnn_ae_forward.1} parent=171 // pred_fallthru
        _
    $region172: #{cnn_ae_forward.1} parent=5 // pred_fallthru
      _
    %p10335 = scmp.le.s32.totalorder 2, %s83
    // Predicated region
    $region177: #{cnn_ae_forward.1} parent=5 // pred_check
      %p10336 = pneg %p10335
    $region178: #{cnn_ae_forward.1} parent=5 // pred_check_branch
      %10338 = sbr.rel (%p10336) target = $region180
    $region179: #{cnn_ae_forward.1} parent=5 // pred_region
      %s10339 = ssub.s32 %s83, 2
      // Predicated region
      $region181: #{cnn_ae_forward.1} parent=179 // pred_check
        %p10340 = pneg %p915
      $region182: #{cnn_ae_forward.1} parent=179 // pred_check_branch
        %10342 = sbr.rel (%p10340) target = $region184
      $region183: #{cnn_ae_forward.1} parent=179 // pred_region
        %p10343 = scmp.lt.s32.totalorder %s89, 1
        %s10344 = scalar_select %p10343, %s89, 1
        %s10345 = smul.addr %s10344, 4
        %s10346 = smul.addr %s10345, 8
        %s10347 = scalar_lea.vmem %s77, %s10346
      $region184: #{cnn_ae_forward.1} parent=179 // pred_fallthru
        _
    $region180: #{cnn_ae_forward.1} parent=5 // pred_fallthru
      _
  $region6: #{cnn_ae_forward.1} parent=0 // loop_footer
    %s87 = sadd.s32 1, %s83
  $region7: #{cnn_ae_forward.1} parent=0 // loop_footer_branch
    %82 = sbr.rel target = $region3
  $region8: #{cnn_ae_forward.1} parent=0 // loop_exit
    _

</llo_original>
